<compile_context>
chip_gen: v7x
topology: tpu7x:2x2x1
jax: 0.10.0
libtpu: 0.0.40
codegen_flags: <defaults>
</compile_context>

<pallas_src>
import functools
import math

import jax
import jax.numpy as jnp
from jax.experimental import pallas as pl
from jax.experimental.pallas import tpu as pltpu

EPS = 1e-6


def _gelu_erf(x):
    """GELU with exact-erf semantics via Abramowitz&Stegun 7.1.26 (|err|~1.5e-7).

    The 1/(1+p*z) divide is an EUP approximate reciprocal plus one Newton
    refinement step, so the (saturating) VPU only sees two extra ops.
    """
    a1, a2, a3, a4, a5 = (0.254829592, -0.284496736, 1.421413741,
                          -1.453152027, 1.061405429)
    p = 0.3275911
    z = jnp.abs(x) * jnp.float32(1.0 / math.sqrt(2.0))
    den = 1.0 + p * z
    r = pl.reciprocal(den, approx=True)
    t = r * (2.0 - den * r)                      # one Newton step -> ~2^-24 rel
    poly = ((((a5 * t + a4) * t + a3) * t + a2) * t + a1) * t
    erf_abs = 1.0 - poly * jnp.exp(-z * z)
    erf = jnp.where(x >= 0.0, erf_abs, -erf_abs)
    return 0.5 * x * (1.0 + erf)


def gcc_block_kernel(x_ref, wmdw_ref, wmw_ref, peh_ref, pew_ref, wh_ref,
                     gmat_ref, pc_ref, w1_ref, b1_ref, w2_ref, b2_ref,
                     out_ref, *, H, W, Cg, G, K):
    HW = H * W
    GC = G * Cg
    pad = 3                      # the PyTorch module hardcodes padding=3 (K=7)

    x = x_ref[0]                 # (3*GC, HW): [g1 rows | g2 rows | local rows]
    xg1 = x[:GC]
    xg2 = x[GC:2 * GC]
    xl = x[2 * GC:]

    # packed per-channel scalars, tiled over the G packed images
    dwb, nlw, nlb = pc_ref[:, 0:1], pc_ref[:, 1:2], pc_ref[:, 2:3]
    bh, bw = pc_ref[:, 3:4], pc_ref[:, 4:5]
    ngw1, ngb1 = pc_ref[:, 5:6], pc_ref[:, 6:7]
    ngw2, ngb2 = pc_ref[:, 7:8], pc_ref[:, 8:9]

    gmat = gmat_ref[...]         # (GC, GC) per-image mean matrix (1/Cg blocks)

    # ---------------- local branch: depthwise KxK conv -----------------------
    # Each tap = flat lane rotation (XLU) * precomputed fused weight*mask slab,
    # loaded at the use site so live ranges stay one tap long.
    y_l = dwb + xl * wmdw_ref[pad * K + pad]           # center tap (shift 0)
    for i in range(K):
        di = i - pad
        for j in range(K):
            dj = j - pad
            s = di * W + dj
            if s == 0:
                continue
            shifted = pltpu.roll(xl, (-s) % HW, axis=1)
            y_l = y_l + shifted * wmdw_ref[i * K + j]

    # per-image LayerNorm over Cg channels (group stats via tiny MXU matmul)
    mu = jnp.dot(gmat, y_l, preferred_element_type=jnp.float32)
    d = y_l - mu
    var = jnp.dot(gmat, d * d, preferred_element_type=jnp.float32)
    y_l = d * jax.lax.rsqrt(var + EPS) * nlw + nlb

    # ---------------- global branch 1: circular conv along H -----------------
    # out[c,h,w] = sum_k wh[c,k] * in[c,(h+k)%H,w]  ==  flat roll by k*W.
    g1in = xg1 + peh_ref[...]
    g1 = bh + g1in * wh_ref[:, 0:1]
    for k in range(1, H):
        g1 = g1 + pltpu.roll(g1in, HW - k * W, axis=1) * wh_ref[:, k:k + 1]

    # ---------------- global branch 2: circular conv along W -----------------
    # Row-circular conv regrouped by flat shift s in [-(W-1), W-1]; the tap
    # weight is pre-multiplied with the "no row crossing" mask in the wrapper,
    # so each tap is again just roll * fused-weight-mask.
    g2in = xg2 + pew_ref[...]
    g2 = bw + g2in * wmw_ref[W - 1]                    # s == 0 tap
    for idx, s in enumerate(range(-(W - 1), W)):
        if s == 0:
            continue
        shifted = pltpu.roll(g2in, (-s) % HW, axis=1)
        g2 = g2 + shifted * wmw_ref[idx]

    # per-image LayerNorm over the 2*Cg global channels (no concat needed)
    mu = 0.5 * (jnp.dot(gmat, g1, preferred_element_type=jnp.float32)
                + jnp.dot(gmat, g2, preferred_element_type=jnp.float32))
    d1 = g1 - mu
    d2 = g2 - mu
    var = 0.5 * (jnp.dot(gmat, d1 * d1, preferred_element_type=jnp.float32)
                 + jnp.dot(gmat, d2 * d2, preferred_element_type=jnp.float32))
    inv = jax.lax.rsqrt(var + EPS)
    g1n = d1 * inv * ngw1 + ngb1
    g2n = d2 * inv * ngw2 + ngb2

    # ---------------- pointwise MLP (fused block-diagonal matmuls) -----------
    feat = jnp.concatenate([g1n, g2n, y_l], axis=0)    # (3*GC, HW), lane-dense
    h = jnp.dot(w1_ref[...], feat,
                preferred_element_type=jnp.float32) + b1_ref[...]
    h = _gelu_erf(h)                                   # (G*4D, HW)
    mlp = jnp.dot(w2_ref[...], h,
                  preferred_element_type=jnp.float32) + b2_ref[...]

    # layer-scale gamma is pre-folded into w2/b2; residual + lane-dense store.
    out_ref[0] = x + mlp


def _pick_images_per_step(B, Cg, images_per_step=None):
    if images_per_step is not None:
        if B % images_per_step:
            raise ValueError("images_per_step must divide the batch")
        return images_per_step
    # Fill the 8 f32 sublanes of a vreg (Cg=4 -> 2 images).  For very large B
    # on single-TC chips one can fold even more aggressively via the override.
    g = max(1, 8 // max(1, Cg))
    while g > 1 and B % g:
        g -= 1
    return g


def make_params(key, dim, meta_kernel_size, local_kernel_size=7):
    """Deterministic synthetic parameters, stored in PyTorch layouts."""
    Cg = dim // 3
    K = local_kernel_size
    M = meta_kernel_size
    ks = jax.random.split(key, 13)
    p = {}
    p["dw_w"] = 0.1 * jax.random.normal(ks[0], (Cg, 1, K, K), jnp.float32)
    p["dw_b"] = 0.1 * jax.random.normal(ks[1], (Cg,), jnp.float32)
    p["nl_w"] = jnp.ones((Cg,), jnp.float32)
    p["nl_b"] = jnp.zeros((Cg,), jnp.float32)
    p["wH"] = 0.1 * jax.random.normal(ks[2], (Cg, 1, M, 1), jnp.float32)
    p["bH"] = jax.random.normal(ks[3], (Cg,), jnp.float32)
    p["peH"] = jax.random.normal(ks[4], (1, Cg, M, 1), jnp.float32)
    p["wW"] = 0.1 * jax.random.normal(ks[5], (Cg, 1, 1, M), jnp.float32)
    p["bW"] = jax.random.normal(ks[6], (Cg,), jnp.float32)
    p["peW"] = jax.random.normal(ks[7], (1, Cg, 1, M), jnp.float32)
    p["ng_w"] = jnp.ones((2 * Cg,), jnp.float32)
    p["ng_b"] = jnp.zeros((2 * Cg,), jnp.float32)
    p["w1"] = 0.05 * jax.random.normal(ks[8], (dim, 4 * dim), jnp.float32)
    p["b1"] = 0.05 * jax.random.normal(ks[9], (4 * dim,), jnp.float32)
    p["w2"] = 0.05 * jax.random.normal(ks[10], (4 * dim, dim), jnp.float32)
    p["b2"] = 0.05 * jax.random.normal(ks[11], (dim,), jnp.float32)
    # module init is 1e-6*ones; use random values so the MLP branch is exercised
    p["gamma"] = 0.1 * jax.random.normal(ks[12], (dim,), jnp.float32)
    return p


def gcc_cvx_block_v2(x_nchw, p, local_kernel_size=7, images_per_step=None):
    """Forward pass. x_nchw: (B, dim, H, W); returns (B, dim, H, W)."""
    B, D, H, W = x_nchw.shape
    if D % 3:
        raise ValueError("dim must be divisible by 3")
    Cg = D // 3
    K = local_kernel_size
    if K != 7:
        raise NotImplementedError("the module hardcodes padding=3, so K must be 7")
    HW = H * W
    pad = 3
    f32 = jnp.float32
    G = _pick_images_per_step(B, Cg, images_per_step)
    GC = G * Cg
    nb = B // G

    # ---- pack G images per step: rows ordered (group, image, channel) -------
    xp = (x_nchw.astype(f32).reshape(nb, G, 3, Cg, HW)
          .transpose(0, 2, 1, 3, 4).reshape(nb, 3 * GC, HW))

    def tile1(v):                    # (Cg,)   -> (GC,)   row = g*Cg + c -> v[c]
        return jnp.tile(v, G)

    def tile2(m):                    # (Cg, n) -> (GC, n)
        return jnp.tile(m, (G, 1))

    cols = jnp.tile(jnp.arange(W, dtype=jnp.int32), H)     # (HW,) column index
    rows = jnp.repeat(jnp.arange(H, dtype=jnp.int32), W)   # (HW,) row index

    # depthwise taps: fused (per-channel weight) * (zero-padding boundary mask)
    dww = p["dw_w"][:, 0]                                   # (Cg, K, K)
    taps = []
    for i in range(K):
        di = i - pad
        rmask = ((rows + di >= 0) & (rows + di < H)).astype(f32)
        for j in range(K):
            dj = j - pad
            cmask = ((cols + dj >= 0) & (cols + dj < W)).astype(f32)
            taps.append(dww[:, i, j][:, None] * (rmask * cmask)[None, :])
    wm_dw = jnp.tile(jnp.stack(taps, 0), (1, G, 1))         # (K*K, GC, HW)

    # W-circular-conv taps regrouped by flat shift s, fused with row-wrap mask
    www = p["wW"][:, 0, 0, :]                               # (Cg, W)
    taps_w = []
    for s in range(-(W - 1), W):
        if s >= 0:
            k = s
            mask = (cols < W - s).astype(f32)
        else:
            k = s + W
            mask = (cols >= -s).astype(f32)
        taps_w.append(www[:, k][:, None] * mask[None, :])
    wm_w = jnp.tile(jnp.stack(taps_w, 0), (1, G, 1))        # (2W-1, GC, HW)

    # positional embeddings (broadcast to full maps) and H-conv weights
    peh = tile2(jnp.broadcast_to(p["peH"][0, :, :, 0][:, :, None],
                                 (Cg, H, W)).reshape(Cg, HW))
    pew = tile2(jnp.broadcast_to(p["peW"][0, :, 0, :][:, None, :],
                                 (Cg, H, W)).reshape(Cg, HW))
    wh = tile2(p["wH"][:, 0, :, 0])                         # (GC, H)

    # per-image group-mean matrix for LayerNorm stats over packed sublanes
    gid = jnp.repeat(jnp.arange(G), Cg)
    gmat = (gid[:, None] == gid[None, :]).astype(f32) / Cg  # (GC, GC)

    # consolidated per-channel scalars
    pc = jnp.stack([tile1(p["dw_b"]), tile1(p["nl_w"]), tile1(p["nl_b"]),
                    tile1(p["bH"]), tile1(p["bW"]),
                    tile1(p["ng_w"][:Cg]), tile1(p["ng_b"][:Cg]),
                    tile1(p["ng_w"][Cg:]), tile1(p["ng_b"][Cg:])], axis=1)

    # block-diagonal MLP weights (per packed image), gamma folded into pwconv2
    eyeG = jnp.eye(G, dtype=f32)
    w1t = p["w1"].T.reshape(4 * D, 3, Cg)                   # [o, grp, c]
    w1blk = jnp.einsum("ab,pqr->apqbr", eyeG, w1t).reshape(G * 4 * D, 3 * GC)
    b1p = jnp.tile(p["b1"], G)[:, None]                     # (G*4D, 1)
    gw2 = (p["gamma"][:, None] * p["w2"].T).reshape(3, Cg, 4 * D)   # [grp, c, o]
    w2blk = jnp.einsum("ab,qrp->qarbp", eyeG, gw2).reshape(3 * GC, G * 4 * D)
    b2p = jnp.tile((p["gamma"] * p["b2"]).reshape(3, 1, Cg),
                   (1, G, 1)).reshape(3 * GC)[:, None]      # (3*GC, 1)

    const_args = (wm_dw, wm_w, peh, pew, wh, gmat, pc, w1blk, b1p, w2blk, b2p)

    in_specs = [pl.BlockSpec((1, 3 * GC, HW), lambda b: (b, 0, 0))]
    for a in const_args:                       # grid-invariant blocks
        in_specs.append(pl.BlockSpec(a.shape, lambda b, n=a.ndim: (0,) * n))

    kernel = functools.partial(gcc_block_kernel, H=H, W=W, Cg=Cg, G=G, K=K)
    out = pl.pallas_call(
        kernel,
        out_shape=jax.ShapeDtypeStruct((nb, 3 * GC, HW), f32),
        grid=(nb,),
        in_specs=in_specs,
        out_specs=pl.BlockSpec((1, 3 * GC, HW), lambda b: (b, 0, 0)),
        compiler_params=pltpu.CompilerParams(
            dimension_semantics=("parallel",)),
    )(xp, *const_args)

    # unpack (nb, 3, G, Cg, HW) -> (B, D, H, W)
    out = (out.reshape(nb, 3, G, Cg, HW).transpose(0, 2, 1, 3, 4)
           .reshape(B, D, H, W))
    return out


def reference_forward(x_nchw, p):
    """Pure-JAX (XLA) reference mirroring the PyTorch module, for validation."""
    B, D, H, W = x_nchw.shape
    Cg = D // 3
    dn = ("NCHW", "OIHW", "NCHW")
    xg1, xg2, xl = x_nchw[:, :Cg], x_nchw[:, Cg:2 * Cg], x_nchw[:, 2 * Cg:]

    def ln_cl(y, w, b):  # LayerNorm over channel, channels_last semantics
        yt = jnp.transpose(y, (0, 2, 3, 1))
        mu = yt.mean(-1, keepdims=True)
        var = ((yt - mu) ** 2).mean(-1, keepdims=True)
        yt = (yt - mu) / jnp.sqrt(var + EPS) * w + b
        return jnp.transpose(yt, (0, 3, 1, 2))

    yl = jax.lax.conv_general_dilated(xl, p["dw_w"], (1, 1), ((3, 3), (3, 3)),
                                      feature_group_count=Cg,
                                      dimension_numbers=dn)
    yl = ln_cl(yl + p["dw_b"][None, :, None, None], p["nl_w"], p["nl_b"])

    g1 = xg1 + p["peH"]
    g1cat = jnp.concatenate([g1, g1[:, :, :-1, :]], axis=2)
    g1 = jax.lax.conv_general_dilated(g1cat, p["wH"], (1, 1), "VALID",
                                      feature_group_count=Cg,
                                      dimension_numbers=dn)
    g1 = g1 + p["bH"][None, :, None, None]

    g2 = xg2 + p["peW"]
    g2cat = jnp.concatenate([g2, g2[:, :, :, :-1]], axis=3)
    g2 = jax.lax.conv_general_dilated(g2cat, p["wW"], (1, 1), "VALID",
                                      feature_group_count=Cg,
                                      dimension_numbers=dn)
    g2 = g2 + p["bW"][None, :, None, None]

    xg = ln_cl(jnp.concatenate([g1, g2], axis=1), p["ng_w"], p["ng_b"])
    feat = jnp.transpose(jnp.concatenate([xg, yl], axis=1), (0, 2, 3, 1))
    h = feat @ p["w1"] + p["b1"]
    h = 0.5 * h * (1.0 + jax.lax.erf(h / jnp.sqrt(2.0)))   # exact GELU
    h = h @ p["w2"] + p["b2"]
    h = h * p["gamma"]
    return x_nchw + jnp.transpose(h, (0, 3, 1, 2))


if __name__ == "__main__":
    # dim must be divisible by 3; spatial size must equal meta_kernel_size
    # (instance_kernel_method=None path of gcc_Conv2d).
    B, dim, H, W = 2, 12, 16, 16
    key = jax.random.PRNGKey(0)
    kx, kp = jax.random.split(key)
    x = jax.random.normal(kx, (B, dim, H, W), jnp.float32)
    params = make_params(kp, dim, meta_kernel_size=H, local_kernel_size=7)

    fwd = jax.jit(lambda xx, pp: gcc_cvx_block_v2(xx, pp))
    out = jax.block_until_ready(fwd(x, params))

    ref = reference_forward(x, params)
    assert out.shape == x.shape
    max_err = float(jnp.max(jnp.abs(out - ref)))
    assert jnp.allclose(out, ref, atol=2e-5, rtol=2e-5), max_err
    print("KERNEL_OK")
</pallas_src>

<mosaic_0001>
module attributes {stable_mosaic.version = 11 : i64} {
  func.func @gcc_block_kernel(%arg0: i32, %arg1: memref<1x24x256xf32, #tpu.memory_space<vmem>>, %arg2: memref<49x8x256xf32, #tpu.memory_space<vmem>>, %arg3: memref<31x8x256xf32, #tpu.memory_space<vmem>>, %arg4: memref<8x256xf32, #tpu.memory_space<vmem>>, %arg5: memref<8x256xf32, #tpu.memory_space<vmem>>, %arg6: memref<8x16xf32, #tpu.memory_space<vmem>>, %arg7: memref<8x8xf32, #tpu.memory_space<vmem>>, %arg8: memref<8x9xf32, #tpu.memory_space<vmem>>, %arg9: memref<96x24xf32, #tpu.memory_space<vmem>>, %arg10: memref<96x1xf32, #tpu.memory_space<vmem>>, %arg11: memref<24x96xf32, #tpu.memory_space<vmem>>, %arg12: memref<24x1xf32, #tpu.memory_space<vmem>>, %arg13: memref<1x24x256xf32, #tpu.memory_space<vmem>>) attributes {dimension_semantics = [#tpu.dimension_semantics<parallel>], iteration_bounds = array<i64: 1>, scalar_prefetch = 0 : i64, scratch_operands = 0 : i64, tpu.core_type = #tpu.core_type<tc>, window_params = [{transform_indices = @transform_0, window_bounds = array<i64: 1, 24, 256>}, {pipeline_mode = #tpu.pipeline_mode<synchronous>, transform_indices = @transform_1, window_bounds = array<i64: 49, 8, 256>}, {pipeline_mode = #tpu.pipeline_mode<synchronous>, transform_indices = @transform_2, window_bounds = array<i64: 31, 8, 256>}, {pipeline_mode = #tpu.pipeline_mode<synchronous>, transform_indices = @transform_3, window_bounds = array<i64: 8, 256>}, {pipeline_mode = #tpu.pipeline_mode<synchronous>, transform_indices = @transform_4, window_bounds = array<i64: 8, 256>}, {pipeline_mode = #tpu.pipeline_mode<synchronous>, transform_indices = @transform_5, window_bounds = array<i64: 8, 16>}, {pipeline_mode = #tpu.pipeline_mode<synchronous>, transform_indices = @transform_6, window_bounds = array<i64: 8, 8>}, {pipeline_mode = #tpu.pipeline_mode<synchronous>, transform_indices = @transform_7, window_bounds = array<i64: 8, 9>}, {pipeline_mode = #tpu.pipeline_mode<synchronous>, transform_indices = @transform_8, window_bounds = array<i64: 96, 24>}, {pipeline_mode = #tpu.pipeline_mode<synchronous>, transform_indices = @transform_9, window_bounds = array<i64: 96, 1>}, {pipeline_mode = #tpu.pipeline_mode<synchronous>, transform_indices = @transform_10, window_bounds = array<i64: 24, 96>}, {pipeline_mode = #tpu.pipeline_mode<synchronous>, transform_indices = @transform_11, window_bounds = array<i64: 24, 1>}, {transform_indices = @transform_12, window_bounds = array<i64: 1, 24, 256>}]} {
    %c0 = arith.constant 0 : index
    %c0_0 = arith.constant 0 : index
    %c0_1 = arith.constant 0 : index
    %0 = vector.load %arg1[%c0, %c0_0, %c0_1] : memref<1x24x256xf32, #tpu.memory_space<vmem>>, vector<1x24x256xf32>
    %1 = vector.shape_cast %0 : vector<1x24x256xf32> to vector<24x256xf32>
    %2 = vector.extract_strided_slice %1 {offsets = [0, 0], sizes = [8, 256], strides = [1, 1]} : vector<24x256xf32> to vector<8x256xf32>
    %3 = vector.extract_strided_slice %1 {offsets = [8, 0], sizes = [8, 256], strides = [1, 1]} : vector<24x256xf32> to vector<8x256xf32>
    %4 = vector.extract_strided_slice %1 {offsets = [16, 0], sizes = [8, 256], strides = [1, 1]} : vector<24x256xf32> to vector<8x256xf32>
    %c0_2 = arith.constant 0 : index
    %c0_3 = arith.constant 0 : index
    %5 = vector.load %arg8[%c0_2, %c0_3] : memref<8x9xf32, #tpu.memory_space<vmem>>, vector<8x1xf32>
    %c0_4 = arith.constant 0 : index
    %c1 = arith.constant 1 : index
    %6 = vector.load %arg8[%c0_4, %c1] : memref<8x9xf32, #tpu.memory_space<vmem>>, vector<8x1xf32>
    %c0_5 = arith.constant 0 : index
    %c2 = arith.constant 2 : index
    %7 = vector.load %arg8[%c0_5, %c2] : memref<8x9xf32, #tpu.memory_space<vmem>>, vector<8x1xf32>
    %c0_6 = arith.constant 0 : index
    %c3 = arith.constant 3 : index
    %8 = vector.load %arg8[%c0_6, %c3] : memref<8x9xf32, #tpu.memory_space<vmem>>, vector<8x1xf32>
    %c0_7 = arith.constant 0 : index
    %c4 = arith.constant 4 : index
    %9 = vector.load %arg8[%c0_7, %c4] : memref<8x9xf32, #tpu.memory_space<vmem>>, vector<8x1xf32>
    %c0_8 = arith.constant 0 : index
    %c5 = arith.constant 5 : index
    %10 = vector.load %arg8[%c0_8, %c5] : memref<8x9xf32, #tpu.memory_space<vmem>>, vector<8x1xf32>
    %c0_9 = arith.constant 0 : index
    %c6 = arith.constant 6 : index
    %11 = vector.load %arg8[%c0_9, %c6] : memref<8x9xf32, #tpu.memory_space<vmem>>, vector<8x1xf32>
    %c0_10 = arith.constant 0 : index
    %c7 = arith.constant 7 : index
    %12 = vector.load %arg8[%c0_10, %c7] : memref<8x9xf32, #tpu.memory_space<vmem>>, vector<8x1xf32>
    %c0_11 = arith.constant 0 : index
    %c8 = arith.constant 8 : index
    %13 = vector.load %arg8[%c0_11, %c8] : memref<8x9xf32, #tpu.memory_space<vmem>>, vector<8x1xf32>
    %c0_12 = arith.constant 0 : index
    %c0_13 = arith.constant 0 : index
    %14 = vector.load %arg7[%c0_12, %c0_13] : memref<8x8xf32, #tpu.memory_space<vmem>>, vector<8x8xf32>
    %c24 = arith.constant 24 : index
    %c0_14 = arith.constant 0 : index
    %c0_15 = arith.constant 0 : index
    %15 = vector.load %arg2[%c24, %c0_14, %c0_15] : memref<49x8x256xf32, #tpu.memory_space<vmem>>, vector<1x8x256xf32>
    %16 = vector.shape_cast %15 : vector<1x8x256xf32> to vector<8x256xf32>
    %17 = arith.mulf %4, %16 : vector<8x256xf32>
    %18 = vector.broadcast %5 : vector<8x1xf32> to vector<8x256xf32>
    %19 = arith.addf %18, %17 : vector<8x256xf32>
    %c51_i32 = arith.constant 51 : i32
    %20 = tpu.dynamic_rotate %4 by %c51_i32 dim 1 : vector<8x256xf32>, i32 -> vector<8x256xf32>
    %c0_16 = arith.constant 0 : index
    %c0_17 = arith.constant 0 : index
    %c0_18 = arith.constant 0 : index
    %21 = vector.load %arg2[%c0_16, %c0_17, %c0_18] : memref<49x8x256xf32, #tpu.memory_space<vmem>>, vector<1x8x256xf32>
    %22 = vector.shape_cast %21 : vector<1x8x256xf32> to vector<8x256xf32>
    %23 = arith.mulf %20, %22 : vector<8x256xf32>
    %24 = arith.addf %19, %23 : vector<8x256xf32>
    %c50_i32 = arith.constant 50 : i32
    %25 = tpu.dynamic_rotate %4 by %c50_i32 dim 1 : vector<8x256xf32>, i32 -> vector<8x256xf32>
    %c1_19 = arith.constant 1 : index
    %c0_20 = arith.constant 0 : index
    %c0_21 = arith.constant 0 : index
    %26 = vector.load %arg2[%c1_19, %c0_20, %c0_21] : memref<49x8x256xf32, #tpu.memory_space<vmem>>, vector<1x8x256xf32>
    %27 = vector.shape_cast %26 : vector<1x8x256xf32> to vector<8x256xf32>
    %28 = arith.mulf %25, %27 : vector<8x256xf32>
    %29 = arith.addf %24, %28 : vector<8x256xf32>
    %c49_i32 = arith.constant 49 : i32
    %30 = tpu.dynamic_rotate %4 by %c49_i32 dim 1 : vector<8x256xf32>, i32 -> vector<8x256xf32>
    %c2_22 = arith.constant 2 : index
    %c0_23 = arith.constant 0 : index
    %c0_24 = arith.constant 0 : index
    %31 = vector.load %arg2[%c2_22, %c0_23, %c0_24] : memref<49x8x256xf32, #tpu.memory_space<vmem>>, vector<1x8x256xf32>
    %32 = vector.shape_cast %31 : vector<1x8x256xf32> to vector<8x256xf32>
    %33 = arith.mulf %30, %32 : vector<8x256xf32>
    %34 = arith.addf %29, %33 : vector<8x256xf32>
    %c48_i32 = arith.constant 48 : i32
    %35 = tpu.dynamic_rotate %4 by %c48_i32 dim 1 : vector<8x256xf32>, i32 -> vector<8x256xf32>
    %c3_25 = arith.constant 3 : index
    %c0_26 = arith.constant 0 : index
    %c0_27 = arith.constant 0 : index
    %36 = vector.load %arg2[%c3_25, %c0_26, %c0_27] : memref<49x8x256xf32, #tpu.memory_space<vmem>>, vector<1x8x256xf32>
    %37 = vector.shape_cast %36 : vector<1x8x256xf32> to vector<8x256xf32>
    %38 = arith.mulf %35, %37 : vector<8x256xf32>
    %39 = arith.addf %34, %38 : vector<8x256xf32>
    %c47_i32 = arith.constant 47 : i32
    %40 = tpu.dynamic_rotate %4 by %c47_i32 dim 1 : vector<8x256xf32>, i32 -> vector<8x256xf32>
    %c4_28 = arith.constant 4 : index
    %c0_29 = arith.constant 0 : index
    %c0_30 = arith.constant 0 : index
    %41 = vector.load %arg2[%c4_28, %c0_29, %c0_30] : memref<49x8x256xf32, #tpu.memory_space<vmem>>, vector<1x8x256xf32>
    %42 = vector.shape_cast %41 : vector<1x8x256xf32> to vector<8x256xf32>
    %43 = arith.mulf %40, %42 : vector<8x256xf32>
    %44 = arith.addf %39, %43 : vector<8x256xf32>
    %c46_i32 = arith.constant 46 : i32
    %45 = tpu.dynamic_rotate %4 by %c46_i32 dim 1 : vector<8x256xf32>, i32 -> vector<8x256xf32>
    %c5_31 = arith.constant 5 : index
    %c0_32 = arith.constant 0 : index
    %c0_33 = arith.constant 0 : index
    %46 = vector.load %arg2[%c5_31, %c0_32, %c0_33] : memref<49x8x256xf32, #tpu.memory_space<vmem>>, vector<1x8x256xf32>
    %47 = vector.shape_cast %46 : vector<1x8x256xf32> to vector<8x256xf32>
    %48 = arith.mulf %45, %47 : vector<8x256xf32>
    %49 = arith.addf %44, %48 : vector<8x256xf32>
    %c45_i32 = arith.constant 45 : i32
    %50 = tpu.dynamic_rotate %4 by %c45_i32 dim 1 : vector<8x256xf32>, i32 -> vector<8x256xf32>
    %c6_34 = arith.constant 6 : index
    %c0_35 = arith.constant 0 : index
    %c0_36 = arith.constant 0 : index
    %51 = vector.load %arg2[%c6_34, %c0_35, %c0_36] : memref<49x8x256xf32, #tpu.memory_space<vmem>>, vector<1x8x256xf32>
    %52 = vector.shape_cast %51 : vector<1x8x256xf32> to vector<8x256xf32>
    %53 = arith.mulf %50, %52 : vector<8x256xf32>
    %54 = arith.addf %49, %53 : vector<8x256xf32>
    %c35_i32 = arith.constant 35 : i32
    %55 = tpu.dynamic_rotate %4 by %c35_i32 dim 1 : vector<8x256xf32>, i32 -> vector<8x256xf32>
    %c7_37 = arith.constant 7 : index
    %c0_38 = arith.constant 0 : index
    %c0_39 = arith.constant 0 : index
    %56 = vector.load %arg2[%c7_37, %c0_38, %c0_39] : memref<49x8x256xf32, #tpu.memory_space<vmem>>, vector<1x8x256xf32>
    %57 = vector.shape_cast %56 : vector<1x8x256xf32> to vector<8x256xf32>
    %58 = arith.mulf %55, %57 : vector<8x256xf32>
    %59 = arith.addf %54, %58 : vector<8x256xf32>
    %c34_i32 = arith.constant 34 : i32
    %60 = tpu.dynamic_rotate %4 by %c34_i32 dim 1 : vector<8x256xf32>, i32 -> vector<8x256xf32>
    %c8_40 = arith.constant 8 : index
    %c0_41 = arith.constant 0 : index
    %c0_42 = arith.constant 0 : index
    %61 = vector.load %arg2[%c8_40, %c0_41, %c0_42] : memref<49x8x256xf32, #tpu.memory_space<vmem>>, vector<1x8x256xf32>
    %62 = vector.shape_cast %61 : vector<1x8x256xf32> to vector<8x256xf32>
    %63 = arith.mulf %60, %62 : vector<8x256xf32>
    %64 = arith.addf %59, %63 : vector<8x256xf32>
    %c33_i32 = arith.constant 33 : i32
    %65 = tpu.dynamic_rotate %4 by %c33_i32 dim 1 : vector<8x256xf32>, i32 -> vector<8x256xf32>
    %c9 = arith.constant 9 : index
    %c0_43 = arith.constant 0 : index
    %c0_44 = arith.constant 0 : index
    %66 = vector.load %arg2[%c9, %c0_43, %c0_44] : memref<49x8x256xf32, #tpu.memory_space<vmem>>, vector<1x8x256xf32>
    %67 = vector.shape_cast %66 : vector<1x8x256xf32> to vector<8x256xf32>
    %68 = arith.mulf %65, %67 : vector<8x256xf32>
    %69 = arith.addf %64, %68 : vector<8x256xf32>
    %c32_i32 = arith.constant 32 : i32
    %70 = tpu.dynamic_rotate %4 by %c32_i32 dim 1 : vector<8x256xf32>, i32 -> vector<8x256xf32>
    %c10 = arith.constant 10 : index
    %c0_45 = arith.constant 0 : index
    %c0_46 = arith.constant 0 : index
    %71 = vector.load %arg2[%c10, %c0_45, %c0_46] : memref<49x8x256xf32, #tpu.memory_space<vmem>>, vector<1x8x256xf32>
    %72 = vector.shape_cast %71 : vector<1x8x256xf32> to vector<8x256xf32>
    %73 = arith.mulf %70, %72 : vector<8x256xf32>
    %74 = arith.addf %69, %73 : vector<8x256xf32>
    %c31_i32 = arith.constant 31 : i32
    %75 = tpu.dynamic_rotate %4 by %c31_i32 dim 1 : vector<8x256xf32>, i32 -> vector<8x256xf32>
    %c11 = arith.constant 11 : index
    %c0_47 = arith.constant 0 : index
    %c0_48 = arith.constant 0 : index
    %76 = vector.load %arg2[%c11, %c0_47, %c0_48] : memref<49x8x256xf32, #tpu.memory_space<vmem>>, vector<1x8x256xf32>
    %77 = vector.shape_cast %76 : vector<1x8x256xf32> to vector<8x256xf32>
    %78 = arith.mulf %75, %77 : vector<8x256xf32>
    %79 = arith.addf %74, %78 : vector<8x256xf32>
    %c30_i32 = arith.constant 30 : i32
    %80 = tpu.dynamic_rotate %4 by %c30_i32 dim 1 : vector<8x256xf32>, i32 -> vector<8x256xf32>
    %c12 = arith.constant 12 : index
    %c0_49 = arith.constant 0 : index
    %c0_50 = arith.constant 0 : index
    %81 = vector.load %arg2[%c12, %c0_49, %c0_50] : memref<49x8x256xf32, #tpu.memory_space<vmem>>, vector<1x8x256xf32>
    %82 = vector.shape_cast %81 : vector<1x8x256xf32> to vector<8x256xf32>
    %83 = arith.mulf %80, %82 : vector<8x256xf32>
    %84 = arith.addf %79, %83 : vector<8x256xf32>
    %c29_i32 = arith.constant 29 : i32
    %85 = tpu.dynamic_rotate %4 by %c29_i32 dim 1 : vector<8x256xf32>, i32 -> vector<8x256xf32>
    %c13 = arith.constant 13 : index
    %c0_51 = arith.constant 0 : index
    %c0_52 = arith.constant 0 : index
    %86 = vector.load %arg2[%c13, %c0_51, %c0_52] : memref<49x8x256xf32, #tpu.memory_space<vmem>>, vector<1x8x256xf32>
    %87 = vector.shape_cast %86 : vector<1x8x256xf32> to vector<8x256xf32>
    %88 = arith.mulf %85, %87 : vector<8x256xf32>
    %89 = arith.addf %84, %88 : vector<8x256xf32>
    %c19_i32 = arith.constant 19 : i32
    %90 = tpu.dynamic_rotate %4 by %c19_i32 dim 1 : vector<8x256xf32>, i32 -> vector<8x256xf32>
    %c14 = arith.constant 14 : index
    %c0_53 = arith.constant 0 : index
    %c0_54 = arith.constant 0 : index
    %91 = vector.load %arg2[%c14, %c0_53, %c0_54] : memref<49x8x256xf32, #tpu.memory_space<vmem>>, vector<1x8x256xf32>
    %92 = vector.shape_cast %91 : vector<1x8x256xf32> to vector<8x256xf32>
    %93 = arith.mulf %90, %92 : vector<8x256xf32>
    %94 = arith.addf %89, %93 : vector<8x256xf32>
    %c18_i32 = arith.constant 18 : i32
    %95 = tpu.dynamic_rotate %4 by %c18_i32 dim 1 : vector<8x256xf32>, i32 -> vector<8x256xf32>
    %c15 = arith.constant 15 : index
    %c0_55 = arith.constant 0 : index
    %c0_56 = arith.constant 0 : index
    %96 = vector.load %arg2[%c15, %c0_55, %c0_56] : memref<49x8x256xf32, #tpu.memory_space<vmem>>, vector<1x8x256xf32>
    %97 = vector.shape_cast %96 : vector<1x8x256xf32> to vector<8x256xf32>
    %98 = arith.mulf %95, %97 : vector<8x256xf32>
    %99 = arith.addf %94, %98 : vector<8x256xf32>
    %c17_i32 = arith.constant 17 : i32
    %100 = tpu.dynamic_rotate %4 by %c17_i32 dim 1 : vector<8x256xf32>, i32 -> vector<8x256xf32>
    %c16 = arith.constant 16 : index
    %c0_57 = arith.constant 0 : index
    %c0_58 = arith.constant 0 : index
    %101 = vector.load %arg2[%c16, %c0_57, %c0_58] : memref<49x8x256xf32, #tpu.memory_space<vmem>>, vector<1x8x256xf32>
    %102 = vector.shape_cast %101 : vector<1x8x256xf32> to vector<8x256xf32>
    %103 = arith.mulf %100, %102 : vector<8x256xf32>
    %104 = arith.addf %99, %103 : vector<8x256xf32>
    %c16_i32 = arith.constant 16 : i32
    %105 = tpu.dynamic_rotate %4 by %c16_i32 dim 1 : vector<8x256xf32>, i32 -> vector<8x256xf32>
    %c17 = arith.constant 17 : index
    %c0_59 = arith.constant 0 : index
    %c0_60 = arith.constant 0 : index
    %106 = vector.load %arg2[%c17, %c0_59, %c0_60] : memref<49x8x256xf32, #tpu.memory_space<vmem>>, vector<1x8x256xf32>
    %107 = vector.shape_cast %106 : vector<1x8x256xf32> to vector<8x256xf32>
    %108 = arith.mulf %105, %107 : vector<8x256xf32>
    %109 = arith.addf %104, %108 : vector<8x256xf32>
    %c15_i32 = arith.constant 15 : i32
    %110 = tpu.dynamic_rotate %4 by %c15_i32 dim 1 : vector<8x256xf32>, i32 -> vector<8x256xf32>
    %c18 = arith.constant 18 : index
    %c0_61 = arith.constant 0 : index
    %c0_62 = arith.constant 0 : index
    %111 = vector.load %arg2[%c18, %c0_61, %c0_62] : memref<49x8x256xf32, #tpu.memory_space<vmem>>, vector<1x8x256xf32>
    %112 = vector.shape_cast %111 : vector<1x8x256xf32> to vector<8x256xf32>
    %113 = arith.mulf %110, %112 : vector<8x256xf32>
    %114 = arith.addf %109, %113 : vector<8x256xf32>
    %c14_i32 = arith.constant 14 : i32
    %115 = tpu.dynamic_rotate %4 by %c14_i32 dim 1 : vector<8x256xf32>, i32 -> vector<8x256xf32>
    %c19 = arith.constant 19 : index
    %c0_63 = arith.constant 0 : index
    %c0_64 = arith.constant 0 : index
    %116 = vector.load %arg2[%c19, %c0_63, %c0_64] : memref<49x8x256xf32, #tpu.memory_space<vmem>>, vector<1x8x256xf32>
    %117 = vector.shape_cast %116 : vector<1x8x256xf32> to vector<8x256xf32>
    %118 = arith.mulf %115, %117 : vector<8x256xf32>
    %119 = arith.addf %114, %118 : vector<8x256xf32>
    %c13_i32 = arith.constant 13 : i32
    %120 = tpu.dynamic_rotate %4 by %c13_i32 dim 1 : vector<8x256xf32>, i32 -> vector<8x256xf32>
    %c20 = arith.constant 20 : index
    %c0_65 = arith.constant 0 : index
    %c0_66 = arith.constant 0 : index
    %121 = vector.load %arg2[%c20, %c0_65, %c0_66] : memref<49x8x256xf32, #tpu.memory_space<vmem>>, vector<1x8x256xf32>
    %122 = vector.shape_cast %121 : vector<1x8x256xf32> to vector<8x256xf32>
    %123 = arith.mulf %120, %122 : vector<8x256xf32>
    %124 = arith.addf %119, %123 : vector<8x256xf32>
    %c3_i32 = arith.constant 3 : i32
    %125 = tpu.dynamic_rotate %4 by %c3_i32 dim 1 : vector<8x256xf32>, i32 -> vector<8x256xf32>
    %c21 = arith.constant 21 : index
    %c0_67 = arith.constant 0 : index
    %c0_68 = arith.constant 0 : index
    %126 = vector.load %arg2[%c21, %c0_67, %c0_68] : memref<49x8x256xf32, #tpu.memory_space<vmem>>, vector<1x8x256xf32>
    %127 = vector.shape_cast %126 : vector<1x8x256xf32> to vector<8x256xf32>
    %128 = arith.mulf %125, %127 : vector<8x256xf32>
    %129 = arith.addf %124, %128 : vector<8x256xf32>
    %c2_i32 = arith.constant 2 : i32
    %130 = tpu.dynamic_rotate %4 by %c2_i32 dim 1 : vector<8x256xf32>, i32 -> vector<8x256xf32>
    %c22 = arith.constant 22 : index
    %c0_69 = arith.constant 0 : index
    %c0_70 = arith.constant 0 : index
    %131 = vector.load %arg2[%c22, %c0_69, %c0_70] : memref<49x8x256xf32, #tpu.memory_space<vmem>>, vector<1x8x256xf32>
    %132 = vector.shape_cast %131 : vector<1x8x256xf32> to vector<8x256xf32>
    %133 = arith.mulf %130, %132 : vector<8x256xf32>
    %134 = arith.addf %129, %133 : vector<8x256xf32>
    %c1_i32 = arith.constant 1 : i32
    %135 = tpu.dynamic_rotate %4 by %c1_i32 dim 1 : vector<8x256xf32>, i32 -> vector<8x256xf32>
    %c23 = arith.constant 23 : index
    %c0_71 = arith.constant 0 : index
    %c0_72 = arith.constant 0 : index
    %136 = vector.load %arg2[%c23, %c0_71, %c0_72] : memref<49x8x256xf32, #tpu.memory_space<vmem>>, vector<1x8x256xf32>
    %137 = vector.shape_cast %136 : vector<1x8x256xf32> to vector<8x256xf32>
    %138 = arith.mulf %135, %137 : vector<8x256xf32>
    %139 = arith.addf %134, %138 : vector<8x256xf32>
    %c255_i32 = arith.constant 255 : i32
    %140 = tpu.dynamic_rotate %4 by %c255_i32 dim 1 : vector<8x256xf32>, i32 -> vector<8x256xf32>
    %c25 = arith.constant 25 : index
    %c0_73 = arith.constant 0 : index
    %c0_74 = arith.constant 0 : index
    %141 = vector.load %arg2[%c25, %c0_73, %c0_74] : memref<49x8x256xf32, #tpu.memory_space<vmem>>, vector<1x8x256xf32>
    %142 = vector.shape_cast %141 : vector<1x8x256xf32> to vector<8x256xf32>
    %143 = arith.mulf %140, %142 : vector<8x256xf32>
    %144 = arith.addf %139, %143 : vector<8x256xf32>
    %c254_i32 = arith.constant 254 : i32
    %145 = tpu.dynamic_rotate %4 by %c254_i32 dim 1 : vector<8x256xf32>, i32 -> vector<8x256xf32>
    %c26 = arith.constant 26 : index
    %c0_75 = arith.constant 0 : index
    %c0_76 = arith.constant 0 : index
    %146 = vector.load %arg2[%c26, %c0_75, %c0_76] : memref<49x8x256xf32, #tpu.memory_space<vmem>>, vector<1x8x256xf32>
    %147 = vector.shape_cast %146 : vector<1x8x256xf32> to vector<8x256xf32>
    %148 = arith.mulf %145, %147 : vector<8x256xf32>
    %149 = arith.addf %144, %148 : vector<8x256xf32>
    %c253_i32 = arith.constant 253 : i32
    %150 = tpu.dynamic_rotate %4 by %c253_i32 dim 1 : vector<8x256xf32>, i32 -> vector<8x256xf32>
    %c27 = arith.constant 27 : index
    %c0_77 = arith.constant 0 : index
    %c0_78 = arith.constant 0 : index
    %151 = vector.load %arg2[%c27, %c0_77, %c0_78] : memref<49x8x256xf32, #tpu.memory_space<vmem>>, vector<1x8x256xf32>
    %152 = vector.shape_cast %151 : vector<1x8x256xf32> to vector<8x256xf32>
    %153 = arith.mulf %150, %152 : vector<8x256xf32>
    %154 = arith.addf %149, %153 : vector<8x256xf32>
    %c243_i32 = arith.constant 243 : i32
    %155 = tpu.dynamic_rotate %4 by %c243_i32 dim 1 : vector<8x256xf32>, i32 -> vector<8x256xf32>
    %c28 = arith.constant 28 : index
    %c0_79 = arith.constant 0 : index
    %c0_80 = arith.constant 0 : index
    %156 = vector.load %arg2[%c28, %c0_79, %c0_80] : memref<49x8x256xf32, #tpu.memory_space<vmem>>, vector<1x8x256xf32>
    %157 = vector.shape_cast %156 : vector<1x8x256xf32> to vector<8x256xf32>
    %158 = arith.mulf %155, %157 : vector<8x256xf32>
    %159 = arith.addf %154, %158 : vector<8x256xf32>
    %c242_i32 = arith.constant 242 : i32
    %160 = tpu.dynamic_rotate %4 by %c242_i32 dim 1 : vector<8x256xf32>, i32 -> vector<8x256xf32>
    %c29 = arith.constant 29 : index
    %c0_81 = arith.constant 0 : index
    %c0_82 = arith.constant 0 : index
    %161 = vector.load %arg2[%c29, %c0_81, %c0_82] : memref<49x8x256xf32, #tpu.memory_space<vmem>>, vector<1x8x256xf32>
    %162 = vector.shape_cast %161 : vector<1x8x256xf32> to vector<8x256xf32>
    %163 = arith.mulf %160, %162 : vector<8x256xf32>
    %164 = arith.addf %159, %163 : vector<8x256xf32>
    %c241_i32 = arith.constant 241 : i32
    %165 = tpu.dynamic_rotate %4 by %c241_i32 dim 1 : vector<8x256xf32>, i32 -> vector<8x256xf32>
    %c30 = arith.constant 30 : index
    %c0_83 = arith.constant 0 : index
    %c0_84 = arith.constant 0 : index
    %166 = vector.load %arg2[%c30, %c0_83, %c0_84] : memref<49x8x256xf32, #tpu.memory_space<vmem>>, vector<1x8x256xf32>
    %167 = vector.shape_cast %166 : vector<1x8x256xf32> to vector<8x256xf32>
    %168 = arith.mulf %165, %167 : vector<8x256xf32>
    %169 = arith.addf %164, %168 : vector<8x256xf32>
    %c240_i32 = arith.constant 240 : i32
    %170 = tpu.dynamic_rotate %4 by %c240_i32 dim 1 : vector<8x256xf32>, i32 -> vector<8x256xf32>
    %c31 = arith.constant 31 : index
    %c0_85 = arith.constant 0 : index
    %c0_86 = arith.constant 0 : index
    %171 = vector.load %arg2[%c31, %c0_85, %c0_86] : memref<49x8x256xf32, #tpu.memory_space<vmem>>, vector<1x8x256xf32>
    %172 = vector.shape_cast %171 : vector<1x8x256xf32> to vector<8x256xf32>
    %173 = arith.mulf %170, %172 : vector<8x256xf32>
    %174 = arith.addf %169, %173 : vector<8x256xf32>
    %c239_i32 = arith.constant 239 : i32
    %175 = tpu.dynamic_rotate %4 by %c239_i32 dim 1 : vector<8x256xf32>, i32 -> vector<8x256xf32>
    %c32 = arith.constant 32 : index
    %c0_87 = arith.constant 0 : index
    %c0_88 = arith.constant 0 : index
    %176 = vector.load %arg2[%c32, %c0_87, %c0_88] : memref<49x8x256xf32, #tpu.memory_space<vmem>>, vector<1x8x256xf32>
    %177 = vector.shape_cast %176 : vector<1x8x256xf32> to vector<8x256xf32>
    %178 = arith.mulf %175, %177 : vector<8x256xf32>
    %179 = arith.addf %174, %178 : vector<8x256xf32>
    %c238_i32 = arith.constant 238 : i32
    %180 = tpu.dynamic_rotate %4 by %c238_i32 dim 1 : vector<8x256xf32>, i32 -> vector<8x256xf32>
    %c33 = arith.constant 33 : index
    %c0_89 = arith.constant 0 : index
    %c0_90 = arith.constant 0 : index
    %181 = vector.load %arg2[%c33, %c0_89, %c0_90] : memref<49x8x256xf32, #tpu.memory_space<vmem>>, vector<1x8x256xf32>
    %182 = vector.shape_cast %181 : vector<1x8x256xf32> to vector<8x256xf32>
    %183 = arith.mulf %180, %182 : vector<8x256xf32>
    %184 = arith.addf %179, %183 : vector<8x256xf32>
    %c237_i32 = arith.constant 237 : i32
    %185 = tpu.dynamic_rotate %4 by %c237_i32 dim 1 : vector<8x256xf32>, i32 -> vector<8x256xf32>
    %c34 = arith.constant 34 : index
    %c0_91 = arith.constant 0 : index
    %c0_92 = arith.constant 0 : index
    %186 = vector.load %arg2[%c34, %c0_91, %c0_92] : memref<49x8x256xf32, #tpu.memory_space<vmem>>, vector<1x8x256xf32>
    %187 = vector.shape_cast %186 : vector<1x8x256xf32> to vector<8x256xf32>
    %188 = arith.mulf %185, %187 : vector<8x256xf32>
    %189 = arith.addf %184, %188 : vector<8x256xf32>
    %c227_i32 = arith.constant 227 : i32
    %190 = tpu.dynamic_rotate %4 by %c227_i32 dim 1 : vector<8x256xf32>, i32 -> vector<8x256xf32>
    %c35 = arith.constant 35 : index
    %c0_93 = arith.constant 0 : index
    %c0_94 = arith.constant 0 : index
    %191 = vector.load %arg2[%c35, %c0_93, %c0_94] : memref<49x8x256xf32, #tpu.memory_space<vmem>>, vector<1x8x256xf32>
    %192 = vector.shape_cast %191 : vector<1x8x256xf32> to vector<8x256xf32>
    %193 = arith.mulf %190, %192 : vector<8x256xf32>
    %194 = arith.addf %189, %193 : vector<8x256xf32>
    %c226_i32 = arith.constant 226 : i32
    %195 = tpu.dynamic_rotate %4 by %c226_i32 dim 1 : vector<8x256xf32>, i32 -> vector<8x256xf32>
    %c36 = arith.constant 36 : index
    %c0_95 = arith.constant 0 : index
    %c0_96 = arith.constant 0 : index
    %196 = vector.load %arg2[%c36, %c0_95, %c0_96] : memref<49x8x256xf32, #tpu.memory_space<vmem>>, vector<1x8x256xf32>
    %197 = vector.shape_cast %196 : vector<1x8x256xf32> to vector<8x256xf32>
    %198 = arith.mulf %195, %197 : vector<8x256xf32>
    %199 = arith.addf %194, %198 : vector<8x256xf32>
    %c225_i32 = arith.constant 225 : i32
    %200 = tpu.dynamic_rotate %4 by %c225_i32 dim 1 : vector<8x256xf32>, i32 -> vector<8x256xf32>
    %c37 = arith.constant 37 : index
    %c0_97 = arith.constant 0 : index
    %c0_98 = arith.constant 0 : index
    %201 = vector.load %arg2[%c37, %c0_97, %c0_98] : memref<49x8x256xf32, #tpu.memory_space<vmem>>, vector<1x8x256xf32>
    %202 = vector.shape_cast %201 : vector<1x8x256xf32> to vector<8x256xf32>
    %203 = arith.mulf %200, %202 : vector<8x256xf32>
    %204 = arith.addf %199, %203 : vector<8x256xf32>
    %c224_i32 = arith.constant 224 : i32
    %205 = tpu.dynamic_rotate %4 by %c224_i32 dim 1 : vector<8x256xf32>, i32 -> vector<8x256xf32>
    %c38 = arith.constant 38 : index
    %c0_99 = arith.constant 0 : index
    %c0_100 = arith.constant 0 : index
    %206 = vector.load %arg2[%c38, %c0_99, %c0_100] : memref<49x8x256xf32, #tpu.memory_space<vmem>>, vector<1x8x256xf32>
    %207 = vector.shape_cast %206 : vector<1x8x256xf32> to vector<8x256xf32>
    %208 = arith.mulf %205, %207 : vector<8x256xf32>
    %209 = arith.addf %204, %208 : vector<8x256xf32>
    %c223_i32 = arith.constant 223 : i32
    %210 = tpu.dynamic_rotate %4 by %c223_i32 dim 1 : vector<8x256xf32>, i32 -> vector<8x256xf32>
    %c39 = arith.constant 39 : index
    %c0_101 = arith.constant 0 : index
    %c0_102 = arith.constant 0 : index
    %211 = vector.load %arg2[%c39, %c0_101, %c0_102] : memref<49x8x256xf32, #tpu.memory_space<vmem>>, vector<1x8x256xf32>
    %212 = vector.shape_cast %211 : vector<1x8x256xf32> to vector<8x256xf32>
    %213 = arith.mulf %210, %212 : vector<8x256xf32>
    %214 = arith.addf %209, %213 : vector<8x256xf32>
    %c222_i32 = arith.constant 222 : i32
    %215 = tpu.dynamic_rotate %4 by %c222_i32 dim 1 : vector<8x256xf32>, i32 -> vector<8x256xf32>
    %c40 = arith.constant 40 : index
    %c0_103 = arith.constant 0 : index
    %c0_104 = arith.constant 0 : index
    %216 = vector.load %arg2[%c40, %c0_103, %c0_104] : memref<49x8x256xf32, #tpu.memory_space<vmem>>, vector<1x8x256xf32>
    %217 = vector.shape_cast %216 : vector<1x8x256xf32> to vector<8x256xf32>
    %218 = arith.mulf %215, %217 : vector<8x256xf32>
    %219 = arith.addf %214, %218 : vector<8x256xf32>
    %c221_i32 = arith.constant 221 : i32
    %220 = tpu.dynamic_rotate %4 by %c221_i32 dim 1 : vector<8x256xf32>, i32 -> vector<8x256xf32>
    %c41 = arith.constant 41 : index
    %c0_105 = arith.constant 0 : index
    %c0_106 = arith.constant 0 : index
    %221 = vector.load %arg2[%c41, %c0_105, %c0_106] : memref<49x8x256xf32, #tpu.memory_space<vmem>>, vector<1x8x256xf32>
    %222 = vector.shape_cast %221 : vector<1x8x256xf32> to vector<8x256xf32>
    %223 = arith.mulf %220, %222 : vector<8x256xf32>
    %224 = arith.addf %219, %223 : vector<8x256xf32>
    %c211_i32 = arith.constant 211 : i32
    %225 = tpu.dynamic_rotate %4 by %c211_i32 dim 1 : vector<8x256xf32>, i32 -> vector<8x256xf32>
    %c42 = arith.constant 42 : index
    %c0_107 = arith.constant 0 : index
    %c0_108 = arith.constant 0 : index
    %226 = vector.load %arg2[%c42, %c0_107, %c0_108] : memref<49x8x256xf32, #tpu.memory_space<vmem>>, vector<1x8x256xf32>
    %227 = vector.shape_cast %226 : vector<1x8x256xf32> to vector<8x256xf32>
    %228 = arith.mulf %225, %227 : vector<8x256xf32>
    %229 = arith.addf %224, %228 : vector<8x256xf32>
    %c210_i32 = arith.constant 210 : i32
    %230 = tpu.dynamic_rotate %4 by %c210_i32 dim 1 : vector<8x256xf32>, i32 -> vector<8x256xf32>
    %c43 = arith.constant 43 : index
    %c0_109 = arith.constant 0 : index
    %c0_110 = arith.constant 0 : index
    %231 = vector.load %arg2[%c43, %c0_109, %c0_110] : memref<49x8x256xf32, #tpu.memory_space<vmem>>, vector<1x8x256xf32>
    %232 = vector.shape_cast %231 : vector<1x8x256xf32> to vector<8x256xf32>
    %233 = arith.mulf %230, %232 : vector<8x256xf32>
    %234 = arith.addf %229, %233 : vector<8x256xf32>
    %c209_i32 = arith.constant 209 : i32
    %235 = tpu.dynamic_rotate %4 by %c209_i32 dim 1 : vector<8x256xf32>, i32 -> vector<8x256xf32>
    %c44 = arith.constant 44 : index
    %c0_111 = arith.constant 0 : index
    %c0_112 = arith.constant 0 : index
    %236 = vector.load %arg2[%c44, %c0_111, %c0_112] : memref<49x8x256xf32, #tpu.memory_space<vmem>>, vector<1x8x256xf32>
    %237 = vector.shape_cast %236 : vector<1x8x256xf32> to vector<8x256xf32>
    %238 = arith.mulf %235, %237 : vector<8x256xf32>
    %239 = arith.addf %234, %238 : vector<8x256xf32>
    %c208_i32 = arith.constant 208 : i32
    %240 = tpu.dynamic_rotate %4 by %c208_i32 dim 1 : vector<8x256xf32>, i32 -> vector<8x256xf32>
    %c45 = arith.constant 45 : index
    %c0_113 = arith.constant 0 : index
    %c0_114 = arith.constant 0 : index
    %241 = vector.load %arg2[%c45, %c0_113, %c0_114] : memref<49x8x256xf32, #tpu.memory_space<vmem>>, vector<1x8x256xf32>
    %242 = vector.shape_cast %241 : vector<1x8x256xf32> to vector<8x256xf32>
    %243 = arith.mulf %240, %242 : vector<8x256xf32>
    %244 = arith.addf %239, %243 : vector<8x256xf32>
    %c207_i32 = arith.constant 207 : i32
    %245 = tpu.dynamic_rotate %4 by %c207_i32 dim 1 : vector<8x256xf32>, i32 -> vector<8x256xf32>
    %c46 = arith.constant 46 : index
    %c0_115 = arith.constant 0 : index
    %c0_116 = arith.constant 0 : index
    %246 = vector.load %arg2[%c46, %c0_115, %c0_116] : memref<49x8x256xf32, #tpu.memory_space<vmem>>, vector<1x8x256xf32>
    %247 = vector.shape_cast %246 : vector<1x8x256xf32> to vector<8x256xf32>
    %248 = arith.mulf %245, %247 : vector<8x256xf32>
    %249 = arith.addf %244, %248 : vector<8x256xf32>
    %c206_i32 = arith.constant 206 : i32
    %250 = tpu.dynamic_rotate %4 by %c206_i32 dim 1 : vector<8x256xf32>, i32 -> vector<8x256xf32>
    %c47 = arith.constant 47 : index
    %c0_117 = arith.constant 0 : index
    %c0_118 = arith.constant 0 : index
    %251 = vector.load %arg2[%c47, %c0_117, %c0_118] : memref<49x8x256xf32, #tpu.memory_space<vmem>>, vector<1x8x256xf32>
    %252 = vector.shape_cast %251 : vector<1x8x256xf32> to vector<8x256xf32>
    %253 = arith.mulf %250, %252 : vector<8x256xf32>
    %254 = arith.addf %249, %253 : vector<8x256xf32>
    %c205_i32 = arith.constant 205 : i32
    %255 = tpu.dynamic_rotate %4 by %c205_i32 dim 1 : vector<8x256xf32>, i32 -> vector<8x256xf32>
    %c48 = arith.constant 48 : index
    %c0_119 = arith.constant 0 : index
    %c0_120 = arith.constant 0 : index
    %256 = vector.load %arg2[%c48, %c0_119, %c0_120] : memref<49x8x256xf32, #tpu.memory_space<vmem>>, vector<1x8x256xf32>
    %257 = vector.shape_cast %256 : vector<1x8x256xf32> to vector<8x256xf32>
    %258 = arith.mulf %255, %257 : vector<8x256xf32>
    %259 = arith.addf %254, %258 : vector<8x256xf32>
    %cst = arith.constant dense<0.000000e+00> : vector<8x256xf32>
    %260 = tpu.matmul %14, %259, %cst {dimension_numbers = #tpu.dot_dimension_numbers<[1], [0], [0], [1], [0, 0, 1, 1], [], []>} : vector<8x8xf32>, vector<8x256xf32>, vector<8x256xf32> -> vector<8x256xf32>
    %261 = arith.subf %259, %260 : vector<8x256xf32>
    %262 = arith.mulf %261, %261 : vector<8x256xf32>
    %cst_121 = arith.constant dense<0.000000e+00> : vector<8x256xf32>
    %263 = tpu.matmul %14, %262, %cst_121 {dimension_numbers = #tpu.dot_dimension_numbers<[1], [0], [0], [1], [0, 0, 1, 1], [], []>} : vector<8x8xf32>, vector<8x256xf32>, vector<8x256xf32> -> vector<8x256xf32>
    %cst_122 = arith.constant 9.99999997E-7 : f32
    %264 = vector.broadcast %cst_122 : f32 to vector<8x256xf32>
    %265 = arith.addf %263, %264 : vector<8x256xf32>
    %266 = math.rsqrt %265 : vector<8x256xf32>
    %267 = arith.mulf %261, %266 : vector<8x256xf32>
    %268 = vector.broadcast %6 : vector<8x1xf32> to vector<8x256xf32>
    %269 = arith.mulf %267, %268 : vector<8x256xf32>
    %270 = vector.broadcast %7 : vector<8x1xf32> to vector<8x256xf32>
    %271 = arith.addf %269, %270 : vector<8x256xf32>
    %c0_123 = arith.constant 0 : index
    %c0_124 = arith.constant 0 : index
    %272 = vector.load %arg4[%c0_123, %c0_124] : memref<8x256xf32, #tpu.memory_space<vmem>>, vector<8x256xf32>
    %273 = arith.addf %2, %272 : vector<8x256xf32>
    %c0_125 = arith.constant 0 : index
    %c0_126 = arith.constant 0 : index
    %274 = vector.load %arg6[%c0_125, %c0_126] : memref<8x16xf32, #tpu.memory_space<vmem>>, vector<8x1xf32>
    %275 = vector.broadcast %274 : vector<8x1xf32> to vector<8x256xf32>
    %276 = arith.mulf %273, %275 : vector<8x256xf32>
    %277 = vector.broadcast %8 : vector<8x1xf32> to vector<8x256xf32>
    %278 = arith.addf %277, %276 : vector<8x256xf32>
    %c240_i32_127 = arith.constant 240 : i32
    %279 = tpu.dynamic_rotate %273 by %c240_i32_127 dim 1 : vector<8x256xf32>, i32 -> vector<8x256xf32>
    %c0_128 = arith.constant 0 : index
    %c1_129 = arith.constant 1 : index
    %280 = vector.load %arg6[%c0_128, %c1_129] : memref<8x16xf32, #tpu.memory_space<vmem>>, vector<8x1xf32>
    %281 = vector.broadcast %280 : vector<8x1xf32> to vector<8x256xf32>
    %282 = arith.mulf %279, %281 : vector<8x256xf32>
    %283 = arith.addf %278, %282 : vector<8x256xf32>
    %c224_i32_130 = arith.constant 224 : i32
    %284 = tpu.dynamic_rotate %273 by %c224_i32_130 dim 1 : vector<8x256xf32>, i32 -> vector<8x256xf32>
    %c0_131 = arith.constant 0 : index
    %c2_132 = arith.constant 2 : index
    %285 = vector.load %arg6[%c0_131, %c2_132] : memref<8x16xf32, #tpu.memory_space<vmem>>, vector<8x1xf32>
    %286 = vector.broadcast %285 : vector<8x1xf32> to vector<8x256xf32>
    %287 = arith.mulf %284, %286 : vector<8x256xf32>
    %288 = arith.addf %283, %287 : vector<8x256xf32>
    %c208_i32_133 = arith.constant 208 : i32
    %289 = tpu.dynamic_rotate %273 by %c208_i32_133 dim 1 : vector<8x256xf32>, i32 -> vector<8x256xf32>
    %c0_134 = arith.constant 0 : index
    %c3_135 = arith.constant 3 : index
    %290 = vector.load %arg6[%c0_134, %c3_135] : memref<8x16xf32, #tpu.memory_space<vmem>>, vector<8x1xf32>
    %291 = vector.broadcast %290 : vector<8x1xf32> to vector<8x256xf32>
    %292 = arith.mulf %289, %291 : vector<8x256xf32>
    %293 = arith.addf %288, %292 : vector<8x256xf32>
    %c192_i32 = arith.constant 192 : i32
    %294 = tpu.dynamic_rotate %273 by %c192_i32 dim 1 : vector<8x256xf32>, i32 -> vector<8x256xf32>
    %c0_136 = arith.constant 0 : index
    %c4_137 = arith.constant 4 : index
    %295 = vector.load %arg6[%c0_136, %c4_137] : memref<8x16xf32, #tpu.memory_space<vmem>>, vector<8x1xf32>
    %296 = vector.broadcast %295 : vector<8x1xf32> to vector<8x256xf32>
    %297 = arith.mulf %294, %296 : vector<8x256xf32>
    %298 = arith.addf %293, %297 : vector<8x256xf32>
    %c176_i32 = arith.constant 176 : i32
    %299 = tpu.dynamic_rotate %273 by %c176_i32 dim 1 : vector<8x256xf32>, i32 -> vector<8x256xf32>
    %c0_138 = arith.constant 0 : index
    %c5_139 = arith.constant 5 : index
    %300 = vector.load %arg6[%c0_138, %c5_139] : memref<8x16xf32, #tpu.memory_space<vmem>>, vector<8x1xf32>
    %301 = vector.broadcast %300 : vector<8x1xf32> to vector<8x256xf32>
    %302 = arith.mulf %299, %301 : vector<8x256xf32>
    %303 = arith.addf %298, %302 : vector<8x256xf32>
    %c160_i32 = arith.constant 160 : i32
    %304 = tpu.dynamic_rotate %273 by %c160_i32 dim 1 : vector<8x256xf32>, i32 -> vector<8x256xf32>
    %c0_140 = arith.constant 0 : index
    %c6_141 = arith.constant 6 : index
    %305 = vector.load %arg6[%c0_140, %c6_141] : memref<8x16xf32, #tpu.memory_space<vmem>>, vector<8x1xf32>
    %306 = vector.broadcast %305 : vector<8x1xf32> to vector<8x256xf32>
    %307 = arith.mulf %304, %306 : vector<8x256xf32>
    %308 = arith.addf %303, %307 : vector<8x256xf32>
    %c144_i32 = arith.constant 144 : i32
    %309 = tpu.dynamic_rotate %273 by %c144_i32 dim 1 : vector<8x256xf32>, i32 -> vector<8x256xf32>
    %c0_142 = arith.constant 0 : index
    %c7_143 = arith.constant 7 : index
    %310 = vector.load %arg6[%c0_142, %c7_143] : memref<8x16xf32, #tpu.memory_space<vmem>>, vector<8x1xf32>
    %311 = vector.broadcast %310 : vector<8x1xf32> to vector<8x256xf32>
    %312 = arith.mulf %309, %311 : vector<8x256xf32>
    %313 = arith.addf %308, %312 : vector<8x256xf32>
    %c128_i32 = arith.constant 128 : i32
    %314 = tpu.dynamic_rotate %273 by %c128_i32 dim 1 : vector<8x256xf32>, i32 -> vector<8x256xf32>
    %c0_144 = arith.constant 0 : index
    %c8_145 = arith.constant 8 : index
    %315 = vector.load %arg6[%c0_144, %c8_145] : memref<8x16xf32, #tpu.memory_space<vmem>>, vector<8x1xf32>
    %316 = vector.broadcast %315 : vector<8x1xf32> to vector<8x256xf32>
    %317 = arith.mulf %314, %316 : vector<8x256xf32>
    %318 = arith.addf %313, %317 : vector<8x256xf32>
    %c112_i32 = arith.constant 112 : i32
    %319 = tpu.dynamic_rotate %273 by %c112_i32 dim 1 : vector<8x256xf32>, i32 -> vector<8x256xf32>
    %c0_146 = arith.constant 0 : index
    %c9_147 = arith.constant 9 : index
    %320 = vector.load %arg6[%c0_146, %c9_147] : memref<8x16xf32, #tpu.memory_space<vmem>>, vector<8x1xf32>
    %321 = vector.broadcast %320 : vector<8x1xf32> to vector<8x256xf32>
    %322 = arith.mulf %319, %321 : vector<8x256xf32>
    %323 = arith.addf %318, %322 : vector<8x256xf32>
    %c96_i32 = arith.constant 96 : i32
    %324 = tpu.dynamic_rotate %273 by %c96_i32 dim 1 : vector<8x256xf32>, i32 -> vector<8x256xf32>
    %c0_148 = arith.constant 0 : index
    %c10_149 = arith.constant 10 : index
    %325 = vector.load %arg6[%c0_148, %c10_149] : memref<8x16xf32, #tpu.memory_space<vmem>>, vector<8x1xf32>
    %326 = vector.broadcast %325 : vector<8x1xf32> to vector<8x256xf32>
    %327 = arith.mulf %324, %326 : vector<8x256xf32>
    %328 = arith.addf %323, %327 : vector<8x256xf32>
    %c80_i32 = arith.constant 80 : i32
    %329 = tpu.dynamic_rotate %273 by %c80_i32 dim 1 : vector<8x256xf32>, i32 -> vector<8x256xf32>
    %c0_150 = arith.constant 0 : index
    %c11_151 = arith.constant 11 : index
    %330 = vector.load %arg6[%c0_150, %c11_151] : memref<8x16xf32, #tpu.memory_space<vmem>>, vector<8x1xf32>
    %331 = vector.broadcast %330 : vector<8x1xf32> to vector<8x256xf32>
    %332 = arith.mulf %329, %331 : vector<8x256xf32>
    %333 = arith.addf %328, %332 : vector<8x256xf32>
    %c64_i32 = arith.constant 64 : i32
    %334 = tpu.dynamic_rotate %273 by %c64_i32 dim 1 : vector<8x256xf32>, i32 -> vector<8x256xf32>
    %c0_152 = arith.constant 0 : index
    %c12_153 = arith.constant 12 : index
    %335 = vector.load %arg6[%c0_152, %c12_153] : memref<8x16xf32, #tpu.memory_space<vmem>>, vector<8x1xf32>
    %336 = vector.broadcast %335 : vector<8x1xf32> to vector<8x256xf32>
    %337 = arith.mulf %334, %336 : vector<8x256xf32>
    %338 = arith.addf %333, %337 : vector<8x256xf32>
    %c48_i32_154 = arith.constant 48 : i32
    %339 = tpu.dynamic_rotate %273 by %c48_i32_154 dim 1 : vector<8x256xf32>, i32 -> vector<8x256xf32>
    %c0_155 = arith.constant 0 : index
    %c13_156 = arith.constant 13 : index
    %340 = vector.load %arg6[%c0_155, %c13_156] : memref<8x16xf32, #tpu.memory_space<vmem>>, vector<8x1xf32>
    %341 = vector.broadcast %340 : vector<8x1xf32> to vector<8x256xf32>
    %342 = arith.mulf %339, %341 : vector<8x256xf32>
    %343 = arith.addf %338, %342 : vector<8x256xf32>
    %c32_i32_157 = arith.constant 32 : i32
    %344 = tpu.dynamic_rotate %273 by %c32_i32_157 dim 1 : vector<8x256xf32>, i32 -> vector<8x256xf32>
    %c0_158 = arith.constant 0 : index
    %c14_159 = arith.constant 14 : index
    %345 = vector.load %arg6[%c0_158, %c14_159] : memref<8x16xf32, #tpu.memory_space<vmem>>, vector<8x1xf32>
    %346 = vector.broadcast %345 : vector<8x1xf32> to vector<8x256xf32>
    %347 = arith.mulf %344, %346 : vector<8x256xf32>
    %348 = arith.addf %343, %347 : vector<8x256xf32>
    %c16_i32_160 = arith.constant 16 : i32
    %349 = tpu.dynamic_rotate %273 by %c16_i32_160 dim 1 : vector<8x256xf32>, i32 -> vector<8x256xf32>
    %c0_161 = arith.constant 0 : index
    %c15_162 = arith.constant 15 : index
    %350 = vector.load %arg6[%c0_161, %c15_162] : memref<8x16xf32, #tpu.memory_space<vmem>>, vector<8x1xf32>
    %351 = vector.broadcast %350 : vector<8x1xf32> to vector<8x256xf32>
    %352 = arith.mulf %349, %351 : vector<8x256xf32>
    %353 = arith.addf %348, %352 : vector<8x256xf32>
    %c0_163 = arith.constant 0 : index
    %c0_164 = arith.constant 0 : index
    %354 = vector.load %arg5[%c0_163, %c0_164] : memref<8x256xf32, #tpu.memory_space<vmem>>, vector<8x256xf32>
    %355 = arith.addf %3, %354 : vector<8x256xf32>
    %c15_165 = arith.constant 15 : index
    %c0_166 = arith.constant 0 : index
    %c0_167 = arith.constant 0 : index
    %356 = vector.load %arg3[%c15_165, %c0_166, %c0_167] : memref<31x8x256xf32, #tpu.memory_space<vmem>>, vector<1x8x256xf32>
    %357 = vector.shape_cast %356 : vector<1x8x256xf32> to vector<8x256xf32>
    %358 = arith.mulf %355, %357 : vector<8x256xf32>
    %359 = vector.broadcast %9 : vector<8x1xf32> to vector<8x256xf32>
    %360 = arith.addf %359, %358 : vector<8x256xf32>
    %c15_i32_168 = arith.constant 15 : i32
    %361 = tpu.dynamic_rotate %355 by %c15_i32_168 dim 1 : vector<8x256xf32>, i32 -> vector<8x256xf32>
    %c0_169 = arith.constant 0 : index
    %c0_170 = arith.constant 0 : index
    %c0_171 = arith.constant 0 : index
    %362 = vector.load %arg3[%c0_169, %c0_170, %c0_171] : memref<31x8x256xf32, #tpu.memory_space<vmem>>, vector<1x8x256xf32>
    %363 = vector.shape_cast %362 : vector<1x8x256xf32> to vector<8x256xf32>
    %364 = arith.mulf %361, %363 : vector<8x256xf32>
    %365 = arith.addf %360, %364 : vector<8x256xf32>
    %c14_i32_172 = arith.constant 14 : i32
    %366 = tpu.dynamic_rotate %355 by %c14_i32_172 dim 1 : vector<8x256xf32>, i32 -> vector<8x256xf32>
    %c1_173 = arith.constant 1 : index
    %c0_174 = arith.constant 0 : index
    %c0_175 = arith.constant 0 : index
    %367 = vector.load %arg3[%c1_173, %c0_174, %c0_175] : memref<31x8x256xf32, #tpu.memory_space<vmem>>, vector<1x8x256xf32>
    %368 = vector.shape_cast %367 : vector<1x8x256xf32> to vector<8x256xf32>
    %369 = arith.mulf %366, %368 : vector<8x256xf32>
    %370 = arith.addf %365, %369 : vector<8x256xf32>
    %c13_i32_176 = arith.constant 13 : i32
    %371 = tpu.dynamic_rotate %355 by %c13_i32_176 dim 1 : vector<8x256xf32>, i32 -> vector<8x256xf32>
    %c2_177 = arith.constant 2 : index
    %c0_178 = arith.constant 0 : index
    %c0_179 = arith.constant 0 : index
    %372 = vector.load %arg3[%c2_177, %c0_178, %c0_179] : memref<31x8x256xf32, #tpu.memory_space<vmem>>, vector<1x8x256xf32>
    %373 = vector.shape_cast %372 : vector<1x8x256xf32> to vector<8x256xf32>
    %374 = arith.mulf %371, %373 : vector<8x256xf32>
    %375 = arith.addf %370, %374 : vector<8x256xf32>
    %c12_i32 = arith.constant 12 : i32
    %376 = tpu.dynamic_rotate %355 by %c12_i32 dim 1 : vector<8x256xf32>, i32 -> vector<8x256xf32>
    %c3_180 = arith.constant 3 : index
    %c0_181 = arith.constant 0 : index
    %c0_182 = arith.constant 0 : index
    %377 = vector.load %arg3[%c3_180, %c0_181, %c0_182] : memref<31x8x256xf32, #tpu.memory_space<vmem>>, vector<1x8x256xf32>
    %378 = vector.shape_cast %377 : vector<1x8x256xf32> to vector<8x256xf32>
    %379 = arith.mulf %376, %378 : vector<8x256xf32>
    %380 = arith.addf %375, %379 : vector<8x256xf32>
    %c11_i32 = arith.constant 11 : i32
    %381 = tpu.dynamic_rotate %355 by %c11_i32 dim 1 : vector<8x256xf32>, i32 -> vector<8x256xf32>
    %c4_183 = arith.constant 4 : index
    %c0_184 = arith.constant 0 : index
    %c0_185 = arith.constant 0 : index
    %382 = vector.load %arg3[%c4_183, %c0_184, %c0_185] : memref<31x8x256xf32, #tpu.memory_space<vmem>>, vector<1x8x256xf32>
    %383 = vector.shape_cast %382 : vector<1x8x256xf32> to vector<8x256xf32>
    %384 = arith.mulf %381, %383 : vector<8x256xf32>
    %385 = arith.addf %380, %384 : vector<8x256xf32>
    %c10_i32 = arith.constant 10 : i32
    %386 = tpu.dynamic_rotate %355 by %c10_i32 dim 1 : vector<8x256xf32>, i32 -> vector<8x256xf32>
    %c5_186 = arith.constant 5 : index
    %c0_187 = arith.constant 0 : index
    %c0_188 = arith.constant 0 : index
    %387 = vector.load %arg3[%c5_186, %c0_187, %c0_188] : memref<31x8x256xf32, #tpu.memory_space<vmem>>, vector<1x8x256xf32>
    %388 = vector.shape_cast %387 : vector<1x8x256xf32> to vector<8x256xf32>
    %389 = arith.mulf %386, %388 : vector<8x256xf32>
    %390 = arith.addf %385, %389 : vector<8x256xf32>
    %c9_i32 = arith.constant 9 : i32
    %391 = tpu.dynamic_rotate %355 by %c9_i32 dim 1 : vector<8x256xf32>, i32 -> vector<8x256xf32>
    %c6_189 = arith.constant 6 : index
    %c0_190 = arith.constant 0 : index
    %c0_191 = arith.constant 0 : index
    %392 = vector.load %arg3[%c6_189, %c0_190, %c0_191] : memref<31x8x256xf32, #tpu.memory_space<vmem>>, vector<1x8x256xf32>
    %393 = vector.shape_cast %392 : vector<1x8x256xf32> to vector<8x256xf32>
    %394 = arith.mulf %391, %393 : vector<8x256xf32>
    %395 = arith.addf %390, %394 : vector<8x256xf32>
    %c8_i32 = arith.constant 8 : i32
    %396 = tpu.dynamic_rotate %355 by %c8_i32 dim 1 : vector<8x256xf32>, i32 -> vector<8x256xf32>
    %c7_192 = arith.constant 7 : index
    %c0_193 = arith.constant 0 : index
    %c0_194 = arith.constant 0 : index
    %397 = vector.load %arg3[%c7_192, %c0_193, %c0_194] : memref<31x8x256xf32, #tpu.memory_space<vmem>>, vector<1x8x256xf32>
    %398 = vector.shape_cast %397 : vector<1x8x256xf32> to vector<8x256xf32>
    %399 = arith.mulf %396, %398 : vector<8x256xf32>
    %400 = arith.addf %395, %399 : vector<8x256xf32>
    %c7_i32 = arith.constant 7 : i32
    %401 = tpu.dynamic_rotate %355 by %c7_i32 dim 1 : vector<8x256xf32>, i32 -> vector<8x256xf32>
    %c8_195 = arith.constant 8 : index
    %c0_196 = arith.constant 0 : index
    %c0_197 = arith.constant 0 : index
    %402 = vector.load %arg3[%c8_195, %c0_196, %c0_197] : memref<31x8x256xf32, #tpu.memory_space<vmem>>, vector<1x8x256xf32>
    %403 = vector.shape_cast %402 : vector<1x8x256xf32> to vector<8x256xf32>
    %404 = arith.mulf %401, %403 : vector<8x256xf32>
    %405 = arith.addf %400, %404 : vector<8x256xf32>
    %c6_i32 = arith.constant 6 : i32
    %406 = tpu.dynamic_rotate %355 by %c6_i32 dim 1 : vector<8x256xf32>, i32 -> vector<8x256xf32>
    %c9_198 = arith.constant 9 : index
    %c0_199 = arith.constant 0 : index
    %c0_200 = arith.constant 0 : index
    %407 = vector.load %arg3[%c9_198, %c0_199, %c0_200] : memref<31x8x256xf32, #tpu.memory_space<vmem>>, vector<1x8x256xf32>
    %408 = vector.shape_cast %407 : vector<1x8x256xf32> to vector<8x256xf32>
    %409 = arith.mulf %406, %408 : vector<8x256xf32>
    %410 = arith.addf %405, %409 : vector<8x256xf32>
    %c5_i32 = arith.constant 5 : i32
    %411 = tpu.dynamic_rotate %355 by %c5_i32 dim 1 : vector<8x256xf32>, i32 -> vector<8x256xf32>
    %c10_201 = arith.constant 10 : index
    %c0_202 = arith.constant 0 : index
    %c0_203 = arith.constant 0 : index
    %412 = vector.load %arg3[%c10_201, %c0_202, %c0_203] : memref<31x8x256xf32, #tpu.memory_space<vmem>>, vector<1x8x256xf32>
    %413 = vector.shape_cast %412 : vector<1x8x256xf32> to vector<8x256xf32>
    %414 = arith.mulf %411, %413 : vector<8x256xf32>
    %415 = arith.addf %410, %414 : vector<8x256xf32>
    %c4_i32 = arith.constant 4 : i32
    %416 = tpu.dynamic_rotate %355 by %c4_i32 dim 1 : vector<8x256xf32>, i32 -> vector<8x256xf32>
    %c11_204 = arith.constant 11 : index
    %c0_205 = arith.constant 0 : index
    %c0_206 = arith.constant 0 : index
    %417 = vector.load %arg3[%c11_204, %c0_205, %c0_206] : memref<31x8x256xf32, #tpu.memory_space<vmem>>, vector<1x8x256xf32>
    %418 = vector.shape_cast %417 : vector<1x8x256xf32> to vector<8x256xf32>
    %419 = arith.mulf %416, %418 : vector<8x256xf32>
    %420 = arith.addf %415, %419 : vector<8x256xf32>
    %c3_i32_207 = arith.constant 3 : i32
    %421 = tpu.dynamic_rotate %355 by %c3_i32_207 dim 1 : vector<8x256xf32>, i32 -> vector<8x256xf32>
    %c12_208 = arith.constant 12 : index
    %c0_209 = arith.constant 0 : index
    %c0_210 = arith.constant 0 : index
    %422 = vector.load %arg3[%c12_208, %c0_209, %c0_210] : memref<31x8x256xf32, #tpu.memory_space<vmem>>, vector<1x8x256xf32>
    %423 = vector.shape_cast %422 : vector<1x8x256xf32> to vector<8x256xf32>
    %424 = arith.mulf %421, %423 : vector<8x256xf32>
    %425 = arith.addf %420, %424 : vector<8x256xf32>
    %c2_i32_211 = arith.constant 2 : i32
    %426 = tpu.dynamic_rotate %355 by %c2_i32_211 dim 1 : vector<8x256xf32>, i32 -> vector<8x256xf32>
    %c13_212 = arith.constant 13 : index
    %c0_213 = arith.constant 0 : index
    %c0_214 = arith.constant 0 : index
    %427 = vector.load %arg3[%c13_212, %c0_213, %c0_214] : memref<31x8x256xf32, #tpu.memory_space<vmem>>, vector<1x8x256xf32>
    %428 = vector.shape_cast %427 : vector<1x8x256xf32> to vector<8x256xf32>
    %429 = arith.mulf %426, %428 : vector<8x256xf32>
    %430 = arith.addf %425, %429 : vector<8x256xf32>
    %c1_i32_215 = arith.constant 1 : i32
    %431 = tpu.dynamic_rotate %355 by %c1_i32_215 dim 1 : vector<8x256xf32>, i32 -> vector<8x256xf32>
    %c14_216 = arith.constant 14 : index
    %c0_217 = arith.constant 0 : index
    %c0_218 = arith.constant 0 : index
    %432 = vector.load %arg3[%c14_216, %c0_217, %c0_218] : memref<31x8x256xf32, #tpu.memory_space<vmem>>, vector<1x8x256xf32>
    %433 = vector.shape_cast %432 : vector<1x8x256xf32> to vector<8x256xf32>
    %434 = arith.mulf %431, %433 : vector<8x256xf32>
    %435 = arith.addf %430, %434 : vector<8x256xf32>
    %c255_i32_219 = arith.constant 255 : i32
    %436 = tpu.dynamic_rotate %355 by %c255_i32_219 dim 1 : vector<8x256xf32>, i32 -> vector<8x256xf32>
    %c16_220 = arith.constant 16 : index
    %c0_221 = arith.constant 0 : index
    %c0_222 = arith.constant 0 : index
    %437 = vector.load %arg3[%c16_220, %c0_221, %c0_222] : memref<31x8x256xf32, #tpu.memory_space<vmem>>, vector<1x8x256xf32>
    %438 = vector.shape_cast %437 : vector<1x8x256xf32> to vector<8x256xf32>
    %439 = arith.mulf %436, %438 : vector<8x256xf32>
    %440 = arith.addf %435, %439 : vector<8x256xf32>
    %c254_i32_223 = arith.constant 254 : i32
    %441 = tpu.dynamic_rotate %355 by %c254_i32_223 dim 1 : vector<8x256xf32>, i32 -> vector<8x256xf32>
    %c17_224 = arith.constant 17 : index
    %c0_225 = arith.constant 0 : index
    %c0_226 = arith.constant 0 : index
    %442 = vector.load %arg3[%c17_224, %c0_225, %c0_226] : memref<31x8x256xf32, #tpu.memory_space<vmem>>, vector<1x8x256xf32>
    %443 = vector.shape_cast %442 : vector<1x8x256xf32> to vector<8x256xf32>
    %444 = arith.mulf %441, %443 : vector<8x256xf32>
    %445 = arith.addf %440, %444 : vector<8x256xf32>
    %c253_i32_227 = arith.constant 253 : i32
    %446 = tpu.dynamic_rotate %355 by %c253_i32_227 dim 1 : vector<8x256xf32>, i32 -> vector<8x256xf32>
    %c18_228 = arith.constant 18 : index
    %c0_229 = arith.constant 0 : index
    %c0_230 = arith.constant 0 : index
    %447 = vector.load %arg3[%c18_228, %c0_229, %c0_230] : memref<31x8x256xf32, #tpu.memory_space<vmem>>, vector<1x8x256xf32>
    %448 = vector.shape_cast %447 : vector<1x8x256xf32> to vector<8x256xf32>
    %449 = arith.mulf %446, %448 : vector<8x256xf32>
    %450 = arith.addf %445, %449 : vector<8x256xf32>
    %c252_i32 = arith.constant 252 : i32
    %451 = tpu.dynamic_rotate %355 by %c252_i32 dim 1 : vector<8x256xf32>, i32 -> vector<8x256xf32>
    %c19_231 = arith.constant 19 : index
    %c0_232 = arith.constant 0 : index
    %c0_233 = arith.constant 0 : index
    %452 = vector.load %arg3[%c19_231, %c0_232, %c0_233] : memref<31x8x256xf32, #tpu.memory_space<vmem>>, vector<1x8x256xf32>
    %453 = vector.shape_cast %452 : vector<1x8x256xf32> to vector<8x256xf32>
    %454 = arith.mulf %451, %453 : vector<8x256xf32>
    %455 = arith.addf %450, %454 : vector<8x256xf32>
    %c251_i32 = arith.constant 251 : i32
    %456 = tpu.dynamic_rotate %355 by %c251_i32 dim 1 : vector<8x256xf32>, i32 -> vector<8x256xf32>
    %c20_234 = arith.constant 20 : index
    %c0_235 = arith.constant 0 : index
    %c0_236 = arith.constant 0 : index
    %457 = vector.load %arg3[%c20_234, %c0_235, %c0_236] : memref<31x8x256xf32, #tpu.memory_space<vmem>>, vector<1x8x256xf32>
    %458 = vector.shape_cast %457 : vector<1x8x256xf32> to vector<8x256xf32>
    %459 = arith.mulf %456, %458 : vector<8x256xf32>
    %460 = arith.addf %455, %459 : vector<8x256xf32>
    %c250_i32 = arith.constant 250 : i32
    %461 = tpu.dynamic_rotate %355 by %c250_i32 dim 1 : vector<8x256xf32>, i32 -> vector<8x256xf32>
    %c21_237 = arith.constant 21 : index
    %c0_238 = arith.constant 0 : index
    %c0_239 = arith.constant 0 : index
    %462 = vector.load %arg3[%c21_237, %c0_238, %c0_239] : memref<31x8x256xf32, #tpu.memory_space<vmem>>, vector<1x8x256xf32>
    %463 = vector.shape_cast %462 : vector<1x8x256xf32> to vector<8x256xf32>
    %464 = arith.mulf %461, %463 : vector<8x256xf32>
    %465 = arith.addf %460, %464 : vector<8x256xf32>
    %c249_i32 = arith.constant 249 : i32
    %466 = tpu.dynamic_rotate %355 by %c249_i32 dim 1 : vector<8x256xf32>, i32 -> vector<8x256xf32>
    %c22_240 = arith.constant 22 : index
    %c0_241 = arith.constant 0 : index
    %c0_242 = arith.constant 0 : index
    %467 = vector.load %arg3[%c22_240, %c0_241, %c0_242] : memref<31x8x256xf32, #tpu.memory_space<vmem>>, vector<1x8x256xf32>
    %468 = vector.shape_cast %467 : vector<1x8x256xf32> to vector<8x256xf32>
    %469 = arith.mulf %466, %468 : vector<8x256xf32>
    %470 = arith.addf %465, %469 : vector<8x256xf32>
    %c248_i32 = arith.constant 248 : i32
    %471 = tpu.dynamic_rotate %355 by %c248_i32 dim 1 : vector<8x256xf32>, i32 -> vector<8x256xf32>
    %c23_243 = arith.constant 23 : index
    %c0_244 = arith.constant 0 : index
    %c0_245 = arith.constant 0 : index
    %472 = vector.load %arg3[%c23_243, %c0_244, %c0_245] : memref<31x8x256xf32, #tpu.memory_space<vmem>>, vector<1x8x256xf32>
    %473 = vector.shape_cast %472 : vector<1x8x256xf32> to vector<8x256xf32>
    %474 = arith.mulf %471, %473 : vector<8x256xf32>
    %475 = arith.addf %470, %474 : vector<8x256xf32>
    %c247_i32 = arith.constant 247 : i32
    %476 = tpu.dynamic_rotate %355 by %c247_i32 dim 1 : vector<8x256xf32>, i32 -> vector<8x256xf32>
    %c24_246 = arith.constant 24 : index
    %c0_247 = arith.constant 0 : index
    %c0_248 = arith.constant 0 : index
    %477 = vector.load %arg3[%c24_246, %c0_247, %c0_248] : memref<31x8x256xf32, #tpu.memory_space<vmem>>, vector<1x8x256xf32>
    %478 = vector.shape_cast %477 : vector<1x8x256xf32> to vector<8x256xf32>
    %479 = arith.mulf %476, %478 : vector<8x256xf32>
    %480 = arith.addf %475, %479 : vector<8x256xf32>
    %c246_i32 = arith.constant 246 : i32
    %481 = tpu.dynamic_rotate %355 by %c246_i32 dim 1 : vector<8x256xf32>, i32 -> vector<8x256xf32>
    %c25_249 = arith.constant 25 : index
    %c0_250 = arith.constant 0 : index
    %c0_251 = arith.constant 0 : index
    %482 = vector.load %arg3[%c25_249, %c0_250, %c0_251] : memref<31x8x256xf32, #tpu.memory_space<vmem>>, vector<1x8x256xf32>
    %483 = vector.shape_cast %482 : vector<1x8x256xf32> to vector<8x256xf32>
    %484 = arith.mulf %481, %483 : vector<8x256xf32>
    %485 = arith.addf %480, %484 : vector<8x256xf32>
    %c245_i32 = arith.constant 245 : i32
    %486 = tpu.dynamic_rotate %355 by %c245_i32 dim 1 : vector<8x256xf32>, i32 -> vector<8x256xf32>
    %c26_252 = arith.constant 26 : index
    %c0_253 = arith.constant 0 : index
    %c0_254 = arith.constant 0 : index
    %487 = vector.load %arg3[%c26_252, %c0_253, %c0_254] : memref<31x8x256xf32, #tpu.memory_space<vmem>>, vector<1x8x256xf32>
    %488 = vector.shape_cast %487 : vector<1x8x256xf32> to vector<8x256xf32>
    %489 = arith.mulf %486, %488 : vector<8x256xf32>
    %490 = arith.addf %485, %489 : vector<8x256xf32>
    %c244_i32 = arith.constant 244 : i32
    %491 = tpu.dynamic_rotate %355 by %c244_i32 dim 1 : vector<8x256xf32>, i32 -> vector<8x256xf32>
    %c27_255 = arith.constant 27 : index
    %c0_256 = arith.constant 0 : index
    %c0_257 = arith.constant 0 : index
    %492 = vector.load %arg3[%c27_255, %c0_256, %c0_257] : memref<31x8x256xf32, #tpu.memory_space<vmem>>, vector<1x8x256xf32>
    %493 = vector.shape_cast %492 : vector<1x8x256xf32> to vector<8x256xf32>
    %494 = arith.mulf %491, %493 : vector<8x256xf32>
    %495 = arith.addf %490, %494 : vector<8x256xf32>
    %c243_i32_258 = arith.constant 243 : i32
    %496 = tpu.dynamic_rotate %355 by %c243_i32_258 dim 1 : vector<8x256xf32>, i32 -> vector<8x256xf32>
    %c28_259 = arith.constant 28 : index
    %c0_260 = arith.constant 0 : index
    %c0_261 = arith.constant 0 : index
    %497 = vector.load %arg3[%c28_259, %c0_260, %c0_261] : memref<31x8x256xf32, #tpu.memory_space<vmem>>, vector<1x8x256xf32>
    %498 = vector.shape_cast %497 : vector<1x8x256xf32> to vector<8x256xf32>
    %499 = arith.mulf %496, %498 : vector<8x256xf32>
    %500 = arith.addf %495, %499 : vector<8x256xf32>
    %c242_i32_262 = arith.constant 242 : i32
    %501 = tpu.dynamic_rotate %355 by %c242_i32_262 dim 1 : vector<8x256xf32>, i32 -> vector<8x256xf32>
    %c29_263 = arith.constant 29 : index
    %c0_264 = arith.constant 0 : index
    %c0_265 = arith.constant 0 : index
    %502 = vector.load %arg3[%c29_263, %c0_264, %c0_265] : memref<31x8x256xf32, #tpu.memory_space<vmem>>, vector<1x8x256xf32>
    %503 = vector.shape_cast %502 : vector<1x8x256xf32> to vector<8x256xf32>
    %504 = arith.mulf %501, %503 : vector<8x256xf32>
    %505 = arith.addf %500, %504 : vector<8x256xf32>
    %c241_i32_266 = arith.constant 241 : i32
    %506 = tpu.dynamic_rotate %355 by %c241_i32_266 dim 1 : vector<8x256xf32>, i32 -> vector<8x256xf32>
    %c30_267 = arith.constant 30 : index
    %c0_268 = arith.constant 0 : index
    %c0_269 = arith.constant 0 : index
    %507 = vector.load %arg3[%c30_267, %c0_268, %c0_269] : memref<31x8x256xf32, #tpu.memory_space<vmem>>, vector<1x8x256xf32>
    %508 = vector.shape_cast %507 : vector<1x8x256xf32> to vector<8x256xf32>
    %509 = arith.mulf %506, %508 : vector<8x256xf32>
    %510 = arith.addf %505, %509 : vector<8x256xf32>
    %cst_270 = arith.constant dense<0.000000e+00> : vector<8x256xf32>
    %511 = tpu.matmul %14, %353, %cst_270 {dimension_numbers = #tpu.dot_dimension_numbers<[1], [0], [0], [1], [0, 0, 1, 1], [], []>} : vector<8x8xf32>, vector<8x256xf32>, vector<8x256xf32> -> vector<8x256xf32>
    %cst_271 = arith.constant dense<0.000000e+00> : vector<8x256xf32>
    %512 = tpu.matmul %14, %510, %cst_271 {dimension_numbers = #tpu.dot_dimension_numbers<[1], [0], [0], [1], [0, 0, 1, 1], [], []>} : vector<8x8xf32>, vector<8x256xf32>, vector<8x256xf32> -> vector<8x256xf32>
    %513 = arith.addf %511, %512 : vector<8x256xf32>
    %cst_272 = arith.constant 5.000000e-01 : f32
    %514 = vector.broadcast %cst_272 : f32 to vector<8x256xf32>
    %515 = arith.mulf %514, %513 : vector<8x256xf32>
    %516 = arith.subf %353, %515 : vector<8x256xf32>
    %517 = arith.subf %510, %515 : vector<8x256xf32>
    %518 = arith.mulf %516, %516 : vector<8x256xf32>
    %cst_273 = arith.constant dense<0.000000e+00> : vector<8x256xf32>
    %519 = tpu.matmul %14, %518, %cst_273 {dimension_numbers = #tpu.dot_dimension_numbers<[1], [0], [0], [1], [0, 0, 1, 1], [], []>} : vector<8x8xf32>, vector<8x256xf32>, vector<8x256xf32> -> vector<8x256xf32>
    %520 = arith.mulf %517, %517 : vector<8x256xf32>
    %cst_274 = arith.constant dense<0.000000e+00> : vector<8x256xf32>
    %521 = tpu.matmul %14, %520, %cst_274 {dimension_numbers = #tpu.dot_dimension_numbers<[1], [0], [0], [1], [0, 0, 1, 1], [], []>} : vector<8x8xf32>, vector<8x256xf32>, vector<8x256xf32> -> vector<8x256xf32>
    %522 = arith.addf %519, %521 : vector<8x256xf32>
    %cst_275 = arith.constant 5.000000e-01 : f32
    %523 = vector.broadcast %cst_275 : f32 to vector<8x256xf32>
    %524 = arith.mulf %523, %522 : vector<8x256xf32>
    %cst_276 = arith.constant 9.99999997E-7 : f32
    %525 = vector.broadcast %cst_276 : f32 to vector<8x256xf32>
    %526 = arith.addf %524, %525 : vector<8x256xf32>
    %527 = math.rsqrt %526 : vector<8x256xf32>
    %528 = arith.mulf %516, %527 : vector<8x256xf32>
    %529 = vector.broadcast %10 : vector<8x1xf32> to vector<8x256xf32>
    %530 = arith.mulf %528, %529 : vector<8x256xf32>
    %531 = vector.broadcast %11 : vector<8x1xf32> to vector<8x256xf32>
    %532 = arith.addf %530, %531 : vector<8x256xf32>
    %533 = arith.mulf %517, %527 : vector<8x256xf32>
    %534 = vector.broadcast %12 : vector<8x1xf32> to vector<8x256xf32>
    %535 = arith.mulf %533, %534 : vector<8x256xf32>
    %536 = vector.broadcast %13 : vector<8x1xf32> to vector<8x256xf32>
    %537 = arith.addf %535, %536 : vector<8x256xf32>
    %538 = tpu.concatenate %532, %537, %271 in 0 : vector<8x256xf32>, vector<8x256xf32>, vector<8x256xf32> -> vector<24x256xf32>
    %c0_277 = arith.constant 0 : index
    %c0_278 = arith.constant 0 : index
    %539 = vector.load %arg9[%c0_277, %c0_278] : memref<96x24xf32, #tpu.memory_space<vmem>>, vector<96x24xf32>
    %cst_279 = arith.constant dense<0.000000e+00> : vector<96x256xf32>
    %540 = tpu.matmul %539, %538, %cst_279 {dimension_numbers = #tpu.dot_dimension_numbers<[1], [0], [0], [1], [0, 0, 1, 1], [], []>} : vector<96x24xf32>, vector<24x256xf32>, vector<96x256xf32> -> vector<96x256xf32>
    %c0_280 = arith.constant 0 : index
    %c0_281 = arith.constant 0 : index
    %541 = vector.load %arg10[%c0_280, %c0_281] : memref<96x1xf32, #tpu.memory_space<vmem>>, vector<96x1xf32>
    %542 = vector.broadcast %541 : vector<96x1xf32> to vector<96x256xf32>
    %543 = arith.addf %540, %542 : vector<96x256xf32>
    %544 = math.absf %543 : vector<96x256xf32>
    %cst_282 = arith.constant 0.707106769 : f32
    %545 = vector.broadcast %cst_282 : f32 to vector<96x256xf32>
    %546 = arith.mulf %544, %545 : vector<96x256xf32>
    %cst_283 = arith.constant 0.327591091 : f32
    %547 = vector.broadcast %cst_283 : f32 to vector<96x256xf32>
    %548 = arith.mulf %547, %546 : vector<96x256xf32>
    %cst_284 = arith.constant 1.000000e+00 : f32
    %549 = vector.broadcast %cst_284 : f32 to vector<96x256xf32>
    %550 = arith.addf %549, %548 : vector<96x256xf32>
    %551 = tpu.reciprocal %550 {approx = true} : vector<96x256xf32> -> vector<96x256xf32>
    %552 = arith.mulf %550, %551 : vector<96x256xf32>
    %cst_285 = arith.constant 2.000000e+00 : f32
    %553 = vector.broadcast %cst_285 : f32 to vector<96x256xf32>
    %554 = arith.subf %553, %552 : vector<96x256xf32>
    %555 = arith.mulf %551, %554 : vector<96x256xf32>
    %cst_286 = arith.constant 1.06140542 : f32
    %556 = vector.broadcast %cst_286 : f32 to vector<96x256xf32>
    %557 = arith.mulf %556, %555 : vector<96x256xf32>
    %cst_287 = arith.constant -1.45315206 : f32
    %558 = vector.broadcast %cst_287 : f32 to vector<96x256xf32>
    %559 = arith.addf %557, %558 : vector<96x256xf32>
    %560 = arith.mulf %559, %555 : vector<96x256xf32>
    %cst_288 = arith.constant 1.42141378 : f32
    %561 = vector.broadcast %cst_288 : f32 to vector<96x256xf32>
    %562 = arith.addf %560, %561 : vector<96x256xf32>
    %563 = arith.mulf %562, %555 : vector<96x256xf32>
    %cst_289 = arith.constant -0.284496725 : f32
    %564 = vector.broadcast %cst_289 : f32 to vector<96x256xf32>
    %565 = arith.addf %563, %564 : vector<96x256xf32>
    %566 = arith.mulf %565, %555 : vector<96x256xf32>
    %cst_290 = arith.constant 0.254829586 : f32
    %567 = vector.broadcast %cst_290 : f32 to vector<96x256xf32>
    %568 = arith.addf %566, %567 : vector<96x256xf32>
    %569 = arith.mulf %568, %555 : vector<96x256xf32>
    %cst_291 = arith.constant 0.000000e+00 : f32
    %570 = vector.broadcast %cst_291 : f32 to vector<96x256xf32>
    %571 = arith.subf %570, %546 : vector<96x256xf32>
    %572 = arith.mulf %571, %546 : vector<96x256xf32>
    %573 = math.exp %572 : vector<96x256xf32>
    %574 = arith.mulf %569, %573 : vector<96x256xf32>
    %cst_292 = arith.constant 1.000000e+00 : f32
    %575 = vector.broadcast %cst_292 : f32 to vector<96x256xf32>
    %576 = arith.subf %575, %574 : vector<96x256xf32>
    %cst_293 = arith.constant 0.000000e+00 : f32
    %577 = vector.broadcast %cst_293 : f32 to vector<96x256xf32>
    %578 = arith.cmpf oge, %543, %577 : vector<96x256xf32>
    %cst_294 = arith.constant 0.000000e+00 : f32
    %579 = vector.broadcast %cst_294 : f32 to vector<96x256xf32>
    %580 = arith.subf %579, %576 : vector<96x256xf32>
    %581 = arith.select %578, %576, %580 : vector<96x256xi1>, vector<96x256xf32>
    %cst_295 = arith.constant 5.000000e-01 : f32
    %582 = vector.broadcast %cst_295 : f32 to vector<96x256xf32>
    %583 = arith.mulf %582, %543 : vector<96x256xf32>
    %cst_296 = arith.constant 1.000000e+00 : f32
    %584 = vector.broadcast %cst_296 : f32 to vector<96x256xf32>
    %585 = arith.addf %584, %581 : vector<96x256xf32>
    %586 = arith.mulf %583, %585 : vector<96x256xf32>
    %c0_297 = arith.constant 0 : index
    %c0_298 = arith.constant 0 : index
    %587 = vector.load %arg11[%c0_297, %c0_298] : memref<24x96xf32, #tpu.memory_space<vmem>>, vector<24x96xf32>
    %cst_299 = arith.constant dense<0.000000e+00> : vector<24x256xf32>
    %588 = tpu.matmul %587, %586, %cst_299 {dimension_numbers = #tpu.dot_dimension_numbers<[1], [0], [0], [1], [0, 0, 1, 1], [], []>} : vector<24x96xf32>, vector<96x256xf32>, vector<24x256xf32> -> vector<24x256xf32>
    %c0_300 = arith.constant 0 : index
    %c0_301 = arith.constant 0 : index
    %589 = vector.load %arg12[%c0_300, %c0_301] : memref<24x1xf32, #tpu.memory_space<vmem>>, vector<24x1xf32>
    %590 = vector.broadcast %589 : vector<24x1xf32> to vector<24x256xf32>
    %591 = arith.addf %588, %590 : vector<24x256xf32>
    %592 = arith.addf %1, %591 : vector<24x256xf32>
    %c0_302 = arith.constant 0 : index
    %c0_303 = arith.constant 0 : index
    %c0_304 = arith.constant 0 : index
    %593 = vector.load %arg13[%c0_302, %c0_303, %c0_304] : memref<1x24x256xf32, #tpu.memory_space<vmem>>, vector<1x24x256xf32>
    %594 = vector.shape_cast %593 : vector<1x24x256xf32> to vector<24x256xf32>
    %595 = vector.shape_cast %592 : vector<24x256xf32> to vector<1x24x256xf32>
    tpu.vector_store %arg13[%c0_302, %c0_303, %c0_304], %595 {strides = array<i32>} : memref<1x24x256xf32, #tpu.memory_space<vmem>>, vector<1x24x256xf32>,
    return
  }
  func.func @transform_0(%arg0: i32) -> (i32, i32, i32) {
    %c0_i32 = arith.constant 0 : i32
    %c0_i32_0 = arith.constant 0 : i32
    %c0_i32_1 = arith.constant 0 : i32
    return %arg0, %c0_i32, %c0_i32_0 : i32, i32, i32
  }
  func.func @transform_1(%arg0: i32) -> (i32, i32, i32) {
    %c0_i32 = arith.constant 0 : i32
    %c0_i32_0 = arith.constant 0 : i32
    %c0_i32_1 = arith.constant 0 : i32
    %c0_i32_2 = arith.constant 0 : i32
    return %c0_i32, %c0_i32_0, %c0_i32_1 : i32, i32, i32
  }
  func.func @transform_2(%arg0: i32) -> (i32, i32, i32) {
    %c0_i32 = arith.constant 0 : i32
    %c0_i32_0 = arith.constant 0 : i32
    %c0_i32_1 = arith.constant 0 : i32
    %c0_i32_2 = arith.constant 0 : i32
    return %c0_i32, %c0_i32_0, %c0_i32_1 : i32, i32, i32
  }
  func.func @transform_3(%arg0: i32) -> (i32, i32) {
    %c0_i32 = arith.constant 0 : i32
    %c0_i32_0 = arith.constant 0 : i32
    %c0_i32_1 = arith.constant 0 : i32
    return %c0_i32, %c0_i32_0 : i32, i32
  }
  func.func @transform_4(%arg0: i32) -> (i32, i32) {
    %c0_i32 = arith.constant 0 : i32
    %c0_i32_0 = arith.constant 0 : i32
    %c0_i32_1 = arith.constant 0 : i32
    return %c0_i32, %c0_i32_0 : i32, i32
  }
  func.func @transform_5(%arg0: i32) -> (i32, i32) {
    %c0_i32 = arith.constant 0 : i32
    %c0_i32_0 = arith.constant 0 : i32
    %c0_i32_1 = arith.constant 0 : i32
    return %c0_i32, %c0_i32_0 : i32, i32
  }
  func.func @transform_6(%arg0: i32) -> (i32, i32) {
    %c0_i32 = arith.constant 0 : i32
    %c0_i32_0 = arith.constant 0 : i32
    %c0_i32_1 = arith.constant 0 : i32
    return %c0_i32, %c0_i32_0 : i32, i32
  }
  func.func @transform_7(%arg0: i32) -> (i32, i32) {
    %c0_i32 = arith.constant 0 : i32
    %c0_i32_0 = arith.constant 0 : i32
    %c0_i32_1 = arith.constant 0 : i32
    return %c0_i32, %c0_i32_0 : i32, i32
  }
  func.func @transform_8(%arg0: i32) -> (i32, i32) {
    %c0_i32 = arith.constant 0 : i32
    %c0_i32_0 = arith.constant 0 : i32
    %c0_i32_1 = arith.constant 0 : i32
    return %c0_i32, %c0_i32_0 : i32, i32
  }
  func.func @transform_9(%arg0: i32) -> (i32, i32) {
    %c0_i32 = arith.constant 0 : i32
    %c0_i32_0 = arith.constant 0 : i32
    %c0_i32_1 = arith.constant 0 : i32
    return %c0_i32, %c0_i32_0 : i32, i32
  }
  func.func @transform_10(%arg0: i32) -> (i32, i32) {
    %c0_i32 = arith.constant 0 : i32
    %c0_i32_0 = arith.constant 0 : i32
    %c0_i32_1 = arith.constant 0 : i32
    return %c0_i32, %c0_i32_0 : i32, i32
  }
  func.func @transform_11(%arg0: i32) -> (i32, i32) {
    %c0_i32 = arith.constant 0 : i32
    %c0_i32_0 = arith.constant 0 : i32
    %c0_i32_1 = arith.constant 0 : i32
    return %c0_i32, %c0_i32_0 : i32, i32
  }
  func.func @transform_12(%arg0: i32) -> (i32, i32, i32) {
    %c0_i32 = arith.constant 0 : i32
    %c0_i32_0 = arith.constant 0 : i32
    %c0_i32_1 = arith.constant 0 : i32
    return %arg0, %c0_i32, %c0_i32_0 : i32, i32, i32
  }
}

</mosaic_0001>

<llo_original>
// kernel: tile.90
$region0: #{tile.90}
  %s0 = inlined_call_operand.vmem [shape: f32[49,2,4,256], index: 0, kind: input, shape index: {}]
  %s1 = inlined_call_operand.vmem [shape: f32[49,8,256], index: 1, kind: output, shape index: {}]
  $region1: #{tile.90} parent=0
    #allocation0 [shape = 'u8[802816]{0}', space=vmem, size = 0xc4000, scoped, tag = 'scoped mem for input reshape']
    %s3 = sshllo.u32 0, 4
    %s4 = smul.addr 4, 195
    %s5 = scalar_lea.vmem %s0, %s4
    %v6 = vld [vmem:[%s5] sm:%s3]
    %s7 = scalar_lea.vmem [#allocation0], 1560
    %8 = vst [vmem:[%s7] sm:%s3] %v6
    %s9 = smul.addr 4, 194
    %s10 = scalar_lea.vmem %s0, %s9
    %v11 = vld [vmem:[%s10] sm:%s3]
    %s12 = scalar_lea.vmem [#allocation0], 1552
    %13 = vst [vmem:[%s12] sm:%s3] %v11
    %s14 = smul.addr 4, 193
    %s15 = scalar_lea.vmem %s0, %s14
    %v16 = vld [vmem:[%s15] sm:%s3]
    %s17 = scalar_lea.vmem [#allocation0], 1544
    %18 = vst [vmem:[%s17] sm:%s3] %v16
    %s19 = smul.addr 4, 192
    %s20 = scalar_lea.vmem %s0, %s19
    %v21 = vld [vmem:[%s20] sm:%s3]
    %s22 = scalar_lea.vmem [#allocation0], 1536
    %23 = vst [vmem:[%s22] sm:%s3] %v21
    %s24 = smul.addr 4, 191
    %s25 = scalar_lea.vmem %s0, %s24
    %v26 = vld [vmem:[%s25] sm:%s3]
    %s27 = scalar_lea.vmem [#allocation0], 1528
    %28 = vst [vmem:[%s27] sm:%s3] %v26
    %s29 = smul.addr 4, 190
    %s30 = scalar_lea.vmem %s0, %s29
    %v31 = vld [vmem:[%s30] sm:%s3]
    %s32 = scalar_lea.vmem [#allocation0], 1520
    %33 = vst [vmem:[%s32] sm:%s3] %v31
    %s34 = smul.addr 4, 189
    %s35 = scalar_lea.vmem %s0, %s34
    %v36 = vld [vmem:[%s35] sm:%s3]
    %s37 = scalar_lea.vmem [#allocation0], 1512
    %38 = vst [vmem:[%s37] sm:%s3] %v36
    %s39 = smul.addr 4, 188
    %s40 = scalar_lea.vmem %s0, %s39
    %v41 = vld [vmem:[%s40] sm:%s3]
    %s42 = scalar_lea.vmem [#allocation0], 1504
    %43 = vst [vmem:[%s42] sm:%s3] %v41
    %s44 = smul.addr 4, 187
    %s45 = scalar_lea.vmem %s0, %s44
    %v46 = vld [vmem:[%s45] sm:%s3]
    %s47 = scalar_lea.vmem [#allocation0], 1496
    %48 = vst [vmem:[%s47] sm:%s3] %v46
    %s49 = smul.addr 4, 186
    %s50 = scalar_lea.vmem %s0, %s49
    %v51 = vld [vmem:[%s50] sm:%s3]
    %s52 = scalar_lea.vmem [#allocation0], 1488
    %53 = vst [vmem:[%s52] sm:%s3] %v51
    %s54 = smul.addr 4, 185
    %s55 = scalar_lea.vmem %s0, %s54
    %v56 = vld [vmem:[%s55] sm:%s3]
    %s57 = scalar_lea.vmem [#allocation0], 1480
    %58 = vst [vmem:[%s57] sm:%s3] %v56
    %s59 = smul.addr 4, 184
    %s60 = scalar_lea.vmem %s0, %s59
    %v61 = vld [vmem:[%s60] sm:%s3]
    %s62 = scalar_lea.vmem [#allocation0], 1472
    %63 = vst [vmem:[%s62] sm:%s3] %v61
    %s64 = smul.addr 4, 183
    %s65 = scalar_lea.vmem %s0, %s64
    %v66 = vld [vmem:[%s65] sm:%s3]
    %s67 = scalar_lea.vmem [#allocation0], 1464
    %68 = vst [vmem:[%s67] sm:%s3] %v66
    %s69 = smul.addr 4, 182
    %s70 = scalar_lea.vmem %s0, %s69
    %v71 = vld [vmem:[%s70] sm:%s3]
    %s72 = scalar_lea.vmem [#allocation0], 1456
    %73 = vst [vmem:[%s72] sm:%s3] %v71
    %s74 = smul.addr 4, 181
    %s75 = scalar_lea.vmem %s0, %s74
    %v76 = vld [vmem:[%s75] sm:%s3]
    %s77 = scalar_lea.vmem [#allocation0], 1448
    %78 = vst [vmem:[%s77] sm:%s3] %v76
    %s79 = smul.addr 4, 180
    %s80 = scalar_lea.vmem %s0, %s79
    %v81 = vld [vmem:[%s80] sm:%s3]
    %s82 = scalar_lea.vmem [#allocation0], 1440
    %83 = vst [vmem:[%s82] sm:%s3] %v81
    %s84 = smul.addr 4, 179
    %s85 = scalar_lea.vmem %s0, %s84
    %v86 = vld [vmem:[%s85] sm:%s3]
    %s87 = scalar_lea.vmem [#allocation0], 1432
    %88 = vst [vmem:[%s87] sm:%s3] %v86
    %s89 = smul.addr 4, 178
    %s90 = scalar_lea.vmem %s0, %s89
    %v91 = vld [vmem:[%s90] sm:%s3]
    %s92 = scalar_lea.vmem [#allocation0], 1424
    %93 = vst [vmem:[%s92] sm:%s3] %v91
    %s94 = smul.addr 4, 177
    %s95 = scalar_lea.vmem %s0, %s94
    %v96 = vld [vmem:[%s95] sm:%s3]
    %s97 = scalar_lea.vmem [#allocation0], 1416
    %98 = vst [vmem:[%s97] sm:%s3] %v96
    %s99 = smul.addr 4, 176
    %s100 = scalar_lea.vmem %s0, %s99
    %v101 = vld [vmem:[%s100] sm:%s3]
    %s102 = scalar_lea.vmem [#allocation0], 1408
    %103 = vst [vmem:[%s102] sm:%s3] %v101
    %s104 = smul.addr 4, 175
    %s105 = scalar_lea.vmem %s0, %s104
    %v106 = vld [vmem:[%s105] sm:%s3]
    %s107 = scalar_lea.vmem [#allocation0], 1400
    %108 = vst [vmem:[%s107] sm:%s3] %v106
    %s109 = smul.addr 4, 174
    %s110 = scalar_lea.vmem %s0, %s109
    %v111 = vld [vmem:[%s110] sm:%s3]
    %s112 = scalar_lea.vmem [#allocation0], 1392
    %113 = vst [vmem:[%s112] sm:%s3] %v111
    %s114 = smul.addr 4, 173
    %s115 = scalar_lea.vmem %s0, %s114
    %v116 = vld [vmem:[%s115] sm:%s3]
    %s117 = scalar_lea.vmem [#allocation0], 1384
    %118 = vst [vmem:[%s117] sm:%s3] %v116
    %s119 = smul.addr 4, 172
    %s120 = scalar_lea.vmem %s0, %s119
    %v121 = vld [vmem:[%s120] sm:%s3]
    %s122 = scalar_lea.vmem [#allocation0], 1376
    %123 = vst [vmem:[%s122] sm:%s3] %v121
    %s124 = smul.addr 4, 171
    %s125 = scalar_lea.vmem %s0, %s124
    %v126 = vld [vmem:[%s125] sm:%s3]
    %s127 = scalar_lea.vmem [#allocation0], 1368
    %128 = vst [vmem:[%s127] sm:%s3] %v126
    %s129 = smul.addr 4, 170
    %s130 = scalar_lea.vmem %s0, %s129
    %v131 = vld [vmem:[%s130] sm:%s3]
    %s132 = scalar_lea.vmem [#allocation0], 1360
    %133 = vst [vmem:[%s132] sm:%s3] %v131
    %s134 = smul.addr 4, 169
    %s135 = scalar_lea.vmem %s0, %s134
    %v136 = vld [vmem:[%s135] sm:%s3]
    %s137 = scalar_lea.vmem [#allocation0], 1352
    %138 = vst [vmem:[%s137] sm:%s3] %v136
    %s139 = smul.addr 4, 168
    %s140 = scalar_lea.vmem %s0, %s139
    %v141 = vld [vmem:[%s140] sm:%s3]
    %s142 = scalar_lea.vmem [#allocation0], 1344
    %143 = vst [vmem:[%s142] sm:%s3] %v141
    %s144 = smul.addr 4, 167
    %s145 = scalar_lea.vmem %s0, %s144
    %v146 = vld [vmem:[%s145] sm:%s3]
    %s147 = scalar_lea.vmem [#allocation0], 1336
    %148 = vst [vmem:[%s147] sm:%s3] %v146
    %s149 = smul.addr 4, 166
    %s150 = scalar_lea.vmem %s0, %s149
    %v151 = vld [vmem:[%s150] sm:%s3]
    %s152 = scalar_lea.vmem [#allocation0], 1328
    %153 = vst [vmem:[%s152] sm:%s3] %v151
    %s154 = smul.addr 4, 165
    %s155 = scalar_lea.vmem %s0, %s154
    %v156 = vld [vmem:[%s155] sm:%s3]
    %s157 = scalar_lea.vmem [#allocation0], 1320
    %158 = vst [vmem:[%s157] sm:%s3] %v156
    %s159 = smul.addr 4, 164
    %s160 = scalar_lea.vmem %s0, %s159
    %v161 = vld [vmem:[%s160] sm:%s3]
    %s162 = scalar_lea.vmem [#allocation0], 1312
    %163 = vst [vmem:[%s162] sm:%s3] %v161
    %s164 = smul.addr 4, 163
    %s165 = scalar_lea.vmem %s0, %s164
    %v166 = vld [vmem:[%s165] sm:%s3]
    %s167 = scalar_lea.vmem [#allocation0], 1304
    %168 = vst [vmem:[%s167] sm:%s3] %v166
    %s169 = smul.addr 4, 162
    %s170 = scalar_lea.vmem %s0, %s169
    %v171 = vld [vmem:[%s170] sm:%s3]
    %s172 = scalar_lea.vmem [#allocation0], 1296
    %173 = vst [vmem:[%s172] sm:%s3] %v171
    %s174 = smul.addr 4, 161
    %s175 = scalar_lea.vmem %s0, %s174
    %v176 = vld [vmem:[%s175] sm:%s3]
    %s177 = scalar_lea.vmem [#allocation0], 1288
    %178 = vst [vmem:[%s177] sm:%s3] %v176
    %s179 = smul.addr 4, 160
    %s180 = scalar_lea.vmem %s0, %s179
    %v181 = vld [vmem:[%s180] sm:%s3]
    %s182 = scalar_lea.vmem [#allocation0], 1280
    %183 = vst [vmem:[%s182] sm:%s3] %v181
    %s184 = smul.addr 4, 159
    %s185 = scalar_lea.vmem %s0, %s184
    %v186 = vld [vmem:[%s185] sm:%s3]
    %s187 = scalar_lea.vmem [#allocation0], 1272
    %188 = vst [vmem:[%s187] sm:%s3] %v186
    %s189 = smul.addr 4, 158
    %s190 = scalar_lea.vmem %s0, %s189
    %v191 = vld [vmem:[%s190] sm:%s3]
    %s192 = scalar_lea.vmem [#allocation0], 1264
    %193 = vst [vmem:[%s192] sm:%s3] %v191
    %s194 = smul.addr 4, 157
    %s195 = scalar_lea.vmem %s0, %s194
    %v196 = vld [vmem:[%s195] sm:%s3]
    %s197 = scalar_lea.vmem [#allocation0], 1256
    %198 = vst [vmem:[%s197] sm:%s3] %v196
    %s199 = smul.addr 4, 156
    %s200 = scalar_lea.vmem %s0, %s199
    %v201 = vld [vmem:[%s200] sm:%s3]
    %s202 = scalar_lea.vmem [#allocation0], 1248
    %203 = vst [vmem:[%s202] sm:%s3] %v201
    %s204 = smul.addr 4, 155
    %s205 = scalar_lea.vmem %s0, %s204
    %v206 = vld [vmem:[%s205] sm:%s3]
    %s207 = scalar_lea.vmem [#allocation0], 1240
    %208 = vst [vmem:[%s207] sm:%s3] %v206
    %s209 = smul.addr 4, 154
    %s210 = scalar_lea.vmem %s0, %s209
    %v211 = vld [vmem:[%s210] sm:%s3]
    %s212 = scalar_lea.vmem [#allocation0], 1232
    %213 = vst [vmem:[%s212] sm:%s3] %v211
    %s214 = smul.addr 4, 153
    %s215 = scalar_lea.vmem %s0, %s214
    %v216 = vld [vmem:[%s215] sm:%s3]
    %s217 = scalar_lea.vmem [#allocation0], 1224
    %218 = vst [vmem:[%s217] sm:%s3] %v216
    %s219 = smul.addr 4, 152
    %s220 = scalar_lea.vmem %s0, %s219
    %v221 = vld [vmem:[%s220] sm:%s3]
    %s222 = scalar_lea.vmem [#allocation0], 1216
    %223 = vst [vmem:[%s222] sm:%s3] %v221
    %s224 = smul.addr 4, 151
    %s225 = scalar_lea.vmem %s0, %s224
    %v226 = vld [vmem:[%s225] sm:%s3]
    %s227 = scalar_lea.vmem [#allocation0], 1208
    %228 = vst [vmem:[%s227] sm:%s3] %v226
    %s229 = smul.addr 4, 150
    %s230 = scalar_lea.vmem %s0, %s229
    %v231 = vld [vmem:[%s230] sm:%s3]
    %s232 = scalar_lea.vmem [#allocation0], 1200
    %233 = vst [vmem:[%s232] sm:%s3] %v231
    %s234 = smul.addr 4, 149
    %s235 = scalar_lea.vmem %s0, %s234
    %v236 = vld [vmem:[%s235] sm:%s3]
    %s237 = scalar_lea.vmem [#allocation0], 1192
    %238 = vst [vmem:[%s237] sm:%s3] %v236
    %s239 = smul.addr 4, 148
    %s240 = scalar_lea.vmem %s0, %s239
    %v241 = vld [vmem:[%s240] sm:%s3]
    %s242 = scalar_lea.vmem [#allocation0], 1184
    %243 = vst [vmem:[%s242] sm:%s3] %v241
    %s244 = smul.addr 4, 147
    %s245 = scalar_lea.vmem %s0, %s244
    %v246 = vld [vmem:[%s245] sm:%s3]
    %s247 = scalar_lea.vmem [#allocation0], 1176
    %248 = vst [vmem:[%s247] sm:%s3] %v246
    %s249 = smul.addr 4, 146
    %s250 = scalar_lea.vmem %s0, %s249
    %v251 = vld [vmem:[%s250] sm:%s3]
    %s252 = scalar_lea.vmem [#allocation0], 1168
    %253 = vst [vmem:[%s252] sm:%s3] %v251
    %s254 = smul.addr 4, 145
    %s255 = scalar_lea.vmem %s0, %s254
    %v256 = vld [vmem:[%s255] sm:%s3]
    %s257 = scalar_lea.vmem [#allocation0], 1160
    %258 = vst [vmem:[%s257] sm:%s3] %v256
    %s259 = smul.addr 4, 144
    %s260 = scalar_lea.vmem %s0, %s259
    %v261 = vld [vmem:[%s260] sm:%s3]
    %s262 = scalar_lea.vmem [#allocation0], 1152
    %263 = vst [vmem:[%s262] sm:%s3] %v261
    %s264 = smul.addr 4, 143
    %s265 = scalar_lea.vmem %s0, %s264
    %v266 = vld [vmem:[%s265] sm:%s3]
    %s267 = scalar_lea.vmem [#allocation0], 1144
    %268 = vst [vmem:[%s267] sm:%s3] %v266
    %s269 = smul.addr 4, 142
    %s270 = scalar_lea.vmem %s0, %s269
    %v271 = vld [vmem:[%s270] sm:%s3]
    %s272 = scalar_lea.vmem [#allocation0], 1136
    %273 = vst [vmem:[%s272] sm:%s3] %v271
    %s274 = smul.addr 4, 141
    %s275 = scalar_lea.vmem %s0, %s274
    %v276 = vld [vmem:[%s275] sm:%s3]
    %s277 = scalar_lea.vmem [#allocation0], 1128
    %278 = vst [vmem:[%s277] sm:%s3] %v276
    %s279 = smul.addr 4, 140
    %s280 = scalar_lea.vmem %s0, %s279
    %v281 = vld [vmem:[%s280] sm:%s3]
    %s282 = scalar_lea.vmem [#allocation0], 1120
    %283 = vst [vmem:[%s282] sm:%s3] %v281
    %s284 = smul.addr 4, 139
    %s285 = scalar_lea.vmem %s0, %s284
    %v286 = vld [vmem:[%s285] sm:%s3]
    %s287 = scalar_lea.vmem [#allocation0], 1112
    %288 = vst [vmem:[%s287] sm:%s3] %v286
    %s289 = smul.addr 4, 138
    %s290 = scalar_lea.vmem %s0, %s289
    %v291 = vld [vmem:[%s290] sm:%s3]
    %s292 = scalar_lea.vmem [#allocation0], 1104
    %293 = vst [vmem:[%s292] sm:%s3] %v291
    %s294 = smul.addr 4, 137
    %s295 = scalar_lea.vmem %s0, %s294
    %v296 = vld [vmem:[%s295] sm:%s3]
    %s297 = scalar_lea.vmem [#allocation0], 1096
    %298 = vst [vmem:[%s297] sm:%s3] %v296
    %s299 = smul.addr 4, 136
    %s300 = scalar_lea.vmem %s0, %s299
    %v301 = vld [vmem:[%s300] sm:%s3]
    %s302 = scalar_lea.vmem [#allocation0], 1088
    %303 = vst [vmem:[%s302] sm:%s3] %v301
    %s304 = smul.addr 4, 135
    %s305 = scalar_lea.vmem %s0, %s304
    %v306 = vld [vmem:[%s305] sm:%s3]
    %s307 = scalar_lea.vmem [#allocation0], 1080
    %308 = vst [vmem:[%s307] sm:%s3] %v306
    %s309 = smul.addr 4, 134
    %s310 = scalar_lea.vmem %s0, %s309
    %v311 = vld [vmem:[%s310] sm:%s3]
    %s312 = scalar_lea.vmem [#allocation0], 1072
    %313 = vst [vmem:[%s312] sm:%s3] %v311
    %s314 = smul.addr 4, 133
    %s315 = scalar_lea.vmem %s0, %s314
    %v316 = vld [vmem:[%s315] sm:%s3]
    %s317 = scalar_lea.vmem [#allocation0], 1064
    %318 = vst [vmem:[%s317] sm:%s3] %v316
    %s319 = smul.addr 4, 132
    %s320 = scalar_lea.vmem %s0, %s319
    %v321 = vld [vmem:[%s320] sm:%s3]
    %s322 = scalar_lea.vmem [#allocation0], 1056
    %323 = vst [vmem:[%s322] sm:%s3] %v321
    %s324 = smul.addr 4, 131
    %s325 = scalar_lea.vmem %s0, %s324
    %v326 = vld [vmem:[%s325] sm:%s3]
    %s327 = scalar_lea.vmem [#allocation0], 1048
    %328 = vst [vmem:[%s327] sm:%s3] %v326
    %s329 = smul.addr 4, 130
    %s330 = scalar_lea.vmem %s0, %s329
    %v331 = vld [vmem:[%s330] sm:%s3]
    %s332 = scalar_lea.vmem [#allocation0], 1040
    %333 = vst [vmem:[%s332] sm:%s3] %v331
    %s334 = smul.addr 4, 129
    %s335 = scalar_lea.vmem %s0, %s334
    %v336 = vld [vmem:[%s335] sm:%s3]
    %s337 = scalar_lea.vmem [#allocation0], 1032
    %338 = vst [vmem:[%s337] sm:%s3] %v336
    %s339 = smul.addr 4, 128
    %s340 = scalar_lea.vmem %s0, %s339
    %v341 = vld [vmem:[%s340] sm:%s3]
    %s342 = scalar_lea.vmem [#allocation0], 1024
    %343 = vst [vmem:[%s342] sm:%s3] %v341
    %s344 = smul.addr 4, 127
    %s345 = scalar_lea.vmem %s0, %s344
    %v346 = vld [vmem:[%s345] sm:%s3]
    %s347 = scalar_lea.vmem [#allocation0], 1016
    %348 = vst [vmem:[%s347] sm:%s3] %v346
    %s349 = smul.addr 4, 126
    %s350 = scalar_lea.vmem %s0, %s349
    %v351 = vld [vmem:[%s350] sm:%s3]
    %s352 = scalar_lea.vmem [#allocation0], 1008
    %353 = vst [vmem:[%s352] sm:%s3] %v351
    %s354 = smul.addr 4, 125
    %s355 = scalar_lea.vmem %s0, %s354
    %v356 = vld [vmem:[%s355] sm:%s3]
    %s357 = scalar_lea.vmem [#allocation0], 1000
    %358 = vst [vmem:[%s357] sm:%s3] %v356
    %s359 = smul.addr 4, 124
    %s360 = scalar_lea.vmem %s0, %s359
    %v361 = vld [vmem:[%s360] sm:%s3]
    %s362 = scalar_lea.vmem [#allocation0], 992
    %363 = vst [vmem:[%s362] sm:%s3] %v361
    %s364 = smul.addr 4, 123
    %s365 = scalar_lea.vmem %s0, %s364
    %v366 = vld [vmem:[%s365] sm:%s3]
    %s367 = scalar_lea.vmem [#allocation0], 984
    %368 = vst [vmem:[%s367] sm:%s3] %v366
    %s369 = smul.addr 4, 122
    %s370 = scalar_lea.vmem %s0, %s369
    %v371 = vld [vmem:[%s370] sm:%s3]
    %s372 = scalar_lea.vmem [#allocation0], 976
    %373 = vst [vmem:[%s372] sm:%s3] %v371
    %s374 = smul.addr 4, 121
    %s375 = scalar_lea.vmem %s0, %s374
    %v376 = vld [vmem:[%s375] sm:%s3]
    %s377 = scalar_lea.vmem [#allocation0], 968
    %378 = vst [vmem:[%s377] sm:%s3] %v376
    %s379 = smul.addr 4, 120
    %s380 = scalar_lea.vmem %s0, %s379
    %v381 = vld [vmem:[%s380] sm:%s3]
    %s382 = scalar_lea.vmem [#allocation0], 960
    %383 = vst [vmem:[%s382] sm:%s3] %v381
    %s384 = smul.addr 4, 119
    %s385 = scalar_lea.vmem %s0, %s384
    %v386 = vld [vmem:[%s385] sm:%s3]
    %s387 = scalar_lea.vmem [#allocation0], 952
    %388 = vst [vmem:[%s387] sm:%s3] %v386
    %s389 = smul.addr 4, 118
    %s390 = scalar_lea.vmem %s0, %s389
    %v391 = vld [vmem:[%s390] sm:%s3]
    %s392 = scalar_lea.vmem [#allocation0], 944
    %393 = vst [vmem:[%s392] sm:%s3] %v391
    %s394 = smul.addr 4, 117
    %s395 = scalar_lea.vmem %s0, %s394
    %v396 = vld [vmem:[%s395] sm:%s3]
    %s397 = scalar_lea.vmem [#allocation0], 936
    %398 = vst [vmem:[%s397] sm:%s3] %v396
    %s399 = smul.addr 4, 116
    %s400 = scalar_lea.vmem %s0, %s399
    %v401 = vld [vmem:[%s400] sm:%s3]
    %s402 = scalar_lea.vmem [#allocation0], 928
    %403 = vst [vmem:[%s402] sm:%s3] %v401
    %s404 = smul.addr 4, 115
    %s405 = scalar_lea.vmem %s0, %s404
    %v406 = vld [vmem:[%s405] sm:%s3]
    %s407 = scalar_lea.vmem [#allocation0], 920
    %408 = vst [vmem:[%s407] sm:%s3] %v406
    %s409 = smul.addr 4, 114
    %s410 = scalar_lea.vmem %s0, %s409
    %v411 = vld [vmem:[%s410] sm:%s3]
    %s412 = scalar_lea.vmem [#allocation0], 912
    %413 = vst [vmem:[%s412] sm:%s3] %v411
    %s414 = smul.addr 4, 113
    %s415 = scalar_lea.vmem %s0, %s414
    %v416 = vld [vmem:[%s415] sm:%s3]
    %s417 = scalar_lea.vmem [#allocation0], 904
    %418 = vst [vmem:[%s417] sm:%s3] %v416
    %s419 = smul.addr 4, 112
    %s420 = scalar_lea.vmem %s0, %s419
    %v421 = vld [vmem:[%s420] sm:%s3]
    %s422 = scalar_lea.vmem [#allocation0], 896
    %423 = vst [vmem:[%s422] sm:%s3] %v421
    %s424 = smul.addr 4, 111
    %s425 = scalar_lea.vmem %s0, %s424
    %v426 = vld [vmem:[%s425] sm:%s3]
    %s427 = scalar_lea.vmem [#allocation0], 888
    %428 = vst [vmem:[%s427] sm:%s3] %v426
    %s429 = smul.addr 4, 110
    %s430 = scalar_lea.vmem %s0, %s429
    %v431 = vld [vmem:[%s430] sm:%s3]
    %s432 = scalar_lea.vmem [#allocation0], 880
    %433 = vst [vmem:[%s432] sm:%s3] %v431
    %s434 = smul.addr 4, 109
    %s435 = scalar_lea.vmem %s0, %s434
    %v436 = vld [vmem:[%s435] sm:%s3]
    %s437 = scalar_lea.vmem [#allocation0], 872
    %438 = vst [vmem:[%s437] sm:%s3] %v436
    %s439 = smul.addr 4, 108
    %s440 = scalar_lea.vmem %s0, %s439
    %v441 = vld [vmem:[%s440] sm:%s3]
    %s442 = scalar_lea.vmem [#allocation0], 864
    %443 = vst [vmem:[%s442] sm:%s3] %v441
    %s444 = smul.addr 4, 107
    %s445 = scalar_lea.vmem %s0, %s444
    %v446 = vld [vmem:[%s445] sm:%s3]
    %s447 = scalar_lea.vmem [#allocation0], 856
    %448 = vst [vmem:[%s447] sm:%s3] %v446
    %s449 = smul.addr 4, 106
    %s450 = scalar_lea.vmem %s0, %s449
    %v451 = vld [vmem:[%s450] sm:%s3]
    %s452 = scalar_lea.vmem [#allocation0], 848
    %453 = vst [vmem:[%s452] sm:%s3] %v451
    %s454 = smul.addr 4, 105
    %s455 = scalar_lea.vmem %s0, %s454
    %v456 = vld [vmem:[%s455] sm:%s3]
    %s457 = scalar_lea.vmem [#allocation0], 840
    %458 = vst [vmem:[%s457] sm:%s3] %v456
    %s459 = smul.addr 4, 104
    %s460 = scalar_lea.vmem %s0, %s459
    %v461 = vld [vmem:[%s460] sm:%s3]
    %s462 = scalar_lea.vmem [#allocation0], 832
    %463 = vst [vmem:[%s462] sm:%s3] %v461
    %s464 = smul.addr 4, 103
    %s465 = scalar_lea.vmem %s0, %s464
    %v466 = vld [vmem:[%s465] sm:%s3]
    %s467 = scalar_lea.vmem [#allocation0], 824
    %468 = vst [vmem:[%s467] sm:%s3] %v466
    %s469 = smul.addr 4, 102
    %s470 = scalar_lea.vmem %s0, %s469
    %v471 = vld [vmem:[%s470] sm:%s3]
    %s472 = scalar_lea.vmem [#allocation0], 816
    %473 = vst [vmem:[%s472] sm:%s3] %v471
    %s474 = smul.addr 4, 101
    %s475 = scalar_lea.vmem %s0, %s474
    %v476 = vld [vmem:[%s475] sm:%s3]
    %s477 = scalar_lea.vmem [#allocation0], 808
    %478 = vst [vmem:[%s477] sm:%s3] %v476
    %s479 = smul.addr 4, 100
    %s480 = scalar_lea.vmem %s0, %s479
    %v481 = vld [vmem:[%s480] sm:%s3]
    %s482 = scalar_lea.vmem [#allocation0], 800
    %483 = vst [vmem:[%s482] sm:%s3] %v481
    %s484 = smul.addr 4, 99
    %s485 = scalar_lea.vmem %s0, %s484
    %v486 = vld [vmem:[%s485] sm:%s3]
    %s487 = scalar_lea.vmem [#allocation0], 792
    %488 = vst [vmem:[%s487] sm:%s3] %v486
    %s489 = smul.addr 4, 98
    %s490 = scalar_lea.vmem %s0, %s489
    %v491 = vld [vmem:[%s490] sm:%s3]
    %s492 = scalar_lea.vmem [#allocation0], 784
    %493 = vst [vmem:[%s492] sm:%s3] %v491
    %s494 = smul.addr 4, 97
    %s495 = scalar_lea.vmem %s0, %s494
    %v496 = vld [vmem:[%s495] sm:%s3]
    %s497 = scalar_lea.vmem [#allocation0], 776
    %498 = vst [vmem:[%s497] sm:%s3] %v496
    %s499 = smul.addr 4, 96
    %s500 = scalar_lea.vmem %s0, %s499
    %v501 = vld [vmem:[%s500] sm:%s3]
    %s502 = scalar_lea.vmem [#allocation0], 768
    %503 = vst [vmem:[%s502] sm:%s3] %v501
    %s504 = smul.addr 4, 95
    %s505 = scalar_lea.vmem %s0, %s504
    %v506 = vld [vmem:[%s505] sm:%s3]
    %s507 = scalar_lea.vmem [#allocation0], 760
    %508 = vst [vmem:[%s507] sm:%s3] %v506
    %s509 = smul.addr 4, 94
    %s510 = scalar_lea.vmem %s0, %s509
    %v511 = vld [vmem:[%s510] sm:%s3]
    %s512 = scalar_lea.vmem [#allocation0], 752
    %513 = vst [vmem:[%s512] sm:%s3] %v511
    %s514 = smul.addr 4, 93
    %s515 = scalar_lea.vmem %s0, %s514
    %v516 = vld [vmem:[%s515] sm:%s3]
    %s517 = scalar_lea.vmem [#allocation0], 744
    %518 = vst [vmem:[%s517] sm:%s3] %v516
    %s519 = smul.addr 4, 92
    %s520 = scalar_lea.vmem %s0, %s519
    %v521 = vld [vmem:[%s520] sm:%s3]
    %s522 = scalar_lea.vmem [#allocation0], 736
    %523 = vst [vmem:[%s522] sm:%s3] %v521
    %s524 = smul.addr 4, 91
    %s525 = scalar_lea.vmem %s0, %s524
    %v526 = vld [vmem:[%s525] sm:%s3]
    %s527 = scalar_lea.vmem [#allocation0], 728
    %528 = vst [vmem:[%s527] sm:%s3] %v526
    %s529 = smul.addr 4, 90
    %s530 = scalar_lea.vmem %s0, %s529
    %v531 = vld [vmem:[%s530] sm:%s3]
    %s532 = scalar_lea.vmem [#allocation0], 720
    %533 = vst [vmem:[%s532] sm:%s3] %v531
    %s534 = smul.addr 4, 89
    %s535 = scalar_lea.vmem %s0, %s534
    %v536 = vld [vmem:[%s535] sm:%s3]
    %s537 = scalar_lea.vmem [#allocation0], 712
    %538 = vst [vmem:[%s537] sm:%s3] %v536
    %s539 = smul.addr 4, 88
    %s540 = scalar_lea.vmem %s0, %s539
    %v541 = vld [vmem:[%s540] sm:%s3]
    %s542 = scalar_lea.vmem [#allocation0], 704
    %543 = vst [vmem:[%s542] sm:%s3] %v541
    %s544 = smul.addr 4, 87
    %s545 = scalar_lea.vmem %s0, %s544
    %v546 = vld [vmem:[%s545] sm:%s3]
    %s547 = scalar_lea.vmem [#allocation0], 696
    %548 = vst [vmem:[%s547] sm:%s3] %v546
    %s549 = smul.addr 4, 86
    %s550 = scalar_lea.vmem %s0, %s549
    %v551 = vld [vmem:[%s550] sm:%s3]
    %s552 = scalar_lea.vmem [#allocation0], 688
    %553 = vst [vmem:[%s552] sm:%s3] %v551
    %s554 = smul.addr 4, 85
    %s555 = scalar_lea.vmem %s0, %s554
    %v556 = vld [vmem:[%s555] sm:%s3]
    %s557 = scalar_lea.vmem [#allocation0], 680
    %558 = vst [vmem:[%s557] sm:%s3] %v556
    %s559 = smul.addr 4, 84
    %s560 = scalar_lea.vmem %s0, %s559
    %v561 = vld [vmem:[%s560] sm:%s3]
    %s562 = scalar_lea.vmem [#allocation0], 672
    %563 = vst [vmem:[%s562] sm:%s3] %v561
    %s564 = smul.addr 4, 83
    %s565 = scalar_lea.vmem %s0, %s564
    %v566 = vld [vmem:[%s565] sm:%s3]
    %s567 = scalar_lea.vmem [#allocation0], 664
    %568 = vst [vmem:[%s567] sm:%s3] %v566
    %s569 = smul.addr 4, 82
    %s570 = scalar_lea.vmem %s0, %s569
    %v571 = vld [vmem:[%s570] sm:%s3]
    %s572 = scalar_lea.vmem [#allocation0], 656
    %573 = vst [vmem:[%s572] sm:%s3] %v571
    %s574 = smul.addr 4, 81
    %s575 = scalar_lea.vmem %s0, %s574
    %v576 = vld [vmem:[%s575] sm:%s3]
    %s577 = scalar_lea.vmem [#allocation0], 648
    %578 = vst [vmem:[%s577] sm:%s3] %v576
    %s579 = smul.addr 4, 80
    %s580 = scalar_lea.vmem %s0, %s579
    %v581 = vld [vmem:[%s580] sm:%s3]
    %s582 = scalar_lea.vmem [#allocation0], 640
    %583 = vst [vmem:[%s582] sm:%s3] %v581
    %s584 = smul.addr 4, 79
    %s585 = scalar_lea.vmem %s0, %s584
    %v586 = vld [vmem:[%s585] sm:%s3]
    %s587 = scalar_lea.vmem [#allocation0], 632
    %588 = vst [vmem:[%s587] sm:%s3] %v586
    %s589 = smul.addr 4, 78
    %s590 = scalar_lea.vmem %s0, %s589
    %v591 = vld [vmem:[%s590] sm:%s3]
    %s592 = scalar_lea.vmem [#allocation0], 624
    %593 = vst [vmem:[%s592] sm:%s3] %v591
    %s594 = smul.addr 4, 77
    %s595 = scalar_lea.vmem %s0, %s594
    %v596 = vld [vmem:[%s595] sm:%s3]
    %s597 = scalar_lea.vmem [#allocation0], 616
    %598 = vst [vmem:[%s597] sm:%s3] %v596
    %s599 = smul.addr 4, 76
    %s600 = scalar_lea.vmem %s0, %s599
    %v601 = vld [vmem:[%s600] sm:%s3]
    %s602 = scalar_lea.vmem [#allocation0], 608
    %603 = vst [vmem:[%s602] sm:%s3] %v601
    %s604 = smul.addr 4, 75
    %s605 = scalar_lea.vmem %s0, %s604
    %v606 = vld [vmem:[%s605] sm:%s3]
    %s607 = scalar_lea.vmem [#allocation0], 600
    %608 = vst [vmem:[%s607] sm:%s3] %v606
    %s609 = smul.addr 4, 74
    %s610 = scalar_lea.vmem %s0, %s609
    %v611 = vld [vmem:[%s610] sm:%s3]
    %s612 = scalar_lea.vmem [#allocation0], 592
    %613 = vst [vmem:[%s612] sm:%s3] %v611
    %s614 = smul.addr 4, 73
    %s615 = scalar_lea.vmem %s0, %s614
    %v616 = vld [vmem:[%s615] sm:%s3]
    %s617 = scalar_lea.vmem [#allocation0], 584
    %618 = vst [vmem:[%s617] sm:%s3] %v616
    %s619 = smul.addr 4, 72
    %s620 = scalar_lea.vmem %s0, %s619
    %v621 = vld [vmem:[%s620] sm:%s3]
    %s622 = scalar_lea.vmem [#allocation0], 576
    %623 = vst [vmem:[%s622] sm:%s3] %v621
    %s624 = smul.addr 4, 71
    %s625 = scalar_lea.vmem %s0, %s624
    %v626 = vld [vmem:[%s625] sm:%s3]
    %s627 = scalar_lea.vmem [#allocation0], 568
    %628 = vst [vmem:[%s627] sm:%s3] %v626
    %s629 = smul.addr 4, 70
    %s630 = scalar_lea.vmem %s0, %s629
    %v631 = vld [vmem:[%s630] sm:%s3]
    %s632 = scalar_lea.vmem [#allocation0], 560
    %633 = vst [vmem:[%s632] sm:%s3] %v631
    %s634 = smul.addr 4, 69
    %s635 = scalar_lea.vmem %s0, %s634
    %v636 = vld [vmem:[%s635] sm:%s3]
    %s637 = scalar_lea.vmem [#allocation0], 552
    %638 = vst [vmem:[%s637] sm:%s3] %v636
    %s639 = smul.addr 4, 68
    %s640 = scalar_lea.vmem %s0, %s639
    %v641 = vld [vmem:[%s640] sm:%s3]
    %s642 = scalar_lea.vmem [#allocation0], 544
    %643 = vst [vmem:[%s642] sm:%s3] %v641
    %s644 = smul.addr 4, 67
    %s645 = scalar_lea.vmem %s0, %s644
    %v646 = vld [vmem:[%s645] sm:%s3]
    %s647 = scalar_lea.vmem [#allocation0], 536
    %648 = vst [vmem:[%s647] sm:%s3] %v646
    %s649 = smul.addr 4, 66
    %s650 = scalar_lea.vmem %s0, %s649
    %v651 = vld [vmem:[%s650] sm:%s3]
    %s652 = scalar_lea.vmem [#allocation0], 528
    %653 = vst [vmem:[%s652] sm:%s3] %v651
    %s654 = smul.addr 4, 65
    %s655 = scalar_lea.vmem %s0, %s654
    %v656 = vld [vmem:[%s655] sm:%s3]
    %s657 = scalar_lea.vmem [#allocation0], 520
    %658 = vst [vmem:[%s657] sm:%s3] %v656
    %s659 = smul.addr 4, 64
    %s660 = scalar_lea.vmem %s0, %s659
    %v661 = vld [vmem:[%s660] sm:%s3]
    %s662 = scalar_lea.vmem [#allocation0], 512
    %663 = vst [vmem:[%s662] sm:%s3] %v661
    %s664 = smul.addr 4, 63
    %s665 = scalar_lea.vmem %s0, %s664
    %v666 = vld [vmem:[%s665] sm:%s3]
    %s667 = scalar_lea.vmem [#allocation0], 504
    %668 = vst [vmem:[%s667] sm:%s3] %v666
    %s669 = smul.addr 4, 62
    %s670 = scalar_lea.vmem %s0, %s669
    %v671 = vld [vmem:[%s670] sm:%s3]
    %s672 = scalar_lea.vmem [#allocation0], 496
    %673 = vst [vmem:[%s672] sm:%s3] %v671
    %s674 = smul.addr 4, 61
    %s675 = scalar_lea.vmem %s0, %s674
    %v676 = vld [vmem:[%s675] sm:%s3]
    %s677 = scalar_lea.vmem [#allocation0], 488
    %678 = vst [vmem:[%s677] sm:%s3] %v676
    %s679 = smul.addr 4, 60
    %s680 = scalar_lea.vmem %s0, %s679
    %v681 = vld [vmem:[%s680] sm:%s3]
    %s682 = scalar_lea.vmem [#allocation0], 480
    %683 = vst [vmem:[%s682] sm:%s3] %v681
    %s684 = smul.addr 4, 59
    %s685 = scalar_lea.vmem %s0, %s684
    %v686 = vld [vmem:[%s685] sm:%s3]
    %s687 = scalar_lea.vmem [#allocation0], 472
    %688 = vst [vmem:[%s687] sm:%s3] %v686
    %s689 = smul.addr 4, 58
    %s690 = scalar_lea.vmem %s0, %s689
    %v691 = vld [vmem:[%s690] sm:%s3]
    %s692 = scalar_lea.vmem [#allocation0], 464
    %693 = vst [vmem:[%s692] sm:%s3] %v691
    %s694 = smul.addr 4, 57
    %s695 = scalar_lea.vmem %s0, %s694
    %v696 = vld [vmem:[%s695] sm:%s3]
    %s697 = scalar_lea.vmem [#allocation0], 456
    %698 = vst [vmem:[%s697] sm:%s3] %v696
    %s699 = smul.addr 4, 56
    %s700 = scalar_lea.vmem %s0, %s699
    %v701 = vld [vmem:[%s700] sm:%s3]
    %s702 = scalar_lea.vmem [#allocation0], 448
    %703 = vst [vmem:[%s702] sm:%s3] %v701
    %s704 = smul.addr 4, 55
    %s705 = scalar_lea.vmem %s0, %s704
    %v706 = vld [vmem:[%s705] sm:%s3]
    %s707 = scalar_lea.vmem [#allocation0], 440
    %708 = vst [vmem:[%s707] sm:%s3] %v706
    %s709 = smul.addr 4, 54
    %s710 = scalar_lea.vmem %s0, %s709
    %v711 = vld [vmem:[%s710] sm:%s3]
    %s712 = scalar_lea.vmem [#allocation0], 432
    %713 = vst [vmem:[%s712] sm:%s3] %v711
    %s714 = smul.addr 4, 53
    %s715 = scalar_lea.vmem %s0, %s714
    %v716 = vld [vmem:[%s715] sm:%s3]
    %s717 = scalar_lea.vmem [#allocation0], 424
    %718 = vst [vmem:[%s717] sm:%s3] %v716
    %s719 = smul.addr 4, 52
    %s720 = scalar_lea.vmem %s0, %s719
    %v721 = vld [vmem:[%s720] sm:%s3]
    %s722 = scalar_lea.vmem [#allocation0], 416
    %723 = vst [vmem:[%s722] sm:%s3] %v721
    %s724 = smul.addr 4, 51
    %s725 = scalar_lea.vmem %s0, %s724
    %v726 = vld [vmem:[%s725] sm:%s3]
    %s727 = scalar_lea.vmem [#allocation0], 408
    %728 = vst [vmem:[%s727] sm:%s3] %v726
    %s729 = smul.addr 4, 50
    %s730 = scalar_lea.vmem %s0, %s729
    %v731 = vld [vmem:[%s730] sm:%s3]
    %s732 = scalar_lea.vmem [#allocation0], 400
    %733 = vst [vmem:[%s732] sm:%s3] %v731
    %s734 = smul.addr 4, 49
    %s735 = scalar_lea.vmem %s0, %s734
    %v736 = vld [vmem:[%s735] sm:%s3]
    %s737 = scalar_lea.vmem [#allocation0], 392
    %738 = vst [vmem:[%s737] sm:%s3] %v736
    %s739 = smul.addr 4, 48
    %s740 = scalar_lea.vmem %s0, %s739
    %v741 = vld [vmem:[%s740] sm:%s3]
    %s742 = scalar_lea.vmem [#allocation0], 384
    %743 = vst [vmem:[%s742] sm:%s3] %v741
    %s744 = smul.addr 4, 47
    %s745 = scalar_lea.vmem %s0, %s744
    %v746 = vld [vmem:[%s745] sm:%s3]
    %s747 = scalar_lea.vmem [#allocation0], 376
    %748 = vst [vmem:[%s747] sm:%s3] %v746
    %s749 = smul.addr 4, 46
    %s750 = scalar_lea.vmem %s0, %s749
    %v751 = vld [vmem:[%s750] sm:%s3]
    %s752 = scalar_lea.vmem [#allocation0], 368
    %753 = vst [vmem:[%s752] sm:%s3] %v751
    %s754 = smul.addr 4, 45
    %s755 = scalar_lea.vmem %s0, %s754
    %v756 = vld [vmem:[%s755] sm:%s3]
    %s757 = scalar_lea.vmem [#allocation0], 360
    %758 = vst [vmem:[%s757] sm:%s3] %v756
    %s759 = smul.addr 4, 44
    %s760 = scalar_lea.vmem %s0, %s759
    %v761 = vld [vmem:[%s760] sm:%s3]
    %s762 = scalar_lea.vmem [#allocation0], 352
    %763 = vst [vmem:[%s762] sm:%s3] %v761
    %s764 = smul.addr 4, 43
    %s765 = scalar_lea.vmem %s0, %s764
    %v766 = vld [vmem:[%s765] sm:%s3]
    %s767 = scalar_lea.vmem [#allocation0], 344
    %768 = vst [vmem:[%s767] sm:%s3] %v766
    %s769 = smul.addr 4, 42
    %s770 = scalar_lea.vmem %s0, %s769
    %v771 = vld [vmem:[%s770] sm:%s3]
    %s772 = scalar_lea.vmem [#allocation0], 336
    %773 = vst [vmem:[%s772] sm:%s3] %v771
    %s774 = smul.addr 4, 41
    %s775 = scalar_lea.vmem %s0, %s774
    %v776 = vld [vmem:[%s775] sm:%s3]
    %s777 = scalar_lea.vmem [#allocation0], 328
    %778 = vst [vmem:[%s777] sm:%s3] %v776
    %s779 = smul.addr 4, 40
    %s780 = scalar_lea.vmem %s0, %s779
    %v781 = vld [vmem:[%s780] sm:%s3]
    %s782 = scalar_lea.vmem [#allocation0], 320
    %783 = vst [vmem:[%s782] sm:%s3] %v781
    %s784 = smul.addr 4, 39
    %s785 = scalar_lea.vmem %s0, %s784
    %v786 = vld [vmem:[%s785] sm:%s3]
    %s787 = scalar_lea.vmem [#allocation0], 312
    %788 = vst [vmem:[%s787] sm:%s3] %v786
    %s789 = smul.addr 4, 38
    %s790 = scalar_lea.vmem %s0, %s789
    %v791 = vld [vmem:[%s790] sm:%s3]
    %s792 = scalar_lea.vmem [#allocation0], 304
    %793 = vst [vmem:[%s792] sm:%s3] %v791
    %s794 = smul.addr 4, 37
    %s795 = scalar_lea.vmem %s0, %s794
    %v796 = vld [vmem:[%s795] sm:%s3]
    %s797 = scalar_lea.vmem [#allocation0], 296
    %798 = vst [vmem:[%s797] sm:%s3] %v796
    %s799 = smul.addr 4, 36
    %s800 = scalar_lea.vmem %s0, %s799
    %v801 = vld [vmem:[%s800] sm:%s3]
    %s802 = scalar_lea.vmem [#allocation0], 288
    %803 = vst [vmem:[%s802] sm:%s3] %v801
    %s804 = smul.addr 4, 35
    %s805 = scalar_lea.vmem %s0, %s804
    %v806 = vld [vmem:[%s805] sm:%s3]
    %s807 = scalar_lea.vmem [#allocation0], 280
    %808 = vst [vmem:[%s807] sm:%s3] %v806
    %s809 = smul.addr 4, 34
    %s810 = scalar_lea.vmem %s0, %s809
    %v811 = vld [vmem:[%s810] sm:%s3]
    %s812 = scalar_lea.vmem [#allocation0], 272
    %813 = vst [vmem:[%s812] sm:%s3] %v811
    %s814 = smul.addr 4, 33
    %s815 = scalar_lea.vmem %s0, %s814
    %v816 = vld [vmem:[%s815] sm:%s3]
    %s817 = scalar_lea.vmem [#allocation0], 264
    %818 = vst [vmem:[%s817] sm:%s3] %v816
    %s819 = smul.addr 4, 32
    %s820 = scalar_lea.vmem %s0, %s819
    %v821 = vld [vmem:[%s820] sm:%s3]
    %s822 = scalar_lea.vmem [#allocation0], 256
    %823 = vst [vmem:[%s822] sm:%s3] %v821
    %s824 = smul.addr 4, 31
    %s825 = scalar_lea.vmem %s0, %s824
    %v826 = vld [vmem:[%s825] sm:%s3]
    %s827 = scalar_lea.vmem [#allocation0], 248
    %828 = vst [vmem:[%s827] sm:%s3] %v826
    %s829 = smul.addr 4, 30
    %s830 = scalar_lea.vmem %s0, %s829
    %v831 = vld [vmem:[%s830] sm:%s3]
    %s832 = scalar_lea.vmem [#allocation0], 240
    %833 = vst [vmem:[%s832] sm:%s3] %v831
    %s834 = smul.addr 4, 29
    %s835 = scalar_lea.vmem %s0, %s834
    %v836 = vld [vmem:[%s835] sm:%s3]
    %s837 = scalar_lea.vmem [#allocation0], 232
    %838 = vst [vmem:[%s837] sm:%s3] %v836
    %s839 = smul.addr 4, 28
    %s840 = scalar_lea.vmem %s0, %s839
    %v841 = vld [vmem:[%s840] sm:%s3]
    %s842 = scalar_lea.vmem [#allocation0], 224
    %843 = vst [vmem:[%s842] sm:%s3] %v841
    %s844 = smul.addr 4, 27
    %s845 = scalar_lea.vmem %s0, %s844
    %v846 = vld [vmem:[%s845] sm:%s3]
    %s847 = scalar_lea.vmem [#allocation0], 216
    %848 = vst [vmem:[%s847] sm:%s3] %v846
    %s849 = smul.addr 4, 26
    %s850 = scalar_lea.vmem %s0, %s849
    %v851 = vld [vmem:[%s850] sm:%s3]
    %s852 = scalar_lea.vmem [#allocation0], 208
    %853 = vst [vmem:[%s852] sm:%s3] %v851
    %s854 = smul.addr 4, 25
    %s855 = scalar_lea.vmem %s0, %s854
    %v856 = vld [vmem:[%s855] sm:%s3]
    %s857 = scalar_lea.vmem [#allocation0], 200
    %858 = vst [vmem:[%s857] sm:%s3] %v856
    %s859 = smul.addr 4, 24
    %s860 = scalar_lea.vmem %s0, %s859
    %v861 = vld [vmem:[%s860] sm:%s3]
    %s862 = scalar_lea.vmem [#allocation0], 192
    %863 = vst [vmem:[%s862] sm:%s3] %v861
    %s864 = smul.addr 4, 23
    %s865 = scalar_lea.vmem %s0, %s864
    %v866 = vld [vmem:[%s865] sm:%s3]
    %s867 = scalar_lea.vmem [#allocation0], 184
    %868 = vst [vmem:[%s867] sm:%s3] %v866
    %s869 = smul.addr 4, 22
    %s870 = scalar_lea.vmem %s0, %s869
    %v871 = vld [vmem:[%s870] sm:%s3]
    %s872 = scalar_lea.vmem [#allocation0], 176
    %873 = vst [vmem:[%s872] sm:%s3] %v871
    %s874 = smul.addr 4, 21
    %s875 = scalar_lea.vmem %s0, %s874
    %v876 = vld [vmem:[%s875] sm:%s3]
    %s877 = scalar_lea.vmem [#allocation0], 168
    %878 = vst [vmem:[%s877] sm:%s3] %v876
    %s879 = smul.addr 4, 20
    %s880 = scalar_lea.vmem %s0, %s879
    %v881 = vld [vmem:[%s880] sm:%s3]
    %s882 = scalar_lea.vmem [#allocation0], 160
    %883 = vst [vmem:[%s882] sm:%s3] %v881
    %s884 = smul.addr 4, 19
    %s885 = scalar_lea.vmem %s0, %s884
    %v886 = vld [vmem:[%s885] sm:%s3]
    %s887 = scalar_lea.vmem [#allocation0], 152
    %888 = vst [vmem:[%s887] sm:%s3] %v886
    %s889 = smul.addr 4, 18
    %s890 = scalar_lea.vmem %s0, %s889
    %v891 = vld [vmem:[%s890] sm:%s3]
    %s892 = scalar_lea.vmem [#allocation0], 144
    %893 = vst [vmem:[%s892] sm:%s3] %v891
    %s894 = smul.addr 4, 17
    %s895 = scalar_lea.vmem %s0, %s894
    %v896 = vld [vmem:[%s895] sm:%s3]
    %s897 = scalar_lea.vmem [#allocation0], 136
    %898 = vst [vmem:[%s897] sm:%s3] %v896
    %s899 = smul.addr 4, 16
    %s900 = scalar_lea.vmem %s0, %s899
    %v901 = vld [vmem:[%s900] sm:%s3]
    %s902 = scalar_lea.vmem [#allocation0], 128
    %903 = vst [vmem:[%s902] sm:%s3] %v901
    %s904 = smul.addr 4, 15
    %s905 = scalar_lea.vmem %s0, %s904
    %v906 = vld [vmem:[%s905] sm:%s3]
    %s907 = scalar_lea.vmem [#allocation0], 120
    %908 = vst [vmem:[%s907] sm:%s3] %v906
    %s909 = smul.addr 4, 14
    %s910 = scalar_lea.vmem %s0, %s909
    %v911 = vld [vmem:[%s910] sm:%s3]
    %s912 = scalar_lea.vmem [#allocation0], 112
    %913 = vst [vmem:[%s912] sm:%s3] %v911
    %s914 = smul.addr 4, 13
    %s915 = scalar_lea.vmem %s0, %s914
    %v916 = vld [vmem:[%s915] sm:%s3]
    %s917 = scalar_lea.vmem [#allocation0], 104
    %918 = vst [vmem:[%s917] sm:%s3] %v916
    %s919 = smul.addr 4, 12
    %s920 = scalar_lea.vmem %s0, %s919
    %v921 = vld [vmem:[%s920] sm:%s3]
    %s922 = scalar_lea.vmem [#allocation0], 96
    %923 = vst [vmem:[%s922] sm:%s3] %v921
    %s924 = smul.addr 4, 11
    %s925 = scalar_lea.vmem %s0, %s924
    %v926 = vld [vmem:[%s925] sm:%s3]
    %s927 = scalar_lea.vmem [#allocation0], 88
    %928 = vst [vmem:[%s927] sm:%s3] %v926
    %s929 = smul.addr 4, 10
    %s930 = scalar_lea.vmem %s0, %s929
    %v931 = vld [vmem:[%s930] sm:%s3]
    %s932 = scalar_lea.vmem [#allocation0], 80
    %933 = vst [vmem:[%s932] sm:%s3] %v931
    %s934 = smul.addr 4, 9
    %s935 = scalar_lea.vmem %s0, %s934
    %v936 = vld [vmem:[%s935] sm:%s3]
    %s937 = scalar_lea.vmem [#allocation0], 72
    %938 = vst [vmem:[%s937] sm:%s3] %v936
    %s939 = smul.addr 4, 8
    %s940 = scalar_lea.vmem %s0, %s939
    %v941 = vld [vmem:[%s940] sm:%s3]
    %s942 = scalar_lea.vmem [#allocation0], 64
    %943 = vst [vmem:[%s942] sm:%s3] %v941
    %s944 = smul.addr 4, 7
    %s945 = scalar_lea.vmem %s0, %s944
    %v946 = vld [vmem:[%s945] sm:%s3]
    %s947 = scalar_lea.vmem [#allocation0], 56
    %948 = vst [vmem:[%s947] sm:%s3] %v946
    %s949 = smul.addr 4, 6
    %s950 = scalar_lea.vmem %s0, %s949
    %v951 = vld [vmem:[%s950] sm:%s3]
    %s952 = scalar_lea.vmem [#allocation0], 48
    %953 = vst [vmem:[%s952] sm:%s3] %v951
    %s954 = smul.addr 4, 5
    %s955 = scalar_lea.vmem %s0, %s954
    %v956 = vld [vmem:[%s955] sm:%s3]
    %s957 = scalar_lea.vmem [#allocation0], 40
    %958 = vst [vmem:[%s957] sm:%s3] %v956
    %s959 = smul.addr 4, 4
    %s960 = scalar_lea.vmem %s0, %s959
    %v961 = vld [vmem:[%s960] sm:%s3]
    %s962 = scalar_lea.vmem [#allocation0], 32
    %963 = vst [vmem:[%s962] sm:%s3] %v961
    %s964 = smul.addr 4, 3
    %s965 = scalar_lea.vmem %s0, %s964
    %v966 = vld [vmem:[%s965] sm:%s3]
    %s967 = scalar_lea.vmem [#allocation0], 24
    %968 = vst [vmem:[%s967] sm:%s3] %v966
    %s969 = smul.addr 4, 2
    %s970 = scalar_lea.vmem %s0, %s969
    %v971 = vld [vmem:[%s970] sm:%s3]
    %s972 = scalar_lea.vmem [#allocation0], 16
    %973 = vst [vmem:[%s972] sm:%s3] %v971
    %s974 = scalar_lea.vmem %s0, 4
    %v975 = vld [vmem:[%s974] sm:%s3]
    %s976 = scalar_lea.vmem [#allocation0], 8
    %977 = vst [vmem:[%s976] sm:%s3] %v975
    %v978 = vld [vmem:[%s0] sm:%s3]
    %979 = vst [vmem:[#allocation0] sm:%s3] %v978
    %v980 = vld [vmem:[#allocation0] sm:$0xf]
    %981 = vst [vmem:[%s1] sm:$0xf] %v980
    %s982 = scalar_lea.vmem [#allocation0], 8
    %v983 = vld [vmem:[%s982] sm:$0xf]
    %s984 = scalar_lea.vmem %s1, 8
    %985 = vst [vmem:[%s984] sm:$0xf] %v983
    %s986 = scalar_lea.vmem [#allocation0], 16
    %v987 = vld [vmem:[%s986] sm:$0xf]
    %s988 = scalar_lea.vmem %s1, 4
    %989 = vst [vmem:[%s988] sm:$0xf] %v987
    %s990 = scalar_lea.vmem [#allocation0], 24
    %v991 = vld [vmem:[%s990] sm:$0xf]
    %s992 = scalar_lea.vmem %s1, 12
    %993 = vst [vmem:[%s992] sm:$0xf] %v991
    %s994 = scalar_lea.vmem [#allocation0], 32
    %v995 = vld [vmem:[%s994] sm:$0xf]
    %s996 = scalar_lea.vmem %s1, 16
    %997 = vst [vmem:[%s996] sm:$0xf] %v995
    %s998 = scalar_lea.vmem [#allocation0], 40
    %v999 = vld [vmem:[%s998] sm:$0xf]
    %s1000 = scalar_lea.vmem %s1, 24
    %1001 = vst [vmem:[%s1000] sm:$0xf] %v999
    %s1002 = scalar_lea.vmem [#allocation0], 48
    %v1003 = vld [vmem:[%s1002] sm:$0xf]
    %s1004 = scalar_lea.vmem %s1, 20
    %1005 = vst [vmem:[%s1004] sm:$0xf] %v1003
    %s1006 = scalar_lea.vmem [#allocation0], 56
    %v1007 = vld [vmem:[%s1006] sm:$0xf]
    %s1008 = scalar_lea.vmem %s1, 28
    %1009 = vst [vmem:[%s1008] sm:$0xf] %v1007
    %s1010 = scalar_lea.vmem [#allocation0], 64
    %v1011 = vld [vmem:[%s1010] sm:$0xf]
    %s1012 = scalar_lea.vmem %s1, 32
    %1013 = vst [vmem:[%s1012] sm:$0xf] %v1011
    %s1014 = scalar_lea.vmem [#allocation0], 72
    %v1015 = vld [vmem:[%s1014] sm:$0xf]
    %s1016 = scalar_lea.vmem %s1, 40
    %1017 = vst [vmem:[%s1016] sm:$0xf] %v1015
    %s1018 = scalar_lea.vmem [#allocation0], 80
    %v1019 = vld [vmem:[%s1018] sm:$0xf]
    %s1020 = scalar_lea.vmem %s1, 36
    %1021 = vst [vmem:[%s1020] sm:$0xf] %v1019
    %s1022 = scalar_lea.vmem [#allocation0], 88
    %v1023 = vld [vmem:[%s1022] sm:$0xf]
    %s1024 = scalar_lea.vmem %s1, 44
    %1025 = vst [vmem:[%s1024] sm:$0xf] %v1023
    %s1026 = scalar_lea.vmem [#allocation0], 96
    %v1027 = vld [vmem:[%s1026] sm:$0xf]
    %s1028 = scalar_lea.vmem %s1, 48
    %1029 = vst [vmem:[%s1028] sm:$0xf] %v1027
    %s1030 = scalar_lea.vmem [#allocation0], 104
    %v1031 = vld [vmem:[%s1030] sm:$0xf]
    %s1032 = scalar_lea.vmem %s1, 56
    %1033 = vst [vmem:[%s1032] sm:$0xf] %v1031
    %s1034 = scalar_lea.vmem [#allocation0], 112
    %v1035 = vld [vmem:[%s1034] sm:$0xf]
    %s1036 = scalar_lea.vmem %s1, 52
    %1037 = vst [vmem:[%s1036] sm:$0xf] %v1035
    %s1038 = scalar_lea.vmem [#allocation0], 120
    %v1039 = vld [vmem:[%s1038] sm:$0xf]
    %s1040 = scalar_lea.vmem %s1, 60
    %1041 = vst [vmem:[%s1040] sm:$0xf] %v1039
    %s1042 = scalar_lea.vmem [#allocation0], 128
    %v1043 = vld [vmem:[%s1042] sm:$0xf]
    %s1044 = scalar_lea.vmem %s1, 64
    %1045 = vst [vmem:[%s1044] sm:$0xf] %v1043
    %s1046 = scalar_lea.vmem [#allocation0], 136
    %v1047 = vld [vmem:[%s1046] sm:$0xf]
    %s1048 = scalar_lea.vmem %s1, 72
    %1049 = vst [vmem:[%s1048] sm:$0xf] %v1047
    %s1050 = scalar_lea.vmem [#allocation0], 144
    %v1051 = vld [vmem:[%s1050] sm:$0xf]
    %s1052 = scalar_lea.vmem %s1, 68
    %1053 = vst [vmem:[%s1052] sm:$0xf] %v1051
    %s1054 = scalar_lea.vmem [#allocation0], 152
    %v1055 = vld [vmem:[%s1054] sm:$0xf]
    %s1056 = scalar_lea.vmem %s1, 76
    %1057 = vst [vmem:[%s1056] sm:$0xf] %v1055
    %s1058 = scalar_lea.vmem [#allocation0], 160
    %v1059 = vld [vmem:[%s1058] sm:$0xf]
    %s1060 = scalar_lea.vmem %s1, 80
    %1061 = vst [vmem:[%s1060] sm:$0xf] %v1059
    %s1062 = scalar_lea.vmem [#allocation0], 168
    %v1063 = vld [vmem:[%s1062] sm:$0xf]
    %s1064 = scalar_lea.vmem %s1, 88
    %1065 = vst [vmem:[%s1064] sm:$0xf] %v1063
    %s1066 = scalar_lea.vmem [#allocation0], 176
    %v1067 = vld [vmem:[%s1066] sm:$0xf]
    %s1068 = scalar_lea.vmem %s1, 84
    %1069 = vst [vmem:[%s1068] sm:$0xf] %v1067
    %s1070 = scalar_lea.vmem [#allocation0], 184
    %v1071 = vld [vmem:[%s1070] sm:$0xf]
    %s1072 = scalar_lea.vmem %s1, 92
    %1073 = vst [vmem:[%s1072] sm:$0xf] %v1071
    %s1074 = scalar_lea.vmem [#allocation0], 192
    %v1075 = vld [vmem:[%s1074] sm:$0xf]
    %s1076 = scalar_lea.vmem %s1, 96
    %1077 = vst [vmem:[%s1076] sm:$0xf] %v1075
    %s1078 = scalar_lea.vmem [#allocation0], 200
    %v1079 = vld [vmem:[%s1078] sm:$0xf]
    %s1080 = scalar_lea.vmem %s1, 104
    %1081 = vst [vmem:[%s1080] sm:$0xf] %v1079
    %s1082 = scalar_lea.vmem [#allocation0], 208
    %v1083 = vld [vmem:[%s1082] sm:$0xf]
    %s1084 = scalar_lea.vmem %s1, 100
    %1085 = vst [vmem:[%s1084] sm:$0xf] %v1083
    %s1086 = scalar_lea.vmem [#allocation0], 216
    %v1087 = vld [vmem:[%s1086] sm:$0xf]
    %s1088 = scalar_lea.vmem %s1, 108
    %1089 = vst [vmem:[%s1088] sm:$0xf] %v1087
    %s1090 = scalar_lea.vmem [#allocation0], 224
    %v1091 = vld [vmem:[%s1090] sm:$0xf]
    %s1092 = scalar_lea.vmem %s1, 112
    %1093 = vst [vmem:[%s1092] sm:$0xf] %v1091
    %s1094 = scalar_lea.vmem [#allocation0], 232
    %v1095 = vld [vmem:[%s1094] sm:$0xf]
    %s1096 = scalar_lea.vmem %s1, 120
    %1097 = vst [vmem:[%s1096] sm:$0xf] %v1095
    %s1098 = scalar_lea.vmem [#allocation0], 240
    %v1099 = vld [vmem:[%s1098] sm:$0xf]
    %s1100 = scalar_lea.vmem %s1, 116
    %1101 = vst [vmem:[%s1100] sm:$0xf] %v1099
    %s1102 = scalar_lea.vmem [#allocation0], 248
    %v1103 = vld [vmem:[%s1102] sm:$0xf]
    %s1104 = scalar_lea.vmem %s1, 124
    %1105 = vst [vmem:[%s1104] sm:$0xf] %v1103
    %s1106 = scalar_lea.vmem [#allocation0], 256
    %v1107 = vld [vmem:[%s1106] sm:$0xf]
    %s1108 = scalar_lea.vmem %s1, 128
    %1109 = vst [vmem:[%s1108] sm:$0xf] %v1107
    %s1110 = scalar_lea.vmem [#allocation0], 264
    %v1111 = vld [vmem:[%s1110] sm:$0xf]
    %s1112 = scalar_lea.vmem %s1, 136
    %1113 = vst [vmem:[%s1112] sm:$0xf] %v1111
    %s1114 = scalar_lea.vmem [#allocation0], 272
    %v1115 = vld [vmem:[%s1114] sm:$0xf]
    %s1116 = scalar_lea.vmem %s1, 132
    %1117 = vst [vmem:[%s1116] sm:$0xf] %v1115
    %s1118 = scalar_lea.vmem [#allocation0], 280
    %v1119 = vld [vmem:[%s1118] sm:$0xf]
    %s1120 = scalar_lea.vmem %s1, 140
    %1121 = vst [vmem:[%s1120] sm:$0xf] %v1119
    %s1122 = scalar_lea.vmem [#allocation0], 288
    %v1123 = vld [vmem:[%s1122] sm:$0xf]
    %s1124 = scalar_lea.vmem %s1, 144
    %1125 = vst [vmem:[%s1124] sm:$0xf] %v1123
    %s1126 = scalar_lea.vmem [#allocation0], 296
    %v1127 = vld [vmem:[%s1126] sm:$0xf]
    %s1128 = scalar_lea.vmem %s1, 152
    %1129 = vst [vmem:[%s1128] sm:$0xf] %v1127
    %s1130 = scalar_lea.vmem [#allocation0], 304
    %v1131 = vld [vmem:[%s1130] sm:$0xf]
    %s1132 = scalar_lea.vmem %s1, 148
    %1133 = vst [vmem:[%s1132] sm:$0xf] %v1131
    %s1134 = scalar_lea.vmem [#allocation0], 312
    %v1135 = vld [vmem:[%s1134] sm:$0xf]
    %s1136 = scalar_lea.vmem %s1, 156
    %1137 = vst [vmem:[%s1136] sm:$0xf] %v1135
    %s1138 = scalar_lea.vmem [#allocation0], 320
    %v1139 = vld [vmem:[%s1138] sm:$0xf]
    %s1140 = scalar_lea.vmem %s1, 160
    %1141 = vst [vmem:[%s1140] sm:$0xf] %v1139
    %s1142 = scalar_lea.vmem [#allocation0], 328
    %v1143 = vld [vmem:[%s1142] sm:$0xf]
    %s1144 = scalar_lea.vmem %s1, 168
    %1145 = vst [vmem:[%s1144] sm:$0xf] %v1143
    %s1146 = scalar_lea.vmem [#allocation0], 336
    %v1147 = vld [vmem:[%s1146] sm:$0xf]
    %s1148 = scalar_lea.vmem %s1, 164
    %1149 = vst [vmem:[%s1148] sm:$0xf] %v1147
    %s1150 = scalar_lea.vmem [#allocation0], 344
    %v1151 = vld [vmem:[%s1150] sm:$0xf]
    %s1152 = scalar_lea.vmem %s1, 172
    %1153 = vst [vmem:[%s1152] sm:$0xf] %v1151
    %s1154 = scalar_lea.vmem [#allocation0], 352
    %v1155 = vld [vmem:[%s1154] sm:$0xf]
    %s1156 = scalar_lea.vmem %s1, 176
    %1157 = vst [vmem:[%s1156] sm:$0xf] %v1155
    %s1158 = scalar_lea.vmem [#allocation0], 360
    %v1159 = vld [vmem:[%s1158] sm:$0xf]
    %s1160 = scalar_lea.vmem %s1, 184
    %1161 = vst [vmem:[%s1160] sm:$0xf] %v1159
    %s1162 = scalar_lea.vmem [#allocation0], 368
    %v1163 = vld [vmem:[%s1162] sm:$0xf]
    %s1164 = scalar_lea.vmem %s1, 180
    %1165 = vst [vmem:[%s1164] sm:$0xf] %v1163
    %s1166 = scalar_lea.vmem [#allocation0], 376
    %v1167 = vld [vmem:[%s1166] sm:$0xf]
    %s1168 = scalar_lea.vmem %s1, 188
    %1169 = vst [vmem:[%s1168] sm:$0xf] %v1167
    %s1170 = scalar_lea.vmem [#allocation0], 384
    %v1171 = vld [vmem:[%s1170] sm:$0xf]
    %s1172 = scalar_lea.vmem %s1, 192
    %1173 = vst [vmem:[%s1172] sm:$0xf] %v1171
    %s1174 = scalar_lea.vmem [#allocation0], 392
    %v1175 = vld [vmem:[%s1174] sm:$0xf]
    %s1176 = scalar_lea.vmem %s1, 200
    %1177 = vst [vmem:[%s1176] sm:$0xf] %v1175
    %s1178 = scalar_lea.vmem [#allocation0], 400
    %v1179 = vld [vmem:[%s1178] sm:$0xf]
    %s1180 = scalar_lea.vmem %s1, 196
    %1181 = vst [vmem:[%s1180] sm:$0xf] %v1179
    %s1182 = scalar_lea.vmem [#allocation0], 408
    %v1183 = vld [vmem:[%s1182] sm:$0xf]
    %s1184 = scalar_lea.vmem %s1, 204
    %1185 = vst [vmem:[%s1184] sm:$0xf] %v1183
    %s1186 = scalar_lea.vmem [#allocation0], 416
    %v1187 = vld [vmem:[%s1186] sm:$0xf]
    %s1188 = scalar_lea.vmem %s1, 208
    %1189 = vst [vmem:[%s1188] sm:$0xf] %v1187
    %s1190 = scalar_lea.vmem [#allocation0], 424
    %v1191 = vld [vmem:[%s1190] sm:$0xf]
    %s1192 = scalar_lea.vmem %s1, 216
    %1193 = vst [vmem:[%s1192] sm:$0xf] %v1191
    %s1194 = scalar_lea.vmem [#allocation0], 432
    %v1195 = vld [vmem:[%s1194] sm:$0xf]
    %s1196 = scalar_lea.vmem %s1, 212
    %1197 = vst [vmem:[%s1196] sm:$0xf] %v1195
    %s1198 = scalar_lea.vmem [#allocation0], 440
    %v1199 = vld [vmem:[%s1198] sm:$0xf]
    %s1200 = scalar_lea.vmem %s1, 220
    %1201 = vst [vmem:[%s1200] sm:$0xf] %v1199
    %s1202 = scalar_lea.vmem [#allocation0], 448
    %v1203 = vld [vmem:[%s1202] sm:$0xf]
    %s1204 = scalar_lea.vmem %s1, 224
    %1205 = vst [vmem:[%s1204] sm:$0xf] %v1203
    %s1206 = scalar_lea.vmem [#allocation0], 456
    %v1207 = vld [vmem:[%s1206] sm:$0xf]
    %s1208 = scalar_lea.vmem %s1, 232
    %1209 = vst [vmem:[%s1208] sm:$0xf] %v1207
    %s1210 = scalar_lea.vmem [#allocation0], 464
    %v1211 = vld [vmem:[%s1210] sm:$0xf]
    %s1212 = scalar_lea.vmem %s1, 228
    %1213 = vst [vmem:[%s1212] sm:$0xf] %v1211
    %s1214 = scalar_lea.vmem [#allocation0], 472
    %v1215 = vld [vmem:[%s1214] sm:$0xf]
    %s1216 = scalar_lea.vmem %s1, 236
    %1217 = vst [vmem:[%s1216] sm:$0xf] %v1215
    %s1218 = scalar_lea.vmem [#allocation0], 480
    %v1219 = vld [vmem:[%s1218] sm:$0xf]
    %s1220 = scalar_lea.vmem %s1, 240
    %1221 = vst [vmem:[%s1220] sm:$0xf] %v1219
    %s1222 = scalar_lea.vmem [#allocation0], 488
    %v1223 = vld [vmem:[%s1222] sm:$0xf]
    %s1224 = scalar_lea.vmem %s1, 248
    %1225 = vst [vmem:[%s1224] sm:$0xf] %v1223
    %s1226 = scalar_lea.vmem [#allocation0], 496
    %v1227 = vld [vmem:[%s1226] sm:$0xf]
    %s1228 = scalar_lea.vmem %s1, 244
    %1229 = vst [vmem:[%s1228] sm:$0xf] %v1227
    %s1230 = scalar_lea.vmem [#allocation0], 504
    %v1231 = vld [vmem:[%s1230] sm:$0xf]
    %s1232 = scalar_lea.vmem %s1, 252
    %1233 = vst [vmem:[%s1232] sm:$0xf] %v1231
    %s1234 = scalar_lea.vmem [#allocation0], 512
    %v1235 = vld [vmem:[%s1234] sm:$0xf]
    %s1236 = scalar_lea.vmem %s1, 256
    %1237 = vst [vmem:[%s1236] sm:$0xf] %v1235
    %s1238 = scalar_lea.vmem [#allocation0], 520
    %v1239 = vld [vmem:[%s1238] sm:$0xf]
    %s1240 = scalar_lea.vmem %s1, 264
    %1241 = vst [vmem:[%s1240] sm:$0xf] %v1239
    %s1242 = scalar_lea.vmem [#allocation0], 528
    %v1243 = vld [vmem:[%s1242] sm:$0xf]
    %s1244 = scalar_lea.vmem %s1, 260
    %1245 = vst [vmem:[%s1244] sm:$0xf] %v1243
    %s1246 = scalar_lea.vmem [#allocation0], 536
    %v1247 = vld [vmem:[%s1246] sm:$0xf]
    %s1248 = scalar_lea.vmem %s1, 268
    %1249 = vst [vmem:[%s1248] sm:$0xf] %v1247
    %s1250 = scalar_lea.vmem [#allocation0], 544
    %v1251 = vld [vmem:[%s1250] sm:$0xf]
    %s1252 = scalar_lea.vmem %s1, 272
    %1253 = vst [vmem:[%s1252] sm:$0xf] %v1251
    %s1254 = scalar_lea.vmem [#allocation0], 552
    %v1255 = vld [vmem:[%s1254] sm:$0xf]
    %s1256 = scalar_lea.vmem %s1, 280
    %1257 = vst [vmem:[%s1256] sm:$0xf] %v1255
    %s1258 = scalar_lea.vmem [#allocation0], 560
    %v1259 = vld [vmem:[%s1258] sm:$0xf]
    %s1260 = scalar_lea.vmem %s1, 276
    %1261 = vst [vmem:[%s1260] sm:$0xf] %v1259
    %s1262 = scalar_lea.vmem [#allocation0], 568
    %v1263 = vld [vmem:[%s1262] sm:$0xf]
    %s1264 = scalar_lea.vmem %s1, 284
    %1265 = vst [vmem:[%s1264] sm:$0xf] %v1263
    %s1266 = scalar_lea.vmem [#allocation0], 576
    %v1267 = vld [vmem:[%s1266] sm:$0xf]
    %s1268 = scalar_lea.vmem %s1, 288
    %1269 = vst [vmem:[%s1268] sm:$0xf] %v1267
    %s1270 = scalar_lea.vmem [#allocation0], 584
    %v1271 = vld [vmem:[%s1270] sm:$0xf]
    %s1272 = scalar_lea.vmem %s1, 296
    %1273 = vst [vmem:[%s1272] sm:$0xf] %v1271
    %s1274 = scalar_lea.vmem [#allocation0], 592
    %v1275 = vld [vmem:[%s1274] sm:$0xf]
    %s1276 = scalar_lea.vmem %s1, 292
    %1277 = vst [vmem:[%s1276] sm:$0xf] %v1275
    %s1278 = scalar_lea.vmem [#allocation0], 600
    %v1279 = vld [vmem:[%s1278] sm:$0xf]
    %s1280 = scalar_lea.vmem %s1, 300
    %1281 = vst [vmem:[%s1280] sm:$0xf] %v1279
    %s1282 = scalar_lea.vmem [#allocation0], 608
    %v1283 = vld [vmem:[%s1282] sm:$0xf]
    %s1284 = scalar_lea.vmem %s1, 304
    %1285 = vst [vmem:[%s1284] sm:$0xf] %v1283
    %s1286 = scalar_lea.vmem [#allocation0], 616
    %v1287 = vld [vmem:[%s1286] sm:$0xf]
    %s1288 = scalar_lea.vmem %s1, 312
    %1289 = vst [vmem:[%s1288] sm:$0xf] %v1287
    %s1290 = scalar_lea.vmem [#allocation0], 624
    %v1291 = vld [vmem:[%s1290] sm:$0xf]
    %s1292 = scalar_lea.vmem %s1, 308
    %1293 = vst [vmem:[%s1292] sm:$0xf] %v1291
    %s1294 = scalar_lea.vmem [#allocation0], 632
    %v1295 = vld [vmem:[%s1294] sm:$0xf]
    %s1296 = scalar_lea.vmem %s1, 316
    %1297 = vst [vmem:[%s1296] sm:$0xf] %v1295
    %s1298 = scalar_lea.vmem [#allocation0], 640
    %v1299 = vld [vmem:[%s1298] sm:$0xf]
    %s1300 = scalar_lea.vmem %s1, 320
    %1301 = vst [vmem:[%s1300] sm:$0xf] %v1299
    %s1302 = scalar_lea.vmem [#allocation0], 648
    %v1303 = vld [vmem:[%s1302] sm:$0xf]
    %s1304 = scalar_lea.vmem %s1, 328
    %1305 = vst [vmem:[%s1304] sm:$0xf] %v1303
    %s1306 = scalar_lea.vmem [#allocation0], 656
    %v1307 = vld [vmem:[%s1306] sm:$0xf]
    %s1308 = scalar_lea.vmem %s1, 324
    %1309 = vst [vmem:[%s1308] sm:$0xf] %v1307
    %s1310 = scalar_lea.vmem [#allocation0], 664
    %v1311 = vld [vmem:[%s1310] sm:$0xf]
    %s1312 = scalar_lea.vmem %s1, 332
    %1313 = vst [vmem:[%s1312] sm:$0xf] %v1311
    %s1314 = scalar_lea.vmem [#allocation0], 672
    %v1315 = vld [vmem:[%s1314] sm:$0xf]
    %s1316 = scalar_lea.vmem %s1, 336
    %1317 = vst [vmem:[%s1316] sm:$0xf] %v1315
    %s1318 = scalar_lea.vmem [#allocation0], 680
    %v1319 = vld [vmem:[%s1318] sm:$0xf]
    %s1320 = scalar_lea.vmem %s1, 344
    %1321 = vst [vmem:[%s1320] sm:$0xf] %v1319
    %s1322 = scalar_lea.vmem [#allocation0], 688
    %v1323 = vld [vmem:[%s1322] sm:$0xf]
    %s1324 = scalar_lea.vmem %s1, 340
    %1325 = vst [vmem:[%s1324] sm:$0xf] %v1323
    %s1326 = scalar_lea.vmem [#allocation0], 696
    %v1327 = vld [vmem:[%s1326] sm:$0xf]
    %s1328 = scalar_lea.vmem %s1, 348
    %1329 = vst [vmem:[%s1328] sm:$0xf] %v1327
    %s1330 = scalar_lea.vmem [#allocation0], 704
    %v1331 = vld [vmem:[%s1330] sm:$0xf]
    %s1332 = scalar_lea.vmem %s1, 352
    %1333 = vst [vmem:[%s1332] sm:$0xf] %v1331
    %s1334 = scalar_lea.vmem [#allocation0], 712
    %v1335 = vld [vmem:[%s1334] sm:$0xf]
    %s1336 = scalar_lea.vmem %s1, 360
    %1337 = vst [vmem:[%s1336] sm:$0xf] %v1335
    %s1338 = scalar_lea.vmem [#allocation0], 720
    %v1339 = vld [vmem:[%s1338] sm:$0xf]
    %s1340 = scalar_lea.vmem %s1, 356
    %1341 = vst [vmem:[%s1340] sm:$0xf] %v1339
    %s1342 = scalar_lea.vmem [#allocation0], 728
    %v1343 = vld [vmem:[%s1342] sm:$0xf]
    %s1344 = scalar_lea.vmem %s1, 364
    %1345 = vst [vmem:[%s1344] sm:$0xf] %v1343
    %s1346 = scalar_lea.vmem [#allocation0], 736
    %v1347 = vld [vmem:[%s1346] sm:$0xf]
    %s1348 = scalar_lea.vmem %s1, 368
    %1349 = vst [vmem:[%s1348] sm:$0xf] %v1347
    %s1350 = scalar_lea.vmem [#allocation0], 744
    %v1351 = vld [vmem:[%s1350] sm:$0xf]
    %s1352 = scalar_lea.vmem %s1, 376
    %1353 = vst [vmem:[%s1352] sm:$0xf] %v1351
    %s1354 = scalar_lea.vmem [#allocation0], 752
    %v1355 = vld [vmem:[%s1354] sm:$0xf]
    %s1356 = scalar_lea.vmem %s1, 372
    %1357 = vst [vmem:[%s1356] sm:$0xf] %v1355
    %s1358 = scalar_lea.vmem [#allocation0], 760
    %v1359 = vld [vmem:[%s1358] sm:$0xf]
    %s1360 = scalar_lea.vmem %s1, 380
    %1361 = vst [vmem:[%s1360] sm:$0xf] %v1359
    %s1362 = scalar_lea.vmem [#allocation0], 768
    %v1363 = vld [vmem:[%s1362] sm:$0xf]
    %s1364 = scalar_lea.vmem %s1, 384
    %1365 = vst [vmem:[%s1364] sm:$0xf] %v1363
    %s1366 = scalar_lea.vmem [#allocation0], 776
    %v1367 = vld [vmem:[%s1366] sm:$0xf]
    %s1368 = scalar_lea.vmem %s1, 392
    %1369 = vst [vmem:[%s1368] sm:$0xf] %v1367
    %s1370 = scalar_lea.vmem [#allocation0], 784
    %v1371 = vld [vmem:[%s1370] sm:$0xf]
    %s1372 = scalar_lea.vmem %s1, 388
    %1373 = vst [vmem:[%s1372] sm:$0xf] %v1371
    %s1374 = scalar_lea.vmem [#allocation0], 792
    %v1375 = vld [vmem:[%s1374] sm:$0xf]
    %s1376 = scalar_lea.vmem %s1, 396
    %1377 = vst [vmem:[%s1376] sm:$0xf] %v1375
    %s1378 = scalar_lea.vmem [#allocation0], 800
    %v1379 = vld [vmem:[%s1378] sm:$0xf]
    %s1380 = scalar_lea.vmem %s1, 400
    %1381 = vst [vmem:[%s1380] sm:$0xf] %v1379
    %s1382 = scalar_lea.vmem [#allocation0], 808
    %v1383 = vld [vmem:[%s1382] sm:$0xf]
    %s1384 = scalar_lea.vmem %s1, 408
    %1385 = vst [vmem:[%s1384] sm:$0xf] %v1383
    %s1386 = scalar_lea.vmem [#allocation0], 816
    %v1387 = vld [vmem:[%s1386] sm:$0xf]
    %s1388 = scalar_lea.vmem %s1, 404
    %1389 = vst [vmem:[%s1388] sm:$0xf] %v1387
    %s1390 = scalar_lea.vmem [#allocation0], 824
    %v1391 = vld [vmem:[%s1390] sm:$0xf]
    %s1392 = scalar_lea.vmem %s1, 412
    %1393 = vst [vmem:[%s1392] sm:$0xf] %v1391
    %s1394 = scalar_lea.vmem [#allocation0], 832
    %v1395 = vld [vmem:[%s1394] sm:$0xf]
    %s1396 = scalar_lea.vmem %s1, 416
    %1397 = vst [vmem:[%s1396] sm:$0xf] %v1395
    %s1398 = scalar_lea.vmem [#allocation0], 840
    %v1399 = vld [vmem:[%s1398] sm:$0xf]
    %s1400 = scalar_lea.vmem %s1, 424
    %1401 = vst [vmem:[%s1400] sm:$0xf] %v1399
    %s1402 = scalar_lea.vmem [#allocation0], 848
    %v1403 = vld [vmem:[%s1402] sm:$0xf]
    %s1404 = scalar_lea.vmem %s1, 420
    %1405 = vst [vmem:[%s1404] sm:$0xf] %v1403
    %s1406 = scalar_lea.vmem [#allocation0], 856
    %v1407 = vld [vmem:[%s1406] sm:$0xf]
    %s1408 = scalar_lea.vmem %s1, 428
    %1409 = vst [vmem:[%s1408] sm:$0xf] %v1407
    %s1410 = scalar_lea.vmem [#allocation0], 864
    %v1411 = vld [vmem:[%s1410] sm:$0xf]
    %s1412 = scalar_lea.vmem %s1, 432
    %1413 = vst [vmem:[%s1412] sm:$0xf] %v1411
    %s1414 = scalar_lea.vmem [#allocation0], 872
    %v1415 = vld [vmem:[%s1414] sm:$0xf]
    %s1416 = scalar_lea.vmem %s1, 440
    %1417 = vst [vmem:[%s1416] sm:$0xf] %v1415
    %s1418 = scalar_lea.vmem [#allocation0], 880
    %v1419 = vld [vmem:[%s1418] sm:$0xf]
    %s1420 = scalar_lea.vmem %s1, 436
    %1421 = vst [vmem:[%s1420] sm:$0xf] %v1419
    %s1422 = scalar_lea.vmem [#allocation0], 888
    %v1423 = vld [vmem:[%s1422] sm:$0xf]
    %s1424 = scalar_lea.vmem %s1, 444
    %1425 = vst [vmem:[%s1424] sm:$0xf] %v1423
    %s1426 = scalar_lea.vmem [#allocation0], 896
    %v1427 = vld [vmem:[%s1426] sm:$0xf]
    %s1428 = scalar_lea.vmem %s1, 448
    %1429 = vst [vmem:[%s1428] sm:$0xf] %v1427
    %s1430 = scalar_lea.vmem [#allocation0], 904
    %v1431 = vld [vmem:[%s1430] sm:$0xf]
    %s1432 = scalar_lea.vmem %s1, 456
    %1433 = vst [vmem:[%s1432] sm:$0xf] %v1431
    %s1434 = scalar_lea.vmem [#allocation0], 912
    %v1435 = vld [vmem:[%s1434] sm:$0xf]
    %s1436 = scalar_lea.vmem %s1, 452
    %1437 = vst [vmem:[%s1436] sm:$0xf] %v1435
    %s1438 = scalar_lea.vmem [#allocation0], 920
    %v1439 = vld [vmem:[%s1438] sm:$0xf]
    %s1440 = scalar_lea.vmem %s1, 460
    %1441 = vst [vmem:[%s1440] sm:$0xf] %v1439
    %s1442 = scalar_lea.vmem [#allocation0], 928
    %v1443 = vld [vmem:[%s1442] sm:$0xf]
    %s1444 = scalar_lea.vmem %s1, 464
    %1445 = vst [vmem:[%s1444] sm:$0xf] %v1443
    %s1446 = scalar_lea.vmem [#allocation0], 936
    %v1447 = vld [vmem:[%s1446] sm:$0xf]
    %s1448 = scalar_lea.vmem %s1, 472
    %1449 = vst [vmem:[%s1448] sm:$0xf] %v1447
    %s1450 = scalar_lea.vmem [#allocation0], 944
    %v1451 = vld [vmem:[%s1450] sm:$0xf]
    %s1452 = scalar_lea.vmem %s1, 468
    %1453 = vst [vmem:[%s1452] sm:$0xf] %v1451
    %s1454 = scalar_lea.vmem [#allocation0], 952
    %v1455 = vld [vmem:[%s1454] sm:$0xf]
    %s1456 = scalar_lea.vmem %s1, 476
    %1457 = vst [vmem:[%s1456] sm:$0xf] %v1455
    %s1458 = scalar_lea.vmem [#allocation0], 960
    %v1459 = vld [vmem:[%s1458] sm:$0xf]
    %s1460 = scalar_lea.vmem %s1, 480
    %1461 = vst [vmem:[%s1460] sm:$0xf] %v1459
    %s1462 = scalar_lea.vmem [#allocation0], 968
    %v1463 = vld [vmem:[%s1462] sm:$0xf]
    %s1464 = scalar_lea.vmem %s1, 488
    %1465 = vst [vmem:[%s1464] sm:$0xf] %v1463
    %s1466 = scalar_lea.vmem [#allocation0], 976
    %v1467 = vld [vmem:[%s1466] sm:$0xf]
    %s1468 = scalar_lea.vmem %s1, 484
    %1469 = vst [vmem:[%s1468] sm:$0xf] %v1467
    %s1470 = scalar_lea.vmem [#allocation0], 984
    %v1471 = vld [vmem:[%s1470] sm:$0xf]
    %s1472 = scalar_lea.vmem %s1, 492
    %1473 = vst [vmem:[%s1472] sm:$0xf] %v1471
    %s1474 = scalar_lea.vmem [#allocation0], 992
    %v1475 = vld [vmem:[%s1474] sm:$0xf]
    %s1476 = scalar_lea.vmem %s1, 496
    %1477 = vst [vmem:[%s1476] sm:$0xf] %v1475
    %s1478 = scalar_lea.vmem [#allocation0], 1000
    %v1479 = vld [vmem:[%s1478] sm:$0xf]
    %s1480 = scalar_lea.vmem %s1, 504
    %1481 = vst [vmem:[%s1480] sm:$0xf] %v1479
    %s1482 = scalar_lea.vmem [#allocation0], 1008
    %v1483 = vld [vmem:[%s1482] sm:$0xf]
    %s1484 = scalar_lea.vmem %s1, 500
    %1485 = vst [vmem:[%s1484] sm:$0xf] %v1483
    %s1486 = scalar_lea.vmem [#allocation0], 1016
    %v1487 = vld [vmem:[%s1486] sm:$0xf]
    %s1488 = scalar_lea.vmem %s1, 508
    %1489 = vst [vmem:[%s1488] sm:$0xf] %v1487
    %s1490 = scalar_lea.vmem [#allocation0], 1024
    %v1491 = vld [vmem:[%s1490] sm:$0xf]
    %s1492 = scalar_lea.vmem %s1, 512
    %1493 = vst [vmem:[%s1492] sm:$0xf] %v1491
    %s1494 = scalar_lea.vmem [#allocation0], 1032
    %v1495 = vld [vmem:[%s1494] sm:$0xf]
    %s1496 = scalar_lea.vmem %s1, 520
    %1497 = vst [vmem:[%s1496] sm:$0xf] %v1495
    %s1498 = scalar_lea.vmem [#allocation0], 1040
    %v1499 = vld [vmem:[%s1498] sm:$0xf]
    %s1500 = scalar_lea.vmem %s1, 516
    %1501 = vst [vmem:[%s1500] sm:$0xf] %v1499
    %s1502 = scalar_lea.vmem [#allocation0], 1048
    %v1503 = vld [vmem:[%s1502] sm:$0xf]
    %s1504 = scalar_lea.vmem %s1, 524
    %1505 = vst [vmem:[%s1504] sm:$0xf] %v1503
    %s1506 = scalar_lea.vmem [#allocation0], 1056
    %v1507 = vld [vmem:[%s1506] sm:$0xf]
    %s1508 = scalar_lea.vmem %s1, 528
    %1509 = vst [vmem:[%s1508] sm:$0xf] %v1507
    %s1510 = scalar_lea.vmem [#allocation0], 1064
    %v1511 = vld [vmem:[%s1510] sm:$0xf]
    %s1512 = scalar_lea.vmem %s1, 536
    %1513 = vst [vmem:[%s1512] sm:$0xf] %v1511
    %s1514 = scalar_lea.vmem [#allocation0], 1072
    %v1515 = vld [vmem:[%s1514] sm:$0xf]
    %s1516 = scalar_lea.vmem %s1, 532
    %1517 = vst [vmem:[%s1516] sm:$0xf] %v1515
    %s1518 = scalar_lea.vmem [#allocation0], 1080
    %v1519 = vld [vmem:[%s1518] sm:$0xf]
    %s1520 = scalar_lea.vmem %s1, 540
    %1521 = vst [vmem:[%s1520] sm:$0xf] %v1519
    %s1522 = scalar_lea.vmem [#allocation0], 1088
    %v1523 = vld [vmem:[%s1522] sm:$0xf]
    %s1524 = scalar_lea.vmem %s1, 544
    %1525 = vst [vmem:[%s1524] sm:$0xf] %v1523
    %s1526 = scalar_lea.vmem [#allocation0], 1096
    %v1527 = vld [vmem:[%s1526] sm:$0xf]
    %s1528 = scalar_lea.vmem %s1, 552
    %1529 = vst [vmem:[%s1528] sm:$0xf] %v1527
    %s1530 = scalar_lea.vmem [#allocation0], 1104
    %v1531 = vld [vmem:[%s1530] sm:$0xf]
    %s1532 = scalar_lea.vmem %s1, 548
    %1533 = vst [vmem:[%s1532] sm:$0xf] %v1531
    %s1534 = scalar_lea.vmem [#allocation0], 1112
    %v1535 = vld [vmem:[%s1534] sm:$0xf]
    %s1536 = scalar_lea.vmem %s1, 556
    %1537 = vst [vmem:[%s1536] sm:$0xf] %v1535
    %s1538 = scalar_lea.vmem [#allocation0], 1120
    %v1539 = vld [vmem:[%s1538] sm:$0xf]
    %s1540 = scalar_lea.vmem %s1, 560
    %1541 = vst [vmem:[%s1540] sm:$0xf] %v1539
    %s1542 = scalar_lea.vmem [#allocation0], 1128
    %v1543 = vld [vmem:[%s1542] sm:$0xf]
    %s1544 = scalar_lea.vmem %s1, 568
    %1545 = vst [vmem:[%s1544] sm:$0xf] %v1543
    %s1546 = scalar_lea.vmem [#allocation0], 1136
    %v1547 = vld [vmem:[%s1546] sm:$0xf]
    %s1548 = scalar_lea.vmem %s1, 564
    %1549 = vst [vmem:[%s1548] sm:$0xf] %v1547
    %s1550 = scalar_lea.vmem [#allocation0], 1144
    %v1551 = vld [vmem:[%s1550] sm:$0xf]
    %s1552 = scalar_lea.vmem %s1, 572
    %1553 = vst [vmem:[%s1552] sm:$0xf] %v1551
    %s1554 = scalar_lea.vmem [#allocation0], 1152
    %v1555 = vld [vmem:[%s1554] sm:$0xf]
    %s1556 = scalar_lea.vmem %s1, 576
    %1557 = vst [vmem:[%s1556] sm:$0xf] %v1555
    %s1558 = scalar_lea.vmem [#allocation0], 1160
    %v1559 = vld [vmem:[%s1558] sm:$0xf]
    %s1560 = scalar_lea.vmem %s1, 584
    %1561 = vst [vmem:[%s1560] sm:$0xf] %v1559
    %s1562 = scalar_lea.vmem [#allocation0], 1168
    %v1563 = vld [vmem:[%s1562] sm:$0xf]
    %s1564 = scalar_lea.vmem %s1, 580
    %1565 = vst [vmem:[%s1564] sm:$0xf] %v1563
    %s1566 = scalar_lea.vmem [#allocation0], 1176
    %v1567 = vld [vmem:[%s1566] sm:$0xf]
    %s1568 = scalar_lea.vmem %s1, 588
    %1569 = vst [vmem:[%s1568] sm:$0xf] %v1567
    %s1570 = scalar_lea.vmem [#allocation0], 1184
    %v1571 = vld [vmem:[%s1570] sm:$0xf]
    %s1572 = scalar_lea.vmem %s1, 592
    %1573 = vst [vmem:[%s1572] sm:$0xf] %v1571
    %s1574 = scalar_lea.vmem [#allocation0], 1192
    %v1575 = vld [vmem:[%s1574] sm:$0xf]
    %s1576 = scalar_lea.vmem %s1, 600
    %1577 = vst [vmem:[%s1576] sm:$0xf] %v1575
    %s1578 = scalar_lea.vmem [#allocation0], 1200
    %v1579 = vld [vmem:[%s1578] sm:$0xf]
    %s1580 = scalar_lea.vmem %s1, 596
    %1581 = vst [vmem:[%s1580] sm:$0xf] %v1579
    %s1582 = scalar_lea.vmem [#allocation0], 1208
    %v1583 = vld [vmem:[%s1582] sm:$0xf]
    %s1584 = scalar_lea.vmem %s1, 604
    %1585 = vst [vmem:[%s1584] sm:$0xf] %v1583
    %s1586 = scalar_lea.vmem [#allocation0], 1216
    %v1587 = vld [vmem:[%s1586] sm:$0xf]
    %s1588 = scalar_lea.vmem %s1, 608
    %1589 = vst [vmem:[%s1588] sm:$0xf] %v1587
    %s1590 = scalar_lea.vmem [#allocation0], 1224
    %v1591 = vld [vmem:[%s1590] sm:$0xf]
    %s1592 = scalar_lea.vmem %s1, 616
    %1593 = vst [vmem:[%s1592] sm:$0xf] %v1591
    %s1594 = scalar_lea.vmem [#allocation0], 1232
    %v1595 = vld [vmem:[%s1594] sm:$0xf]
    %s1596 = scalar_lea.vmem %s1, 612
    %1597 = vst [vmem:[%s1596] sm:$0xf] %v1595
    %s1598 = scalar_lea.vmem [#allocation0], 1240
    %v1599 = vld [vmem:[%s1598] sm:$0xf]
    %s1600 = scalar_lea.vmem %s1, 620
    %1601 = vst [vmem:[%s1600] sm:$0xf] %v1599
    %s1602 = scalar_lea.vmem [#allocation0], 1248
    %v1603 = vld [vmem:[%s1602] sm:$0xf]
    %s1604 = scalar_lea.vmem %s1, 624
    %1605 = vst [vmem:[%s1604] sm:$0xf] %v1603
    %s1606 = scalar_lea.vmem [#allocation0], 1256
    %v1607 = vld [vmem:[%s1606] sm:$0xf]
    %s1608 = scalar_lea.vmem %s1, 632
    %1609 = vst [vmem:[%s1608] sm:$0xf] %v1607
    %s1610 = scalar_lea.vmem [#allocation0], 1264
    %v1611 = vld [vmem:[%s1610] sm:$0xf]
    %s1612 = scalar_lea.vmem %s1, 628
    %1613 = vst [vmem:[%s1612] sm:$0xf] %v1611
    %s1614 = scalar_lea.vmem [#allocation0], 1272
    %v1615 = vld [vmem:[%s1614] sm:$0xf]
    %s1616 = scalar_lea.vmem %s1, 636
    %1617 = vst [vmem:[%s1616] sm:$0xf] %v1615
    %s1618 = scalar_lea.vmem [#allocation0], 1280
    %v1619 = vld [vmem:[%s1618] sm:$0xf]
    %s1620 = scalar_lea.vmem %s1, 640
    %1621 = vst [vmem:[%s1620] sm:$0xf] %v1619
    %s1622 = scalar_lea.vmem [#allocation0], 1288
    %v1623 = vld [vmem:[%s1622] sm:$0xf]
    %s1624 = scalar_lea.vmem %s1, 648
    %1625 = vst [vmem:[%s1624] sm:$0xf] %v1623
    %s1626 = scalar_lea.vmem [#allocation0], 1296
    %v1627 = vld [vmem:[%s1626] sm:$0xf]
    %s1628 = scalar_lea.vmem %s1, 644
    %1629 = vst [vmem:[%s1628] sm:$0xf] %v1627
    %s1630 = scalar_lea.vmem [#allocation0], 1304
    %v1631 = vld [vmem:[%s1630] sm:$0xf]
    %s1632 = scalar_lea.vmem %s1, 652
    %1633 = vst [vmem:[%s1632] sm:$0xf] %v1631
    %s1634 = scalar_lea.vmem [#allocation0], 1312
    %v1635 = vld [vmem:[%s1634] sm:$0xf]
    %s1636 = scalar_lea.vmem %s1, 656
    %1637 = vst [vmem:[%s1636] sm:$0xf] %v1635
    %s1638 = scalar_lea.vmem [#allocation0], 1320
    %v1639 = vld [vmem:[%s1638] sm:$0xf]
    %s1640 = scalar_lea.vmem %s1, 664
    %1641 = vst [vmem:[%s1640] sm:$0xf] %v1639
    %s1642 = scalar_lea.vmem [#allocation0], 1328
    %v1643 = vld [vmem:[%s1642] sm:$0xf]
    %s1644 = scalar_lea.vmem %s1, 660
    %1645 = vst [vmem:[%s1644] sm:$0xf] %v1643
    %s1646 = scalar_lea.vmem [#allocation0], 1336
    %v1647 = vld [vmem:[%s1646] sm:$0xf]
    %s1648 = scalar_lea.vmem %s1, 668
    %1649 = vst [vmem:[%s1648] sm:$0xf] %v1647
    %s1650 = scalar_lea.vmem [#allocation0], 1344
    %v1651 = vld [vmem:[%s1650] sm:$0xf]
    %s1652 = scalar_lea.vmem %s1, 672
    %1653 = vst [vmem:[%s1652] sm:$0xf] %v1651
    %s1654 = scalar_lea.vmem [#allocation0], 1352
    %v1655 = vld [vmem:[%s1654] sm:$0xf]
    %s1656 = scalar_lea.vmem %s1, 680
    %1657 = vst [vmem:[%s1656] sm:$0xf] %v1655
    %s1658 = scalar_lea.vmem [#allocation0], 1360
    %v1659 = vld [vmem:[%s1658] sm:$0xf]
    %s1660 = scalar_lea.vmem %s1, 676
    %1661 = vst [vmem:[%s1660] sm:$0xf] %v1659
    %s1662 = scalar_lea.vmem [#allocation0], 1368
    %v1663 = vld [vmem:[%s1662] sm:$0xf]
    %s1664 = scalar_lea.vmem %s1, 684
    %1665 = vst [vmem:[%s1664] sm:$0xf] %v1663
    %s1666 = scalar_lea.vmem [#allocation0], 1376
    %v1667 = vld [vmem:[%s1666] sm:$0xf]
    %s1668 = scalar_lea.vmem %s1, 688
    %1669 = vst [vmem:[%s1668] sm:$0xf] %v1667
    %s1670 = scalar_lea.vmem [#allocation0], 1384
    %v1671 = vld [vmem:[%s1670] sm:$0xf]
    %s1672 = scalar_lea.vmem %s1, 696
    %1673 = vst [vmem:[%s1672] sm:$0xf] %v1671
    %s1674 = scalar_lea.vmem [#allocation0], 1392
    %v1675 = vld [vmem:[%s1674] sm:$0xf]
    %s1676 = scalar_lea.vmem %s1, 692
    %1677 = vst [vmem:[%s1676] sm:$0xf] %v1675
    %s1678 = scalar_lea.vmem [#allocation0], 1400
    %v1679 = vld [vmem:[%s1678] sm:$0xf]
    %s1680 = scalar_lea.vmem %s1, 700
    %1681 = vst [vmem:[%s1680] sm:$0xf] %v1679
    %s1682 = scalar_lea.vmem [#allocation0], 1408
    %v1683 = vld [vmem:[%s1682] sm:$0xf]
    %s1684 = scalar_lea.vmem %s1, 704
    %1685 = vst [vmem:[%s1684] sm:$0xf] %v1683
    %s1686 = scalar_lea.vmem [#allocation0], 1416
    %v1687 = vld [vmem:[%s1686] sm:$0xf]
    %s1688 = scalar_lea.vmem %s1, 712
    %1689 = vst [vmem:[%s1688] sm:$0xf] %v1687
    %s1690 = scalar_lea.vmem [#allocation0], 1424
    %v1691 = vld [vmem:[%s1690] sm:$0xf]
    %s1692 = scalar_lea.vmem %s1, 708
    %1693 = vst [vmem:[%s1692] sm:$0xf] %v1691
    %s1694 = scalar_lea.vmem [#allocation0], 1432
    %v1695 = vld [vmem:[%s1694] sm:$0xf]
    %s1696 = scalar_lea.vmem %s1, 716
    %1697 = vst [vmem:[%s1696] sm:$0xf] %v1695
    %s1698 = scalar_lea.vmem [#allocation0], 1440
    %v1699 = vld [vmem:[%s1698] sm:$0xf]
    %s1700 = scalar_lea.vmem %s1, 720
    %1701 = vst [vmem:[%s1700] sm:$0xf] %v1699
    %s1702 = scalar_lea.vmem [#allocation0], 1448
    %v1703 = vld [vmem:[%s1702] sm:$0xf]
    %s1704 = scalar_lea.vmem %s1, 728
    %1705 = vst [vmem:[%s1704] sm:$0xf] %v1703
    %s1706 = scalar_lea.vmem [#allocation0], 1456
    %v1707 = vld [vmem:[%s1706] sm:$0xf]
    %s1708 = scalar_lea.vmem %s1, 724
    %1709 = vst [vmem:[%s1708] sm:$0xf] %v1707
    %s1710 = scalar_lea.vmem [#allocation0], 1464
    %v1711 = vld [vmem:[%s1710] sm:$0xf]
    %s1712 = scalar_lea.vmem %s1, 732
    %1713 = vst [vmem:[%s1712] sm:$0xf] %v1711
    %s1714 = scalar_lea.vmem [#allocation0], 1472
    %v1715 = vld [vmem:[%s1714] sm:$0xf]
    %s1716 = scalar_lea.vmem %s1, 736
    %1717 = vst [vmem:[%s1716] sm:$0xf] %v1715
    %s1718 = scalar_lea.vmem [#allocation0], 1480
    %v1719 = vld [vmem:[%s1718] sm:$0xf]
    %s1720 = scalar_lea.vmem %s1, 744
    %1721 = vst [vmem:[%s1720] sm:$0xf] %v1719
    %s1722 = scalar_lea.vmem [#allocation0], 1488
    %v1723 = vld [vmem:[%s1722] sm:$0xf]
    %s1724 = scalar_lea.vmem %s1, 740
    %1725 = vst [vmem:[%s1724] sm:$0xf] %v1723
    %s1726 = scalar_lea.vmem [#allocation0], 1496
    %v1727 = vld [vmem:[%s1726] sm:$0xf]
    %s1728 = scalar_lea.vmem %s1, 748
    %1729 = vst [vmem:[%s1728] sm:$0xf] %v1727
    %s1730 = scalar_lea.vmem [#allocation0], 1504
    %v1731 = vld [vmem:[%s1730] sm:$0xf]
    %s1732 = scalar_lea.vmem %s1, 752
    %1733 = vst [vmem:[%s1732] sm:$0xf] %v1731
    %s1734 = scalar_lea.vmem [#allocation0], 1512
    %v1735 = vld [vmem:[%s1734] sm:$0xf]
    %s1736 = scalar_lea.vmem %s1, 760
    %1737 = vst [vmem:[%s1736] sm:$0xf] %v1735
    %s1738 = scalar_lea.vmem [#allocation0], 1520
    %v1739 = vld [vmem:[%s1738] sm:$0xf]
    %s1740 = scalar_lea.vmem %s1, 756
    %1741 = vst [vmem:[%s1740] sm:$0xf] %v1739
    %s1742 = scalar_lea.vmem [#allocation0], 1528
    %v1743 = vld [vmem:[%s1742] sm:$0xf]
    %s1744 = scalar_lea.vmem %s1, 764
    %1745 = vst [vmem:[%s1744] sm:$0xf] %v1743
    %s1746 = scalar_lea.vmem [#allocation0], 1536
    %v1747 = vld [vmem:[%s1746] sm:$0xf]
    %s1748 = scalar_lea.vmem %s1, 768
    %1749 = vst [vmem:[%s1748] sm:$0xf] %v1747
    %s1750 = scalar_lea.vmem [#allocation0], 1544
    %v1751 = vld [vmem:[%s1750] sm:$0xf]
    %s1752 = scalar_lea.vmem %s1, 776
    %1753 = vst [vmem:[%s1752] sm:$0xf] %v1751
    %s1754 = scalar_lea.vmem [#allocation0], 1552
    %v1755 = vld [vmem:[%s1754] sm:$0xf]
    %s1756 = scalar_lea.vmem %s1, 772
    %1757 = vst [vmem:[%s1756] sm:$0xf] %v1755
    %s1758 = scalar_lea.vmem [#allocation0], 1560
    %v1759 = vld [vmem:[%s1758] sm:$0xf]
    %s1760 = scalar_lea.vmem %s1, 780
    %1761 = vst [vmem:[%s1760] sm:$0xf] %v1759

// kernel: tile.95
$region0: #{tile.95}
  %s0 = inlined_call_operand.vmem [shape: f32[31,2,4,256], index: 0, kind: input, shape index: {}]
  %s1 = inlined_call_operand.vmem [shape: f32[31,8,256], index: 1, kind: output, shape index: {}]
  $region1: #{tile.95} parent=0
    #allocation0 [shape = 'u8[507904]{0}', space=vmem, size = 0x7c000, scoped, tag = 'scoped mem for input reshape']
    %s3 = sshllo.u32 0, 4
    %s4 = smul.addr 4, 123
    %s5 = scalar_lea.vmem %s0, %s4
    %v6 = vld [vmem:[%s5] sm:%s3]
    %s7 = scalar_lea.vmem [#allocation0], 984
    %8 = vst [vmem:[%s7] sm:%s3] %v6
    %s9 = smul.addr 4, 122
    %s10 = scalar_lea.vmem %s0, %s9
    %v11 = vld [vmem:[%s10] sm:%s3]
    %s12 = scalar_lea.vmem [#allocation0], 976
    %13 = vst [vmem:[%s12] sm:%s3] %v11
    %s14 = smul.addr 4, 121
    %s15 = scalar_lea.vmem %s0, %s14
    %v16 = vld [vmem:[%s15] sm:%s3]
    %s17 = scalar_lea.vmem [#allocation0], 968
    %18 = vst [vmem:[%s17] sm:%s3] %v16
    %s19 = smul.addr 4, 120
    %s20 = scalar_lea.vmem %s0, %s19
    %v21 = vld [vmem:[%s20] sm:%s3]
    %s22 = scalar_lea.vmem [#allocation0], 960
    %23 = vst [vmem:[%s22] sm:%s3] %v21
    %s24 = smul.addr 4, 119
    %s25 = scalar_lea.vmem %s0, %s24
    %v26 = vld [vmem:[%s25] sm:%s3]
    %s27 = scalar_lea.vmem [#allocation0], 952
    %28 = vst [vmem:[%s27] sm:%s3] %v26
    %s29 = smul.addr 4, 118
    %s30 = scalar_lea.vmem %s0, %s29
    %v31 = vld [vmem:[%s30] sm:%s3]
    %s32 = scalar_lea.vmem [#allocation0], 944
    %33 = vst [vmem:[%s32] sm:%s3] %v31
    %s34 = smul.addr 4, 117
    %s35 = scalar_lea.vmem %s0, %s34
    %v36 = vld [vmem:[%s35] sm:%s3]
    %s37 = scalar_lea.vmem [#allocation0], 936
    %38 = vst [vmem:[%s37] sm:%s3] %v36
    %s39 = smul.addr 4, 116
    %s40 = scalar_lea.vmem %s0, %s39
    %v41 = vld [vmem:[%s40] sm:%s3]
    %s42 = scalar_lea.vmem [#allocation0], 928
    %43 = vst [vmem:[%s42] sm:%s3] %v41
    %s44 = smul.addr 4, 115
    %s45 = scalar_lea.vmem %s0, %s44
    %v46 = vld [vmem:[%s45] sm:%s3]
    %s47 = scalar_lea.vmem [#allocation0], 920
    %48 = vst [vmem:[%s47] sm:%s3] %v46
    %s49 = smul.addr 4, 114
    %s50 = scalar_lea.vmem %s0, %s49
    %v51 = vld [vmem:[%s50] sm:%s3]
    %s52 = scalar_lea.vmem [#allocation0], 912
    %53 = vst [vmem:[%s52] sm:%s3] %v51
    %s54 = smul.addr 4, 113
    %s55 = scalar_lea.vmem %s0, %s54
    %v56 = vld [vmem:[%s55] sm:%s3]
    %s57 = scalar_lea.vmem [#allocation0], 904
    %58 = vst [vmem:[%s57] sm:%s3] %v56
    %s59 = smul.addr 4, 112
    %s60 = scalar_lea.vmem %s0, %s59
    %v61 = vld [vmem:[%s60] sm:%s3]
    %s62 = scalar_lea.vmem [#allocation0], 896
    %63 = vst [vmem:[%s62] sm:%s3] %v61
    %s64 = smul.addr 4, 111
    %s65 = scalar_lea.vmem %s0, %s64
    %v66 = vld [vmem:[%s65] sm:%s3]
    %s67 = scalar_lea.vmem [#allocation0], 888
    %68 = vst [vmem:[%s67] sm:%s3] %v66
    %s69 = smul.addr 4, 110
    %s70 = scalar_lea.vmem %s0, %s69
    %v71 = vld [vmem:[%s70] sm:%s3]
    %s72 = scalar_lea.vmem [#allocation0], 880
    %73 = vst [vmem:[%s72] sm:%s3] %v71
    %s74 = smul.addr 4, 109
    %s75 = scalar_lea.vmem %s0, %s74
    %v76 = vld [vmem:[%s75] sm:%s3]
    %s77 = scalar_lea.vmem [#allocation0], 872
    %78 = vst [vmem:[%s77] sm:%s3] %v76
    %s79 = smul.addr 4, 108
    %s80 = scalar_lea.vmem %s0, %s79
    %v81 = vld [vmem:[%s80] sm:%s3]
    %s82 = scalar_lea.vmem [#allocation0], 864
    %83 = vst [vmem:[%s82] sm:%s3] %v81
    %s84 = smul.addr 4, 107
    %s85 = scalar_lea.vmem %s0, %s84
    %v86 = vld [vmem:[%s85] sm:%s3]
    %s87 = scalar_lea.vmem [#allocation0], 856
    %88 = vst [vmem:[%s87] sm:%s3] %v86
    %s89 = smul.addr 4, 106
    %s90 = scalar_lea.vmem %s0, %s89
    %v91 = vld [vmem:[%s90] sm:%s3]
    %s92 = scalar_lea.vmem [#allocation0], 848
    %93 = vst [vmem:[%s92] sm:%s3] %v91
    %s94 = smul.addr 4, 105
    %s95 = scalar_lea.vmem %s0, %s94
    %v96 = vld [vmem:[%s95] sm:%s3]
    %s97 = scalar_lea.vmem [#allocation0], 840
    %98 = vst [vmem:[%s97] sm:%s3] %v96
    %s99 = smul.addr 4, 104
    %s100 = scalar_lea.vmem %s0, %s99
    %v101 = vld [vmem:[%s100] sm:%s3]
    %s102 = scalar_lea.vmem [#allocation0], 832
    %103 = vst [vmem:[%s102] sm:%s3] %v101
    %s104 = smul.addr 4, 103
    %s105 = scalar_lea.vmem %s0, %s104
    %v106 = vld [vmem:[%s105] sm:%s3]
    %s107 = scalar_lea.vmem [#allocation0], 824
    %108 = vst [vmem:[%s107] sm:%s3] %v106
    %s109 = smul.addr 4, 102
    %s110 = scalar_lea.vmem %s0, %s109
    %v111 = vld [vmem:[%s110] sm:%s3]
    %s112 = scalar_lea.vmem [#allocation0], 816
    %113 = vst [vmem:[%s112] sm:%s3] %v111
    %s114 = smul.addr 4, 101
    %s115 = scalar_lea.vmem %s0, %s114
    %v116 = vld [vmem:[%s115] sm:%s3]
    %s117 = scalar_lea.vmem [#allocation0], 808
    %118 = vst [vmem:[%s117] sm:%s3] %v116
    %s119 = smul.addr 4, 100
    %s120 = scalar_lea.vmem %s0, %s119
    %v121 = vld [vmem:[%s120] sm:%s3]
    %s122 = scalar_lea.vmem [#allocation0], 800
    %123 = vst [vmem:[%s122] sm:%s3] %v121
    %s124 = smul.addr 4, 99
    %s125 = scalar_lea.vmem %s0, %s124
    %v126 = vld [vmem:[%s125] sm:%s3]
    %s127 = scalar_lea.vmem [#allocation0], 792
    %128 = vst [vmem:[%s127] sm:%s3] %v126
    %s129 = smul.addr 4, 98
    %s130 = scalar_lea.vmem %s0, %s129
    %v131 = vld [vmem:[%s130] sm:%s3]
    %s132 = scalar_lea.vmem [#allocation0], 784
    %133 = vst [vmem:[%s132] sm:%s3] %v131
    %s134 = smul.addr 4, 97
    %s135 = scalar_lea.vmem %s0, %s134
    %v136 = vld [vmem:[%s135] sm:%s3]
    %s137 = scalar_lea.vmem [#allocation0], 776
    %138 = vst [vmem:[%s137] sm:%s3] %v136
    %s139 = smul.addr 4, 96
    %s140 = scalar_lea.vmem %s0, %s139
    %v141 = vld [vmem:[%s140] sm:%s3]
    %s142 = scalar_lea.vmem [#allocation0], 768
    %143 = vst [vmem:[%s142] sm:%s3] %v141
    %s144 = smul.addr 4, 95
    %s145 = scalar_lea.vmem %s0, %s144
    %v146 = vld [vmem:[%s145] sm:%s3]
    %s147 = scalar_lea.vmem [#allocation0], 760
    %148 = vst [vmem:[%s147] sm:%s3] %v146
    %s149 = smul.addr 4, 94
    %s150 = scalar_lea.vmem %s0, %s149
    %v151 = vld [vmem:[%s150] sm:%s3]
    %s152 = scalar_lea.vmem [#allocation0], 752
    %153 = vst [vmem:[%s152] sm:%s3] %v151
    %s154 = smul.addr 4, 93
    %s155 = scalar_lea.vmem %s0, %s154
    %v156 = vld [vmem:[%s155] sm:%s3]
    %s157 = scalar_lea.vmem [#allocation0], 744
    %158 = vst [vmem:[%s157] sm:%s3] %v156
    %s159 = smul.addr 4, 92
    %s160 = scalar_lea.vmem %s0, %s159
    %v161 = vld [vmem:[%s160] sm:%s3]
    %s162 = scalar_lea.vmem [#allocation0], 736
    %163 = vst [vmem:[%s162] sm:%s3] %v161
    %s164 = smul.addr 4, 91
    %s165 = scalar_lea.vmem %s0, %s164
    %v166 = vld [vmem:[%s165] sm:%s3]
    %s167 = scalar_lea.vmem [#allocation0], 728
    %168 = vst [vmem:[%s167] sm:%s3] %v166
    %s169 = smul.addr 4, 90
    %s170 = scalar_lea.vmem %s0, %s169
    %v171 = vld [vmem:[%s170] sm:%s3]
    %s172 = scalar_lea.vmem [#allocation0], 720
    %173 = vst [vmem:[%s172] sm:%s3] %v171
    %s174 = smul.addr 4, 89
    %s175 = scalar_lea.vmem %s0, %s174
    %v176 = vld [vmem:[%s175] sm:%s3]
    %s177 = scalar_lea.vmem [#allocation0], 712
    %178 = vst [vmem:[%s177] sm:%s3] %v176
    %s179 = smul.addr 4, 88
    %s180 = scalar_lea.vmem %s0, %s179
    %v181 = vld [vmem:[%s180] sm:%s3]
    %s182 = scalar_lea.vmem [#allocation0], 704
    %183 = vst [vmem:[%s182] sm:%s3] %v181
    %s184 = smul.addr 4, 87
    %s185 = scalar_lea.vmem %s0, %s184
    %v186 = vld [vmem:[%s185] sm:%s3]
    %s187 = scalar_lea.vmem [#allocation0], 696
    %188 = vst [vmem:[%s187] sm:%s3] %v186
    %s189 = smul.addr 4, 86
    %s190 = scalar_lea.vmem %s0, %s189
    %v191 = vld [vmem:[%s190] sm:%s3]
    %s192 = scalar_lea.vmem [#allocation0], 688
    %193 = vst [vmem:[%s192] sm:%s3] %v191
    %s194 = smul.addr 4, 85
    %s195 = scalar_lea.vmem %s0, %s194
    %v196 = vld [vmem:[%s195] sm:%s3]
    %s197 = scalar_lea.vmem [#allocation0], 680
    %198 = vst [vmem:[%s197] sm:%s3] %v196
    %s199 = smul.addr 4, 84
    %s200 = scalar_lea.vmem %s0, %s199
    %v201 = vld [vmem:[%s200] sm:%s3]
    %s202 = scalar_lea.vmem [#allocation0], 672
    %203 = vst [vmem:[%s202] sm:%s3] %v201
    %s204 = smul.addr 4, 83
    %s205 = scalar_lea.vmem %s0, %s204
    %v206 = vld [vmem:[%s205] sm:%s3]
    %s207 = scalar_lea.vmem [#allocation0], 664
    %208 = vst [vmem:[%s207] sm:%s3] %v206
    %s209 = smul.addr 4, 82
    %s210 = scalar_lea.vmem %s0, %s209
    %v211 = vld [vmem:[%s210] sm:%s3]
    %s212 = scalar_lea.vmem [#allocation0], 656
    %213 = vst [vmem:[%s212] sm:%s3] %v211
    %s214 = smul.addr 4, 81
    %s215 = scalar_lea.vmem %s0, %s214
    %v216 = vld [vmem:[%s215] sm:%s3]
    %s217 = scalar_lea.vmem [#allocation0], 648
    %218 = vst [vmem:[%s217] sm:%s3] %v216
    %s219 = smul.addr 4, 80
    %s220 = scalar_lea.vmem %s0, %s219
    %v221 = vld [vmem:[%s220] sm:%s3]
    %s222 = scalar_lea.vmem [#allocation0], 640
    %223 = vst [vmem:[%s222] sm:%s3] %v221
    %s224 = smul.addr 4, 79
    %s225 = scalar_lea.vmem %s0, %s224
    %v226 = vld [vmem:[%s225] sm:%s3]
    %s227 = scalar_lea.vmem [#allocation0], 632
    %228 = vst [vmem:[%s227] sm:%s3] %v226
    %s229 = smul.addr 4, 78
    %s230 = scalar_lea.vmem %s0, %s229
    %v231 = vld [vmem:[%s230] sm:%s3]
    %s232 = scalar_lea.vmem [#allocation0], 624
    %233 = vst [vmem:[%s232] sm:%s3] %v231
    %s234 = smul.addr 4, 77
    %s235 = scalar_lea.vmem %s0, %s234
    %v236 = vld [vmem:[%s235] sm:%s3]
    %s237 = scalar_lea.vmem [#allocation0], 616
    %238 = vst [vmem:[%s237] sm:%s3] %v236
    %s239 = smul.addr 4, 76
    %s240 = scalar_lea.vmem %s0, %s239
    %v241 = vld [vmem:[%s240] sm:%s3]
    %s242 = scalar_lea.vmem [#allocation0], 608
    %243 = vst [vmem:[%s242] sm:%s3] %v241
    %s244 = smul.addr 4, 75
    %s245 = scalar_lea.vmem %s0, %s244
    %v246 = vld [vmem:[%s245] sm:%s3]
    %s247 = scalar_lea.vmem [#allocation0], 600
    %248 = vst [vmem:[%s247] sm:%s3] %v246
    %s249 = smul.addr 4, 74
    %s250 = scalar_lea.vmem %s0, %s249
    %v251 = vld [vmem:[%s250] sm:%s3]
    %s252 = scalar_lea.vmem [#allocation0], 592
    %253 = vst [vmem:[%s252] sm:%s3] %v251
    %s254 = smul.addr 4, 73
    %s255 = scalar_lea.vmem %s0, %s254
    %v256 = vld [vmem:[%s255] sm:%s3]
    %s257 = scalar_lea.vmem [#allocation0], 584
    %258 = vst [vmem:[%s257] sm:%s3] %v256
    %s259 = smul.addr 4, 72
    %s260 = scalar_lea.vmem %s0, %s259
    %v261 = vld [vmem:[%s260] sm:%s3]
    %s262 = scalar_lea.vmem [#allocation0], 576
    %263 = vst [vmem:[%s262] sm:%s3] %v261
    %s264 = smul.addr 4, 71
    %s265 = scalar_lea.vmem %s0, %s264
    %v266 = vld [vmem:[%s265] sm:%s3]
    %s267 = scalar_lea.vmem [#allocation0], 568
    %268 = vst [vmem:[%s267] sm:%s3] %v266
    %s269 = smul.addr 4, 70
    %s270 = scalar_lea.vmem %s0, %s269
    %v271 = vld [vmem:[%s270] sm:%s3]
    %s272 = scalar_lea.vmem [#allocation0], 560
    %273 = vst [vmem:[%s272] sm:%s3] %v271
    %s274 = smul.addr 4, 69
    %s275 = scalar_lea.vmem %s0, %s274
    %v276 = vld [vmem:[%s275] sm:%s3]
    %s277 = scalar_lea.vmem [#allocation0], 552
    %278 = vst [vmem:[%s277] sm:%s3] %v276
    %s279 = smul.addr 4, 68
    %s280 = scalar_lea.vmem %s0, %s279
    %v281 = vld [vmem:[%s280] sm:%s3]
    %s282 = scalar_lea.vmem [#allocation0], 544
    %283 = vst [vmem:[%s282] sm:%s3] %v281
    %s284 = smul.addr 4, 67
    %s285 = scalar_lea.vmem %s0, %s284
    %v286 = vld [vmem:[%s285] sm:%s3]
    %s287 = scalar_lea.vmem [#allocation0], 536
    %288 = vst [vmem:[%s287] sm:%s3] %v286
    %s289 = smul.addr 4, 66
    %s290 = scalar_lea.vmem %s0, %s289
    %v291 = vld [vmem:[%s290] sm:%s3]
    %s292 = scalar_lea.vmem [#allocation0], 528
    %293 = vst [vmem:[%s292] sm:%s3] %v291
    %s294 = smul.addr 4, 65
    %s295 = scalar_lea.vmem %s0, %s294
    %v296 = vld [vmem:[%s295] sm:%s3]
    %s297 = scalar_lea.vmem [#allocation0], 520
    %298 = vst [vmem:[%s297] sm:%s3] %v296
    %s299 = smul.addr 4, 64
    %s300 = scalar_lea.vmem %s0, %s299
    %v301 = vld [vmem:[%s300] sm:%s3]
    %s302 = scalar_lea.vmem [#allocation0], 512
    %303 = vst [vmem:[%s302] sm:%s3] %v301
    %s304 = smul.addr 4, 63
    %s305 = scalar_lea.vmem %s0, %s304
    %v306 = vld [vmem:[%s305] sm:%s3]
    %s307 = scalar_lea.vmem [#allocation0], 504
    %308 = vst [vmem:[%s307] sm:%s3] %v306
    %s309 = smul.addr 4, 62
    %s310 = scalar_lea.vmem %s0, %s309
    %v311 = vld [vmem:[%s310] sm:%s3]
    %s312 = scalar_lea.vmem [#allocation0], 496
    %313 = vst [vmem:[%s312] sm:%s3] %v311
    %s314 = smul.addr 4, 61
    %s315 = scalar_lea.vmem %s0, %s314
    %v316 = vld [vmem:[%s315] sm:%s3]
    %s317 = scalar_lea.vmem [#allocation0], 488
    %318 = vst [vmem:[%s317] sm:%s3] %v316
    %s319 = smul.addr 4, 60
    %s320 = scalar_lea.vmem %s0, %s319
    %v321 = vld [vmem:[%s320] sm:%s3]
    %s322 = scalar_lea.vmem [#allocation0], 480
    %323 = vst [vmem:[%s322] sm:%s3] %v321
    %s324 = smul.addr 4, 59
    %s325 = scalar_lea.vmem %s0, %s324
    %v326 = vld [vmem:[%s325] sm:%s3]
    %s327 = scalar_lea.vmem [#allocation0], 472
    %328 = vst [vmem:[%s327] sm:%s3] %v326
    %s329 = smul.addr 4, 58
    %s330 = scalar_lea.vmem %s0, %s329
    %v331 = vld [vmem:[%s330] sm:%s3]
    %s332 = scalar_lea.vmem [#allocation0], 464
    %333 = vst [vmem:[%s332] sm:%s3] %v331
    %s334 = smul.addr 4, 57
    %s335 = scalar_lea.vmem %s0, %s334
    %v336 = vld [vmem:[%s335] sm:%s3]
    %s337 = scalar_lea.vmem [#allocation0], 456
    %338 = vst [vmem:[%s337] sm:%s3] %v336
    %s339 = smul.addr 4, 56
    %s340 = scalar_lea.vmem %s0, %s339
    %v341 = vld [vmem:[%s340] sm:%s3]
    %s342 = scalar_lea.vmem [#allocation0], 448
    %343 = vst [vmem:[%s342] sm:%s3] %v341
    %s344 = smul.addr 4, 55
    %s345 = scalar_lea.vmem %s0, %s344
    %v346 = vld [vmem:[%s345] sm:%s3]
    %s347 = scalar_lea.vmem [#allocation0], 440
    %348 = vst [vmem:[%s347] sm:%s3] %v346
    %s349 = smul.addr 4, 54
    %s350 = scalar_lea.vmem %s0, %s349
    %v351 = vld [vmem:[%s350] sm:%s3]
    %s352 = scalar_lea.vmem [#allocation0], 432
    %353 = vst [vmem:[%s352] sm:%s3] %v351
    %s354 = smul.addr 4, 53
    %s355 = scalar_lea.vmem %s0, %s354
    %v356 = vld [vmem:[%s355] sm:%s3]
    %s357 = scalar_lea.vmem [#allocation0], 424
    %358 = vst [vmem:[%s357] sm:%s3] %v356
    %s359 = smul.addr 4, 52
    %s360 = scalar_lea.vmem %s0, %s359
    %v361 = vld [vmem:[%s360] sm:%s3]
    %s362 = scalar_lea.vmem [#allocation0], 416
    %363 = vst [vmem:[%s362] sm:%s3] %v361
    %s364 = smul.addr 4, 51
    %s365 = scalar_lea.vmem %s0, %s364
    %v366 = vld [vmem:[%s365] sm:%s3]
    %s367 = scalar_lea.vmem [#allocation0], 408
    %368 = vst [vmem:[%s367] sm:%s3] %v366
    %s369 = smul.addr 4, 50
    %s370 = scalar_lea.vmem %s0, %s369
    %v371 = vld [vmem:[%s370] sm:%s3]
    %s372 = scalar_lea.vmem [#allocation0], 400
    %373 = vst [vmem:[%s372] sm:%s3] %v371
    %s374 = smul.addr 4, 49
    %s375 = scalar_lea.vmem %s0, %s374
    %v376 = vld [vmem:[%s375] sm:%s3]
    %s377 = scalar_lea.vmem [#allocation0], 392
    %378 = vst [vmem:[%s377] sm:%s3] %v376
    %s379 = smul.addr 4, 48
    %s380 = scalar_lea.vmem %s0, %s379
    %v381 = vld [vmem:[%s380] sm:%s3]
    %s382 = scalar_lea.vmem [#allocation0], 384
    %383 = vst [vmem:[%s382] sm:%s3] %v381
    %s384 = smul.addr 4, 47
    %s385 = scalar_lea.vmem %s0, %s384
    %v386 = vld [vmem:[%s385] sm:%s3]
    %s387 = scalar_lea.vmem [#allocation0], 376
    %388 = vst [vmem:[%s387] sm:%s3] %v386
    %s389 = smul.addr 4, 46
    %s390 = scalar_lea.vmem %s0, %s389
    %v391 = vld [vmem:[%s390] sm:%s3]
    %s392 = scalar_lea.vmem [#allocation0], 368
    %393 = vst [vmem:[%s392] sm:%s3] %v391
    %s394 = smul.addr 4, 45
    %s395 = scalar_lea.vmem %s0, %s394
    %v396 = vld [vmem:[%s395] sm:%s3]
    %s397 = scalar_lea.vmem [#allocation0], 360
    %398 = vst [vmem:[%s397] sm:%s3] %v396
    %s399 = smul.addr 4, 44
    %s400 = scalar_lea.vmem %s0, %s399
    %v401 = vld [vmem:[%s400] sm:%s3]
    %s402 = scalar_lea.vmem [#allocation0], 352
    %403 = vst [vmem:[%s402] sm:%s3] %v401
    %s404 = smul.addr 4, 43
    %s405 = scalar_lea.vmem %s0, %s404
    %v406 = vld [vmem:[%s405] sm:%s3]
    %s407 = scalar_lea.vmem [#allocation0], 344
    %408 = vst [vmem:[%s407] sm:%s3] %v406
    %s409 = smul.addr 4, 42
    %s410 = scalar_lea.vmem %s0, %s409
    %v411 = vld [vmem:[%s410] sm:%s3]
    %s412 = scalar_lea.vmem [#allocation0], 336
    %413 = vst [vmem:[%s412] sm:%s3] %v411
    %s414 = smul.addr 4, 41
    %s415 = scalar_lea.vmem %s0, %s414
    %v416 = vld [vmem:[%s415] sm:%s3]
    %s417 = scalar_lea.vmem [#allocation0], 328
    %418 = vst [vmem:[%s417] sm:%s3] %v416
    %s419 = smul.addr 4, 40
    %s420 = scalar_lea.vmem %s0, %s419
    %v421 = vld [vmem:[%s420] sm:%s3]
    %s422 = scalar_lea.vmem [#allocation0], 320
    %423 = vst [vmem:[%s422] sm:%s3] %v421
    %s424 = smul.addr 4, 39
    %s425 = scalar_lea.vmem %s0, %s424
    %v426 = vld [vmem:[%s425] sm:%s3]
    %s427 = scalar_lea.vmem [#allocation0], 312
    %428 = vst [vmem:[%s427] sm:%s3] %v426
    %s429 = smul.addr 4, 38
    %s430 = scalar_lea.vmem %s0, %s429
    %v431 = vld [vmem:[%s430] sm:%s3]
    %s432 = scalar_lea.vmem [#allocation0], 304
    %433 = vst [vmem:[%s432] sm:%s3] %v431
    %s434 = smul.addr 4, 37
    %s435 = scalar_lea.vmem %s0, %s434
    %v436 = vld [vmem:[%s435] sm:%s3]
    %s437 = scalar_lea.vmem [#allocation0], 296
    %438 = vst [vmem:[%s437] sm:%s3] %v436
    %s439 = smul.addr 4, 36
    %s440 = scalar_lea.vmem %s0, %s439
    %v441 = vld [vmem:[%s440] sm:%s3]
    %s442 = scalar_lea.vmem [#allocation0], 288
    %443 = vst [vmem:[%s442] sm:%s3] %v441
    %s444 = smul.addr 4, 35
    %s445 = scalar_lea.vmem %s0, %s444
    %v446 = vld [vmem:[%s445] sm:%s3]
    %s447 = scalar_lea.vmem [#allocation0], 280
    %448 = vst [vmem:[%s447] sm:%s3] %v446
    %s449 = smul.addr 4, 34
    %s450 = scalar_lea.vmem %s0, %s449
    %v451 = vld [vmem:[%s450] sm:%s3]
    %s452 = scalar_lea.vmem [#allocation0], 272
    %453 = vst [vmem:[%s452] sm:%s3] %v451
    %s454 = smul.addr 4, 33
    %s455 = scalar_lea.vmem %s0, %s454
    %v456 = vld [vmem:[%s455] sm:%s3]
    %s457 = scalar_lea.vmem [#allocation0], 264
    %458 = vst [vmem:[%s457] sm:%s3] %v456
    %s459 = smul.addr 4, 32
    %s460 = scalar_lea.vmem %s0, %s459
    %v461 = vld [vmem:[%s460] sm:%s3]
    %s462 = scalar_lea.vmem [#allocation0], 256
    %463 = vst [vmem:[%s462] sm:%s3] %v461
    %s464 = smul.addr 4, 31
    %s465 = scalar_lea.vmem %s0, %s464
    %v466 = vld [vmem:[%s465] sm:%s3]
    %s467 = scalar_lea.vmem [#allocation0], 248
    %468 = vst [vmem:[%s467] sm:%s3] %v466
    %s469 = smul.addr 4, 30
    %s470 = scalar_lea.vmem %s0, %s469
    %v471 = vld [vmem:[%s470] sm:%s3]
    %s472 = scalar_lea.vmem [#allocation0], 240
    %473 = vst [vmem:[%s472] sm:%s3] %v471
    %s474 = smul.addr 4, 29
    %s475 = scalar_lea.vmem %s0, %s474
    %v476 = vld [vmem:[%s475] sm:%s3]
    %s477 = scalar_lea.vmem [#allocation0], 232
    %478 = vst [vmem:[%s477] sm:%s3] %v476
    %s479 = smul.addr 4, 28
    %s480 = scalar_lea.vmem %s0, %s479
    %v481 = vld [vmem:[%s480] sm:%s3]
    %s482 = scalar_lea.vmem [#allocation0], 224
    %483 = vst [vmem:[%s482] sm:%s3] %v481
    %s484 = smul.addr 4, 27
    %s485 = scalar_lea.vmem %s0, %s484
    %v486 = vld [vmem:[%s485] sm:%s3]
    %s487 = scalar_lea.vmem [#allocation0], 216
    %488 = vst [vmem:[%s487] sm:%s3] %v486
    %s489 = smul.addr 4, 26
    %s490 = scalar_lea.vmem %s0, %s489
    %v491 = vld [vmem:[%s490] sm:%s3]
    %s492 = scalar_lea.vmem [#allocation0], 208
    %493 = vst [vmem:[%s492] sm:%s3] %v491
    %s494 = smul.addr 4, 25
    %s495 = scalar_lea.vmem %s0, %s494
    %v496 = vld [vmem:[%s495] sm:%s3]
    %s497 = scalar_lea.vmem [#allocation0], 200
    %498 = vst [vmem:[%s497] sm:%s3] %v496
    %s499 = smul.addr 4, 24
    %s500 = scalar_lea.vmem %s0, %s499
    %v501 = vld [vmem:[%s500] sm:%s3]
    %s502 = scalar_lea.vmem [#allocation0], 192
    %503 = vst [vmem:[%s502] sm:%s3] %v501
    %s504 = smul.addr 4, 23
    %s505 = scalar_lea.vmem %s0, %s504
    %v506 = vld [vmem:[%s505] sm:%s3]
    %s507 = scalar_lea.vmem [#allocation0], 184
    %508 = vst [vmem:[%s507] sm:%s3] %v506
    %s509 = smul.addr 4, 22
    %s510 = scalar_lea.vmem %s0, %s509
    %v511 = vld [vmem:[%s510] sm:%s3]
    %s512 = scalar_lea.vmem [#allocation0], 176
    %513 = vst [vmem:[%s512] sm:%s3] %v511
    %s514 = smul.addr 4, 21
    %s515 = scalar_lea.vmem %s0, %s514
    %v516 = vld [vmem:[%s515] sm:%s3]
    %s517 = scalar_lea.vmem [#allocation0], 168
    %518 = vst [vmem:[%s517] sm:%s3] %v516
    %s519 = smul.addr 4, 20
    %s520 = scalar_lea.vmem %s0, %s519
    %v521 = vld [vmem:[%s520] sm:%s3]
    %s522 = scalar_lea.vmem [#allocation0], 160
    %523 = vst [vmem:[%s522] sm:%s3] %v521
    %s524 = smul.addr 4, 19
    %s525 = scalar_lea.vmem %s0, %s524
    %v526 = vld [vmem:[%s525] sm:%s3]
    %s527 = scalar_lea.vmem [#allocation0], 152
    %528 = vst [vmem:[%s527] sm:%s3] %v526
    %s529 = smul.addr 4, 18
    %s530 = scalar_lea.vmem %s0, %s529
    %v531 = vld [vmem:[%s530] sm:%s3]
    %s532 = scalar_lea.vmem [#allocation0], 144
    %533 = vst [vmem:[%s532] sm:%s3] %v531
    %s534 = smul.addr 4, 17
    %s535 = scalar_lea.vmem %s0, %s534
    %v536 = vld [vmem:[%s535] sm:%s3]
    %s537 = scalar_lea.vmem [#allocation0], 136
    %538 = vst [vmem:[%s537] sm:%s3] %v536
    %s539 = smul.addr 4, 16
    %s540 = scalar_lea.vmem %s0, %s539
    %v541 = vld [vmem:[%s540] sm:%s3]
    %s542 = scalar_lea.vmem [#allocation0], 128
    %543 = vst [vmem:[%s542] sm:%s3] %v541
    %s544 = smul.addr 4, 15
    %s545 = scalar_lea.vmem %s0, %s544
    %v546 = vld [vmem:[%s545] sm:%s3]
    %s547 = scalar_lea.vmem [#allocation0], 120
    %548 = vst [vmem:[%s547] sm:%s3] %v546
    %s549 = smul.addr 4, 14
    %s550 = scalar_lea.vmem %s0, %s549
    %v551 = vld [vmem:[%s550] sm:%s3]
    %s552 = scalar_lea.vmem [#allocation0], 112
    %553 = vst [vmem:[%s552] sm:%s3] %v551
    %s554 = smul.addr 4, 13
    %s555 = scalar_lea.vmem %s0, %s554
    %v556 = vld [vmem:[%s555] sm:%s3]
    %s557 = scalar_lea.vmem [#allocation0], 104
    %558 = vst [vmem:[%s557] sm:%s3] %v556
    %s559 = smul.addr 4, 12
    %s560 = scalar_lea.vmem %s0, %s559
    %v561 = vld [vmem:[%s560] sm:%s3]
    %s562 = scalar_lea.vmem [#allocation0], 96
    %563 = vst [vmem:[%s562] sm:%s3] %v561
    %s564 = smul.addr 4, 11
    %s565 = scalar_lea.vmem %s0, %s564
    %v566 = vld [vmem:[%s565] sm:%s3]
    %s567 = scalar_lea.vmem [#allocation0], 88
    %568 = vst [vmem:[%s567] sm:%s3] %v566
    %s569 = smul.addr 4, 10
    %s570 = scalar_lea.vmem %s0, %s569
    %v571 = vld [vmem:[%s570] sm:%s3]
    %s572 = scalar_lea.vmem [#allocation0], 80
    %573 = vst [vmem:[%s572] sm:%s3] %v571
    %s574 = smul.addr 4, 9
    %s575 = scalar_lea.vmem %s0, %s574
    %v576 = vld [vmem:[%s575] sm:%s3]
    %s577 = scalar_lea.vmem [#allocation0], 72
    %578 = vst [vmem:[%s577] sm:%s3] %v576
    %s579 = smul.addr 4, 8
    %s580 = scalar_lea.vmem %s0, %s579
    %v581 = vld [vmem:[%s580] sm:%s3]
    %s582 = scalar_lea.vmem [#allocation0], 64
    %583 = vst [vmem:[%s582] sm:%s3] %v581
    %s584 = smul.addr 4, 7
    %s585 = scalar_lea.vmem %s0, %s584
    %v586 = vld [vmem:[%s585] sm:%s3]
    %s587 = scalar_lea.vmem [#allocation0], 56
    %588 = vst [vmem:[%s587] sm:%s3] %v586
    %s589 = smul.addr 4, 6
    %s590 = scalar_lea.vmem %s0, %s589
    %v591 = vld [vmem:[%s590] sm:%s3]
    %s592 = scalar_lea.vmem [#allocation0], 48
    %593 = vst [vmem:[%s592] sm:%s3] %v591
    %s594 = smul.addr 4, 5
    %s595 = scalar_lea.vmem %s0, %s594
    %v596 = vld [vmem:[%s595] sm:%s3]
    %s597 = scalar_lea.vmem [#allocation0], 40
    %598 = vst [vmem:[%s597] sm:%s3] %v596
    %s599 = smul.addr 4, 4
    %s600 = scalar_lea.vmem %s0, %s599
    %v601 = vld [vmem:[%s600] sm:%s3]
    %s602 = scalar_lea.vmem [#allocation0], 32
    %603 = vst [vmem:[%s602] sm:%s3] %v601
    %s604 = smul.addr 4, 3
    %s605 = scalar_lea.vmem %s0, %s604
    %v606 = vld [vmem:[%s605] sm:%s3]
    %s607 = scalar_lea.vmem [#allocation0], 24
    %608 = vst [vmem:[%s607] sm:%s3] %v606
    %s609 = smul.addr 4, 2
    %s610 = scalar_lea.vmem %s0, %s609
    %v611 = vld [vmem:[%s610] sm:%s3]
    %s612 = scalar_lea.vmem [#allocation0], 16
    %613 = vst [vmem:[%s612] sm:%s3] %v611
    %s614 = scalar_lea.vmem %s0, 4
    %v615 = vld [vmem:[%s614] sm:%s3]
    %s616 = scalar_lea.vmem [#allocation0], 8
    %617 = vst [vmem:[%s616] sm:%s3] %v615
    %v618 = vld [vmem:[%s0] sm:%s3]
    %619 = vst [vmem:[#allocation0] sm:%s3] %v618
    %v620 = vld [vmem:[#allocation0] sm:$0xf]
    %621 = vst [vmem:[%s1] sm:$0xf] %v620
    %s622 = scalar_lea.vmem [#allocation0], 8
    %v623 = vld [vmem:[%s622] sm:$0xf]
    %s624 = scalar_lea.vmem %s1, 8
    %625 = vst [vmem:[%s624] sm:$0xf] %v623
    %s626 = scalar_lea.vmem [#allocation0], 16
    %v627 = vld [vmem:[%s626] sm:$0xf]
    %s628 = scalar_lea.vmem %s1, 4
    %629 = vst [vmem:[%s628] sm:$0xf] %v627
    %s630 = scalar_lea.vmem [#allocation0], 24
    %v631 = vld [vmem:[%s630] sm:$0xf]
    %s632 = scalar_lea.vmem %s1, 12
    %633 = vst [vmem:[%s632] sm:$0xf] %v631
    %s634 = scalar_lea.vmem [#allocation0], 32
    %v635 = vld [vmem:[%s634] sm:$0xf]
    %s636 = scalar_lea.vmem %s1, 16
    %637 = vst [vmem:[%s636] sm:$0xf] %v635
    %s638 = scalar_lea.vmem [#allocation0], 40
    %v639 = vld [vmem:[%s638] sm:$0xf]
    %s640 = scalar_lea.vmem %s1, 24
    %641 = vst [vmem:[%s640] sm:$0xf] %v639
    %s642 = scalar_lea.vmem [#allocation0], 48
    %v643 = vld [vmem:[%s642] sm:$0xf]
    %s644 = scalar_lea.vmem %s1, 20
    %645 = vst [vmem:[%s644] sm:$0xf] %v643
    %s646 = scalar_lea.vmem [#allocation0], 56
    %v647 = vld [vmem:[%s646] sm:$0xf]
    %s648 = scalar_lea.vmem %s1, 28
    %649 = vst [vmem:[%s648] sm:$0xf] %v647
    %s650 = scalar_lea.vmem [#allocation0], 64
    %v651 = vld [vmem:[%s650] sm:$0xf]
    %s652 = scalar_lea.vmem %s1, 32
    %653 = vst [vmem:[%s652] sm:$0xf] %v651
    %s654 = scalar_lea.vmem [#allocation0], 72
    %v655 = vld [vmem:[%s654] sm:$0xf]
    %s656 = scalar_lea.vmem %s1, 40
    %657 = vst [vmem:[%s656] sm:$0xf] %v655
    %s658 = scalar_lea.vmem [#allocation0], 80
    %v659 = vld [vmem:[%s658] sm:$0xf]
    %s660 = scalar_lea.vmem %s1, 36
    %661 = vst [vmem:[%s660] sm:$0xf] %v659
    %s662 = scalar_lea.vmem [#allocation0], 88
    %v663 = vld [vmem:[%s662] sm:$0xf]
    %s664 = scalar_lea.vmem %s1, 44
    %665 = vst [vmem:[%s664] sm:$0xf] %v663
    %s666 = scalar_lea.vmem [#allocation0], 96
    %v667 = vld [vmem:[%s666] sm:$0xf]
    %s668 = scalar_lea.vmem %s1, 48
    %669 = vst [vmem:[%s668] sm:$0xf] %v667
    %s670 = scalar_lea.vmem [#allocation0], 104
    %v671 = vld [vmem:[%s670] sm:$0xf]
    %s672 = scalar_lea.vmem %s1, 56
    %673 = vst [vmem:[%s672] sm:$0xf] %v671
    %s674 = scalar_lea.vmem [#allocation0], 112
    %v675 = vld [vmem:[%s674] sm:$0xf]
    %s676 = scalar_lea.vmem %s1, 52
    %677 = vst [vmem:[%s676] sm:$0xf] %v675
    %s678 = scalar_lea.vmem [#allocation0], 120
    %v679 = vld [vmem:[%s678] sm:$0xf]
    %s680 = scalar_lea.vmem %s1, 60
    %681 = vst [vmem:[%s680] sm:$0xf] %v679
    %s682 = scalar_lea.vmem [#allocation0], 128
    %v683 = vld [vmem:[%s682] sm:$0xf]
    %s684 = scalar_lea.vmem %s1, 64
    %685 = vst [vmem:[%s684] sm:$0xf] %v683
    %s686 = scalar_lea.vmem [#allocation0], 136
    %v687 = vld [vmem:[%s686] sm:$0xf]
    %s688 = scalar_lea.vmem %s1, 72
    %689 = vst [vmem:[%s688] sm:$0xf] %v687
    %s690 = scalar_lea.vmem [#allocation0], 144
    %v691 = vld [vmem:[%s690] sm:$0xf]
    %s692 = scalar_lea.vmem %s1, 68
    %693 = vst [vmem:[%s692] sm:$0xf] %v691
    %s694 = scalar_lea.vmem [#allocation0], 152
    %v695 = vld [vmem:[%s694] sm:$0xf]
    %s696 = scalar_lea.vmem %s1, 76
    %697 = vst [vmem:[%s696] sm:$0xf] %v695
    %s698 = scalar_lea.vmem [#allocation0], 160
    %v699 = vld [vmem:[%s698] sm:$0xf]
    %s700 = scalar_lea.vmem %s1, 80
    %701 = vst [vmem:[%s700] sm:$0xf] %v699
    %s702 = scalar_lea.vmem [#allocation0], 168
    %v703 = vld [vmem:[%s702] sm:$0xf]
    %s704 = scalar_lea.vmem %s1, 88
    %705 = vst [vmem:[%s704] sm:$0xf] %v703
    %s706 = scalar_lea.vmem [#allocation0], 176
    %v707 = vld [vmem:[%s706] sm:$0xf]
    %s708 = scalar_lea.vmem %s1, 84
    %709 = vst [vmem:[%s708] sm:$0xf] %v707
    %s710 = scalar_lea.vmem [#allocation0], 184
    %v711 = vld [vmem:[%s710] sm:$0xf]
    %s712 = scalar_lea.vmem %s1, 92
    %713 = vst [vmem:[%s712] sm:$0xf] %v711
    %s714 = scalar_lea.vmem [#allocation0], 192
    %v715 = vld [vmem:[%s714] sm:$0xf]
    %s716 = scalar_lea.vmem %s1, 96
    %717 = vst [vmem:[%s716] sm:$0xf] %v715
    %s718 = scalar_lea.vmem [#allocation0], 200
    %v719 = vld [vmem:[%s718] sm:$0xf]
    %s720 = scalar_lea.vmem %s1, 104
    %721 = vst [vmem:[%s720] sm:$0xf] %v719
    %s722 = scalar_lea.vmem [#allocation0], 208
    %v723 = vld [vmem:[%s722] sm:$0xf]
    %s724 = scalar_lea.vmem %s1, 100
    %725 = vst [vmem:[%s724] sm:$0xf] %v723
    %s726 = scalar_lea.vmem [#allocation0], 216
    %v727 = vld [vmem:[%s726] sm:$0xf]
    %s728 = scalar_lea.vmem %s1, 108
    %729 = vst [vmem:[%s728] sm:$0xf] %v727
    %s730 = scalar_lea.vmem [#allocation0], 224
    %v731 = vld [vmem:[%s730] sm:$0xf]
    %s732 = scalar_lea.vmem %s1, 112
    %733 = vst [vmem:[%s732] sm:$0xf] %v731
    %s734 = scalar_lea.vmem [#allocation0], 232
    %v735 = vld [vmem:[%s734] sm:$0xf]
    %s736 = scalar_lea.vmem %s1, 120
    %737 = vst [vmem:[%s736] sm:$0xf] %v735
    %s738 = scalar_lea.vmem [#allocation0], 240
    %v739 = vld [vmem:[%s738] sm:$0xf]
    %s740 = scalar_lea.vmem %s1, 116
    %741 = vst [vmem:[%s740] sm:$0xf] %v739
    %s742 = scalar_lea.vmem [#allocation0], 248
    %v743 = vld [vmem:[%s742] sm:$0xf]
    %s744 = scalar_lea.vmem %s1, 124
    %745 = vst [vmem:[%s744] sm:$0xf] %v743
    %s746 = scalar_lea.vmem [#allocation0], 256
    %v747 = vld [vmem:[%s746] sm:$0xf]
    %s748 = scalar_lea.vmem %s1, 128
    %749 = vst [vmem:[%s748] sm:$0xf] %v747
    %s750 = scalar_lea.vmem [#allocation0], 264
    %v751 = vld [vmem:[%s750] sm:$0xf]
    %s752 = scalar_lea.vmem %s1, 136
    %753 = vst [vmem:[%s752] sm:$0xf] %v751
    %s754 = scalar_lea.vmem [#allocation0], 272
    %v755 = vld [vmem:[%s754] sm:$0xf]
    %s756 = scalar_lea.vmem %s1, 132
    %757 = vst [vmem:[%s756] sm:$0xf] %v755
    %s758 = scalar_lea.vmem [#allocation0], 280
    %v759 = vld [vmem:[%s758] sm:$0xf]
    %s760 = scalar_lea.vmem %s1, 140
    %761 = vst [vmem:[%s760] sm:$0xf] %v759
    %s762 = scalar_lea.vmem [#allocation0], 288
    %v763 = vld [vmem:[%s762] sm:$0xf]
    %s764 = scalar_lea.vmem %s1, 144
    %765 = vst [vmem:[%s764] sm:$0xf] %v763
    %s766 = scalar_lea.vmem [#allocation0], 296
    %v767 = vld [vmem:[%s766] sm:$0xf]
    %s768 = scalar_lea.vmem %s1, 152
    %769 = vst [vmem:[%s768] sm:$0xf] %v767
    %s770 = scalar_lea.vmem [#allocation0], 304
    %v771 = vld [vmem:[%s770] sm:$0xf]
    %s772 = scalar_lea.vmem %s1, 148
    %773 = vst [vmem:[%s772] sm:$0xf] %v771
    %s774 = scalar_lea.vmem [#allocation0], 312
    %v775 = vld [vmem:[%s774] sm:$0xf]
    %s776 = scalar_lea.vmem %s1, 156
    %777 = vst [vmem:[%s776] sm:$0xf] %v775
    %s778 = scalar_lea.vmem [#allocation0], 320
    %v779 = vld [vmem:[%s778] sm:$0xf]
    %s780 = scalar_lea.vmem %s1, 160
    %781 = vst [vmem:[%s780] sm:$0xf] %v779
    %s782 = scalar_lea.vmem [#allocation0], 328
    %v783 = vld [vmem:[%s782] sm:$0xf]
    %s784 = scalar_lea.vmem %s1, 168
    %785 = vst [vmem:[%s784] sm:$0xf] %v783
    %s786 = scalar_lea.vmem [#allocation0], 336
    %v787 = vld [vmem:[%s786] sm:$0xf]
    %s788 = scalar_lea.vmem %s1, 164
    %789 = vst [vmem:[%s788] sm:$0xf] %v787
    %s790 = scalar_lea.vmem [#allocation0], 344
    %v791 = vld [vmem:[%s790] sm:$0xf]
    %s792 = scalar_lea.vmem %s1, 172
    %793 = vst [vmem:[%s792] sm:$0xf] %v791
    %s794 = scalar_lea.vmem [#allocation0], 352
    %v795 = vld [vmem:[%s794] sm:$0xf]
    %s796 = scalar_lea.vmem %s1, 176
    %797 = vst [vmem:[%s796] sm:$0xf] %v795
    %s798 = scalar_lea.vmem [#allocation0], 360
    %v799 = vld [vmem:[%s798] sm:$0xf]
    %s800 = scalar_lea.vmem %s1, 184
    %801 = vst [vmem:[%s800] sm:$0xf] %v799
    %s802 = scalar_lea.vmem [#allocation0], 368
    %v803 = vld [vmem:[%s802] sm:$0xf]
    %s804 = scalar_lea.vmem %s1, 180
    %805 = vst [vmem:[%s804] sm:$0xf] %v803
    %s806 = scalar_lea.vmem [#allocation0], 376
    %v807 = vld [vmem:[%s806] sm:$0xf]
    %s808 = scalar_lea.vmem %s1, 188
    %809 = vst [vmem:[%s808] sm:$0xf] %v807
    %s810 = scalar_lea.vmem [#allocation0], 384
    %v811 = vld [vmem:[%s810] sm:$0xf]
    %s812 = scalar_lea.vmem %s1, 192
    %813 = vst [vmem:[%s812] sm:$0xf] %v811
    %s814 = scalar_lea.vmem [#allocation0], 392
    %v815 = vld [vmem:[%s814] sm:$0xf]
    %s816 = scalar_lea.vmem %s1, 200
    %817 = vst [vmem:[%s816] sm:$0xf] %v815
    %s818 = scalar_lea.vmem [#allocation0], 400
    %v819 = vld [vmem:[%s818] sm:$0xf]
    %s820 = scalar_lea.vmem %s1, 196
    %821 = vst [vmem:[%s820] sm:$0xf] %v819
    %s822 = scalar_lea.vmem [#allocation0], 408
    %v823 = vld [vmem:[%s822] sm:$0xf]
    %s824 = scalar_lea.vmem %s1, 204
    %825 = vst [vmem:[%s824] sm:$0xf] %v823
    %s826 = scalar_lea.vmem [#allocation0], 416
    %v827 = vld [vmem:[%s826] sm:$0xf]
    %s828 = scalar_lea.vmem %s1, 208
    %829 = vst [vmem:[%s828] sm:$0xf] %v827
    %s830 = scalar_lea.vmem [#allocation0], 424
    %v831 = vld [vmem:[%s830] sm:$0xf]
    %s832 = scalar_lea.vmem %s1, 216
    %833 = vst [vmem:[%s832] sm:$0xf] %v831
    %s834 = scalar_lea.vmem [#allocation0], 432
    %v835 = vld [vmem:[%s834] sm:$0xf]
    %s836 = scalar_lea.vmem %s1, 212
    %837 = vst [vmem:[%s836] sm:$0xf] %v835
    %s838 = scalar_lea.vmem [#allocation0], 440
    %v839 = vld [vmem:[%s838] sm:$0xf]
    %s840 = scalar_lea.vmem %s1, 220
    %841 = vst [vmem:[%s840] sm:$0xf] %v839
    %s842 = scalar_lea.vmem [#allocation0], 448
    %v843 = vld [vmem:[%s842] sm:$0xf]
    %s844 = scalar_lea.vmem %s1, 224
    %845 = vst [vmem:[%s844] sm:$0xf] %v843
    %s846 = scalar_lea.vmem [#allocation0], 456
    %v847 = vld [vmem:[%s846] sm:$0xf]
    %s848 = scalar_lea.vmem %s1, 232
    %849 = vst [vmem:[%s848] sm:$0xf] %v847
    %s850 = scalar_lea.vmem [#allocation0], 464
    %v851 = vld [vmem:[%s850] sm:$0xf]
    %s852 = scalar_lea.vmem %s1, 228
    %853 = vst [vmem:[%s852] sm:$0xf] %v851
    %s854 = scalar_lea.vmem [#allocation0], 472
    %v855 = vld [vmem:[%s854] sm:$0xf]
    %s856 = scalar_lea.vmem %s1, 236
    %857 = vst [vmem:[%s856] sm:$0xf] %v855
    %s858 = scalar_lea.vmem [#allocation0], 480
    %v859 = vld [vmem:[%s858] sm:$0xf]
    %s860 = scalar_lea.vmem %s1, 240
    %861 = vst [vmem:[%s860] sm:$0xf] %v859
    %s862 = scalar_lea.vmem [#allocation0], 488
    %v863 = vld [vmem:[%s862] sm:$0xf]
    %s864 = scalar_lea.vmem %s1, 248
    %865 = vst [vmem:[%s864] sm:$0xf] %v863
    %s866 = scalar_lea.vmem [#allocation0], 496
    %v867 = vld [vmem:[%s866] sm:$0xf]
    %s868 = scalar_lea.vmem %s1, 244
    %869 = vst [vmem:[%s868] sm:$0xf] %v867
    %s870 = scalar_lea.vmem [#allocation0], 504
    %v871 = vld [vmem:[%s870] sm:$0xf]
    %s872 = scalar_lea.vmem %s1, 252
    %873 = vst [vmem:[%s872] sm:$0xf] %v871
    %s874 = scalar_lea.vmem [#allocation0], 512
    %v875 = vld [vmem:[%s874] sm:$0xf]
    %s876 = scalar_lea.vmem %s1, 256
    %877 = vst [vmem:[%s876] sm:$0xf] %v875
    %s878 = scalar_lea.vmem [#allocation0], 520
    %v879 = vld [vmem:[%s878] sm:$0xf]
    %s880 = scalar_lea.vmem %s1, 264
    %881 = vst [vmem:[%s880] sm:$0xf] %v879
    %s882 = scalar_lea.vmem [#allocation0], 528
    %v883 = vld [vmem:[%s882] sm:$0xf]
    %s884 = scalar_lea.vmem %s1, 260
    %885 = vst [vmem:[%s884] sm:$0xf] %v883
    %s886 = scalar_lea.vmem [#allocation0], 536
    %v887 = vld [vmem:[%s886] sm:$0xf]
    %s888 = scalar_lea.vmem %s1, 268
    %889 = vst [vmem:[%s888] sm:$0xf] %v887
    %s890 = scalar_lea.vmem [#allocation0], 544
    %v891 = vld [vmem:[%s890] sm:$0xf]
    %s892 = scalar_lea.vmem %s1, 272
    %893 = vst [vmem:[%s892] sm:$0xf] %v891
    %s894 = scalar_lea.vmem [#allocation0], 552
    %v895 = vld [vmem:[%s894] sm:$0xf]
    %s896 = scalar_lea.vmem %s1, 280
    %897 = vst [vmem:[%s896] sm:$0xf] %v895
    %s898 = scalar_lea.vmem [#allocation0], 560
    %v899 = vld [vmem:[%s898] sm:$0xf]
    %s900 = scalar_lea.vmem %s1, 276
    %901 = vst [vmem:[%s900] sm:$0xf] %v899
    %s902 = scalar_lea.vmem [#allocation0], 568
    %v903 = vld [vmem:[%s902] sm:$0xf]
    %s904 = scalar_lea.vmem %s1, 284
    %905 = vst [vmem:[%s904] sm:$0xf] %v903
    %s906 = scalar_lea.vmem [#allocation0], 576
    %v907 = vld [vmem:[%s906] sm:$0xf]
    %s908 = scalar_lea.vmem %s1, 288
    %909 = vst [vmem:[%s908] sm:$0xf] %v907
    %s910 = scalar_lea.vmem [#allocation0], 584
    %v911 = vld [vmem:[%s910] sm:$0xf]
    %s912 = scalar_lea.vmem %s1, 296
    %913 = vst [vmem:[%s912] sm:$0xf] %v911
    %s914 = scalar_lea.vmem [#allocation0], 592
    %v915 = vld [vmem:[%s914] sm:$0xf]
    %s916 = scalar_lea.vmem %s1, 292
    %917 = vst [vmem:[%s916] sm:$0xf] %v915
    %s918 = scalar_lea.vmem [#allocation0], 600
    %v919 = vld [vmem:[%s918] sm:$0xf]
    %s920 = scalar_lea.vmem %s1, 300
    %921 = vst [vmem:[%s920] sm:$0xf] %v919
    %s922 = scalar_lea.vmem [#allocation0], 608
    %v923 = vld [vmem:[%s922] sm:$0xf]
    %s924 = scalar_lea.vmem %s1, 304
    %925 = vst [vmem:[%s924] sm:$0xf] %v923
    %s926 = scalar_lea.vmem [#allocation0], 616
    %v927 = vld [vmem:[%s926] sm:$0xf]
    %s928 = scalar_lea.vmem %s1, 312
    %929 = vst [vmem:[%s928] sm:$0xf] %v927
    %s930 = scalar_lea.vmem [#allocation0], 624
    %v931 = vld [vmem:[%s930] sm:$0xf]
    %s932 = scalar_lea.vmem %s1, 308
    %933 = vst [vmem:[%s932] sm:$0xf] %v931
    %s934 = scalar_lea.vmem [#allocation0], 632
    %v935 = vld [vmem:[%s934] sm:$0xf]
    %s936 = scalar_lea.vmem %s1, 316
    %937 = vst [vmem:[%s936] sm:$0xf] %v935
    %s938 = scalar_lea.vmem [#allocation0], 640
    %v939 = vld [vmem:[%s938] sm:$0xf]
    %s940 = scalar_lea.vmem %s1, 320
    %941 = vst [vmem:[%s940] sm:$0xf] %v939
    %s942 = scalar_lea.vmem [#allocation0], 648
    %v943 = vld [vmem:[%s942] sm:$0xf]
    %s944 = scalar_lea.vmem %s1, 328
    %945 = vst [vmem:[%s944] sm:$0xf] %v943
    %s946 = scalar_lea.vmem [#allocation0], 656
    %v947 = vld [vmem:[%s946] sm:$0xf]
    %s948 = scalar_lea.vmem %s1, 324
    %949 = vst [vmem:[%s948] sm:$0xf] %v947
    %s950 = scalar_lea.vmem [#allocation0], 664
    %v951 = vld [vmem:[%s950] sm:$0xf]
    %s952 = scalar_lea.vmem %s1, 332
    %953 = vst [vmem:[%s952] sm:$0xf] %v951
    %s954 = scalar_lea.vmem [#allocation0], 672
    %v955 = vld [vmem:[%s954] sm:$0xf]
    %s956 = scalar_lea.vmem %s1, 336
    %957 = vst [vmem:[%s956] sm:$0xf] %v955
    %s958 = scalar_lea.vmem [#allocation0], 680
    %v959 = vld [vmem:[%s958] sm:$0xf]
    %s960 = scalar_lea.vmem %s1, 344
    %961 = vst [vmem:[%s960] sm:$0xf] %v959
    %s962 = scalar_lea.vmem [#allocation0], 688
    %v963 = vld [vmem:[%s962] sm:$0xf]
    %s964 = scalar_lea.vmem %s1, 340
    %965 = vst [vmem:[%s964] sm:$0xf] %v963
    %s966 = scalar_lea.vmem [#allocation0], 696
    %v967 = vld [vmem:[%s966] sm:$0xf]
    %s968 = scalar_lea.vmem %s1, 348
    %969 = vst [vmem:[%s968] sm:$0xf] %v967
    %s970 = scalar_lea.vmem [#allocation0], 704
    %v971 = vld [vmem:[%s970] sm:$0xf]
    %s972 = scalar_lea.vmem %s1, 352
    %973 = vst [vmem:[%s972] sm:$0xf] %v971
    %s974 = scalar_lea.vmem [#allocation0], 712
    %v975 = vld [vmem:[%s974] sm:$0xf]
    %s976 = scalar_lea.vmem %s1, 360
    %977 = vst [vmem:[%s976] sm:$0xf] %v975
    %s978 = scalar_lea.vmem [#allocation0], 720
    %v979 = vld [vmem:[%s978] sm:$0xf]
    %s980 = scalar_lea.vmem %s1, 356
    %981 = vst [vmem:[%s980] sm:$0xf] %v979
    %s982 = scalar_lea.vmem [#allocation0], 728
    %v983 = vld [vmem:[%s982] sm:$0xf]
    %s984 = scalar_lea.vmem %s1, 364
    %985 = vst [vmem:[%s984] sm:$0xf] %v983
    %s986 = scalar_lea.vmem [#allocation0], 736
    %v987 = vld [vmem:[%s986] sm:$0xf]
    %s988 = scalar_lea.vmem %s1, 368
    %989 = vst [vmem:[%s988] sm:$0xf] %v987
    %s990 = scalar_lea.vmem [#allocation0], 744
    %v991 = vld [vmem:[%s990] sm:$0xf]
    %s992 = scalar_lea.vmem %s1, 376
    %993 = vst [vmem:[%s992] sm:$0xf] %v991
    %s994 = scalar_lea.vmem [#allocation0], 752
    %v995 = vld [vmem:[%s994] sm:$0xf]
    %s996 = scalar_lea.vmem %s1, 372
    %997 = vst [vmem:[%s996] sm:$0xf] %v995
    %s998 = scalar_lea.vmem [#allocation0], 760
    %v999 = vld [vmem:[%s998] sm:$0xf]
    %s1000 = scalar_lea.vmem %s1, 380
    %1001 = vst [vmem:[%s1000] sm:$0xf] %v999
    %s1002 = scalar_lea.vmem [#allocation0], 768
    %v1003 = vld [vmem:[%s1002] sm:$0xf]
    %s1004 = scalar_lea.vmem %s1, 384
    %1005 = vst [vmem:[%s1004] sm:$0xf] %v1003
    %s1006 = scalar_lea.vmem [#allocation0], 776
    %v1007 = vld [vmem:[%s1006] sm:$0xf]
    %s1008 = scalar_lea.vmem %s1, 392
    %1009 = vst [vmem:[%s1008] sm:$0xf] %v1007
    %s1010 = scalar_lea.vmem [#allocation0], 784
    %v1011 = vld [vmem:[%s1010] sm:$0xf]
    %s1012 = scalar_lea.vmem %s1, 388
    %1013 = vst [vmem:[%s1012] sm:$0xf] %v1011
    %s1014 = scalar_lea.vmem [#allocation0], 792
    %v1015 = vld [vmem:[%s1014] sm:$0xf]
    %s1016 = scalar_lea.vmem %s1, 396
    %1017 = vst [vmem:[%s1016] sm:$0xf] %v1015
    %s1018 = scalar_lea.vmem [#allocation0], 800
    %v1019 = vld [vmem:[%s1018] sm:$0xf]
    %s1020 = scalar_lea.vmem %s1, 400
    %1021 = vst [vmem:[%s1020] sm:$0xf] %v1019
    %s1022 = scalar_lea.vmem [#allocation0], 808
    %v1023 = vld [vmem:[%s1022] sm:$0xf]
    %s1024 = scalar_lea.vmem %s1, 408
    %1025 = vst [vmem:[%s1024] sm:$0xf] %v1023
    %s1026 = scalar_lea.vmem [#allocation0], 816
    %v1027 = vld [vmem:[%s1026] sm:$0xf]
    %s1028 = scalar_lea.vmem %s1, 404
    %1029 = vst [vmem:[%s1028] sm:$0xf] %v1027
    %s1030 = scalar_lea.vmem [#allocation0], 824
    %v1031 = vld [vmem:[%s1030] sm:$0xf]
    %s1032 = scalar_lea.vmem %s1, 412
    %1033 = vst [vmem:[%s1032] sm:$0xf] %v1031
    %s1034 = scalar_lea.vmem [#allocation0], 832
    %v1035 = vld [vmem:[%s1034] sm:$0xf]
    %s1036 = scalar_lea.vmem %s1, 416
    %1037 = vst [vmem:[%s1036] sm:$0xf] %v1035
    %s1038 = scalar_lea.vmem [#allocation0], 840
    %v1039 = vld [vmem:[%s1038] sm:$0xf]
    %s1040 = scalar_lea.vmem %s1, 424
    %1041 = vst [vmem:[%s1040] sm:$0xf] %v1039
    %s1042 = scalar_lea.vmem [#allocation0], 848
    %v1043 = vld [vmem:[%s1042] sm:$0xf]
    %s1044 = scalar_lea.vmem %s1, 420
    %1045 = vst [vmem:[%s1044] sm:$0xf] %v1043
    %s1046 = scalar_lea.vmem [#allocation0], 856
    %v1047 = vld [vmem:[%s1046] sm:$0xf]
    %s1048 = scalar_lea.vmem %s1, 428
    %1049 = vst [vmem:[%s1048] sm:$0xf] %v1047
    %s1050 = scalar_lea.vmem [#allocation0], 864
    %v1051 = vld [vmem:[%s1050] sm:$0xf]
    %s1052 = scalar_lea.vmem %s1, 432
    %1053 = vst [vmem:[%s1052] sm:$0xf] %v1051
    %s1054 = scalar_lea.vmem [#allocation0], 872
    %v1055 = vld [vmem:[%s1054] sm:$0xf]
    %s1056 = scalar_lea.vmem %s1, 440
    %1057 = vst [vmem:[%s1056] sm:$0xf] %v1055
    %s1058 = scalar_lea.vmem [#allocation0], 880
    %v1059 = vld [vmem:[%s1058] sm:$0xf]
    %s1060 = scalar_lea.vmem %s1, 436
    %1061 = vst [vmem:[%s1060] sm:$0xf] %v1059
    %s1062 = scalar_lea.vmem [#allocation0], 888
    %v1063 = vld [vmem:[%s1062] sm:$0xf]
    %s1064 = scalar_lea.vmem %s1, 444
    %1065 = vst [vmem:[%s1064] sm:$0xf] %v1063
    %s1066 = scalar_lea.vmem [#allocation0], 896
    %v1067 = vld [vmem:[%s1066] sm:$0xf]
    %s1068 = scalar_lea.vmem %s1, 448
    %1069 = vst [vmem:[%s1068] sm:$0xf] %v1067
    %s1070 = scalar_lea.vmem [#allocation0], 904
    %v1071 = vld [vmem:[%s1070] sm:$0xf]
    %s1072 = scalar_lea.vmem %s1, 456
    %1073 = vst [vmem:[%s1072] sm:$0xf] %v1071
    %s1074 = scalar_lea.vmem [#allocation0], 912
    %v1075 = vld [vmem:[%s1074] sm:$0xf]
    %s1076 = scalar_lea.vmem %s1, 452
    %1077 = vst [vmem:[%s1076] sm:$0xf] %v1075
    %s1078 = scalar_lea.vmem [#allocation0], 920
    %v1079 = vld [vmem:[%s1078] sm:$0xf]
    %s1080 = scalar_lea.vmem %s1, 460
    %1081 = vst [vmem:[%s1080] sm:$0xf] %v1079
    %s1082 = scalar_lea.vmem [#allocation0], 928
    %v1083 = vld [vmem:[%s1082] sm:$0xf]
    %s1084 = scalar_lea.vmem %s1, 464
    %1085 = vst [vmem:[%s1084] sm:$0xf] %v1083
    %s1086 = scalar_lea.vmem [#allocation0], 936
    %v1087 = vld [vmem:[%s1086] sm:$0xf]
    %s1088 = scalar_lea.vmem %s1, 472
    %1089 = vst [vmem:[%s1088] sm:$0xf] %v1087
    %s1090 = scalar_lea.vmem [#allocation0], 944
    %v1091 = vld [vmem:[%s1090] sm:$0xf]
    %s1092 = scalar_lea.vmem %s1, 468
    %1093 = vst [vmem:[%s1092] sm:$0xf] %v1091
    %s1094 = scalar_lea.vmem [#allocation0], 952
    %v1095 = vld [vmem:[%s1094] sm:$0xf]
    %s1096 = scalar_lea.vmem %s1, 476
    %1097 = vst [vmem:[%s1096] sm:$0xf] %v1095
    %s1098 = scalar_lea.vmem [#allocation0], 960
    %v1099 = vld [vmem:[%s1098] sm:$0xf]
    %s1100 = scalar_lea.vmem %s1, 480
    %1101 = vst [vmem:[%s1100] sm:$0xf] %v1099
    %s1102 = scalar_lea.vmem [#allocation0], 968
    %v1103 = vld [vmem:[%s1102] sm:$0xf]
    %s1104 = scalar_lea.vmem %s1, 488
    %1105 = vst [vmem:[%s1104] sm:$0xf] %v1103
    %s1106 = scalar_lea.vmem [#allocation0], 976
    %v1107 = vld [vmem:[%s1106] sm:$0xf]
    %s1108 = scalar_lea.vmem %s1, 484
    %1109 = vst [vmem:[%s1108] sm:$0xf] %v1107
    %s1110 = scalar_lea.vmem [#allocation0], 984
    %v1111 = vld [vmem:[%s1110] sm:$0xf]
    %s1112 = scalar_lea.vmem %s1, 492
    %1113 = vst [vmem:[%s1112] sm:$0xf] %v1111

// kernel: tile.131
$region0: #{tile.131}
  #allocation0 [shape = 's32[1]{0}', space=sflag, size = 0x4, scoped, tag = 'scoped memory for tile.131']
  %s0 = inlined_call_operand.vmem [shape: f32[4], index: 0, kind: input, shape index: {}]
  %s1 = inlined_call_operand.vmem [shape: f32[2,4], index: 1, kind: output, shape index: {}]
  // Predicated region
  $region2: #{tile.131} parent=0 // pred_check
    _
  $region3: #{tile.131} parent=0 // pred_check_branch
    %3 = sbr.rel (0) target = $region5
  $region4: #{tile.131} parent=0 // pred_region
    _
  $region5: #{tile.131} parent=0 // pred_fallthru
    _
  %v4 = vld [vmem:[%s0] ss:$0 sm:$0xff]
  %5 = vst [vmem:[%s1] sm:$0x3] %v4

// kernel: tile.5
$region0: #{tile.5}
  %s0 = inlined_call_operand.vmem [shape: f32[2,4], index: 0, kind: input, shape index: {}]
  %s1 = inlined_call_operand.vmem [shape: f32[8,1], index: 1, kind: output, shape index: {}]
  $region1: #{tile.5} parent=0
    #allocation0 [shape = 'u8[4096]{0}', space=vmem, size = 0x1000, scoped, tag = 'scoped mem for input reshape']
    %s3 = sshllo.u32 0, 2
    %v4 = vld [vmem:[%s0] sm:%s3]
    %5 = vst [vmem:[#allocation0] sm:%s3] %v4
    %v6 = vld [vmem:[#allocation0] sm:$0x3]
    %vm7 = vcmask 7168
    %8 = vst.msk [vmem:[%s1] ss:$4 sm:$0x3] %vm7, %v6
    %v9 = vld [vmem:[#allocation0] sm:$0x3]
    %10 = vrot.lane.b32.xlu0 %v9, 127
    %v11 = vpop.permute.xlu0 %10
    %vm12 = vcmask 7168
    %s13 = scalar_lea.vmem %s1, 1
    %14 = vst.msk [vmem:[%s13] ss:$4 sm:$0x3] %vm12, %v11
    %v15 = vld [vmem:[#allocation0] sm:$0x3]
    %16 = vrot.lane.b32.xlu0 %v15, 126
    %v17 = vpop.permute.xlu0 %16
    %vm18 = vcmask 7168
    %s19 = scalar_lea.vmem %s1, 2
    %20 = vst.msk [vmem:[%s19] ss:$4 sm:$0x3] %vm18, %v17
    %v21 = vld [vmem:[#allocation0] sm:$0x3]
    %22 = vrot.lane.b32.xlu0 %v21, 125
    %v23 = vpop.permute.xlu0 %22
    %vm24 = vcmask 7168
    %s25 = scalar_lea.vmem %s1, 3
    %26 = vst.msk [vmem:[%s25] ss:$4 sm:$0x3] %vm24, %v23

// kernel: tile.103
$region0: #{tile.103}
  %s0 = inlined_call_operand.vmem [shape: f32[2,4,256], index: 0, kind: input, shape index: {}]
  %s1 = inlined_call_operand.vmem [shape: f32[8,256], index: 1, kind: output, shape index: {}]
  $region1: #{tile.103} parent=0
    #allocation0 [shape = 'u8[16384]{0}', space=vmem, size = 0x4000, scoped, tag = 'scoped mem for input reshape']
    %s3 = sshllo.u32 0, 4
    %s4 = smul.addr 4, 3
    %s5 = scalar_lea.vmem %s0, %s4
    %v6 = vld [vmem:[%s5] sm:%s3]
    %s7 = scalar_lea.vmem [#allocation0], 24
    %8 = vst [vmem:[%s7] sm:%s3] %v6
    %s9 = smul.addr 4, 2
    %s10 = scalar_lea.vmem %s0, %s9
    %v11 = vld [vmem:[%s10] sm:%s3]
    %s12 = scalar_lea.vmem [#allocation0], 16
    %13 = vst [vmem:[%s12] sm:%s3] %v11
    %s14 = scalar_lea.vmem %s0, 4
    %v15 = vld [vmem:[%s14] sm:%s3]
    %s16 = scalar_lea.vmem [#allocation0], 8
    %17 = vst [vmem:[%s16] sm:%s3] %v15
    %v18 = vld [vmem:[%s0] sm:%s3]
    %19 = vst [vmem:[#allocation0] sm:%s3] %v18
    %v20 = vld [vmem:[#allocation0] sm:$0xf]
    %21 = vst [vmem:[%s1] sm:$0xf] %v20
    %s22 = scalar_lea.vmem [#allocation0], 8
    %v23 = vld [vmem:[%s22] sm:$0xf]
    %s24 = scalar_lea.vmem %s1, 8
    %25 = vst [vmem:[%s24] sm:$0xf] %v23
    %s26 = scalar_lea.vmem [#allocation0], 16
    %v27 = vld [vmem:[%s26] sm:$0xf]
    %s28 = scalar_lea.vmem %s1, 4
    %29 = vst [vmem:[%s28] sm:$0xf] %v27
    %s30 = scalar_lea.vmem [#allocation0], 24
    %v31 = vld [vmem:[%s30] sm:$0xf]
    %s32 = scalar_lea.vmem %s1, 12
    %33 = vst [vmem:[%s32] sm:$0xf] %v31

// kernel: tile.156
$region0: #{tile.156}
  #allocation0 [shape = 's32[1]{0}', space=sflag, size = 0x4, scoped, tag = 'scoped memory for tile.156']
  %s0 = inlined_call_operand.vmem [shape: f32[48], index: 0, kind: input, shape index: {}]
  %s1 = inlined_call_operand.vmem [shape: f32[2,48], index: 1, kind: output, shape index: {}]
  // Predicated region
  $region2: #{tile.156} parent=0 // pred_check
    _
  $region3: #{tile.156} parent=0 // pred_check_branch
    %3 = sbr.rel (0) target = $region5
  $region4: #{tile.156} parent=0 // pred_region
    _
  $region5: #{tile.156} parent=0 // pred_fallthru
    _
  %v4 = vld [vmem:[%s0] ss:$0 sm:$0xff]
  %5 = vst [vmem:[%s1] sm:$0x3] %v4

// kernel: tile.9
$region0: #{tile.9}
  %s0 = inlined_call_operand.vmem [shape: f32[2,48], index: 0, kind: input, shape index: {}]
  %s1 = inlined_call_operand.vmem [shape: f32[96,1], index: 1, kind: output, shape index: {}]
  $region1: #{tile.9} parent=0
    #allocation0 [shape = 'u8[4096]{0}', space=vmem, size = 0x1000, scoped, tag = 'scoped mem for input reshape']
    %s3 = sshllo.u32 0, 2
    %v4 = vld [vmem:[%s0] sm:%s3]
    %5 = vst [vmem:[#allocation0] sm:%s3] %v4
    %v6 = vld [vmem:[#allocation0] sm:$0x3]
    %vm7 = vcmask 7168
    %8 = vst.msk [vmem:[%s1] ss:$48 sm:$0x3] %vm7, %v6
    %v9 = vld [vmem:[#allocation0] sm:$0x3]
    %10 = vrot.lane.b32.xlu0 %v9, 127
    %v11 = vpop.permute.xlu0 %10
    %vm12 = vcmask 7168
    %s13 = scalar_lea.vmem %s1, 1
    %14 = vst.msk [vmem:[%s13] ss:$48 sm:$0x3] %vm12, %v11
    %v15 = vld [vmem:[#allocation0] sm:$0x3]
    %16 = vrot.lane.b32.xlu0 %v15, 126
    %v17 = vpop.permute.xlu0 %16
    %vm18 = vcmask 7168
    %s19 = scalar_lea.vmem %s1, 2
    %20 = vst.msk [vmem:[%s19] ss:$48 sm:$0x3] %vm18, %v17
    %v21 = vld [vmem:[#allocation0] sm:$0x3]
    %22 = vrot.lane.b32.xlu0 %v21, 125
    %v23 = vpop.permute.xlu0 %22
    %vm24 = vcmask 7168
    %s25 = scalar_lea.vmem %s1, 3
    %26 = vst.msk [vmem:[%s25] ss:$48 sm:$0x3] %vm24, %v23
    %v27 = vld [vmem:[#allocation0] sm:$0x3]
    %28 = vrot.lane.b32.xlu0 %v27, 124
    %v29 = vpop.permute.xlu0 %28
    %vm30 = vcmask 7168
    %s31 = scalar_lea.vmem %s1, 4
    %32 = vst.msk [vmem:[%s31] ss:$48 sm:$0x3] %vm30, %v29
    %v33 = vld [vmem:[#allocation0] sm:$0x3]
    %34 = vrot.lane.b32.xlu0 %v33, 123
    %v35 = vpop.permute.xlu0 %34
    %vm36 = vcmask 7168
    %s37 = scalar_lea.vmem %s1, 5
    %38 = vst.msk [vmem:[%s37] ss:$48 sm:$0x3] %vm36, %v35
    %v39 = vld [vmem:[#allocation0] sm:$0x3]
    %40 = vrot.lane.b32.xlu0 %v39, 122
    %v41 = vpop.permute.xlu0 %40
    %vm42 = vcmask 7168
    %s43 = scalar_lea.vmem %s1, 6
    %44 = vst.msk [vmem:[%s43] ss:$48 sm:$0x3] %vm42, %v41
    %v45 = vld [vmem:[#allocation0] sm:$0x3]
    %46 = vrot.lane.b32.xlu0 %v45, 121
    %v47 = vpop.permute.xlu0 %46
    %vm48 = vcmask 7168
    %s49 = scalar_lea.vmem %s1, 7
    %50 = vst.msk [vmem:[%s49] ss:$48 sm:$0x3] %vm48, %v47
    %v51 = vld [vmem:[#allocation0] sm:$0x3]
    %52 = vrot.lane.b32.xlu0 %v51, 120
    %v53 = vpop.permute.xlu0 %52
    %vm54 = vcmask 7168
    %s55 = scalar_lea.vmem %s1, 8
    %56 = vst.msk [vmem:[%s55] ss:$48 sm:$0x3] %vm54, %v53
    %v57 = vld [vmem:[#allocation0] sm:$0x3]
    %58 = vrot.lane.b32.xlu0 %v57, 119
    %v59 = vpop.permute.xlu0 %58
    %vm60 = vcmask 7168
    %s61 = scalar_lea.vmem %s1, 9
    %62 = vst.msk [vmem:[%s61] ss:$48 sm:$0x3] %vm60, %v59
    %v63 = vld [vmem:[#allocation0] sm:$0x3]
    %64 = vrot.lane.b32.xlu0 %v63, 118
    %v65 = vpop.permute.xlu0 %64
    %vm66 = vcmask 7168
    %s67 = scalar_lea.vmem %s1, 10
    %68 = vst.msk [vmem:[%s67] ss:$48 sm:$0x3] %vm66, %v65
    %v69 = vld [vmem:[#allocation0] sm:$0x3]
    %70 = vrot.lane.b32.xlu0 %v69, 117
    %v71 = vpop.permute.xlu0 %70
    %vm72 = vcmask 7168
    %s73 = scalar_lea.vmem %s1, 11
    %74 = vst.msk [vmem:[%s73] ss:$48 sm:$0x3] %vm72, %v71
    %v75 = vld [vmem:[#allocation0] sm:$0x3]
    %76 = vrot.lane.b32.xlu0 %v75, 116
    %v77 = vpop.permute.xlu0 %76
    %vm78 = vcmask 7168
    %s79 = scalar_lea.vmem %s1, 12
    %80 = vst.msk [vmem:[%s79] ss:$48 sm:$0x3] %vm78, %v77
    %v81 = vld [vmem:[#allocation0] sm:$0x3]
    %82 = vrot.lane.b32.xlu0 %v81, 115
    %v83 = vpop.permute.xlu0 %82
    %vm84 = vcmask 7168
    %s85 = scalar_lea.vmem %s1, 13
    %86 = vst.msk [vmem:[%s85] ss:$48 sm:$0x3] %vm84, %v83
    %v87 = vld [vmem:[#allocation0] sm:$0x3]
    %88 = vrot.lane.b32.xlu0 %v87, 114
    %v89 = vpop.permute.xlu0 %88
    %vm90 = vcmask 7168
    %s91 = scalar_lea.vmem %s1, 14
    %92 = vst.msk [vmem:[%s91] ss:$48 sm:$0x3] %vm90, %v89
    %v93 = vld [vmem:[#allocation0] sm:$0x3]
    %94 = vrot.lane.b32.xlu0 %v93, 113
    %v95 = vpop.permute.xlu0 %94
    %vm96 = vcmask 7168
    %s97 = scalar_lea.vmem %s1, 15
    %98 = vst.msk [vmem:[%s97] ss:$48 sm:$0x3] %vm96, %v95
    %s99 = scalar_lea.vmem [#allocation0], 1
    %s100 = smov 3
    %v101 = vld [vmem:[%s99] ss:$-1 sm:%s100]
    %102 = vrot.lane.b32.xlu0 %v101, 112
    %v103 = vpop.permute.xlu0 %102
    %vm104 = vcmask 7168
    %s105 = scalar_lea.vmem %s1, 64
    %106 = vst.msk [vmem:[%s105] ss:$-48 sm:$0x3] %vm104, %v103
    %s107 = scalar_lea.vmem [#allocation0], 1
    %s108 = smov 3
    %v109 = vld [vmem:[%s107] ss:$-1 sm:%s108]
    %110 = vrot.lane.b32.xlu0 %v109, 111
    %v111 = vpop.permute.xlu0 %110
    %vm112 = vcmask 7168
    %s113 = scalar_lea.vmem %s1, 65
    %114 = vst.msk [vmem:[%s113] ss:$-48 sm:$0x3] %vm112, %v111
    %s115 = scalar_lea.vmem [#allocation0], 1
    %s116 = smov 3
    %v117 = vld [vmem:[%s115] ss:$-1 sm:%s116]
    %118 = vrot.lane.b32.xlu0 %v117, 110
    %v119 = vpop.permute.xlu0 %118
    %vm120 = vcmask 7168
    %s121 = scalar_lea.vmem %s1, 66
    %122 = vst.msk [vmem:[%s121] ss:$-48 sm:$0x3] %vm120, %v119
    %s123 = scalar_lea.vmem [#allocation0], 1
    %s124 = smov 3
    %v125 = vld [vmem:[%s123] ss:$-1 sm:%s124]
    %126 = vrot.lane.b32.xlu0 %v125, 109
    %v127 = vpop.permute.xlu0 %126
    %vm128 = vcmask 7168
    %s129 = scalar_lea.vmem %s1, 67
    %130 = vst.msk [vmem:[%s129] ss:$-48 sm:$0x3] %vm128, %v127
    %s131 = scalar_lea.vmem [#allocation0], 1
    %s132 = smov 3
    %v133 = vld [vmem:[%s131] ss:$-1 sm:%s132]
    %134 = vrot.lane.b32.xlu0 %v133, 108
    %v135 = vpop.permute.xlu0 %134
    %vm136 = vcmask 7168
    %s137 = scalar_lea.vmem %s1, 68
    %138 = vst.msk [vmem:[%s137] ss:$-48 sm:$0x3] %vm136, %v135
    %s139 = scalar_lea.vmem [#allocation0], 1
    %s140 = smov 3
    %v141 = vld [vmem:[%s139] ss:$-1 sm:%s140]
    %142 = vrot.lane.b32.xlu0 %v141, 107
    %v143 = vpop.permute.xlu0 %142
    %vm144 = vcmask 7168
    %s145 = scalar_lea.vmem %s1, 69
    %146 = vst.msk [vmem:[%s145] ss:$-48 sm:$0x3] %vm144, %v143
    %s147 = scalar_lea.vmem [#allocation0], 1
    %s148 = smov 3
    %v149 = vld [vmem:[%s147] ss:$-1 sm:%s148]
    %150 = vrot.lane.b32.xlu0 %v149, 106
    %v151 = vpop.permute.xlu0 %150
    %vm152 = vcmask 7168
    %s153 = scalar_lea.vmem %s1, 70
    %154 = vst.msk [vmem:[%s153] ss:$-48 sm:$0x3] %vm152, %v151
    %s155 = scalar_lea.vmem [#allocation0], 1
    %s156 = smov 3
    %v157 = vld [vmem:[%s155] ss:$-1 sm:%s156]
    %158 = vrot.lane.b32.xlu0 %v157, 105
    %v159 = vpop.permute.xlu0 %158
    %vm160 = vcmask 7168
    %s161 = scalar_lea.vmem %s1, 71
    %162 = vst.msk [vmem:[%s161] ss:$-48 sm:$0x3] %vm160, %v159
    %s163 = scalar_lea.vmem [#allocation0], 1
    %s164 = smov 3
    %v165 = vld [vmem:[%s163] ss:$-1 sm:%s164]
    %166 = vrot.lane.b32.xlu0 %v165, 104
    %v167 = vpop.permute.xlu0 %166
    %vm168 = vcmask 7168
    %s169 = scalar_lea.vmem %s1, 72
    %170 = vst.msk [vmem:[%s169] ss:$-48 sm:$0x3] %vm168, %v167
    %s171 = scalar_lea.vmem [#allocation0], 1
    %s172 = smov 3
    %v173 = vld [vmem:[%s171] ss:$-1 sm:%s172]
    %174 = vrot.lane.b32.xlu0 %v173, 103
    %v175 = vpop.permute.xlu0 %174
    %vm176 = vcmask 7168
    %s177 = scalar_lea.vmem %s1, 73
    %178 = vst.msk [vmem:[%s177] ss:$-48 sm:$0x3] %vm176, %v175
    %s179 = scalar_lea.vmem [#allocation0], 1
    %s180 = smov 3
    %v181 = vld [vmem:[%s179] ss:$-1 sm:%s180]
    %182 = vrot.lane.b32.xlu0 %v181, 102
    %v183 = vpop.permute.xlu0 %182
    %vm184 = vcmask 7168
    %s185 = scalar_lea.vmem %s1, 74
    %186 = vst.msk [vmem:[%s185] ss:$-48 sm:$0x3] %vm184, %v183
    %s187 = scalar_lea.vmem [#allocation0], 1
    %s188 = smov 3
    %v189 = vld [vmem:[%s187] ss:$-1 sm:%s188]
    %190 = vrot.lane.b32.xlu0 %v189, 101
    %v191 = vpop.permute.xlu0 %190
    %vm192 = vcmask 7168
    %s193 = scalar_lea.vmem %s1, 75
    %194 = vst.msk [vmem:[%s193] ss:$-48 sm:$0x3] %vm192, %v191
    %s195 = scalar_lea.vmem [#allocation0], 1
    %s196 = smov 3
    %v197 = vld [vmem:[%s195] ss:$-1 sm:%s196]
    %198 = vrot.lane.b32.xlu0 %v197, 100
    %v199 = vpop.permute.xlu0 %198
    %vm200 = vcmask 7168
    %s201 = scalar_lea.vmem %s1, 76
    %202 = vst.msk [vmem:[%s201] ss:$-48 sm:$0x3] %vm200, %v199
    %s203 = scalar_lea.vmem [#allocation0], 1
    %s204 = smov 3
    %v205 = vld [vmem:[%s203] ss:$-1 sm:%s204]
    %206 = vrot.lane.b32.xlu0 %v205, 99
    %v207 = vpop.permute.xlu0 %206
    %vm208 = vcmask 7168
    %s209 = scalar_lea.vmem %s1, 77
    %210 = vst.msk [vmem:[%s209] ss:$-48 sm:$0x3] %vm208, %v207
    %s211 = scalar_lea.vmem [#allocation0], 1
    %s212 = smov 3
    %v213 = vld [vmem:[%s211] ss:$-1 sm:%s212]
    %214 = vrot.lane.b32.xlu0 %v213, 98
    %v215 = vpop.permute.xlu0 %214
    %vm216 = vcmask 7168
    %s217 = scalar_lea.vmem %s1, 78
    %218 = vst.msk [vmem:[%s217] ss:$-48 sm:$0x3] %vm216, %v215
    %s219 = scalar_lea.vmem [#allocation0], 1
    %s220 = smov 3
    %v221 = vld [vmem:[%s219] ss:$-1 sm:%s220]
    %222 = vrot.lane.b32.xlu0 %v221, 97
    %v223 = vpop.permute.xlu0 %222
    %vm224 = vcmask 7168
    %s225 = scalar_lea.vmem %s1, 79
    %226 = vst.msk [vmem:[%s225] ss:$-48 sm:$0x3] %vm224, %v223
    %v227 = vld [vmem:[#allocation0] sm:$0x3]
    %228 = vrot.lane.b32.xlu0 %v227, 96
    %v229 = vpop.permute.xlu0 %228
    %vm230 = vcmask 7168
    %s231 = scalar_lea.vmem %s1, 32
    %232 = vst.msk [vmem:[%s231] ss:$48 sm:$0x3] %vm230, %v229
    %v233 = vld [vmem:[#allocation0] sm:$0x3]
    %234 = vrot.lane.b32.xlu0 %v233, 95
    %v235 = vpop.permute.xlu0 %234
    %vm236 = vcmask 7168
    %s237 = scalar_lea.vmem %s1, 33
    %238 = vst.msk [vmem:[%s237] ss:$48 sm:$0x3] %vm236, %v235
    %v239 = vld [vmem:[#allocation0] sm:$0x3]
    %240 = vrot.lane.b32.xlu0 %v239, 94
    %v241 = vpop.permute.xlu0 %240
    %vm242 = vcmask 7168
    %s243 = scalar_lea.vmem %s1, 34
    %244 = vst.msk [vmem:[%s243] ss:$48 sm:$0x3] %vm242, %v241
    %v245 = vld [vmem:[#allocation0] sm:$0x3]
    %246 = vrot.lane.b32.xlu0 %v245, 93
    %v247 = vpop.permute.xlu0 %246
    %vm248 = vcmask 7168
    %s249 = scalar_lea.vmem %s1, 35
    %250 = vst.msk [vmem:[%s249] ss:$48 sm:$0x3] %vm248, %v247
    %v251 = vld [vmem:[#allocation0] sm:$0x3]
    %252 = vrot.lane.b32.xlu0 %v251, 92
    %v253 = vpop.permute.xlu0 %252
    %vm254 = vcmask 7168
    %s255 = scalar_lea.vmem %s1, 36
    %256 = vst.msk [vmem:[%s255] ss:$48 sm:$0x3] %vm254, %v253
    %v257 = vld [vmem:[#allocation0] sm:$0x3]
    %258 = vrot.lane.b32.xlu0 %v257, 91
    %v259 = vpop.permute.xlu0 %258
    %vm260 = vcmask 7168
    %s261 = scalar_lea.vmem %s1, 37
    %262 = vst.msk [vmem:[%s261] ss:$48 sm:$0x3] %vm260, %v259
    %v263 = vld [vmem:[#allocation0] sm:$0x3]
    %264 = vrot.lane.b32.xlu0 %v263, 90
    %v265 = vpop.permute.xlu0 %264
    %vm266 = vcmask 7168
    %s267 = scalar_lea.vmem %s1, 38
    %268 = vst.msk [vmem:[%s267] ss:$48 sm:$0x3] %vm266, %v265
    %v269 = vld [vmem:[#allocation0] sm:$0x3]
    %270 = vrot.lane.b32.xlu0 %v269, 89
    %v271 = vpop.permute.xlu0 %270
    %vm272 = vcmask 7168
    %s273 = scalar_lea.vmem %s1, 39
    %274 = vst.msk [vmem:[%s273] ss:$48 sm:$0x3] %vm272, %v271
    %v275 = vld [vmem:[#allocation0] sm:$0x3]
    %276 = vrot.lane.b32.xlu0 %v275, 88
    %v277 = vpop.permute.xlu0 %276
    %vm278 = vcmask 7168
    %s279 = scalar_lea.vmem %s1, 40
    %280 = vst.msk [vmem:[%s279] ss:$48 sm:$0x3] %vm278, %v277
    %v281 = vld [vmem:[#allocation0] sm:$0x3]
    %282 = vrot.lane.b32.xlu0 %v281, 87
    %v283 = vpop.permute.xlu0 %282
    %vm284 = vcmask 7168
    %s285 = scalar_lea.vmem %s1, 41
    %286 = vst.msk [vmem:[%s285] ss:$48 sm:$0x3] %vm284, %v283
    %v287 = vld [vmem:[#allocation0] sm:$0x3]
    %288 = vrot.lane.b32.xlu0 %v287, 86
    %v289 = vpop.permute.xlu0 %288
    %vm290 = vcmask 7168
    %s291 = scalar_lea.vmem %s1, 42
    %292 = vst.msk [vmem:[%s291] ss:$48 sm:$0x3] %vm290, %v289
    %v293 = vld [vmem:[#allocation0] sm:$0x3]
    %294 = vrot.lane.b32.xlu0 %v293, 85
    %v295 = vpop.permute.xlu0 %294
    %vm296 = vcmask 7168
    %s297 = scalar_lea.vmem %s1, 43
    %298 = vst.msk [vmem:[%s297] ss:$48 sm:$0x3] %vm296, %v295
    %v299 = vld [vmem:[#allocation0] sm:$0x3]
    %300 = vrot.lane.b32.xlu0 %v299, 84
    %v301 = vpop.permute.xlu0 %300
    %vm302 = vcmask 7168
    %s303 = scalar_lea.vmem %s1, 44
    %304 = vst.msk [vmem:[%s303] ss:$48 sm:$0x3] %vm302, %v301
    %v305 = vld [vmem:[#allocation0] sm:$0x3]
    %306 = vrot.lane.b32.xlu0 %v305, 83
    %v307 = vpop.permute.xlu0 %306
    %vm308 = vcmask 7168
    %s309 = scalar_lea.vmem %s1, 45
    %310 = vst.msk [vmem:[%s309] ss:$48 sm:$0x3] %vm308, %v307
    %v311 = vld [vmem:[#allocation0] sm:$0x3]
    %312 = vrot.lane.b32.xlu0 %v311, 82
    %v313 = vpop.permute.xlu0 %312
    %vm314 = vcmask 7168
    %s315 = scalar_lea.vmem %s1, 46
    %316 = vst.msk [vmem:[%s315] ss:$48 sm:$0x3] %vm314, %v313
    %v317 = vld [vmem:[#allocation0] sm:$0x3]
    %318 = vrot.lane.b32.xlu0 %v317, 81
    %v319 = vpop.permute.xlu0 %318
    %vm320 = vcmask 7168
    %s321 = scalar_lea.vmem %s1, 47
    %322 = vst.msk [vmem:[%s321] ss:$48 sm:$0x3] %vm320, %v319

// kernel: mul.1227
$region0: #{mul.1227}
  #allocation0 [shape = 's32[1]{0}', space=sflag, size = 0x4, scoped, tag = 'scoped memory for mul.1227']
  %s0 = inlined_call_operand.vmem [shape: f32[12], index: 0, kind: input, shape index: {}]
  %s1 = inlined_call_operand.vmem [shape: f32[12], index: 1, kind: input, shape index: {}]
  %s2 = inlined_call_operand.vmem [shape: f32[12], index: 2, kind: output, shape index: {}]
  %v3 = vld [vmem:[%s0] sm:$0x1]
  %v4 = vld [vmem:[%s1] sm:$0x1]
  %5 = xla_tuple %v3, %v4
  %6 = xla_tuple %5
  %v7 = vmul.f32 %v3, %v4
  %8 = xla_tuple %v7
  %9 = vst [vmem:[%s2] sm:$0x1] %v7

// kernel: eq.9
$region0: #{eq.9}
  %s0 = inlined_call_operand.vmem [shape: s32[2,4], index: 0, kind: input, shape index: {}]
  %s1 = inlined_call_operand.vmem [shape: s32[8], index: 1, kind: output, shape index: {}]
  $region1: #{eq.9} parent=0
    #allocation0 [shape = 'u8[4096]{0}', space=vmem, size = 0x1000, scoped, tag = 'scoped mem for output reshape']
    #allocation1 [shape = 'u8[4096]{0}', space=vmem, size = 0x1000, scoped, tag = 'scoped mem for input reshape']
    %s3 = sshllo.u32 0, 2
    %v4 = vld [vmem:[%s0] sm:%s3]
    %5 = vst [vmem:[#allocation1] sm:%s3] %v4
    %v6 = vld [vmem:[#allocation1] sm:$0x1]
    %vm7 = vcmask 31744
    %8 = vst.msk [vmem:[#allocation0] sm:$0x1] %vm7, %v6
    %s9 = scalar_lea.vmem [#allocation1], 1
    %v10 = vld [vmem:[%s9] sm:$0x1]
    %11 = vrot.lane.b32.xlu0 %v10, 4
    %v12 = vpop.permute.xlu0 %11
    %vm13 = vcmask 64544
    %14 = vst.msk [vmem:[#allocation0] sm:$0x1] %vm13, %v12
    %s16 = sshllo.u32 0, 1
    %v18 = vld [vmem:[#allocation0] sm:%s16]
    %s19 = sshllo.u32 0, 1
    %20 = vst [vmem:[%s1] sm:%s19] %v18

// kernel: _lambda_.1
$region0: #{_lambda_.1}
  #allocation0 [shape = 'u32[]', space=smem, size = 0x4, offset = 0x4, fixed_abs, tag = 'smem constant byte address 0x4 - core index']
  #allocation1 [shape = 'u32[144,128]{1,0:T(1,128)}', space=vmem, size = 0x12000, scoped, tag = 'internal scratch']
  %s0 = inlined_call_operand.vmem [shape: f32[1,24,256], index: 0, kind: input, shape index: {}]
  %s1 = inlined_call_operand.vmem [shape: f32[49,8,256], index: 1, kind: input, shape index: {}]
  %s2 = inlined_call_operand.vmem [shape: f32[31,8,256], index: 2, kind: input, shape index: {}]
  %s3 = inlined_call_operand.vmem [shape: f32[8,256], index: 3, kind: input, shape index: {}]
  %s4 = inlined_call_operand.vmem [shape: f32[8,256], index: 4, kind: input, shape index: {}]
  %s5 = inlined_call_operand.vmem [shape: f32[8,16], index: 5, kind: input, shape index: {}]
  %s6 = inlined_call_operand.vmem [shape: f32[8,8], index: 6, kind: input, shape index: {}]
  %s7 = inlined_call_operand.vmem [shape: f32[8,9], index: 7, kind: input, shape index: {}]
  %s8 = inlined_call_operand.vmem [shape: f32[96,24], index: 8, kind: input, shape index: {}]
  %s9 = inlined_call_operand.vmem [shape: f32[96,1], index: 9, kind: input, shape index: {}]
  %s10 = inlined_call_operand.vmem [shape: f32[24,96], index: 10, kind: input, shape index: {}]
  %s11 = inlined_call_operand.vmem [shape: f32[24,1], index: 11, kind: input, shape index: {}]
  %s12 = inlined_call_operand.vmem [shape: f32[1,24,256], index: 12, kind: output, shape index: {}]
  %s13 = sld [smem:[#allocation0]]
  $region58: #{_lambda_.1} parent=0
    _
  %s15 = ssub.s32 1, %s13
  %s16 = scalar_select 0, %s15, %s13
  // Predicated region
  $region2: #{_lambda_.1} parent=0 // pred_check
    _
  $region3: #{_lambda_.1} parent=0 // pred_check_branch
    %18 = sbr.rel (0) target = $region5
  $region4: #{_lambda_.1} parent=0 // pred_region
    _
  $region5: #{_lambda_.1} parent=0 // pred_fallthru
    _
  // Predicated region
  $region6: #{_lambda_.1} parent=0 // pred_check
    _
  $region7: #{_lambda_.1} parent=0 // pred_check_branch
    %20 = sbr.rel (0) target = $region9
  $region8: #{_lambda_.1} parent=0 // pred_region
    _
  $region9: #{_lambda_.1} parent=0 // pred_fallthru
    _
  // Predicated region
  $region10: #{_lambda_.1} parent=0 // pred_check
    _
  $region11: #{_lambda_.1} parent=0 // pred_check_branch
    %22 = sbr.rel (0) target = $region13
  $region12: #{_lambda_.1} parent=0 // pred_region
    _
  $region13: #{_lambda_.1} parent=0 // pred_fallthru
    _
  // Predicated region
  $region14: #{_lambda_.1} parent=0 // pred_check
    _
  $region15: #{_lambda_.1} parent=0 // pred_check_branch
    %24 = sbr.rel (0) target = $region17
  $region16: #{_lambda_.1} parent=0 // pred_region
    _
  $region17: #{_lambda_.1} parent=0 // pred_fallthru
    _
  // Predicated region
  $region18: #{_lambda_.1} parent=0 // pred_check
    _
  $region19: #{_lambda_.1} parent=0 // pred_check_branch
    %26 = sbr.rel (0) target = $region21
  $region20: #{_lambda_.1} parent=0 // pred_region
    _
  $region21: #{_lambda_.1} parent=0 // pred_fallthru
    _
  // Predicated region
  $region22: #{_lambda_.1} parent=0 // pred_check
    _
  $region23: #{_lambda_.1} parent=0 // pred_check_branch
    %28 = sbr.rel (0) target = $region25
  $region24: #{_lambda_.1} parent=0 // pred_region
    _
  $region25: #{_lambda_.1} parent=0 // pred_fallthru
    _
  // Predicated region
  $region26: #{_lambda_.1} parent=0 // pred_check
    _
  $region27: #{_lambda_.1} parent=0 // pred_check_branch
    %30 = sbr.rel (0) target = $region29
  $region28: #{_lambda_.1} parent=0 // pred_region
    _
  $region29: #{_lambda_.1} parent=0 // pred_fallthru
    _
  // Predicated region
  $region30: #{_lambda_.1} parent=0 // pred_check
    _
  $region31: #{_lambda_.1} parent=0 // pred_check_branch
    %32 = sbr.rel (0) target = $region33
  $region32: #{_lambda_.1} parent=0 // pred_region
    _
  $region33: #{_lambda_.1} parent=0 // pred_fallthru
    _
  // Predicated region
  $region34: #{_lambda_.1} parent=0 // pred_check
    _
  $region35: #{_lambda_.1} parent=0 // pred_check_branch
    %34 = sbr.rel (0) target = $region37
  $region36: #{_lambda_.1} parent=0 // pred_region
    _
  $region37: #{_lambda_.1} parent=0 // pred_fallthru
    _
  // Predicated region
  $region38: #{_lambda_.1} parent=0 // pred_check
    _
  $region39: #{_lambda_.1} parent=0 // pred_check_branch
    %36 = sbr.rel (0) target = $region41
  $region40: #{_lambda_.1} parent=0 // pred_region
    _
  $region41: #{_lambda_.1} parent=0 // pred_fallthru
    _
  // Predicated region
  $region42: #{_lambda_.1} parent=0 // pred_check
    _
  $region43: #{_lambda_.1} parent=0 // pred_check_branch
    %38 = sbr.rel (0) target = $region45
  $region44: #{_lambda_.1} parent=0 // pred_region
    _
  $region45: #{_lambda_.1} parent=0 // pred_fallthru
    _
  // Predicated region
  $region46: #{_lambda_.1} parent=0 // pred_check
    _
  $region47: #{_lambda_.1} parent=0 // pred_check_branch
    %40 = sbr.rel (0) target = $region49
  $region48: #{_lambda_.1} parent=0 // pred_region
    _
  $region49: #{_lambda_.1} parent=0 // pred_fallthru
    _
  %v41 = vld [vmem:[%s0] sm:$0xff]
  %v42 = vld [vmem:[%s0 + $0x8] sm:$0xff]
  %v43 = vld [vmem:[%s0 + $0x10] sm:$0xff]
  %v44 = vld [vmem:[%s0 + $0x18] sm:$0xff]
  %v45 = vld [vmem:[%s0 + $0x20] sm:$0xff]
  %v46 = vld [vmem:[%s0 + $0x28] sm:$0xff]
  %v47 = vld [vmem:[%s7] sm:$0xff]
  %v48 = vld [vmem:[%s6] sm:$0xff]
  %s49 = scalar_lea.vmem %s1, 384
  %v50 = vld [vmem:[%s49] sm:$0xff]
  %v51 = vld [vmem:[%s49 + $0x8] sm:$0xff]
  %v52 = vmul.f32 %v45, %v50
  %v53 = vmul.f32 %v46, %v51
  %55 = vset.pattern.permute.xlu0 0
  %56 = vperm.xlu0 %55, %v47
  %v57 = vpop.permute.xlu0 %56
  %v59 = vadd.f32 %v57, %v52
  %v60 = vadd.f32 %v57, %v53
  %61 = vrot.lane.b32.xlu0 %v45, 51
  %v62 = vpop.permute.xlu0 %61
  %63 = vrot.lane.b32.xlu0 %v46, 51
  %v64 = vpop.permute.xlu0 %63
  %v65 = vlaneseq
  %v66 = vand.u32 %v65, 127
  %vm67 = vcmp.lt.s32.totalorder %v66, 51
  %v68 = vsel %vm67, %v62, %v64
  %v69 = vsel %vm67, %v64, %v62
  %v70 = vld [vmem:[%s1] sm:$0xff]
  %v71 = vld [vmem:[%s1 + $0x8] sm:$0xff]
  %v72 = vmul.f32 %v69, %v70
  %v73 = vmul.f32 %v68, %v71
  %v74 = vadd.f32 %v59, %v72
  %v75 = vadd.f32 %v60, %v73
  %76 = vrot.lane.b32.xlu0 %v45, 50
  %v77 = vpop.permute.xlu0 %76
  %78 = vrot.lane.b32.xlu0 %v46, 50
  %v79 = vpop.permute.xlu0 %78
  %vm80 = vcmp.lt.s32.totalorder %v66, 50
  %v81 = vsel %vm80, %v77, %v79
  %v82 = vsel %vm80, %v79, %v77
  %s83 = scalar_lea.vmem %s1, 16
  %v84 = vld [vmem:[%s83] sm:$0xff]
  %v85 = vld [vmem:[%s83 + $0x8] sm:$0xff]
  %v86 = vmul.f32 %v82, %v84
  %v87 = vmul.f32 %v81, %v85
  %v88 = vadd.f32 %v74, %v86
  %v89 = vadd.f32 %v75, %v87
  %90 = vrot.lane.b32.xlu0 %v45, 49
  %v91 = vpop.permute.xlu0 %90
  %92 = vrot.lane.b32.xlu0 %v46, 49
  %v93 = vpop.permute.xlu0 %92
  %vm94 = vcmp.lt.s32.totalorder %v66, 49
  %v95 = vsel %vm94, %v91, %v93
  %v96 = vsel %vm94, %v93, %v91
  %s97 = scalar_lea.vmem %s1, 32
  %v98 = vld [vmem:[%s97] sm:$0xff]
  %v99 = vld [vmem:[%s97 + $0x8] sm:$0xff]
  %v100 = vmul.f32 %v96, %v98
  %v101 = vmul.f32 %v95, %v99
  %v102 = vadd.f32 %v88, %v100
  %v103 = vadd.f32 %v89, %v101
  %104 = vrot.lane.b32.xlu0 %v45, 48
  %v105 = vpop.permute.xlu0 %104
  %106 = vrot.lane.b32.xlu0 %v46, 48
  %v107 = vpop.permute.xlu0 %106
  %vm108 = vcmp.lt.s32.totalorder %v66, 48
  %v109 = vsel %vm108, %v105, %v107
  %v110 = vsel %vm108, %v107, %v105
  %s111 = scalar_lea.vmem %s1, 48
  %v112 = vld [vmem:[%s111] sm:$0xff]
  %v113 = vld [vmem:[%s111 + $0x8] sm:$0xff]
  %v114 = vmul.f32 %v110, %v112
  %v115 = vmul.f32 %v109, %v113
  %v116 = vadd.f32 %v102, %v114
  %v117 = vadd.f32 %v103, %v115
  %118 = vrot.lane.b32.xlu0 %v45, 47
  %v119 = vpop.permute.xlu0 %118
  %120 = vrot.lane.b32.xlu0 %v46, 47
  %v121 = vpop.permute.xlu0 %120
  %vm122 = vcmp.lt.s32.totalorder %v66, 47
  %v123 = vsel %vm122, %v119, %v121
  %v124 = vsel %vm122, %v121, %v119
  %s125 = scalar_lea.vmem %s1, 64
  %v126 = vld [vmem:[%s125] sm:$0xff]
  %v127 = vld [vmem:[%s125 + $0x8] sm:$0xff]
  %v128 = vmul.f32 %v124, %v126
  %v129 = vmul.f32 %v123, %v127
  %v130 = vadd.f32 %v116, %v128
  %v131 = vadd.f32 %v117, %v129
  %132 = vrot.lane.b32.xlu0 %v45, 46
  %v133 = vpop.permute.xlu0 %132
  %134 = vrot.lane.b32.xlu0 %v46, 46
  %v135 = vpop.permute.xlu0 %134
  %vm136 = vcmp.lt.s32.totalorder %v66, 46
  %v137 = vsel %vm136, %v133, %v135
  %v138 = vsel %vm136, %v135, %v133
  %s139 = scalar_lea.vmem %s1, 80
  %v140 = vld [vmem:[%s139] sm:$0xff]
  %v141 = vld [vmem:[%s139 + $0x8] sm:$0xff]
  %v142 = vmul.f32 %v138, %v140
  %v143 = vmul.f32 %v137, %v141
  %v144 = vadd.f32 %v130, %v142
  %v145 = vadd.f32 %v131, %v143
  %146 = vrot.lane.b32.xlu0 %v45, 45
  %v147 = vpop.permute.xlu0 %146
  %148 = vrot.lane.b32.xlu0 %v46, 45
  %v149 = vpop.permute.xlu0 %148
  %vm150 = vcmp.lt.s32.totalorder %v66, 45
  %v151 = vsel %vm150, %v147, %v149
  %v152 = vsel %vm150, %v149, %v147
  %s153 = scalar_lea.vmem %s1, 96
  %v154 = vld [vmem:[%s153] sm:$0xff]
  %v155 = vld [vmem:[%s153 + $0x8] sm:$0xff]
  %v156 = vmul.f32 %v152, %v154
  %v157 = vmul.f32 %v151, %v155
  %v158 = vadd.f32 %v144, %v156
  %v159 = vadd.f32 %v145, %v157
  %160 = vrot.lane.b32.xlu0 %v45, 35
  %v161 = vpop.permute.xlu0 %160
  %162 = vrot.lane.b32.xlu0 %v46, 35
  %v163 = vpop.permute.xlu0 %162
  %vm164 = vcmp.lt.s32.totalorder %v66, 35
  %v165 = vsel %vm164, %v161, %v163
  %v166 = vsel %vm164, %v163, %v161
  %s167 = scalar_lea.vmem %s1, 112
  %v168 = vld [vmem:[%s167] sm:$0xff]
  %v169 = vld [vmem:[%s167 + $0x8] sm:$0xff]
  %v170 = vmul.f32 %v166, %v168
  %v171 = vmul.f32 %v165, %v169
  %v172 = vadd.f32 %v158, %v170
  %v173 = vadd.f32 %v159, %v171
  %174 = vrot.lane.b32.xlu0 %v45, 34
  %v175 = vpop.permute.xlu0 %174
  %176 = vrot.lane.b32.xlu0 %v46, 34
  %v177 = vpop.permute.xlu0 %176
  %vm178 = vcmp.lt.s32.totalorder %v66, 34
  %v179 = vsel %vm178, %v175, %v177
  %v180 = vsel %vm178, %v177, %v175
  %s181 = scalar_lea.vmem %s1, 128
  %v182 = vld [vmem:[%s181] sm:$0xff]
  %v183 = vld [vmem:[%s181 + $0x8] sm:$0xff]
  %v184 = vmul.f32 %v180, %v182
  %v185 = vmul.f32 %v179, %v183
  %v186 = vadd.f32 %v172, %v184
  %v187 = vadd.f32 %v173, %v185
  %188 = vrot.lane.b32.xlu0 %v45, 33
  %v189 = vpop.permute.xlu0 %188
  %190 = vrot.lane.b32.xlu0 %v46, 33
  %v191 = vpop.permute.xlu0 %190
  %vm192 = vcmp.lt.s32.totalorder %v66, 33
  %v193 = vsel %vm192, %v189, %v191
  %v194 = vsel %vm192, %v191, %v189
  %s195 = scalar_lea.vmem %s1, 144
  %v196 = vld [vmem:[%s195] sm:$0xff]
  %v197 = vld [vmem:[%s195 + $0x8] sm:$0xff]
  %v198 = vmul.f32 %v194, %v196
  %v199 = vmul.f32 %v193, %v197
  %v200 = vadd.f32 %v186, %v198
  %v201 = vadd.f32 %v187, %v199
  %202 = vrot.lane.b32.xlu0 %v45, 32
  %v203 = vpop.permute.xlu0 %202
  %204 = vrot.lane.b32.xlu0 %v46, 32
  %v205 = vpop.permute.xlu0 %204
  %vm206 = vcmp.lt.s32.totalorder %v66, 32
  %v207 = vsel %vm206, %v203, %v205
  %v208 = vsel %vm206, %v205, %v203
  %s209 = scalar_lea.vmem %s1, 160
  %v210 = vld [vmem:[%s209] sm:$0xff]
  %v211 = vld [vmem:[%s209 + $0x8] sm:$0xff]
  %v212 = vmul.f32 %v208, %v210
  %v213 = vmul.f32 %v207, %v211
  %v214 = vadd.f32 %v200, %v212
  %v215 = vadd.f32 %v201, %v213
  %216 = vrot.lane.b32.xlu0 %v45, 31
  %v217 = vpop.permute.xlu0 %216
  %218 = vrot.lane.b32.xlu0 %v46, 31
  %v219 = vpop.permute.xlu0 %218
  %vm220 = vcmp.lt.s32.totalorder %v66, 31
  %v221 = vsel %vm220, %v217, %v219
  %v222 = vsel %vm220, %v219, %v217
  %s223 = scalar_lea.vmem %s1, 176
  %v224 = vld [vmem:[%s223] sm:$0xff]
  %v225 = vld [vmem:[%s223 + $0x8] sm:$0xff]
  %v226 = vmul.f32 %v222, %v224
  %v227 = vmul.f32 %v221, %v225
  %v228 = vadd.f32 %v214, %v226
  %v229 = vadd.f32 %v215, %v227
  %230 = vrot.lane.b32.xlu0 %v45, 30
  %v231 = vpop.permute.xlu0 %230
  %232 = vrot.lane.b32.xlu0 %v46, 30
  %v233 = vpop.permute.xlu0 %232
  %vm234 = vcmp.lt.s32.totalorder %v66, 30
  %v235 = vsel %vm234, %v231, %v233
  %v236 = vsel %vm234, %v233, %v231
  %s237 = scalar_lea.vmem %s1, 192
  %v238 = vld [vmem:[%s237] sm:$0xff]
  %v239 = vld [vmem:[%s237 + $0x8] sm:$0xff]
  %v240 = vmul.f32 %v236, %v238
  %v241 = vmul.f32 %v235, %v239
  %v242 = vadd.f32 %v228, %v240
  %v243 = vadd.f32 %v229, %v241
  %244 = vrot.lane.b32.xlu0 %v45, 29
  %v245 = vpop.permute.xlu0 %244
  %246 = vrot.lane.b32.xlu0 %v46, 29
  %v247 = vpop.permute.xlu0 %246
  %vm248 = vcmp.lt.s32.totalorder %v66, 29
  %v249 = vsel %vm248, %v245, %v247
  %v250 = vsel %vm248, %v247, %v245
  %s251 = scalar_lea.vmem %s1, 208
  %v252 = vld [vmem:[%s251] sm:$0xff]
  %v253 = vld [vmem:[%s251 + $0x8] sm:$0xff]
  %v254 = vmul.f32 %v250, %v252
  %v255 = vmul.f32 %v249, %v253
  %v256 = vadd.f32 %v242, %v254
  %v257 = vadd.f32 %v243, %v255
  %258 = vrot.lane.b32.xlu0 %v45, 19
  %v259 = vpop.permute.xlu0 %258
  %260 = vrot.lane.b32.xlu0 %v46, 19
  %v261 = vpop.permute.xlu0 %260
  %vm262 = vcmp.lt.s32.totalorder %v66, 19
  %v263 = vsel %vm262, %v259, %v261
  %v264 = vsel %vm262, %v261, %v259
  %s265 = scalar_lea.vmem %s1, 224
  %v266 = vld [vmem:[%s265] sm:$0xff]
  %v267 = vld [vmem:[%s265 + $0x8] sm:$0xff]
  %v268 = vmul.f32 %v264, %v266
  %v269 = vmul.f32 %v263, %v267
  %v270 = vadd.f32 %v256, %v268
  %v271 = vadd.f32 %v257, %v269
  %272 = vrot.lane.b32.xlu0 %v45, 18
  %v273 = vpop.permute.xlu0 %272
  %274 = vrot.lane.b32.xlu0 %v46, 18
  %v275 = vpop.permute.xlu0 %274
  %vm276 = vcmp.lt.s32.totalorder %v66, 18
  %v277 = vsel %vm276, %v273, %v275
  %v278 = vsel %vm276, %v275, %v273
  %s279 = scalar_lea.vmem %s1, 240
  %v280 = vld [vmem:[%s279] sm:$0xff]
  %v281 = vld [vmem:[%s279 + $0x8] sm:$0xff]
  %v282 = vmul.f32 %v278, %v280
  %v283 = vmul.f32 %v277, %v281
  %v284 = vadd.f32 %v270, %v282
  %v285 = vadd.f32 %v271, %v283
  %286 = vrot.lane.b32.xlu0 %v45, 17
  %v287 = vpop.permute.xlu0 %286
  %288 = vrot.lane.b32.xlu0 %v46, 17
  %v289 = vpop.permute.xlu0 %288
  %vm290 = vcmp.lt.s32.totalorder %v66, 17
  %v291 = vsel %vm290, %v287, %v289
  %v292 = vsel %vm290, %v289, %v287
  %s293 = scalar_lea.vmem %s1, 256
  %v294 = vld [vmem:[%s293] sm:$0xff]
  %v295 = vld [vmem:[%s293 + $0x8] sm:$0xff]
  %v296 = vmul.f32 %v292, %v294
  %v297 = vmul.f32 %v291, %v295
  %v298 = vadd.f32 %v284, %v296
  %v299 = vadd.f32 %v285, %v297
  %300 = vrot.lane.b32.xlu0 %v45, 16
  %v301 = vpop.permute.xlu0 %300
  %302 = vrot.lane.b32.xlu0 %v46, 16
  %v303 = vpop.permute.xlu0 %302
  %vm304 = vcmp.lt.s32.totalorder %v66, 16
  %v305 = vsel %vm304, %v301, %v303
  %v306 = vsel %vm304, %v303, %v301
  %s307 = scalar_lea.vmem %s1, 272
  %v308 = vld [vmem:[%s307] sm:$0xff]
  %v309 = vld [vmem:[%s307 + $0x8] sm:$0xff]
  %v310 = vmul.f32 %v306, %v308
  %v311 = vmul.f32 %v305, %v309
  %v312 = vadd.f32 %v298, %v310
  %v313 = vadd.f32 %v299, %v311
  %314 = vrot.lane.b32.xlu0 %v45, 15
  %v315 = vpop.permute.xlu0 %314
  %316 = vrot.lane.b32.xlu0 %v46, 15
  %v317 = vpop.permute.xlu0 %316
  %vm318 = vcmp.lt.s32.totalorder %v66, 15
  %v319 = vsel %vm318, %v315, %v317
  %v320 = vsel %vm318, %v317, %v315
  %s321 = scalar_lea.vmem %s1, 288
  %v322 = vld [vmem:[%s321] sm:$0xff]
  %v323 = vld [vmem:[%s321 + $0x8] sm:$0xff]
  %v324 = vmul.f32 %v320, %v322
  %v325 = vmul.f32 %v319, %v323
  %v326 = vadd.f32 %v312, %v324
  %v327 = vadd.f32 %v313, %v325
  %328 = vrot.lane.b32.xlu0 %v45, 14
  %v329 = vpop.permute.xlu0 %328
  %330 = vrot.lane.b32.xlu0 %v46, 14
  %v331 = vpop.permute.xlu0 %330
  %vm332 = vcmp.lt.s32.totalorder %v66, 14
  %v333 = vsel %vm332, %v329, %v331
  %v334 = vsel %vm332, %v331, %v329
  %s335 = scalar_lea.vmem %s1, 304
  %v336 = vld [vmem:[%s335] sm:$0xff]
  %v337 = vld [vmem:[%s335 + $0x8] sm:$0xff]
  %v338 = vmul.f32 %v334, %v336
  %v339 = vmul.f32 %v333, %v337
  %v340 = vadd.f32 %v326, %v338
  %v341 = vadd.f32 %v327, %v339
  %342 = vrot.lane.b32.xlu0 %v45, 13
  %v343 = vpop.permute.xlu0 %342
  %344 = vrot.lane.b32.xlu0 %v46, 13
  %v345 = vpop.permute.xlu0 %344
  %vm346 = vcmp.lt.s32.totalorder %v66, 13
  %v347 = vsel %vm346, %v343, %v345
  %v348 = vsel %vm346, %v345, %v343
  %s349 = scalar_lea.vmem %s1, 320
  %v350 = vld [vmem:[%s349] sm:$0xff]
  %v351 = vld [vmem:[%s349 + $0x8] sm:$0xff]
  %v352 = vmul.f32 %v348, %v350
  %v353 = vmul.f32 %v347, %v351
  %v354 = vadd.f32 %v340, %v352
  %v355 = vadd.f32 %v341, %v353
  %356 = vrot.lane.b32.xlu0 %v45, 3
  %v357 = vpop.permute.xlu0 %356
  %358 = vrot.lane.b32.xlu0 %v46, 3
  %v359 = vpop.permute.xlu0 %358
  %vm360 = vcmp.lt.s32.totalorder %v66, 3
  %v361 = vsel %vm360, %v357, %v359
  %v362 = vsel %vm360, %v359, %v357
  %s363 = scalar_lea.vmem %s1, 336
  %v364 = vld [vmem:[%s363] sm:$0xff]
  %v365 = vld [vmem:[%s363 + $0x8] sm:$0xff]
  %v366 = vmul.f32 %v362, %v364
  %v367 = vmul.f32 %v361, %v365
  %v368 = vadd.f32 %v354, %v366
  %v369 = vadd.f32 %v355, %v367
  %370 = vrot.lane.b32.xlu0 %v45, 2
  %v371 = vpop.permute.xlu0 %370
  %372 = vrot.lane.b32.xlu0 %v46, 2
  %v373 = vpop.permute.xlu0 %372
  %vm374 = vcmp.lt.s32.totalorder %v66, 2
  %v375 = vsel %vm374, %v371, %v373
  %v376 = vsel %vm374, %v373, %v371
  %s377 = scalar_lea.vmem %s1, 352
  %v378 = vld [vmem:[%s377] sm:$0xff]
  %v379 = vld [vmem:[%s377 + $0x8] sm:$0xff]
  %v380 = vmul.f32 %v376, %v378
  %v381 = vmul.f32 %v375, %v379
  %v382 = vadd.f32 %v368, %v380
  %v383 = vadd.f32 %v369, %v381
  %384 = vrot.lane.b32.xlu0 %v45, 1
  %v385 = vpop.permute.xlu0 %384
  %386 = vrot.lane.b32.xlu0 %v46, 1
  %v387 = vpop.permute.xlu0 %386
  %vm388 = vcmp.lt.s32.totalorder %v66, 1
  %v389 = vsel %vm388, %v385, %v387
  %v390 = vsel %vm388, %v387, %v385
  %s391 = scalar_lea.vmem %s1, 368
  %v392 = vld [vmem:[%s391] sm:$0xff]
  %v393 = vld [vmem:[%s391 + $0x8] sm:$0xff]
  %v394 = vmul.f32 %v390, %v392
  %v395 = vmul.f32 %v389, %v393
  %v396 = vadd.f32 %v382, %v394
  %v397 = vadd.f32 %v383, %v395
  %398 = vrot.lane.b32.xlu0 %v45, 127
  %v399 = vpop.permute.xlu0 %398
  %400 = vrot.lane.b32.xlu0 %v46, 127
  %v401 = vpop.permute.xlu0 %400
  %vm402 = vcmp.lt.s32.totalorder %v66, 127
  %v403 = vsel %vm402, %v399, %v401
  %v404 = vsel %vm402, %v401, %v399
  %s405 = scalar_lea.vmem %s1, 400
  %v406 = vld [vmem:[%s405] sm:$0xff]
  %v407 = vld [vmem:[%s405 + $0x8] sm:$0xff]
  %v408 = vmul.f32 %v403, %v406
  %v409 = vmul.f32 %v404, %v407
  %v410 = vadd.f32 %v396, %v408
  %v411 = vadd.f32 %v397, %v409
  %412 = vrot.lane.b32.xlu0 %v45, 126
  %v413 = vpop.permute.xlu0 %412
  %414 = vrot.lane.b32.xlu0 %v46, 126
  %v415 = vpop.permute.xlu0 %414
  %vm416 = vcmp.lt.s32.totalorder %v66, 126
  %v417 = vsel %vm416, %v413, %v415
  %v418 = vsel %vm416, %v415, %v413
  %s419 = scalar_lea.vmem %s1, 416
  %v420 = vld [vmem:[%s419] sm:$0xff]
  %v421 = vld [vmem:[%s419 + $0x8] sm:$0xff]
  %v422 = vmul.f32 %v417, %v420
  %v423 = vmul.f32 %v418, %v421
  %v424 = vadd.f32 %v410, %v422
  %v425 = vadd.f32 %v411, %v423
  %426 = vrot.lane.b32.xlu0 %v45, 125
  %v427 = vpop.permute.xlu0 %426
  %428 = vrot.lane.b32.xlu0 %v46, 125
  %v429 = vpop.permute.xlu0 %428
  %vm430 = vcmp.lt.s32.totalorder %v66, 125
  %v431 = vsel %vm430, %v427, %v429
  %v432 = vsel %vm430, %v429, %v427
  %s433 = scalar_lea.vmem %s1, 432
  %v434 = vld [vmem:[%s433] sm:$0xff]
  %v435 = vld [vmem:[%s433 + $0x8] sm:$0xff]
  %v436 = vmul.f32 %v431, %v434
  %v437 = vmul.f32 %v432, %v435
  %v438 = vadd.f32 %v424, %v436
  %v439 = vadd.f32 %v425, %v437
  %440 = vrot.lane.b32.xlu0 %v45, 115
  %v441 = vpop.permute.xlu0 %440
  %442 = vrot.lane.b32.xlu0 %v46, 115
  %v443 = vpop.permute.xlu0 %442
  %vm444 = vcmp.lt.s32.totalorder %v66, 115
  %v445 = vsel %vm444, %v441, %v443
  %v446 = vsel %vm444, %v443, %v441
  %s447 = scalar_lea.vmem %s1, 448
  %v448 = vld [vmem:[%s447] sm:$0xff]
  %v449 = vld [vmem:[%s447 + $0x8] sm:$0xff]
  %v450 = vmul.f32 %v445, %v448
  %v451 = vmul.f32 %v446, %v449
  %v452 = vadd.f32 %v438, %v450
  %v453 = vadd.f32 %v439, %v451
  %454 = vrot.lane.b32.xlu0 %v45, 114
  %v455 = vpop.permute.xlu0 %454
  %456 = vrot.lane.b32.xlu0 %v46, 114
  %v457 = vpop.permute.xlu0 %456
  %vm458 = vcmp.lt.s32.totalorder %v66, 114
  %v459 = vsel %vm458, %v455, %v457
  %v460 = vsel %vm458, %v457, %v455
  %s461 = scalar_lea.vmem %s1, 464
  %v462 = vld [vmem:[%s461] sm:$0xff]
  %v463 = vld [vmem:[%s461 + $0x8] sm:$0xff]
  %v464 = vmul.f32 %v459, %v462
  %v465 = vmul.f32 %v460, %v463
  %v466 = vadd.f32 %v452, %v464
  %v467 = vadd.f32 %v453, %v465
  %468 = vrot.lane.b32.xlu0 %v45, 113
  %v469 = vpop.permute.xlu0 %468
  %470 = vrot.lane.b32.xlu0 %v46, 113
  %v471 = vpop.permute.xlu0 %470
  %vm472 = vcmp.lt.s32.totalorder %v66, 113
  %v473 = vsel %vm472, %v469, %v471
  %v474 = vsel %vm472, %v471, %v469
  %s475 = scalar_lea.vmem %s1, 480
  %v476 = vld [vmem:[%s475] sm:$0xff]
  %v477 = vld [vmem:[%s475 + $0x8] sm:$0xff]
  %v478 = vmul.f32 %v473, %v476
  %v479 = vmul.f32 %v474, %v477
  %v480 = vadd.f32 %v466, %v478
  %v481 = vadd.f32 %v467, %v479
  %482 = vrot.lane.b32.xlu0 %v45, 112
  %v483 = vpop.permute.xlu0 %482
  %484 = vrot.lane.b32.xlu0 %v46, 112
  %v485 = vpop.permute.xlu0 %484
  %vm486 = vcmp.lt.s32.totalorder %v66, 112
  %v487 = vsel %vm486, %v483, %v485
  %v488 = vsel %vm486, %v485, %v483
  %s489 = scalar_lea.vmem %s1, 496
  %v490 = vld [vmem:[%s489] sm:$0xff]
  %v491 = vld [vmem:[%s489 + $0x8] sm:$0xff]
  %v492 = vmul.f32 %v487, %v490
  %v493 = vmul.f32 %v488, %v491
  %v494 = vadd.f32 %v480, %v492
  %v495 = vadd.f32 %v481, %v493
  %496 = vrot.lane.b32.xlu0 %v45, 111
  %v497 = vpop.permute.xlu0 %496
  %498 = vrot.lane.b32.xlu0 %v46, 111
  %v499 = vpop.permute.xlu0 %498
  %vm500 = vcmp.lt.s32.totalorder %v66, 111
  %v501 = vsel %vm500, %v497, %v499
  %v502 = vsel %vm500, %v499, %v497
  %s503 = scalar_lea.vmem %s1, 512
  %v504 = vld [vmem:[%s503] sm:$0xff]
  %v505 = vld [vmem:[%s503 + $0x8] sm:$0xff]
  %v506 = vmul.f32 %v501, %v504
  %v507 = vmul.f32 %v502, %v505
  %v508 = vadd.f32 %v494, %v506
  %v509 = vadd.f32 %v495, %v507
  %510 = vrot.lane.b32.xlu0 %v45, 110
  %v511 = vpop.permute.xlu0 %510
  %512 = vrot.lane.b32.xlu0 %v46, 110
  %v513 = vpop.permute.xlu0 %512
  %vm514 = vcmp.lt.s32.totalorder %v66, 110
  %v515 = vsel %vm514, %v511, %v513
  %v516 = vsel %vm514, %v513, %v511
  %s517 = scalar_lea.vmem %s1, 528
  %v518 = vld [vmem:[%s517] sm:$0xff]
  %v519 = vld [vmem:[%s517 + $0x8] sm:$0xff]
  %v520 = vmul.f32 %v515, %v518
  %v521 = vmul.f32 %v516, %v519
  %v522 = vadd.f32 %v508, %v520
  %v523 = vadd.f32 %v509, %v521
  %524 = vrot.lane.b32.xlu0 %v45, 109
  %v525 = vpop.permute.xlu0 %524
  %526 = vrot.lane.b32.xlu0 %v46, 109
  %v527 = vpop.permute.xlu0 %526
  %vm528 = vcmp.lt.s32.totalorder %v66, 109
  %v529 = vsel %vm528, %v525, %v527
  %v530 = vsel %vm528, %v527, %v525
  %s531 = scalar_lea.vmem %s1, 544
  %v532 = vld [vmem:[%s531] sm:$0xff]
  %v533 = vld [vmem:[%s531 + $0x8] sm:$0xff]
  %v534 = vmul.f32 %v529, %v532
  %v535 = vmul.f32 %v530, %v533
  %v536 = vadd.f32 %v522, %v534
  %v537 = vadd.f32 %v523, %v535
  %538 = vrot.lane.b32.xlu0 %v45, 99
  %v539 = vpop.permute.xlu0 %538
  %540 = vrot.lane.b32.xlu0 %v46, 99
  %v541 = vpop.permute.xlu0 %540
  %vm542 = vcmp.lt.s32.totalorder %v66, 99
  %v543 = vsel %vm542, %v539, %v541
  %v544 = vsel %vm542, %v541, %v539
  %s545 = scalar_lea.vmem %s1, 560
  %v546 = vld [vmem:[%s545] sm:$0xff]
  %v547 = vld [vmem:[%s545 + $0x8] sm:$0xff]
  %v548 = vmul.f32 %v543, %v546
  %v549 = vmul.f32 %v544, %v547
  %v550 = vadd.f32 %v536, %v548
  %v551 = vadd.f32 %v537, %v549
  %552 = vrot.lane.b32.xlu0 %v45, 98
  %v553 = vpop.permute.xlu0 %552
  %554 = vrot.lane.b32.xlu0 %v46, 98
  %v555 = vpop.permute.xlu0 %554
  %vm556 = vcmp.lt.s32.totalorder %v66, 98
  %v557 = vsel %vm556, %v553, %v555
  %v558 = vsel %vm556, %v555, %v553
  %s559 = scalar_lea.vmem %s1, 576
  %v560 = vld [vmem:[%s559] sm:$0xff]
  %v561 = vld [vmem:[%s559 + $0x8] sm:$0xff]
  %v562 = vmul.f32 %v557, %v560
  %v563 = vmul.f32 %v558, %v561
  %v564 = vadd.f32 %v550, %v562
  %v565 = vadd.f32 %v551, %v563
  %566 = vrot.lane.b32.xlu0 %v45, 97
  %v567 = vpop.permute.xlu0 %566
  %568 = vrot.lane.b32.xlu0 %v46, 97
  %v569 = vpop.permute.xlu0 %568
  %vm570 = vcmp.lt.s32.totalorder %v66, 97
  %v571 = vsel %vm570, %v567, %v569
  %v572 = vsel %vm570, %v569, %v567
  %s573 = scalar_lea.vmem %s1, 592
  %v574 = vld [vmem:[%s573] sm:$0xff]
  %v575 = vld [vmem:[%s573 + $0x8] sm:$0xff]
  %v576 = vmul.f32 %v571, %v574
  %v577 = vmul.f32 %v572, %v575
  %v578 = vadd.f32 %v564, %v576
  %v579 = vadd.f32 %v565, %v577
  %580 = vrot.lane.b32.xlu0 %v45, 96
  %v581 = vpop.permute.xlu0 %580
  %582 = vrot.lane.b32.xlu0 %v46, 96
  %v583 = vpop.permute.xlu0 %582
  %vm584 = vcmp.lt.s32.totalorder %v66, 96
  %v585 = vsel %vm584, %v581, %v583
  %v586 = vsel %vm584, %v583, %v581
  %s587 = scalar_lea.vmem %s1, 608
  %v588 = vld [vmem:[%s587] sm:$0xff]
  %v589 = vld [vmem:[%s587 + $0x8] sm:$0xff]
  %v590 = vmul.f32 %v585, %v588
  %v591 = vmul.f32 %v586, %v589
  %v592 = vadd.f32 %v578, %v590
  %v593 = vadd.f32 %v579, %v591
  %594 = vrot.lane.b32.xlu0 %v45, 95
  %v595 = vpop.permute.xlu0 %594
  %596 = vrot.lane.b32.xlu0 %v46, 95
  %v597 = vpop.permute.xlu0 %596
  %vm598 = vcmp.lt.s32.totalorder %v66, 95
  %v599 = vsel %vm598, %v595, %v597
  %v600 = vsel %vm598, %v597, %v595
  %s601 = scalar_lea.vmem %s1, 624
  %v602 = vld [vmem:[%s601] sm:$0xff]
  %v603 = vld [vmem:[%s601 + $0x8] sm:$0xff]
  %v604 = vmul.f32 %v599, %v602
  %v605 = vmul.f32 %v600, %v603
  %v606 = vadd.f32 %v592, %v604
  %v607 = vadd.f32 %v593, %v605
  %608 = vrot.lane.b32.xlu0 %v45, 94
  %v609 = vpop.permute.xlu0 %608
  %610 = vrot.lane.b32.xlu0 %v46, 94
  %v611 = vpop.permute.xlu0 %610
  %vm612 = vcmp.lt.s32.totalorder %v66, 94
  %v613 = vsel %vm612, %v609, %v611
  %v614 = vsel %vm612, %v611, %v609
  %s615 = scalar_lea.vmem %s1, 640
  %v616 = vld [vmem:[%s615] sm:$0xff]
  %v617 = vld [vmem:[%s615 + $0x8] sm:$0xff]
  %v618 = vmul.f32 %v613, %v616
  %v619 = vmul.f32 %v614, %v617
  %v620 = vadd.f32 %v606, %v618
  %v621 = vadd.f32 %v607, %v619
  %622 = vrot.lane.b32.xlu0 %v45, 93
  %v623 = vpop.permute.xlu0 %622
  %624 = vrot.lane.b32.xlu0 %v46, 93
  %v625 = vpop.permute.xlu0 %624
  %vm626 = vcmp.lt.s32.totalorder %v66, 93
  %v627 = vsel %vm626, %v623, %v625
  %v628 = vsel %vm626, %v625, %v623
  %s629 = scalar_lea.vmem %s1, 656
  %v630 = vld [vmem:[%s629] sm:$0xff]
  %v631 = vld [vmem:[%s629 + $0x8] sm:$0xff]
  %v632 = vmul.f32 %v627, %v630
  %v633 = vmul.f32 %v628, %v631
  %v634 = vadd.f32 %v620, %v632
  %v635 = vadd.f32 %v621, %v633
  %636 = vrot.lane.b32.xlu0 %v45, 83
  %v637 = vpop.permute.xlu0 %636
  %638 = vrot.lane.b32.xlu0 %v46, 83
  %v639 = vpop.permute.xlu0 %638
  %vm640 = vcmp.lt.s32.totalorder %v66, 83
  %v641 = vsel %vm640, %v637, %v639
  %v642 = vsel %vm640, %v639, %v637
  %s643 = scalar_lea.vmem %s1, 672
  %v644 = vld [vmem:[%s643] sm:$0xff]
  %v645 = vld [vmem:[%s643 + $0x8] sm:$0xff]
  %v646 = vmul.f32 %v641, %v644
  %v647 = vmul.f32 %v642, %v645
  %v648 = vadd.f32 %v634, %v646
  %v649 = vadd.f32 %v635, %v647
  %650 = vrot.lane.b32.xlu0 %v45, 82
  %v651 = vpop.permute.xlu0 %650
  %652 = vrot.lane.b32.xlu0 %v46, 82
  %v653 = vpop.permute.xlu0 %652
  %vm654 = vcmp.lt.s32.totalorder %v66, 82
  %v655 = vsel %vm654, %v651, %v653
  %v656 = vsel %vm654, %v653, %v651
  %s657 = scalar_lea.vmem %s1, 688
  %v658 = vld [vmem:[%s657] sm:$0xff]
  %v659 = vld [vmem:[%s657 + $0x8] sm:$0xff]
  %v660 = vmul.f32 %v655, %v658
  %v661 = vmul.f32 %v656, %v659
  %v662 = vadd.f32 %v648, %v660
  %v663 = vadd.f32 %v649, %v661
  %664 = vrot.lane.b32.xlu0 %v45, 81
  %v665 = vpop.permute.xlu0 %664
  %666 = vrot.lane.b32.xlu0 %v46, 81
  %v667 = vpop.permute.xlu0 %666
  %vm668 = vcmp.lt.s32.totalorder %v66, 81
  %v669 = vsel %vm668, %v665, %v667
  %v670 = vsel %vm668, %v667, %v665
  %s671 = scalar_lea.vmem %s1, 704
  %v672 = vld [vmem:[%s671] sm:$0xff]
  %v673 = vld [vmem:[%s671 + $0x8] sm:$0xff]
  %v674 = vmul.f32 %v669, %v672
  %v675 = vmul.f32 %v670, %v673
  %v676 = vadd.f32 %v662, %v674
  %v677 = vadd.f32 %v663, %v675
  %678 = vrot.lane.b32.xlu0 %v45, 80
  %v679 = vpop.permute.xlu0 %678
  %680 = vrot.lane.b32.xlu0 %v46, 80
  %v681 = vpop.permute.xlu0 %680
  %vm682 = vcmp.lt.s32.totalorder %v66, 80
  %v683 = vsel %vm682, %v679, %v681
  %v684 = vsel %vm682, %v681, %v679
  %s685 = scalar_lea.vmem %s1, 720
  %v686 = vld [vmem:[%s685] sm:$0xff]
  %v687 = vld [vmem:[%s685 + $0x8] sm:$0xff]
  %v688 = vmul.f32 %v683, %v686
  %v689 = vmul.f32 %v684, %v687
  %v690 = vadd.f32 %v676, %v688
  %v691 = vadd.f32 %v677, %v689
  %692 = vrot.lane.b32.xlu0 %v45, 79
  %v693 = vpop.permute.xlu0 %692
  %694 = vrot.lane.b32.xlu0 %v46, 79
  %v695 = vpop.permute.xlu0 %694
  %vm696 = vcmp.lt.s32.totalorder %v66, 79
  %v697 = vsel %vm696, %v693, %v695
  %v698 = vsel %vm696, %v695, %v693
  %s699 = scalar_lea.vmem %s1, 736
  %v700 = vld [vmem:[%s699] sm:$0xff]
  %v701 = vld [vmem:[%s699 + $0x8] sm:$0xff]
  %v702 = vmul.f32 %v697, %v700
  %v703 = vmul.f32 %v698, %v701
  %v704 = vadd.f32 %v690, %v702
  %v705 = vadd.f32 %v691, %v703
  %706 = vrot.lane.b32.xlu0 %v45, 78
  %v707 = vpop.permute.xlu0 %706
  %708 = vrot.lane.b32.xlu0 %v46, 78
  %v709 = vpop.permute.xlu0 %708
  %vm710 = vcmp.lt.s32.totalorder %v66, 78
  %v711 = vsel %vm710, %v707, %v709
  %v712 = vsel %vm710, %v709, %v707
  %s713 = scalar_lea.vmem %s1, 752
  %v714 = vld [vmem:[%s713] sm:$0xff]
  %v715 = vld [vmem:[%s713 + $0x8] sm:$0xff]
  %v716 = vmul.f32 %v711, %v714
  %v717 = vmul.f32 %v712, %v715
  %v718 = vadd.f32 %v704, %v716
  %v719 = vadd.f32 %v705, %v717
  %720 = vrot.lane.b32.xlu0 %v45, 77
  %v721 = vpop.permute.xlu0 %720
  %722 = vrot.lane.b32.xlu0 %v46, 77
  %v723 = vpop.permute.xlu0 %722
  %vm724 = vcmp.lt.s32.totalorder %v66, 77
  %v725 = vsel %vm724, %v721, %v723
  %v726 = vsel %vm724, %v723, %v721
  %s727 = scalar_lea.vmem %s1, 768
  %v728 = vld [vmem:[%s727] sm:$0xff]
  %v729 = vld [vmem:[%s727 + $0x8] sm:$0xff]
  %v730 = vmul.f32 %v725, %v728
  %v731 = vmul.f32 %v726, %v729
  %v732 = vadd.f32 %v718, %v730
  %v733 = vadd.f32 %v719, %v731
  %vm734 = vcmask 64512
  %v736 = vsel %vm734, %v48, 0
  %738 = vmatprep.subr.mxu0 %v733
  %739 = vmatpush1.msra.mxu0 %v732
  %740 = vmatprep.subr.mxu0 0.0
  %741 = vmatpush1.msra.mxu0 0.0
  %742 = vmatprep.subr.mxu0 0.0
  %743 = vmatpush1.msra.mxu0 0.0
  %744 = vmatprep.subr.mxu0 0.0
  %745 = vmatpush1.msra.mxu0 0.0
  %746 = vmatprep.subr.mxu0 0.0
  %747 = vmatpush1.msra.mxu0 0.0
  %748 = vmatprep.subr.mxu0 0.0
  %749 = vmatpush1.msra.mxu0 0.0
  %750 = vmatprep.subr.mxu0 0.0
  %751 = vmatpush1.msra.mxu0 0.0
  %752 = vmatprep.subr.mxu0 0.0
  %753 = vmatpush1.msra.mxu0 0.0
  %754 = vmatprep.subr.mxu0 0.0
  %755 = vmatpush1.msra.mxu0 0.0
  %756 = vmatprep.subr.mxu0 0.0
  %757 = vmatpush1.msra.mxu0 0.0
  %758 = vmatprep.subr.mxu0 0.0
  %759 = vmatpush1.msra.mxu0 0.0
  %760 = vmatprep.subr.mxu0 0.0
  %761 = vmatpush1.msra.mxu0 0.0
  %762 = vmatprep.subr.mxu0 0.0
  %763 = vmatpush1.msra.mxu0 0.0
  %764 = vmatprep.subr.mxu0 0.0
  %765 = vmatpush1.msra.mxu0 0.0
  %766 = vmatprep.subr.mxu0 0.0
  %767 = vmatpush1.msra.mxu0 0.0
  %768 = vmatprep.subr.mxu0 0.0
  %769 = vmatpush1.msra.mxu0 0.0
  %770 = vmatprep.subr.mxu0 0.0
  %771 = vmatpush1.msra.mxu0 0.0
  %772 = vmatprep.subr.mxu0 0.0
  %773 = vmatpush1.msra.mxu0 0.0
  %774 = vmatprep.subr.mxu0 0.0
  %775 = vmatpush1.msra.mxu0 0.0
  %776 = vmatprep.subr.mxu0 0.0
  %777 = vmatpush1.msra.mxu0 0.0
  %778 = vmatprep.subr.mxu0 0.0
  %779 = vmatpush1.msra.mxu0 0.0
  %780 = vmatprep.subr.mxu0 0.0
  %781 = vmatpush1.msra.mxu0 0.0
  %782 = vmatprep.subr.mxu0 0.0
  %783 = vmatpush1.msra.mxu0 0.0
  %784 = vmatprep.subr.mxu0 0.0
  %785 = vmatpush1.msra.mxu0 0.0
  %786 = vmatprep.subr.mxu0 0.0
  %787 = vmatpush1.msra.mxu0 0.0
  %788 = vmatprep.subr.mxu0 0.0
  %789 = vmatpush1.msra.mxu0 0.0
  %790 = vmatprep.subr.mxu0 0.0
  %791 = vmatpush1.msra.mxu0 0.0
  %792 = vmatprep.subr.mxu0 0.0
  %793 = vmatpush1.msra.mxu0 0.0
  %794 = vmatprep.subr.mxu0 0.0
  %795 = vmatpush1.msra.mxu0 0.0
  %796 = vmatprep.subr.mxu0 0.0
  %797 = vmatpush1.msra.mxu0 0.0
  %798 = vmatprep.subr.mxu0 0.0
  %799 = vmatpush1.msra.mxu0 0.0
  %800 = vmatprep.subr.mxu0 0.0
  %801 = vmatpush1.msra.mxu0 0.0
  %802 = vmatprep.mubr.f32.mxu0 0.0
  %803 = vmatmul.mubr.f32.gmra.mrb[0].mxu0 %v736
  %v804 = vpop.f32.mrb[0].mxu0
  %v805 = vadd.f32 0.0, %v804
  %v806 = vpop.f32.mrb[0].mxu0
  %v807 = vadd.f32 0.0, %v806
  %808 = vdwg.mxu0
  %v809 = vsub.f32 %v732, %v805
  %v810 = vsub.f32 %v733, %v807
  %v811 = vmul.f32 %v809, %v809
  %v812 = vmul.f32 %v810, %v810
  %813 = vmatprep.subr.mxu0 %v812
  %814 = vmatpush1.msra.mxu0 %v811
  %815 = vmatprep.subr.mxu0 0.0
  %816 = vmatpush1.msra.mxu0 0.0
  %817 = vmatprep.subr.mxu0 0.0
  %818 = vmatpush1.msra.mxu0 0.0
  %819 = vmatprep.subr.mxu0 0.0
  %820 = vmatpush1.msra.mxu0 0.0
  %821 = vmatprep.subr.mxu0 0.0
  %822 = vmatpush1.msra.mxu0 0.0
  %823 = vmatprep.subr.mxu0 0.0
  %824 = vmatpush1.msra.mxu0 0.0
  %825 = vmatprep.subr.mxu0 0.0
  %826 = vmatpush1.msra.mxu0 0.0
  %827 = vmatprep.subr.mxu0 0.0
  %828 = vmatpush1.msra.mxu0 0.0
  %829 = vmatprep.subr.mxu0 0.0
  %830 = vmatpush1.msra.mxu0 0.0
  %831 = vmatprep.subr.mxu0 0.0
  %832 = vmatpush1.msra.mxu0 0.0
  %833 = vmatprep.subr.mxu0 0.0
  %834 = vmatpush1.msra.mxu0 0.0
  %835 = vmatprep.subr.mxu0 0.0
  %836 = vmatpush1.msra.mxu0 0.0
  %837 = vmatprep.subr.mxu0 0.0
  %838 = vmatpush1.msra.mxu0 0.0
  %839 = vmatprep.subr.mxu0 0.0
  %840 = vmatpush1.msra.mxu0 0.0
  %841 = vmatprep.subr.mxu0 0.0
  %842 = vmatpush1.msra.mxu0 0.0
  %843 = vmatprep.subr.mxu0 0.0
  %844 = vmatpush1.msra.mxu0 0.0
  %845 = vmatprep.subr.mxu0 0.0
  %846 = vmatpush1.msra.mxu0 0.0
  %847 = vmatprep.subr.mxu0 0.0
  %848 = vmatpush1.msra.mxu0 0.0
  %849 = vmatprep.subr.mxu0 0.0
  %850 = vmatpush1.msra.mxu0 0.0
  %851 = vmatprep.subr.mxu0 0.0
  %852 = vmatpush1.msra.mxu0 0.0
  %853 = vmatprep.subr.mxu0 0.0
  %854 = vmatpush1.msra.mxu0 0.0
  %855 = vmatprep.subr.mxu0 0.0
  %856 = vmatpush1.msra.mxu0 0.0
  %857 = vmatprep.subr.mxu0 0.0
  %858 = vmatpush1.msra.mxu0 0.0
  %859 = vmatprep.subr.mxu0 0.0
  %860 = vmatpush1.msra.mxu0 0.0
  %861 = vmatprep.subr.mxu0 0.0
  %862 = vmatpush1.msra.mxu0 0.0
  %863 = vmatprep.subr.mxu0 0.0
  %864 = vmatpush1.msra.mxu0 0.0
  %865 = vmatprep.subr.mxu0 0.0
  %866 = vmatpush1.msra.mxu0 0.0
  %867 = vmatprep.subr.mxu0 0.0
  %868 = vmatpush1.msra.mxu0 0.0
  %869 = vmatprep.subr.mxu0 0.0
  %870 = vmatpush1.msra.mxu0 0.0
  %871 = vmatprep.subr.mxu0 0.0
  %872 = vmatpush1.msra.mxu0 0.0
  %873 = vmatprep.subr.mxu0 0.0
  %874 = vmatpush1.msra.mxu0 0.0
  %875 = vmatprep.subr.mxu0 0.0
  %876 = vmatpush1.msra.mxu0 0.0
  %877 = vmatprep.mubr.f32.mxu0 0.0
  %878 = vmatmul.mubr.f32.gmra.mrb[0].mxu0 %v736
  %v879 = vpop.f32.mrb[0].mxu0
  %v880 = vadd.f32 1e-06, %v879
  %v881 = vpop.f32.mrb[0].mxu0
  %v882 = vadd.f32 1e-06, %v881
  %883 = vdwg.mxu0
  %v884 = vrsqrt.pop %v880
  %v885 = vrsqrt.pop %v882
  %v886 = vmul.f32 %v809, %v884
  %v887 = vmul.f32 %v810, %v885
  %888 = vset.pattern.permute.xlu0 1
  %889 = vperm.xlu0 %888, %v47
  %v890 = vpop.permute.xlu0 %889
  %v892 = vmul.f32 %v886, %v890
  %v893 = vmul.f32 %v887, %v890
  %894 = vset.pattern.permute.xlu0 2
  %895 = vperm.xlu0 %894, %v47
  %v896 = vpop.permute.xlu0 %895
  %v898 = vadd.f32 %v892, %v896
  %v899 = vadd.f32 %v893, %v896
  %v900 = vld [vmem:[%s3] sm:$0xff]
  %v901 = vld [vmem:[%s3 + $0x8] sm:$0xff]
  %v902 = vadd.f32 %v41, %v900
  %v903 = vadd.f32 %v42, %v901
  %v904 = vld [vmem:[%s5] sm:$0xff]
  %906 = vset.pattern.permute.xlu0 0
  %907 = vperm.xlu0 %906, %v904
  %v908 = vpop.permute.xlu0 %907
  %v910 = vmul.f32 %v902, %v908
  %v911 = vmul.f32 %v903, %v908
  %912 = vset.pattern.permute.xlu0 3
  %913 = vperm.xlu0 %912, %v47
  %v914 = vpop.permute.xlu0 %913
  %v916 = vadd.f32 %v914, %v910
  %v917 = vadd.f32 %v914, %v911
  %918 = vrot.lane.b32.xlu0 %v902, 112
  %v919 = vpop.permute.xlu0 %918
  %920 = vrot.lane.b32.xlu0 %v903, 112
  %v921 = vpop.permute.xlu0 %920
  %v922 = vsel %vm486, %v919, %v921
  %v923 = vsel %vm486, %v921, %v919
  %924 = vset.pattern.permute.xlu0 1
  %925 = vperm.xlu0 %924, %v904
  %v926 = vpop.permute.xlu0 %925
  %v928 = vmul.f32 %v922, %v926
  %v929 = vmul.f32 %v923, %v926
  %v930 = vadd.f32 %v916, %v928
  %v931 = vadd.f32 %v917, %v929
  %932 = vrot.lane.b32.xlu0 %v902, 96
  %v933 = vpop.permute.xlu0 %932
  %934 = vrot.lane.b32.xlu0 %v903, 96
  %v935 = vpop.permute.xlu0 %934
  %v936 = vsel %vm584, %v933, %v935
  %v937 = vsel %vm584, %v935, %v933
  %938 = vset.pattern.permute.xlu0 2
  %939 = vperm.xlu0 %938, %v904
  %v940 = vpop.permute.xlu0 %939
  %v942 = vmul.f32 %v936, %v940
  %v943 = vmul.f32 %v937, %v940
  %v944 = vadd.f32 %v930, %v942
  %v945 = vadd.f32 %v931, %v943
  %946 = vrot.lane.b32.xlu0 %v902, 80
  %v947 = vpop.permute.xlu0 %946
  %948 = vrot.lane.b32.xlu0 %v903, 80
  %v949 = vpop.permute.xlu0 %948
  %v950 = vsel %vm682, %v947, %v949
  %v951 = vsel %vm682, %v949, %v947
  %952 = vset.pattern.permute.xlu0 3
  %953 = vperm.xlu0 %952, %v904
  %v954 = vpop.permute.xlu0 %953
  %v956 = vmul.f32 %v950, %v954
  %v957 = vmul.f32 %v951, %v954
  %v958 = vadd.f32 %v944, %v956
  %v959 = vadd.f32 %v945, %v957
  %960 = vrot.lane.b32.xlu0 %v902, 64
  %v961 = vpop.permute.xlu0 %960
  %962 = vrot.lane.b32.xlu0 %v903, 64
  %v963 = vpop.permute.xlu0 %962
  %vm964 = vcmp.lt.s32.totalorder %v66, 64
  %v965 = vsel %vm964, %v961, %v963
  %v966 = vsel %vm964, %v963, %v961
  %967 = vset.pattern.permute.xlu0 4
  %968 = vperm.xlu0 %967, %v904
  %v969 = vpop.permute.xlu0 %968
  %v971 = vmul.f32 %v965, %v969
  %v972 = vmul.f32 %v966, %v969
  %v973 = vadd.f32 %v958, %v971
  %v974 = vadd.f32 %v959, %v972
  %975 = vrot.lane.b32.xlu0 %v902, 48
  %v976 = vpop.permute.xlu0 %975
  %977 = vrot.lane.b32.xlu0 %v903, 48
  %v978 = vpop.permute.xlu0 %977
  %v979 = vsel %vm108, %v976, %v978
  %v980 = vsel %vm108, %v978, %v976
  %981 = vset.pattern.permute.xlu0 5
  %982 = vperm.xlu0 %981, %v904
  %v983 = vpop.permute.xlu0 %982
  %v985 = vmul.f32 %v979, %v983
  %v986 = vmul.f32 %v980, %v983
  %v987 = vadd.f32 %v973, %v985
  %v988 = vadd.f32 %v974, %v986
  %989 = vrot.lane.b32.xlu0 %v902, 32
  %v990 = vpop.permute.xlu0 %989
  %991 = vrot.lane.b32.xlu0 %v903, 32
  %v992 = vpop.permute.xlu0 %991
  %v993 = vsel %vm206, %v990, %v992
  %v994 = vsel %vm206, %v992, %v990
  %995 = vset.pattern.permute.xlu0 6
  %996 = vperm.xlu0 %995, %v904
  %v997 = vpop.permute.xlu0 %996
  %v999 = vmul.f32 %v993, %v997
  %v1000 = vmul.f32 %v994, %v997
  %v1001 = vadd.f32 %v987, %v999
  %v1002 = vadd.f32 %v988, %v1000
  %1003 = vrot.lane.b32.xlu0 %v902, 16
  %v1004 = vpop.permute.xlu0 %1003
  %1005 = vrot.lane.b32.xlu0 %v903, 16
  %v1006 = vpop.permute.xlu0 %1005
  %v1007 = vsel %vm304, %v1004, %v1006
  %v1008 = vsel %vm304, %v1006, %v1004
  %1009 = vset.pattern.permute.xlu0 7
  %1010 = vperm.xlu0 %1009, %v904
  %v1011 = vpop.permute.xlu0 %1010
  %v1013 = vmul.f32 %v1007, %v1011
  %v1014 = vmul.f32 %v1008, %v1011
  %v1015 = vadd.f32 %v1001, %v1013
  %v1016 = vadd.f32 %v1002, %v1014
  %1017 = vset.pattern.permute.xlu0 8
  %1018 = vperm.xlu0 %1017, %v904
  %v1019 = vpop.permute.xlu0 %1018
  %v1021 = vmul.f32 %v903, %v1019
  %v1022 = vmul.f32 %v902, %v1019
  %v1023 = vadd.f32 %v1015, %v1021
  %v1024 = vadd.f32 %v1016, %v1022
  %1025 = vset.pattern.permute.xlu0 9
  %1026 = vperm.xlu0 %1025, %v904
  %v1027 = vpop.permute.xlu0 %1026
  %v1029 = vmul.f32 %v923, %v1027
  %v1030 = vmul.f32 %v922, %v1027
  %v1031 = vadd.f32 %v1023, %v1029
  %v1032 = vadd.f32 %v1024, %v1030
  %1033 = vset.pattern.permute.xlu0 10
  %1034 = vperm.xlu0 %1033, %v904
  %v1035 = vpop.permute.xlu0 %1034
  %v1037 = vmul.f32 %v937, %v1035
  %v1038 = vmul.f32 %v936, %v1035
  %v1039 = vadd.f32 %v1031, %v1037
  %v1040 = vadd.f32 %v1032, %v1038
  %1041 = vset.pattern.permute.xlu0 11
  %1042 = vperm.xlu0 %1041, %v904
  %v1043 = vpop.permute.xlu0 %1042
  %v1045 = vmul.f32 %v951, %v1043
  %v1046 = vmul.f32 %v950, %v1043
  %v1047 = vadd.f32 %v1039, %v1045
  %v1048 = vadd.f32 %v1040, %v1046
  %1049 = vset.pattern.permute.xlu0 12
  %1050 = vperm.xlu0 %1049, %v904
  %v1051 = vpop.permute.xlu0 %1050
  %v1053 = vmul.f32 %v966, %v1051
  %v1054 = vmul.f32 %v965, %v1051
  %v1055 = vadd.f32 %v1047, %v1053
  %v1056 = vadd.f32 %v1048, %v1054
  %1057 = vset.pattern.permute.xlu0 13
  %1058 = vperm.xlu0 %1057, %v904
  %v1059 = vpop.permute.xlu0 %1058
  %v1061 = vmul.f32 %v980, %v1059
  %v1062 = vmul.f32 %v979, %v1059
  %v1063 = vadd.f32 %v1055, %v1061
  %v1064 = vadd.f32 %v1056, %v1062
  %1065 = vset.pattern.permute.xlu0 14
  %1066 = vperm.xlu0 %1065, %v904
  %v1067 = vpop.permute.xlu0 %1066
  %v1069 = vmul.f32 %v994, %v1067
  %v1070 = vmul.f32 %v993, %v1067
  %v1071 = vadd.f32 %v1063, %v1069
  %v1072 = vadd.f32 %v1064, %v1070
  %1073 = vset.pattern.permute.xlu0 15
  %1074 = vperm.xlu0 %1073, %v904
  %v1075 = vpop.permute.xlu0 %1074
  %v1077 = vmul.f32 %v1008, %v1075
  %v1078 = vmul.f32 %v1007, %v1075
  %v1079 = vadd.f32 %v1071, %v1077
  %v1080 = vadd.f32 %v1072, %v1078
  %v1081 = vld [vmem:[%s4] sm:$0xff]
  %v1082 = vld [vmem:[%s4 + $0x8] sm:$0xff]
  %v1083 = vadd.f32 %v43, %v1081
  %v1084 = vadd.f32 %v44, %v1082
  %s1085 = scalar_lea.vmem %s2, 240
  %v1086 = vld [vmem:[%s1085] sm:$0xff]
  %v1087 = vld [vmem:[%s1085 + $0x8] sm:$0xff]
  %v1088 = vmul.f32 %v1083, %v1086
  %v1089 = vmul.f32 %v1084, %v1087
  %1090 = vset.pattern.permute.xlu0 4
  %1091 = vperm.xlu0 %1090, %v47
  %v1092 = vpop.permute.xlu0 %1091
  %v1094 = vadd.f32 %v1092, %v1088
  %v1095 = vadd.f32 %v1092, %v1089
  %1096 = vrot.lane.b32.xlu0 %v1083, 15
  %v1097 = vpop.permute.xlu0 %1096
  %1098 = vrot.lane.b32.xlu0 %v1084, 15
  %v1099 = vpop.permute.xlu0 %1098
  %v1100 = vsel %vm318, %v1097, %v1099
  %v1101 = vsel %vm318, %v1099, %v1097
  %v1102 = vld [vmem:[%s2] sm:$0xff]
  %v1103 = vld [vmem:[%s2 + $0x8] sm:$0xff]
  %v1104 = vmul.f32 %v1101, %v1102
  %v1105 = vmul.f32 %v1100, %v1103
  %v1106 = vadd.f32 %v1094, %v1104
  %v1107 = vadd.f32 %v1095, %v1105
  %1108 = vrot.lane.b32.xlu0 %v1083, 14
  %v1109 = vpop.permute.xlu0 %1108
  %1110 = vrot.lane.b32.xlu0 %v1084, 14
  %v1111 = vpop.permute.xlu0 %1110
  %v1112 = vsel %vm332, %v1109, %v1111
  %v1113 = vsel %vm332, %v1111, %v1109
  %s1114 = scalar_lea.vmem %s2, 16
  %v1115 = vld [vmem:[%s1114] sm:$0xff]
  %v1116 = vld [vmem:[%s1114 + $0x8] sm:$0xff]
  %v1117 = vmul.f32 %v1113, %v1115
  %v1118 = vmul.f32 %v1112, %v1116
  %v1119 = vadd.f32 %v1106, %v1117
  %v1120 = vadd.f32 %v1107, %v1118
  %1121 = vrot.lane.b32.xlu0 %v1083, 13
  %v1122 = vpop.permute.xlu0 %1121
  %1123 = vrot.lane.b32.xlu0 %v1084, 13
  %v1124 = vpop.permute.xlu0 %1123
  %v1125 = vsel %vm346, %v1122, %v1124
  %v1126 = vsel %vm346, %v1124, %v1122
  %s1127 = scalar_lea.vmem %s2, 32
  %v1128 = vld [vmem:[%s1127] sm:$0xff]
  %v1129 = vld [vmem:[%s1127 + $0x8] sm:$0xff]
  %v1130 = vmul.f32 %v1126, %v1128
  %v1131 = vmul.f32 %v1125, %v1129
  %v1132 = vadd.f32 %v1119, %v1130
  %v1133 = vadd.f32 %v1120, %v1131
  %1134 = vrot.lane.b32.xlu0 %v1083, 12
  %v1135 = vpop.permute.xlu0 %1134
  %1136 = vrot.lane.b32.xlu0 %v1084, 12
  %v1137 = vpop.permute.xlu0 %1136
  %vm1138 = vcmp.lt.s32.totalorder %v66, 12
  %v1139 = vsel %vm1138, %v1135, %v1137
  %v1140 = vsel %vm1138, %v1137, %v1135
  %s1141 = scalar_lea.vmem %s2, 48
  %v1142 = vld [vmem:[%s1141] sm:$0xff]
  %v1143 = vld [vmem:[%s1141 + $0x8] sm:$0xff]
  %v1144 = vmul.f32 %v1140, %v1142
  %v1145 = vmul.f32 %v1139, %v1143
  %v1146 = vadd.f32 %v1132, %v1144
  %v1147 = vadd.f32 %v1133, %v1145
  %1148 = vrot.lane.b32.xlu0 %v1083, 11
  %v1149 = vpop.permute.xlu0 %1148
  %1150 = vrot.lane.b32.xlu0 %v1084, 11
  %v1151 = vpop.permute.xlu0 %1150
  %vm1152 = vcmp.lt.s32.totalorder %v66, 11
  %v1153 = vsel %vm1152, %v1149, %v1151
  %v1154 = vsel %vm1152, %v1151, %v1149
  %s1155 = scalar_lea.vmem %s2, 64
  %v1156 = vld [vmem:[%s1155] sm:$0xff]
  %v1157 = vld [vmem:[%s1155 + $0x8] sm:$0xff]
  %v1158 = vmul.f32 %v1154, %v1156
  %v1159 = vmul.f32 %v1153, %v1157
  %v1160 = vadd.f32 %v1146, %v1158
  %v1161 = vadd.f32 %v1147, %v1159
  %1162 = vrot.lane.b32.xlu0 %v1083, 10
  %v1163 = vpop.permute.xlu0 %1162
  %1164 = vrot.lane.b32.xlu0 %v1084, 10
  %v1165 = vpop.permute.xlu0 %1164
  %vm1166 = vcmp.lt.s32.totalorder %v66, 10
  %v1167 = vsel %vm1166, %v1163, %v1165
  %v1168 = vsel %vm1166, %v1165, %v1163
  %s1169 = scalar_lea.vmem %s2, 80
  %v1170 = vld [vmem:[%s1169] sm:$0xff]
  %v1171 = vld [vmem:[%s1169 + $0x8] sm:$0xff]
  %v1172 = vmul.f32 %v1168, %v1170
  %v1173 = vmul.f32 %v1167, %v1171
  %v1174 = vadd.f32 %v1160, %v1172
  %v1175 = vadd.f32 %v1161, %v1173
  %1176 = vrot.lane.b32.xlu0 %v1083, 9
  %v1177 = vpop.permute.xlu0 %1176
  %1178 = vrot.lane.b32.xlu0 %v1084, 9
  %v1179 = vpop.permute.xlu0 %1178
  %vm1180 = vcmp.lt.s32.totalorder %v66, 9
  %v1181 = vsel %vm1180, %v1177, %v1179
  %v1182 = vsel %vm1180, %v1179, %v1177
  %s1183 = scalar_lea.vmem %s2, 96
  %v1184 = vld [vmem:[%s1183] sm:$0xff]
  %v1185 = vld [vmem:[%s1183 + $0x8] sm:$0xff]
  %v1186 = vmul.f32 %v1182, %v1184
  %v1187 = vmul.f32 %v1181, %v1185
  %v1188 = vadd.f32 %v1174, %v1186
  %v1189 = vadd.f32 %v1175, %v1187
  %1190 = vrot.lane.b32.xlu0 %v1083, 8
  %v1191 = vpop.permute.xlu0 %1190
  %1192 = vrot.lane.b32.xlu0 %v1084, 8
  %v1193 = vpop.permute.xlu0 %1192
  %vm1194 = vcmp.lt.s32.totalorder %v66, 8
  %v1195 = vsel %vm1194, %v1191, %v1193
  %v1196 = vsel %vm1194, %v1193, %v1191
  %s1197 = scalar_lea.vmem %s2, 112
  %v1198 = vld [vmem:[%s1197] sm:$0xff]
  %v1199 = vld [vmem:[%s1197 + $0x8] sm:$0xff]
  %v1200 = vmul.f32 %v1196, %v1198
  %v1201 = vmul.f32 %v1195, %v1199
  %v1202 = vadd.f32 %v1188, %v1200
  %v1203 = vadd.f32 %v1189, %v1201
  %1204 = vrot.lane.b32.xlu0 %v1083, 7
  %v1205 = vpop.permute.xlu0 %1204
  %1206 = vrot.lane.b32.xlu0 %v1084, 7
  %v1207 = vpop.permute.xlu0 %1206
  %vm1208 = vcmp.lt.s32.totalorder %v66, 7
  %v1209 = vsel %vm1208, %v1205, %v1207
  %v1210 = vsel %vm1208, %v1207, %v1205
  %s1211 = scalar_lea.vmem %s2, 128
  %v1212 = vld [vmem:[%s1211] sm:$0xff]
  %v1213 = vld [vmem:[%s1211 + $0x8] sm:$0xff]
  %v1214 = vmul.f32 %v1210, %v1212
  %v1215 = vmul.f32 %v1209, %v1213
  %v1216 = vadd.f32 %v1202, %v1214
  %v1217 = vadd.f32 %v1203, %v1215
  %1218 = vrot.lane.b32.xlu0 %v1083, 6
  %v1219 = vpop.permute.xlu0 %1218
  %1220 = vrot.lane.b32.xlu0 %v1084, 6
  %v1221 = vpop.permute.xlu0 %1220
  %vm1222 = vcmp.lt.s32.totalorder %v66, 6
  %v1223 = vsel %vm1222, %v1219, %v1221
  %v1224 = vsel %vm1222, %v1221, %v1219
  %s1225 = scalar_lea.vmem %s2, 144
  %v1226 = vld [vmem:[%s1225] sm:$0xff]
  %v1227 = vld [vmem:[%s1225 + $0x8] sm:$0xff]
  %v1228 = vmul.f32 %v1224, %v1226
  %v1229 = vmul.f32 %v1223, %v1227
  %v1230 = vadd.f32 %v1216, %v1228
  %v1231 = vadd.f32 %v1217, %v1229
  %1232 = vrot.lane.b32.xlu0 %v1083, 5
  %v1233 = vpop.permute.xlu0 %1232
  %1234 = vrot.lane.b32.xlu0 %v1084, 5
  %v1235 = vpop.permute.xlu0 %1234
  %vm1236 = vcmp.lt.s32.totalorder %v66, 5
  %v1237 = vsel %vm1236, %v1233, %v1235
  %v1238 = vsel %vm1236, %v1235, %v1233
  %s1239 = scalar_lea.vmem %s2, 160
  %v1240 = vld [vmem:[%s1239] sm:$0xff]
  %v1241 = vld [vmem:[%s1239 + $0x8] sm:$0xff]
  %v1242 = vmul.f32 %v1238, %v1240
  %v1243 = vmul.f32 %v1237, %v1241
  %v1244 = vadd.f32 %v1230, %v1242
  %v1245 = vadd.f32 %v1231, %v1243
  %1246 = vrot.lane.b32.xlu0 %v1083, 4
  %v1247 = vpop.permute.xlu0 %1246
  %1248 = vrot.lane.b32.xlu0 %v1084, 4
  %v1249 = vpop.permute.xlu0 %1248
  %vm1250 = vcmp.lt.s32.totalorder %v66, 4
  %v1251 = vsel %vm1250, %v1247, %v1249
  %v1252 = vsel %vm1250, %v1249, %v1247
  %s1253 = scalar_lea.vmem %s2, 176
  %v1254 = vld [vmem:[%s1253] sm:$0xff]
  %v1255 = vld [vmem:[%s1253 + $0x8] sm:$0xff]
  %v1256 = vmul.f32 %v1252, %v1254
  %v1257 = vmul.f32 %v1251, %v1255
  %v1258 = vadd.f32 %v1244, %v1256
  %v1259 = vadd.f32 %v1245, %v1257
  %1260 = vrot.lane.b32.xlu0 %v1083, 3
  %v1261 = vpop.permute.xlu0 %1260
  %1262 = vrot.lane.b32.xlu0 %v1084, 3
  %v1263 = vpop.permute.xlu0 %1262
  %v1264 = vsel %vm360, %v1261, %v1263
  %v1265 = vsel %vm360, %v1263, %v1261
  %s1266 = scalar_lea.vmem %s2, 192
  %v1267 = vld [vmem:[%s1266] sm:$0xff]
  %v1268 = vld [vmem:[%s1266 + $0x8] sm:$0xff]
  %v1269 = vmul.f32 %v1265, %v1267
  %v1270 = vmul.f32 %v1264, %v1268
  %v1271 = vadd.f32 %v1258, %v1269
  %v1272 = vadd.f32 %v1259, %v1270
  %1273 = vrot.lane.b32.xlu0 %v1083, 2
  %v1274 = vpop.permute.xlu0 %1273
  %1275 = vrot.lane.b32.xlu0 %v1084, 2
  %v1276 = vpop.permute.xlu0 %1275
  %v1277 = vsel %vm374, %v1274, %v1276
  %v1278 = vsel %vm374, %v1276, %v1274
  %s1279 = scalar_lea.vmem %s2, 208
  %v1280 = vld [vmem:[%s1279] sm:$0xff]
  %v1281 = vld [vmem:[%s1279 + $0x8] sm:$0xff]
  %v1282 = vmul.f32 %v1278, %v1280
  %v1283 = vmul.f32 %v1277, %v1281
  %v1284 = vadd.f32 %v1271, %v1282
  %v1285 = vadd.f32 %v1272, %v1283
  %1286 = vrot.lane.b32.xlu0 %v1083, 1
  %v1287 = vpop.permute.xlu0 %1286
  %1288 = vrot.lane.b32.xlu0 %v1084, 1
  %v1289 = vpop.permute.xlu0 %1288
  %v1290 = vsel %vm388, %v1287, %v1289
  %v1291 = vsel %vm388, %v1289, %v1287
  %s1292 = scalar_lea.vmem %s2, 224
  %v1293 = vld [vmem:[%s1292] sm:$0xff]
  %v1294 = vld [vmem:[%s1292 + $0x8] sm:$0xff]
  %v1295 = vmul.f32 %v1291, %v1293
  %v1296 = vmul.f32 %v1290, %v1294
  %v1297 = vadd.f32 %v1284, %v1295
  %v1298 = vadd.f32 %v1285, %v1296
  %1299 = vrot.lane.b32.xlu0 %v1083, 127
  %v1300 = vpop.permute.xlu0 %1299
  %1301 = vrot.lane.b32.xlu0 %v1084, 127
  %v1302 = vpop.permute.xlu0 %1301
  %v1303 = vsel %vm402, %v1300, %v1302
  %v1304 = vsel %vm402, %v1302, %v1300
  %s1305 = scalar_lea.vmem %s2, 256
  %v1306 = vld [vmem:[%s1305] sm:$0xff]
  %v1307 = vld [vmem:[%s1305 + $0x8] sm:$0xff]
  %v1308 = vmul.f32 %v1303, %v1306
  %v1309 = vmul.f32 %v1304, %v1307
  %v1310 = vadd.f32 %v1297, %v1308
  %v1311 = vadd.f32 %v1298, %v1309
  %1312 = vrot.lane.b32.xlu0 %v1083, 126
  %v1313 = vpop.permute.xlu0 %1312
  %1314 = vrot.lane.b32.xlu0 %v1084, 126
  %v1315 = vpop.permute.xlu0 %1314
  %v1316 = vsel %vm416, %v1313, %v1315
  %v1317 = vsel %vm416, %v1315, %v1313
  %s1318 = scalar_lea.vmem %s2, 272
  %v1319 = vld [vmem:[%s1318] sm:$0xff]
  %v1320 = vld [vmem:[%s1318 + $0x8] sm:$0xff]
  %v1321 = vmul.f32 %v1316, %v1319
  %v1322 = vmul.f32 %v1317, %v1320
  %v1323 = vadd.f32 %v1310, %v1321
  %v1324 = vadd.f32 %v1311, %v1322
  %1325 = vrot.lane.b32.xlu0 %v1083, 125
  %v1326 = vpop.permute.xlu0 %1325
  %1327 = vrot.lane.b32.xlu0 %v1084, 125
  %v1328 = vpop.permute.xlu0 %1327
  %v1329 = vsel %vm430, %v1326, %v1328
  %v1330 = vsel %vm430, %v1328, %v1326
  %s1331 = scalar_lea.vmem %s2, 288
  %v1332 = vld [vmem:[%s1331] sm:$0xff]
  %v1333 = vld [vmem:[%s1331 + $0x8] sm:$0xff]
  %v1334 = vmul.f32 %v1329, %v1332
  %v1335 = vmul.f32 %v1330, %v1333
  %v1336 = vadd.f32 %v1323, %v1334
  %v1337 = vadd.f32 %v1324, %v1335
  %1338 = vrot.lane.b32.xlu0 %v1083, 124
  %v1339 = vpop.permute.xlu0 %1338
  %1340 = vrot.lane.b32.xlu0 %v1084, 124
  %v1341 = vpop.permute.xlu0 %1340
  %vm1342 = vcmp.lt.s32.totalorder %v66, 124
  %v1343 = vsel %vm1342, %v1339, %v1341
  %v1344 = vsel %vm1342, %v1341, %v1339
  %s1345 = scalar_lea.vmem %s2, 304
  %v1346 = vld [vmem:[%s1345] sm:$0xff]
  %v1347 = vld [vmem:[%s1345 + $0x8] sm:$0xff]
  %v1348 = vmul.f32 %v1343, %v1346
  %v1349 = vmul.f32 %v1344, %v1347
  %v1350 = vadd.f32 %v1336, %v1348
  %v1351 = vadd.f32 %v1337, %v1349
  %1352 = vrot.lane.b32.xlu0 %v1083, 123
  %v1353 = vpop.permute.xlu0 %1352
  %1354 = vrot.lane.b32.xlu0 %v1084, 123
  %v1355 = vpop.permute.xlu0 %1354
  %vm1356 = vcmp.lt.s32.totalorder %v66, 123
  %v1357 = vsel %vm1356, %v1353, %v1355
  %v1358 = vsel %vm1356, %v1355, %v1353
  %s1359 = scalar_lea.vmem %s2, 320
  %v1360 = vld [vmem:[%s1359] sm:$0xff]
  %v1361 = vld [vmem:[%s1359 + $0x8] sm:$0xff]
  %v1362 = vmul.f32 %v1357, %v1360
  %v1363 = vmul.f32 %v1358, %v1361
  %v1364 = vadd.f32 %v1350, %v1362
  %v1365 = vadd.f32 %v1351, %v1363
  %1366 = vrot.lane.b32.xlu0 %v1083, 122
  %v1367 = vpop.permute.xlu0 %1366
  %1368 = vrot.lane.b32.xlu0 %v1084, 122
  %v1369 = vpop.permute.xlu0 %1368
  %vm1370 = vcmp.lt.s32.totalorder %v66, 122
  %v1371 = vsel %vm1370, %v1367, %v1369
  %v1372 = vsel %vm1370, %v1369, %v1367
  %s1373 = scalar_lea.vmem %s2, 336
  %v1374 = vld [vmem:[%s1373] sm:$0xff]
  %v1375 = vld [vmem:[%s1373 + $0x8] sm:$0xff]
  %v1376 = vmul.f32 %v1371, %v1374
  %v1377 = vmul.f32 %v1372, %v1375
  %v1378 = vadd.f32 %v1364, %v1376
  %v1379 = vadd.f32 %v1365, %v1377
  %1380 = vrot.lane.b32.xlu0 %v1083, 121
  %v1381 = vpop.permute.xlu0 %1380
  %1382 = vrot.lane.b32.xlu0 %v1084, 121
  %v1383 = vpop.permute.xlu0 %1382
  %vm1384 = vcmp.lt.s32.totalorder %v66, 121
  %v1385 = vsel %vm1384, %v1381, %v1383
  %v1386 = vsel %vm1384, %v1383, %v1381
  %s1387 = scalar_lea.vmem %s2, 352
  %v1388 = vld [vmem:[%s1387] sm:$0xff]
  %v1389 = vld [vmem:[%s1387 + $0x8] sm:$0xff]
  %v1390 = vmul.f32 %v1385, %v1388
  %v1391 = vmul.f32 %v1386, %v1389
  %v1392 = vadd.f32 %v1378, %v1390
  %v1393 = vadd.f32 %v1379, %v1391
  %1394 = vrot.lane.b32.xlu0 %v1083, 120
  %v1395 = vpop.permute.xlu0 %1394
  %1396 = vrot.lane.b32.xlu0 %v1084, 120
  %v1397 = vpop.permute.xlu0 %1396
  %vm1398 = vcmp.lt.s32.totalorder %v66, 120
  %v1399 = vsel %vm1398, %v1395, %v1397
  %v1400 = vsel %vm1398, %v1397, %v1395
  %s1401 = scalar_lea.vmem %s2, 368
  %v1402 = vld [vmem:[%s1401] sm:$0xff]
  %v1403 = vld [vmem:[%s1401 + $0x8] sm:$0xff]
  %v1404 = vmul.f32 %v1399, %v1402
  %v1405 = vmul.f32 %v1400, %v1403
  %v1406 = vadd.f32 %v1392, %v1404
  %v1407 = vadd.f32 %v1393, %v1405
  %1408 = vrot.lane.b32.xlu0 %v1083, 119
  %v1409 = vpop.permute.xlu0 %1408
  %1410 = vrot.lane.b32.xlu0 %v1084, 119
  %v1411 = vpop.permute.xlu0 %1410
  %vm1412 = vcmp.lt.s32.totalorder %v66, 119
  %v1413 = vsel %vm1412, %v1409, %v1411
  %v1414 = vsel %vm1412, %v1411, %v1409
  %s1415 = scalar_lea.vmem %s2, 384
  %v1416 = vld [vmem:[%s1415] sm:$0xff]
  %v1417 = vld [vmem:[%s1415 + $0x8] sm:$0xff]
  %v1418 = vmul.f32 %v1413, %v1416
  %v1419 = vmul.f32 %v1414, %v1417
  %v1420 = vadd.f32 %v1406, %v1418
  %v1421 = vadd.f32 %v1407, %v1419
  %1422 = vrot.lane.b32.xlu0 %v1083, 118
  %v1423 = vpop.permute.xlu0 %1422
  %1424 = vrot.lane.b32.xlu0 %v1084, 118
  %v1425 = vpop.permute.xlu0 %1424
  %vm1426 = vcmp.lt.s32.totalorder %v66, 118
  %v1427 = vsel %vm1426, %v1423, %v1425
  %v1428 = vsel %vm1426, %v1425, %v1423
  %s1429 = scalar_lea.vmem %s2, 400
  %v1430 = vld [vmem:[%s1429] sm:$0xff]
  %v1431 = vld [vmem:[%s1429 + $0x8] sm:$0xff]
  %v1432 = vmul.f32 %v1427, %v1430
  %v1433 = vmul.f32 %v1428, %v1431
  %v1434 = vadd.f32 %v1420, %v1432
  %v1435 = vadd.f32 %v1421, %v1433
  %1436 = vrot.lane.b32.xlu0 %v1083, 117
  %v1437 = vpop.permute.xlu0 %1436
  %1438 = vrot.lane.b32.xlu0 %v1084, 117
  %v1439 = vpop.permute.xlu0 %1438
  %vm1440 = vcmp.lt.s32.totalorder %v66, 117
  %v1441 = vsel %vm1440, %v1437, %v1439
  %v1442 = vsel %vm1440, %v1439, %v1437
  %s1443 = scalar_lea.vmem %s2, 416
  %v1444 = vld [vmem:[%s1443] sm:$0xff]
  %v1445 = vld [vmem:[%s1443 + $0x8] sm:$0xff]
  %v1446 = vmul.f32 %v1441, %v1444
  %v1447 = vmul.f32 %v1442, %v1445
  %v1448 = vadd.f32 %v1434, %v1446
  %v1449 = vadd.f32 %v1435, %v1447
  %1450 = vrot.lane.b32.xlu0 %v1083, 116
  %v1451 = vpop.permute.xlu0 %1450
  %1452 = vrot.lane.b32.xlu0 %v1084, 116
  %v1453 = vpop.permute.xlu0 %1452
  %vm1454 = vcmp.lt.s32.totalorder %v66, 116
  %v1455 = vsel %vm1454, %v1451, %v1453
  %v1456 = vsel %vm1454, %v1453, %v1451
  %s1457 = scalar_lea.vmem %s2, 432
  %v1458 = vld [vmem:[%s1457] sm:$0xff]
  %v1459 = vld [vmem:[%s1457 + $0x8] sm:$0xff]
  %v1460 = vmul.f32 %v1455, %v1458
  %v1461 = vmul.f32 %v1456, %v1459
  %v1462 = vadd.f32 %v1448, %v1460
  %v1463 = vadd.f32 %v1449, %v1461
  %1464 = vrot.lane.b32.xlu0 %v1083, 115
  %v1465 = vpop.permute.xlu0 %1464
  %1466 = vrot.lane.b32.xlu0 %v1084, 115
  %v1467 = vpop.permute.xlu0 %1466
  %v1468 = vsel %vm444, %v1465, %v1467
  %v1469 = vsel %vm444, %v1467, %v1465
  %s1470 = scalar_lea.vmem %s2, 448
  %v1471 = vld [vmem:[%s1470] sm:$0xff]
  %v1472 = vld [vmem:[%s1470 + $0x8] sm:$0xff]
  %v1473 = vmul.f32 %v1468, %v1471
  %v1474 = vmul.f32 %v1469, %v1472
  %v1475 = vadd.f32 %v1462, %v1473
  %v1476 = vadd.f32 %v1463, %v1474
  %1477 = vrot.lane.b32.xlu0 %v1083, 114
  %v1478 = vpop.permute.xlu0 %1477
  %1479 = vrot.lane.b32.xlu0 %v1084, 114
  %v1480 = vpop.permute.xlu0 %1479
  %v1481 = vsel %vm458, %v1478, %v1480
  %v1482 = vsel %vm458, %v1480, %v1478
  %s1483 = scalar_lea.vmem %s2, 464
  %v1484 = vld [vmem:[%s1483] sm:$0xff]
  %v1485 = vld [vmem:[%s1483 + $0x8] sm:$0xff]
  %v1486 = vmul.f32 %v1481, %v1484
  %v1487 = vmul.f32 %v1482, %v1485
  %v1488 = vadd.f32 %v1475, %v1486
  %v1489 = vadd.f32 %v1476, %v1487
  %1490 = vrot.lane.b32.xlu0 %v1083, 113
  %v1491 = vpop.permute.xlu0 %1490
  %1492 = vrot.lane.b32.xlu0 %v1084, 113
  %v1493 = vpop.permute.xlu0 %1492
  %v1494 = vsel %vm472, %v1491, %v1493
  %v1495 = vsel %vm472, %v1493, %v1491
  %s1496 = scalar_lea.vmem %s2, 480
  %v1497 = vld [vmem:[%s1496] sm:$0xff]
  %v1498 = vld [vmem:[%s1496 + $0x8] sm:$0xff]
  %v1499 = vmul.f32 %v1494, %v1497
  %v1500 = vmul.f32 %v1495, %v1498
  %v1501 = vadd.f32 %v1488, %v1499
  %v1502 = vadd.f32 %v1489, %v1500
  %1503 = vmatprep.subr.mxu0 %v1502
  %1504 = vmatpush1.msra.mxu0 %v1501
  %1505 = vmatprep.subr.mxu0 0.0
  %1506 = vmatpush1.msra.mxu0 0.0
  %1507 = vmatprep.subr.mxu0 0.0
  %1508 = vmatpush1.msra.mxu0 0.0
  %1509 = vmatprep.subr.mxu0 0.0
  %1510 = vmatpush1.msra.mxu0 0.0
  %1511 = vmatprep.subr.mxu0 0.0
  %1512 = vmatpush1.msra.mxu0 0.0
  %1513 = vmatprep.subr.mxu0 0.0
  %1514 = vmatpush1.msra.mxu0 0.0
  %1515 = vmatprep.subr.mxu0 0.0
  %1516 = vmatpush1.msra.mxu0 0.0
  %1517 = vmatprep.subr.mxu0 0.0
  %1518 = vmatpush1.msra.mxu0 0.0
  %1519 = vmatprep.subr.mxu0 0.0
  %1520 = vmatpush1.msra.mxu0 0.0
  %1521 = vmatprep.subr.mxu0 0.0
  %1522 = vmatpush1.msra.mxu0 0.0
  %1523 = vmatprep.subr.mxu0 0.0
  %1524 = vmatpush1.msra.mxu0 0.0
  %1525 = vmatprep.subr.mxu0 0.0
  %1526 = vmatpush1.msra.mxu0 0.0
  %1527 = vmatprep.subr.mxu0 0.0
  %1528 = vmatpush1.msra.mxu0 0.0
  %1529 = vmatprep.subr.mxu0 0.0
  %1530 = vmatpush1.msra.mxu0 0.0
  %1531 = vmatprep.subr.mxu0 0.0
  %1532 = vmatpush1.msra.mxu0 0.0
  %1533 = vmatprep.subr.mxu0 0.0
  %1534 = vmatpush1.msra.mxu0 0.0
  %1535 = vmatprep.subr.mxu0 0.0
  %1536 = vmatpush1.msra.mxu0 0.0
  %1537 = vmatprep.subr.mxu0 0.0
  %1538 = vmatpush1.msra.mxu0 0.0
  %1539 = vmatprep.subr.mxu0 0.0
  %1540 = vmatpush1.msra.mxu0 0.0
  %1541 = vmatprep.subr.mxu0 0.0
  %1542 = vmatpush1.msra.mxu0 0.0
  %1543 = vmatprep.subr.mxu0 0.0
  %1544 = vmatpush1.msra.mxu0 0.0
  %1545 = vmatprep.subr.mxu0 0.0
  %1546 = vmatpush1.msra.mxu0 0.0
  %1547 = vmatprep.subr.mxu0 0.0
  %1548 = vmatpush1.msra.mxu0 0.0
  %1549 = vmatprep.subr.mxu0 0.0
  %1550 = vmatpush1.msra.mxu0 0.0
  %1551 = vmatprep.subr.mxu0 0.0
  %1552 = vmatpush1.msra.mxu0 0.0
  %1553 = vmatprep.subr.mxu0 0.0
  %1554 = vmatpush1.msra.mxu0 0.0
  %1555 = vmatprep.subr.mxu0 0.0
  %1556 = vmatpush1.msra.mxu0 0.0
  %1557 = vmatprep.subr.mxu0 0.0
  %1558 = vmatpush1.msra.mxu0 0.0
  %1559 = vmatprep.subr.mxu0 0.0
  %1560 = vmatpush1.msra.mxu0 0.0
  %1561 = vmatprep.subr.mxu0 0.0
  %1562 = vmatpush1.msra.mxu0 0.0
  %1563 = vmatprep.subr.mxu0 0.0
  %1564 = vmatpush1.msra.mxu0 0.0
  %1565 = vmatprep.subr.mxu0 0.0
  %1566 = vmatpush1.msra.mxu0 0.0
  %1567 = vmatprep.mubr.f32.mxu0 0.0
  %1568 = vmatmul.mubr.f32.gmra.mrb[0].mxu0 %v736
  %v1569 = vpop.f32.mrb[0].mxu0
  %v1570 = vadd.f32 0.0, %v1569
  %v1571 = vpop.f32.mrb[0].mxu0
  %v1572 = vadd.f32 0.0, %v1571
  %1573 = vdwg.mxu0
  %1574 = vmatprep.subr.mxu0 %v1080
  %1575 = vmatpush1.msra.mxu0 %v1079
  %1576 = vmatprep.subr.mxu0 0.0
  %1577 = vmatpush1.msra.mxu0 0.0
  %1578 = vmatprep.subr.mxu0 0.0
  %1579 = vmatpush1.msra.mxu0 0.0
  %1580 = vmatprep.subr.mxu0 0.0
  %1581 = vmatpush1.msra.mxu0 0.0
  %1582 = vmatprep.subr.mxu0 0.0
  %1583 = vmatpush1.msra.mxu0 0.0
  %1584 = vmatprep.subr.mxu0 0.0
  %1585 = vmatpush1.msra.mxu0 0.0
  %1586 = vmatprep.subr.mxu0 0.0
  %1587 = vmatpush1.msra.mxu0 0.0
  %1588 = vmatprep.subr.mxu0 0.0
  %1589 = vmatpush1.msra.mxu0 0.0
  %1590 = vmatprep.subr.mxu0 0.0
  %1591 = vmatpush1.msra.mxu0 0.0
  %1592 = vmatprep.subr.mxu0 0.0
  %1593 = vmatpush1.msra.mxu0 0.0
  %1594 = vmatprep.subr.mxu0 0.0
  %1595 = vmatpush1.msra.mxu0 0.0
  %1596 = vmatprep.subr.mxu0 0.0
  %1597 = vmatpush1.msra.mxu0 0.0
  %1598 = vmatprep.subr.mxu0 0.0
  %1599 = vmatpush1.msra.mxu0 0.0
  %1600 = vmatprep.subr.mxu0 0.0
  %1601 = vmatpush1.msra.mxu0 0.0
  %1602 = vmatprep.subr.mxu0 0.0
  %1603 = vmatpush1.msra.mxu0 0.0
  %1604 = vmatprep.subr.mxu0 0.0
  %1605 = vmatpush1.msra.mxu0 0.0
  %1606 = vmatprep.subr.mxu0 0.0
  %1607 = vmatpush1.msra.mxu0 0.0
  %1608 = vmatprep.subr.mxu0 0.0
  %1609 = vmatpush1.msra.mxu0 0.0
  %1610 = vmatprep.subr.mxu0 0.0
  %1611 = vmatpush1.msra.mxu0 0.0
  %1612 = vmatprep.subr.mxu0 0.0
  %1613 = vmatpush1.msra.mxu0 0.0
  %1614 = vmatprep.subr.mxu0 0.0
  %1615 = vmatpush1.msra.mxu0 0.0
  %1616 = vmatprep.subr.mxu0 0.0
  %1617 = vmatpush1.msra.mxu0 0.0
  %1618 = vmatprep.subr.mxu0 0.0
  %1619 = vmatpush1.msra.mxu0 0.0
  %1620 = vmatprep.subr.mxu0 0.0
  %1621 = vmatpush1.msra.mxu0 0.0
  %1622 = vmatprep.subr.mxu0 0.0
  %1623 = vmatpush1.msra.mxu0 0.0
  %1624 = vmatprep.subr.mxu0 0.0
  %1625 = vmatpush1.msra.mxu0 0.0
  %1626 = vmatprep.subr.mxu0 0.0
  %1627 = vmatpush1.msra.mxu0 0.0
  %1628 = vmatprep.subr.mxu0 0.0
  %1629 = vmatpush1.msra.mxu0 0.0
  %1630 = vmatprep.subr.mxu0 0.0
  %1631 = vmatpush1.msra.mxu0 0.0
  %1632 = vmatprep.subr.mxu0 0.0
  %1633 = vmatpush1.msra.mxu0 0.0
  %1634 = vmatprep.subr.mxu0 0.0
  %1635 = vmatpush1.msra.mxu0 0.0
  %1636 = vmatprep.subr.mxu0 0.0
  %1637 = vmatpush1.msra.mxu0 0.0
  %1638 = vmatprep.mubr.f32.mxu0 0.0
  %1639 = vmatmul.mubr.f32.gmra.mrb[0].mxu0 %v736
  %v1640 = vpop.f32.mrb[0].mxu0
  %v1641 = vadd.f32 %v1570, %v1640
  %v1642 = vpop.f32.mrb[0].mxu0
  %v1643 = vadd.f32 %v1572, %v1642
  %1644 = vdwg.mxu0
  %v1645 = vmul.f32 %v1641, 0.5
  %v1646 = vmul.f32 %v1643, 0.5
  %v1647 = vsub.f32 %v1079, %v1645
  %v1648 = vsub.f32 %v1080, %v1646
  %v1649 = vsub.f32 %v1501, %v1645
  %v1650 = vsub.f32 %v1502, %v1646
  %v1651 = vmul.f32 %v1647, %v1647
  %v1652 = vmul.f32 %v1648, %v1648
  %v1653 = vmul.f32 %v1649, %v1649
  %v1654 = vmul.f32 %v1650, %v1650
  %1655 = vmatprep.subr.mxu0 %v1654
  %1656 = vmatpush1.msra.mxu0 %v1653
  %1657 = vmatprep.subr.mxu0 0.0
  %1658 = vmatpush1.msra.mxu0 0.0
  %1659 = vmatprep.subr.mxu0 0.0
  %1660 = vmatpush1.msra.mxu0 0.0
  %1661 = vmatprep.subr.mxu0 0.0
  %1662 = vmatpush1.msra.mxu0 0.0
  %1663 = vmatprep.subr.mxu0 0.0
  %1664 = vmatpush1.msra.mxu0 0.0
  %1665 = vmatprep.subr.mxu0 0.0
  %1666 = vmatpush1.msra.mxu0 0.0
  %1667 = vmatprep.subr.mxu0 0.0
  %1668 = vmatpush1.msra.mxu0 0.0
  %1669 = vmatprep.subr.mxu0 0.0
  %1670 = vmatpush1.msra.mxu0 0.0
  %1671 = vmatprep.subr.mxu0 0.0
  %1672 = vmatpush1.msra.mxu0 0.0
  %1673 = vmatprep.subr.mxu0 0.0
  %1674 = vmatpush1.msra.mxu0 0.0
  %1675 = vmatprep.subr.mxu0 0.0
  %1676 = vmatpush1.msra.mxu0 0.0
  %1677 = vmatprep.subr.mxu0 0.0
  %1678 = vmatpush1.msra.mxu0 0.0
  %1679 = vmatprep.subr.mxu0 0.0
  %1680 = vmatpush1.msra.mxu0 0.0
  %1681 = vmatprep.subr.mxu0 0.0
  %1682 = vmatpush1.msra.mxu0 0.0
  %1683 = vmatprep.subr.mxu0 0.0
  %1684 = vmatpush1.msra.mxu0 0.0
  %1685 = vmatprep.subr.mxu0 0.0
  %1686 = vmatpush1.msra.mxu0 0.0
  %1687 = vmatprep.subr.mxu0 0.0
  %1688 = vmatpush1.msra.mxu0 0.0
  %1689 = vmatprep.subr.mxu0 0.0
  %1690 = vmatpush1.msra.mxu0 0.0
  %1691 = vmatprep.subr.mxu0 0.0
  %1692 = vmatpush1.msra.mxu0 0.0
  %1693 = vmatprep.subr.mxu0 0.0
  %1694 = vmatpush1.msra.mxu0 0.0
  %1695 = vmatprep.subr.mxu0 0.0
  %1696 = vmatpush1.msra.mxu0 0.0
  %1697 = vmatprep.subr.mxu0 0.0
  %1698 = vmatpush1.msra.mxu0 0.0
  %1699 = vmatprep.subr.mxu0 0.0
  %1700 = vmatpush1.msra.mxu0 0.0
  %1701 = vmatprep.subr.mxu0 0.0
  %1702 = vmatpush1.msra.mxu0 0.0
  %1703 = vmatprep.subr.mxu0 0.0
  %1704 = vmatpush1.msra.mxu0 0.0
  %1705 = vmatprep.subr.mxu0 0.0
  %1706 = vmatpush1.msra.mxu0 0.0
  %1707 = vmatprep.subr.mxu0 0.0
  %1708 = vmatpush1.msra.mxu0 0.0
  %1709 = vmatprep.subr.mxu0 0.0
  %1710 = vmatpush1.msra.mxu0 0.0
  %1711 = vmatprep.subr.mxu0 0.0
  %1712 = vmatpush1.msra.mxu0 0.0
  %1713 = vmatprep.subr.mxu0 0.0
  %1714 = vmatpush1.msra.mxu0 0.0
  %1715 = vmatprep.subr.mxu0 0.0
  %1716 = vmatpush1.msra.mxu0 0.0
  %1717 = vmatprep.subr.mxu0 0.0
  %1718 = vmatpush1.msra.mxu0 0.0
  %1719 = vmatprep.mubr.f32.mxu0 0.0
  %1720 = vmatmul.mubr.f32.gmra.mrb[0].mxu0 %v736
  %v1721 = vpop.f32.mrb[0].mxu0
  %v1722 = vadd.f32 0.0, %v1721
  %v1723 = vpop.f32.mrb[0].mxu0
  %v1724 = vadd.f32 0.0, %v1723
  %1725 = vdwg.mxu0
  %1726 = vmatprep.subr.mxu0 %v1652
  %1727 = vmatpush1.msra.mxu0 %v1651
  %1728 = vmatprep.subr.mxu0 0.0
  %1729 = vmatpush1.msra.mxu0 0.0
  %1730 = vmatprep.subr.mxu0 0.0
  %1731 = vmatpush1.msra.mxu0 0.0
  %1732 = vmatprep.subr.mxu0 0.0
  %1733 = vmatpush1.msra.mxu0 0.0
  %1734 = vmatprep.subr.mxu0 0.0
  %1735 = vmatpush1.msra.mxu0 0.0
  %1736 = vmatprep.subr.mxu0 0.0
  %1737 = vmatpush1.msra.mxu0 0.0
  %1738 = vmatprep.subr.mxu0 0.0
  %1739 = vmatpush1.msra.mxu0 0.0
  %1740 = vmatprep.subr.mxu0 0.0
  %1741 = vmatpush1.msra.mxu0 0.0
  %1742 = vmatprep.subr.mxu0 0.0
  %1743 = vmatpush1.msra.mxu0 0.0
  %1744 = vmatprep.subr.mxu0 0.0
  %1745 = vmatpush1.msra.mxu0 0.0
  %1746 = vmatprep.subr.mxu0 0.0
  %1747 = vmatpush1.msra.mxu0 0.0
  %1748 = vmatprep.subr.mxu0 0.0
  %1749 = vmatpush1.msra.mxu0 0.0
  %1750 = vmatprep.subr.mxu0 0.0
  %1751 = vmatpush1.msra.mxu0 0.0
  %1752 = vmatprep.subr.mxu0 0.0
  %1753 = vmatpush1.msra.mxu0 0.0
  %1754 = vmatprep.subr.mxu0 0.0
  %1755 = vmatpush1.msra.mxu0 0.0
  %1756 = vmatprep.subr.mxu0 0.0
  %1757 = vmatpush1.msra.mxu0 0.0
  %1758 = vmatprep.subr.mxu0 0.0
  %1759 = vmatpush1.msra.mxu0 0.0
  %1760 = vmatprep.subr.mxu0 0.0
  %1761 = vmatpush1.msra.mxu0 0.0
  %1762 = vmatprep.subr.mxu0 0.0
  %1763 = vmatpush1.msra.mxu0 0.0
  %1764 = vmatprep.subr.mxu0 0.0
  %1765 = vmatpush1.msra.mxu0 0.0
  %1766 = vmatprep.subr.mxu0 0.0
  %1767 = vmatpush1.msra.mxu0 0.0
  %1768 = vmatprep.subr.mxu0 0.0
  %1769 = vmatpush1.msra.mxu0 0.0
  %1770 = vmatprep.subr.mxu0 0.0
  %1771 = vmatpush1.msra.mxu0 0.0
  %1772 = vmatprep.subr.mxu0 0.0
  %1773 = vmatpush1.msra.mxu0 0.0
  %1774 = vmatprep.subr.mxu0 0.0
  %1775 = vmatpush1.msra.mxu0 0.0
  %1776 = vmatprep.subr.mxu0 0.0
  %1777 = vmatpush1.msra.mxu0 0.0
  %1778 = vmatprep.subr.mxu0 0.0
  %1779 = vmatpush1.msra.mxu0 0.0
  %1780 = vmatprep.subr.mxu0 0.0
  %1781 = vmatpush1.msra.mxu0 0.0
  %1782 = vmatprep.subr.mxu0 0.0
  %1783 = vmatpush1.msra.mxu0 0.0
  %1784 = vmatprep.subr.mxu0 0.0
  %1785 = vmatpush1.msra.mxu0 0.0
  %1786 = vmatprep.subr.mxu0 0.0
  %1787 = vmatpush1.msra.mxu0 0.0
  %1788 = vmatprep.subr.mxu0 0.0
  %1789 = vmatpush1.msra.mxu0 0.0
  %1790 = vmatprep.mubr.f32.mxu0 0.0
  %1791 = vmatmul.mubr.f32.gmra.mrb[0].mxu0 %v736
  %v1792 = vpop.f32.mrb[0].mxu0
  %v1793 = vadd.f32 %v1722, %v1792
  %v1794 = vpop.f32.mrb[0].mxu0
  %v1795 = vadd.f32 %v1724, %v1794
  %1796 = vdwg.mxu0
  %v1797 = vmul.f32 %v1793, 0.5
  %v1798 = vmul.f32 %v1795, 0.5
  %v1799 = vadd.f32 %v1797, 1e-06
  %v1800 = vadd.f32 %v1798, 1e-06
  %v1801 = vrsqrt.pop %v1799
  %v1802 = vrsqrt.pop %v1800
  %v1803 = vmul.f32 %v1647, %v1801
  %v1804 = vmul.f32 %v1648, %v1802
  %1805 = vset.pattern.permute.xlu0 5
  %1806 = vperm.xlu0 %1805, %v47
  %v1807 = vpop.permute.xlu0 %1806
  %v1809 = vmul.f32 %v1803, %v1807
  %v1810 = vmul.f32 %v1804, %v1807
  %1811 = vset.pattern.permute.xlu0 6
  %1812 = vperm.xlu0 %1811, %v47
  %v1813 = vpop.permute.xlu0 %1812
  %v1815 = vadd.f32 %v1809, %v1813
  %v1816 = vadd.f32 %v1810, %v1813
  %v1817 = vmul.f32 %v1649, %v1801
  %v1818 = vmul.f32 %v1650, %v1802
  %1819 = vset.pattern.permute.xlu0 7
  %1820 = vperm.xlu0 %1819, %v47
  %v1821 = vpop.permute.xlu0 %1820
  %v1823 = vmul.f32 %v1817, %v1821
  %v1824 = vmul.f32 %v1818, %v1821
  %1825 = vset.pattern.permute.xlu0 8
  %1826 = vperm.xlu0 %1825, %v47
  %v1827 = vpop.permute.xlu0 %1826
  %v1829 = vadd.f32 %v1823, %v1827
  %v1830 = vadd.f32 %v1824, %v1827
  %v1831 = vld [vmem:[%s8] sm:$0xff]
  %v1832 = vld [vmem:[%s8 + $0x8] sm:$0xff]
  %v1833 = vld [vmem:[%s8 + $0x10] sm:$0xff]
  %v1834 = vld [vmem:[%s8 + $0x18] sm:$0xff]
  %v1835 = vld [vmem:[%s8 + $0x20] sm:$0xff]
  %v1836 = vld [vmem:[%s8 + $0x28] sm:$0xff]
  %v1837 = vld [vmem:[%s8 + $0x30] sm:$0xff]
  %v1838 = vld [vmem:[%s8 + $0x38] sm:$0xff]
  %v1839 = vld [vmem:[%s8 + $0x40] sm:$0xff]
  %v1840 = vld [vmem:[%s8 + $0x48] sm:$0xff]
  %v1841 = vld [vmem:[%s8 + $0x50] sm:$0xff]
  %v1842 = vld [vmem:[%s8 + $0x58] sm:$0xff]
  %v1843 = vld [vmem:[%s9] sm:$0xff]
  %v1844 = vld [vmem:[%s9 + $0x8] sm:$0xff]
  %v1845 = vld [vmem:[%s9 + $0x10] sm:$0xff]
  %v1846 = vld [vmem:[%s9 + $0x18] sm:$0xff]
  %v1847 = vld [vmem:[%s9 + $0x20] sm:$0xff]
  %v1848 = vld [vmem:[%s9 + $0x28] sm:$0xff]
  %v1849 = vld [vmem:[%s9 + $0x30] sm:$0xff]
  %v1850 = vld [vmem:[%s9 + $0x38] sm:$0xff]
  %v1851 = vld [vmem:[%s9 + $0x40] sm:$0xff]
  %v1852 = vld [vmem:[%s9 + $0x48] sm:$0xff]
  %v1853 = vld [vmem:[%s9 + $0x50] sm:$0xff]
  %v1854 = vld [vmem:[%s9 + $0x58] sm:$0xff]
  %1856 = vset.pattern.permute.xlu0 0
  %1857 = vperm.xlu0 %1856, %v1843
  %v1858 = vpop.permute.xlu0 %1857
  %1861 = vset.pattern.permute.xlu0 0
  %1862 = vperm.xlu0 %1861, %v1844
  %v1863 = vpop.permute.xlu0 %1862
  %1866 = vset.pattern.permute.xlu0 0
  %1867 = vperm.xlu0 %1866, %v1845
  %v1868 = vpop.permute.xlu0 %1867
  %1871 = vset.pattern.permute.xlu0 0
  %1872 = vperm.xlu0 %1871, %v1846
  %v1873 = vpop.permute.xlu0 %1872
  %1876 = vset.pattern.permute.xlu0 0
  %1877 = vperm.xlu0 %1876, %v1847
  %v1878 = vpop.permute.xlu0 %1877
  %1881 = vset.pattern.permute.xlu0 0
  %1882 = vperm.xlu0 %1881, %v1848
  %v1883 = vpop.permute.xlu0 %1882
  %1886 = vset.pattern.permute.xlu0 0
  %1887 = vperm.xlu0 %1886, %v1849
  %v1888 = vpop.permute.xlu0 %1887
  %1891 = vset.pattern.permute.xlu0 0
  %1892 = vperm.xlu0 %1891, %v1850
  %v1893 = vpop.permute.xlu0 %1892
  %1896 = vset.pattern.permute.xlu0 0
  %1897 = vperm.xlu0 %1896, %v1851
  %v1898 = vpop.permute.xlu0 %1897
  %1901 = vset.pattern.permute.xlu0 0
  %1902 = vperm.xlu0 %1901, %v1852
  %v1903 = vpop.permute.xlu0 %1902
  %1906 = vset.pattern.permute.xlu0 0
  %1907 = vperm.xlu0 %1906, %v1853
  %v1908 = vpop.permute.xlu0 %1907
  %1911 = vset.pattern.permute.xlu0 0
  %1912 = vperm.xlu0 %1911, %v1854
  %v1913 = vpop.permute.xlu0 %1912
  %vm1915 = vcmask 195584
  %v1917 = vsel %vm1915, %v1831, 0
  %v1920 = vsel %vm1915, %v1832, 0
  %v1923 = vsel %vm1915, %v1833, 0
  %v1926 = vsel %vm1915, %v1834, 0
  %v1929 = vsel %vm1915, %v1835, 0
  %v1932 = vsel %vm1915, %v1836, 0
  %v1935 = vsel %vm1915, %v1837, 0
  %v1938 = vsel %vm1915, %v1838, 0
  %v1941 = vsel %vm1915, %v1839, 0
  %v1944 = vsel %vm1915, %v1840, 0
  %v1947 = vsel %vm1915, %v1841, 0
  %v1950 = vsel %vm1915, %v1842, 0
  %1952 = vmatprep.subr.mxu0 %v1816
  %1953 = vmatpush1.msra.mxu0 %v1815
  %1954 = vmatprep.subr.mxu0 %v1830
  %1955 = vmatpush1.msra.mxu0 %v1829
  %1956 = vmatprep.subr.mxu0 %v899
  %1957 = vmatpush1.msra.mxu0 %v898
  %1958 = vmatprep.subr.mxu0 0.0
  %1959 = vmatpush1.msra.mxu0 0.0
  %1960 = vmatprep.subr.mxu0 0.0
  %1961 = vmatpush1.msra.mxu0 0.0
  %1962 = vmatprep.subr.mxu0 0.0
  %1963 = vmatpush1.msra.mxu0 0.0
  %1964 = vmatprep.subr.mxu0 0.0
  %1965 = vmatpush1.msra.mxu0 0.0
  %1966 = vmatprep.subr.mxu0 0.0
  %1967 = vmatpush1.msra.mxu0 0.0
  %1968 = vmatprep.subr.mxu0 0.0
  %1969 = vmatpush1.msra.mxu0 0.0
  %1970 = vmatprep.subr.mxu0 0.0
  %1971 = vmatpush1.msra.mxu0 0.0
  %1972 = vmatprep.subr.mxu0 0.0
  %1973 = vmatpush1.msra.mxu0 0.0
  %1974 = vmatprep.subr.mxu0 0.0
  %1975 = vmatpush1.msra.mxu0 0.0
  %1976 = vmatprep.subr.mxu0 0.0
  %1977 = vmatpush1.msra.mxu0 0.0
  %1978 = vmatprep.subr.mxu0 0.0
  %1979 = vmatpush1.msra.mxu0 0.0
  %1980 = vmatprep.subr.mxu0 0.0
  %1981 = vmatpush1.msra.mxu0 0.0
  %1982 = vmatprep.subr.mxu0 0.0
  %1983 = vmatpush1.msra.mxu0 0.0
  %1984 = vmatprep.subr.mxu0 0.0
  %1985 = vmatpush1.msra.mxu0 0.0
  %1986 = vmatprep.subr.mxu0 0.0
  %1987 = vmatpush1.msra.mxu0 0.0
  %1988 = vmatprep.subr.mxu0 0.0
  %1989 = vmatpush1.msra.mxu0 0.0
  %1990 = vmatprep.subr.mxu0 0.0
  %1991 = vmatpush1.msra.mxu0 0.0
  %1992 = vmatprep.subr.mxu0 0.0
  %1993 = vmatpush1.msra.mxu0 0.0
  %1994 = vmatprep.subr.mxu0 0.0
  %1995 = vmatpush1.msra.mxu0 0.0
  %1996 = vmatprep.subr.mxu0 0.0
  %1997 = vmatpush1.msra.mxu0 0.0
  %1998 = vmatprep.subr.mxu0 0.0
  %1999 = vmatpush1.msra.mxu0 0.0
  %2000 = vmatprep.subr.mxu0 0.0
  %2001 = vmatpush1.msra.mxu0 0.0
  %2002 = vmatprep.subr.mxu0 0.0
  %2003 = vmatpush1.msra.mxu0 0.0
  %2004 = vmatprep.subr.mxu0 0.0
  %2005 = vmatpush1.msra.mxu0 0.0
  %2006 = vmatprep.subr.mxu0 0.0
  %2007 = vmatpush1.msra.mxu0 0.0
  %2008 = vmatprep.subr.mxu0 0.0
  %2009 = vmatpush1.msra.mxu0 0.0
  %2010 = vmatprep.subr.mxu0 0.0
  %2011 = vmatpush1.msra.mxu0 0.0
  %2012 = vmatprep.subr.mxu0 0.0
  %2013 = vmatpush1.msra.mxu0 0.0
  %2014 = vmatprep.subr.mxu0 0.0
  %2015 = vmatpush1.msra.mxu0 0.0
  %2016 = vmatprep.mubr.f32.mxu0 0.0
  %2017 = vmatmul.mubr.f32.gmra.mrb[0].mxu0 %v1917
  %v2018 = vpop.f32.mrb[0].mxu0
  %v2019 = vadd.f32 %v1858, %v2018
  %v2020 = vpop.f32.mrb[0].mxu0
  %v2021 = vadd.f32 %v1858, %v2020
  %2022 = vmatprep.mubr.f32.mxu0 0.0
  %2023 = vmatmul.mubr.f32.gmra.mrb[0].mxu0 %v1920
  %v2024 = vpop.f32.mrb[0].mxu0
  %v2025 = vadd.f32 %v1863, %v2024
  %v2026 = vpop.f32.mrb[0].mxu0
  %v2027 = vadd.f32 %v1863, %v2026
  %2028 = vmatprep.mubr.f32.mxu0 0.0
  %2029 = vmatmul.mubr.f32.gmra.mrb[0].mxu0 %v1923
  %v2030 = vpop.f32.mrb[0].mxu0
  %v2031 = vadd.f32 %v1868, %v2030
  %v2032 = vpop.f32.mrb[0].mxu0
  %v2033 = vadd.f32 %v1868, %v2032
  %2034 = vmatprep.mubr.f32.mxu0 0.0
  %2035 = vmatmul.mubr.f32.gmra.mrb[0].mxu0 %v1926
  %v2036 = vpop.f32.mrb[0].mxu0
  %v2037 = vadd.f32 %v1873, %v2036
  %v2038 = vpop.f32.mrb[0].mxu0
  %v2039 = vadd.f32 %v1873, %v2038
  %2040 = vmatprep.mubr.f32.mxu0 0.0
  %2041 = vmatmul.mubr.f32.gmra.mrb[0].mxu0 %v1929
  %v2042 = vpop.f32.mrb[0].mxu0
  %v2043 = vadd.f32 %v1878, %v2042
  %v2044 = vpop.f32.mrb[0].mxu0
  %v2045 = vadd.f32 %v1878, %v2044
  %2046 = vmatprep.mubr.f32.mxu0 0.0
  %2047 = vmatmul.mubr.f32.gmra.mrb[0].mxu0 %v1932
  %v2048 = vpop.f32.mrb[0].mxu0
  %v2049 = vadd.f32 %v1883, %v2048
  %v2050 = vpop.f32.mrb[0].mxu0
  %v2051 = vadd.f32 %v1883, %v2050
  %2052 = vmatprep.mubr.f32.mxu0 0.0
  %2053 = vmatmul.mubr.f32.gmra.mrb[0].mxu0 %v1935
  %v2054 = vpop.f32.mrb[0].mxu0
  %v2055 = vadd.f32 %v1888, %v2054
  %v2056 = vpop.f32.mrb[0].mxu0
  %v2057 = vadd.f32 %v1888, %v2056
  %2058 = vmatprep.mubr.f32.mxu0 0.0
  %2059 = vmatmul.mubr.f32.gmra.mrb[0].mxu0 %v1938
  %v2060 = vpop.f32.mrb[0].mxu0
  %v2061 = vadd.f32 %v1893, %v2060
  %v2062 = vpop.f32.mrb[0].mxu0
  %v2063 = vadd.f32 %v1893, %v2062
  %2064 = vmatprep.mubr.f32.mxu0 0.0
  %2065 = vmatmul.mubr.f32.gmra.mrb[0].mxu0 %v1941
  %v2066 = vpop.f32.mrb[0].mxu0
  %v2067 = vadd.f32 %v1898, %v2066
  %v2068 = vpop.f32.mrb[0].mxu0
  %v2069 = vadd.f32 %v1898, %v2068
  %2070 = vmatprep.mubr.f32.mxu0 0.0
  %2071 = vmatmul.mubr.f32.gmra.mrb[0].mxu0 %v1944
  %v2072 = vpop.f32.mrb[0].mxu0
  %v2073 = vadd.f32 %v1903, %v2072
  %v2074 = vpop.f32.mrb[0].mxu0
  %v2075 = vadd.f32 %v1903, %v2074
  %2076 = vmatprep.mubr.f32.mxu0 0.0
  %2077 = vmatmul.mubr.f32.gmra.mrb[0].mxu0 %v1947
  %v2078 = vpop.f32.mrb[0].mxu0
  %v2079 = vadd.f32 %v1908, %v2078
  %v2080 = vpop.f32.mrb[0].mxu0
  %v2081 = vadd.f32 %v1908, %v2080
  %2082 = vmatprep.mubr.f32.mxu0 0.0
  %2083 = vmatmul.mubr.f32.gmra.mrb[0].mxu0 %v1950
  %v2084 = vpop.f32.mrb[0].mxu0
  %v2085 = vadd.f32 %v1913, %v2084
  %v2086 = vpop.f32.mrb[0].mxu0
  %v2087 = vadd.f32 %v1913, %v2086
  %2088 = vdwg.mxu0
  %v2089 = vand.u32 2147483647, %v2019
  %v2090 = vand.u32 2147483647, %v2021
  %v2091 = vand.u32 2147483647, %v2025
  %v2092 = vand.u32 2147483647, %v2027
  %v2093 = vand.u32 2147483647, %v2031
  %v2094 = vand.u32 2147483647, %v2033
  %v2095 = vand.u32 2147483647, %v2037
  %v2096 = vand.u32 2147483647, %v2039
  %v2097 = vand.u32 2147483647, %v2043
  %v2098 = vand.u32 2147483647, %v2045
  %v2099 = vand.u32 2147483647, %v2049
  %v2100 = vand.u32 2147483647, %v2051
  %v2101 = vand.u32 2147483647, %v2055
  %v2102 = vand.u32 2147483647, %v2057
  %v2103 = vand.u32 2147483647, %v2061
  %v2104 = vand.u32 2147483647, %v2063
  %v2105 = vand.u32 2147483647, %v2067
  %v2106 = vand.u32 2147483647, %v2069
  %v2107 = vand.u32 2147483647, %v2073
  %v2108 = vand.u32 2147483647, %v2075
  %v2109 = vand.u32 2147483647, %v2079
  %v2110 = vand.u32 2147483647, %v2081
  %v2111 = vand.u32 2147483647, %v2085
  %v2112 = vand.u32 2147483647, %v2087
  %v2113 = vmul.f32 %v2089, 0.70710677
  %v2114 = vmul.f32 %v2090, 0.70710677
  %v2115 = vmul.f32 %v2091, 0.70710677
  %v2116 = vmul.f32 %v2092, 0.70710677
  %v2117 = vmul.f32 %v2093, 0.70710677
  %v2118 = vmul.f32 %v2094, 0.70710677
  %v2119 = vmul.f32 %v2095, 0.70710677
  %v2120 = vmul.f32 %v2096, 0.70710677
  %v2121 = vmul.f32 %v2097, 0.70710677
  %v2122 = vmul.f32 %v2098, 0.70710677
  %v2123 = vmul.f32 %v2099, 0.70710677
  %v2124 = vmul.f32 %v2100, 0.70710677
  %v2125 = vmul.f32 %v2101, 0.70710677
  %v2126 = vmul.f32 %v2102, 0.70710677
  %v2127 = vmul.f32 %v2103, 0.70710677
  %v2128 = vmul.f32 %v2104, 0.70710677
  %v2129 = vmul.f32 %v2105, 0.70710677
  %v2130 = vmul.f32 %v2106, 0.70710677
  %v2131 = vmul.f32 %v2107, 0.70710677
  %v2132 = vmul.f32 %v2108, 0.70710677
  %v2133 = vmul.f32 %v2109, 0.70710677
  %v2134 = vmul.f32 %v2110, 0.70710677
  %v2135 = vmul.f32 %v2111, 0.70710677
  %v2136 = vmul.f32 %v2112, 0.70710677
  %v2137 = vmul.f32 %v2113, 0.3275911
  %v2138 = vmul.f32 %v2114, 0.3275911
  %v2139 = vmul.f32 %v2115, 0.3275911
  %v2140 = vmul.f32 %v2116, 0.3275911
  %v2141 = vmul.f32 %v2117, 0.3275911
  %v2142 = vmul.f32 %v2118, 0.3275911
  %v2143 = vmul.f32 %v2119, 0.3275911
  %v2144 = vmul.f32 %v2120, 0.3275911
  %v2145 = vmul.f32 %v2121, 0.3275911
  %v2146 = vmul.f32 %v2122, 0.3275911
  %v2147 = vmul.f32 %v2123, 0.3275911
  %v2148 = vmul.f32 %v2124, 0.3275911
  %v2149 = vmul.f32 %v2125, 0.3275911
  %v2150 = vmul.f32 %v2126, 0.3275911
  %v2151 = vmul.f32 %v2127, 0.3275911
  %v2152 = vmul.f32 %v2128, 0.3275911
  %v2153 = vmul.f32 %v2129, 0.3275911
  %v2154 = vmul.f32 %v2130, 0.3275911
  %v2155 = vmul.f32 %v2131, 0.3275911
  %v2156 = vmul.f32 %v2132, 0.3275911
  %v2157 = vmul.f32 %v2133, 0.3275911
  %v2158 = vmul.f32 %v2134, 0.3275911
  %v2159 = vmul.f32 %v2135, 0.3275911
  %v2160 = vmul.f32 %v2136, 0.3275911
  %v2161 = vadd.f32 %v2137, 1.0
  %v2162 = vadd.f32 %v2138, 1.0
  %v2163 = vadd.f32 %v2139, 1.0
  %v2164 = vadd.f32 %v2140, 1.0
  %v2165 = vadd.f32 %v2141, 1.0
  %v2166 = vadd.f32 %v2142, 1.0
  %v2167 = vadd.f32 %v2143, 1.0
  %v2168 = vadd.f32 %v2144, 1.0
  %v2169 = vadd.f32 %v2145, 1.0
  %v2170 = vadd.f32 %v2146, 1.0
  %v2171 = vadd.f32 %v2147, 1.0
  %v2172 = vadd.f32 %v2148, 1.0
  %v2173 = vadd.f32 %v2149, 1.0
  %v2174 = vadd.f32 %v2150, 1.0
  %v2175 = vadd.f32 %v2151, 1.0
  %v2176 = vadd.f32 %v2152, 1.0
  %v2177 = vadd.f32 %v2153, 1.0
  %v2178 = vadd.f32 %v2154, 1.0
  %v2179 = vadd.f32 %v2155, 1.0
  %v2180 = vadd.f32 %v2156, 1.0
  %v2181 = vadd.f32 %v2157, 1.0
  %v2182 = vadd.f32 %v2158, 1.0
  %v2183 = vadd.f32 %v2159, 1.0
  %v2184 = vadd.f32 %v2160, 1.0
  %v2185 = vrcp.pop %v2161
  %v2186 = vrcp.pop %v2162
  %v2187 = vrcp.pop %v2163
  %v2188 = vrcp.pop %v2164
  %v2189 = vrcp.pop %v2165
  %v2190 = vrcp.pop %v2166
  %v2191 = vrcp.pop %v2167
  %v2192 = vrcp.pop %v2168
  %v2193 = vrcp.pop %v2169
  %v2194 = vrcp.pop %v2170
  %v2195 = vrcp.pop %v2171
  %v2196 = vrcp.pop %v2172
  %v2197 = vrcp.pop %v2173
  %v2198 = vrcp.pop %v2174
  %v2199 = vrcp.pop %v2175
  %v2200 = vrcp.pop %v2176
  %v2201 = vrcp.pop %v2177
  %v2202 = vrcp.pop %v2178
  %v2203 = vrcp.pop %v2179
  %v2204 = vrcp.pop %v2180
  %v2205 = vrcp.pop %v2181
  %v2206 = vrcp.pop %v2182
  %v2207 = vrcp.pop %v2183
  %v2208 = vrcp.pop %v2184
  %v2209 = vmul.f32 %v2161, %v2185
  %v2210 = vmul.f32 %v2162, %v2186
  %v2211 = vmul.f32 %v2163, %v2187
  %v2212 = vmul.f32 %v2164, %v2188
  %v2213 = vmul.f32 %v2165, %v2189
  %v2214 = vmul.f32 %v2166, %v2190
  %v2215 = vmul.f32 %v2167, %v2191
  %v2216 = vmul.f32 %v2168, %v2192
  %v2217 = vmul.f32 %v2169, %v2193
  %v2218 = vmul.f32 %v2170, %v2194
  %v2219 = vmul.f32 %v2171, %v2195
  %v2220 = vmul.f32 %v2172, %v2196
  %v2221 = vmul.f32 %v2173, %v2197
  %v2222 = vmul.f32 %v2174, %v2198
  %v2223 = vmul.f32 %v2175, %v2199
  %v2224 = vmul.f32 %v2176, %v2200
  %v2225 = vmul.f32 %v2177, %v2201
  %v2226 = vmul.f32 %v2178, %v2202
  %v2227 = vmul.f32 %v2179, %v2203
  %v2228 = vmul.f32 %v2180, %v2204
  %v2229 = vmul.f32 %v2181, %v2205
  %v2230 = vmul.f32 %v2182, %v2206
  %v2231 = vmul.f32 %v2183, %v2207
  %v2232 = vmul.f32 %v2184, %v2208
  %v2233 = vsub.f32 2.0, %v2209
  %v2234 = vsub.f32 2.0, %v2210
  %v2235 = vsub.f32 2.0, %v2211
  %v2236 = vsub.f32 2.0, %v2212
  %v2237 = vsub.f32 2.0, %v2213
  %v2238 = vsub.f32 2.0, %v2214
  %v2239 = vsub.f32 2.0, %v2215
  %v2240 = vsub.f32 2.0, %v2216
  %v2241 = vsub.f32 2.0, %v2217
  %v2242 = vsub.f32 2.0, %v2218
  %v2243 = vsub.f32 2.0, %v2219
  %v2244 = vsub.f32 2.0, %v2220
  %v2245 = vsub.f32 2.0, %v2221
  %v2246 = vsub.f32 2.0, %v2222
  %v2247 = vsub.f32 2.0, %v2223
  %v2248 = vsub.f32 2.0, %v2224
  %v2249 = vsub.f32 2.0, %v2225
  %v2250 = vsub.f32 2.0, %v2226
  %v2251 = vsub.f32 2.0, %v2227
  %v2252 = vsub.f32 2.0, %v2228
  %v2253 = vsub.f32 2.0, %v2229
  %v2254 = vsub.f32 2.0, %v2230
  %v2255 = vsub.f32 2.0, %v2231
  %v2256 = vsub.f32 2.0, %v2232
  %v2257 = vmul.f32 %v2185, %v2233
  %v2258 = vmul.f32 %v2186, %v2234
  %v2259 = vmul.f32 %v2187, %v2235
  %v2260 = vmul.f32 %v2188, %v2236
  %v2261 = vmul.f32 %v2189, %v2237
  %v2262 = vmul.f32 %v2190, %v2238
  %v2263 = vmul.f32 %v2191, %v2239
  %v2264 = vmul.f32 %v2192, %v2240
  %v2265 = vmul.f32 %v2193, %v2241
  %v2266 = vmul.f32 %v2194, %v2242
  %v2267 = vmul.f32 %v2195, %v2243
  %v2268 = vmul.f32 %v2196, %v2244
  %v2269 = vmul.f32 %v2197, %v2245
  %v2270 = vmul.f32 %v2198, %v2246
  %v2271 = vmul.f32 %v2199, %v2247
  %v2272 = vmul.f32 %v2200, %v2248
  %v2273 = vmul.f32 %v2201, %v2249
  %v2274 = vmul.f32 %v2202, %v2250
  %v2275 = vmul.f32 %v2203, %v2251
  %v2276 = vmul.f32 %v2204, %v2252
  %v2277 = vmul.f32 %v2205, %v2253
  %v2278 = vmul.f32 %v2206, %v2254
  %v2279 = vmul.f32 %v2207, %v2255
  %v2280 = vmul.f32 %v2208, %v2256
  %v2281 = vmul.f32 %v2257, 1.0614054
  %v2282 = vmul.f32 %v2258, 1.0614054
  %v2283 = vmul.f32 %v2259, 1.0614054
  %v2284 = vmul.f32 %v2260, 1.0614054
  %v2285 = vmul.f32 %v2261, 1.0614054
  %v2286 = vmul.f32 %v2262, 1.0614054
  %v2287 = vmul.f32 %v2263, 1.0614054
  %v2288 = vmul.f32 %v2264, 1.0614054
  %v2289 = vmul.f32 %v2265, 1.0614054
  %v2290 = vmul.f32 %v2266, 1.0614054
  %v2291 = vmul.f32 %v2267, 1.0614054
  %v2292 = vmul.f32 %v2268, 1.0614054
  %v2293 = vmul.f32 %v2269, 1.0614054
  %v2294 = vmul.f32 %v2270, 1.0614054
  %v2295 = vmul.f32 %v2271, 1.0614054
  %v2296 = vmul.f32 %v2272, 1.0614054
  %v2297 = vmul.f32 %v2273, 1.0614054
  %v2298 = vmul.f32 %v2274, 1.0614054
  %v2299 = vmul.f32 %v2275, 1.0614054
  %v2300 = vmul.f32 %v2276, 1.0614054
  %v2301 = vmul.f32 %v2277, 1.0614054
  %v2302 = vmul.f32 %v2278, 1.0614054
  %v2303 = vmul.f32 %v2279, 1.0614054
  %v2304 = vmul.f32 %v2280, 1.0614054
  %v2305 = vadd.f32 %v2281, -1.4531521
  %v2306 = vadd.f32 %v2282, -1.4531521
  %v2307 = vadd.f32 %v2283, -1.4531521
  %v2308 = vadd.f32 %v2284, -1.4531521
  %v2309 = vadd.f32 %v2285, -1.4531521
  %v2310 = vadd.f32 %v2286, -1.4531521
  %v2311 = vadd.f32 %v2287, -1.4531521
  %v2312 = vadd.f32 %v2288, -1.4531521
  %v2313 = vadd.f32 %v2289, -1.4531521
  %v2314 = vadd.f32 %v2290, -1.4531521
  %v2315 = vadd.f32 %v2291, -1.4531521
  %v2316 = vadd.f32 %v2292, -1.4531521
  %v2317 = vadd.f32 %v2293, -1.4531521
  %v2318 = vadd.f32 %v2294, -1.4531521
  %v2319 = vadd.f32 %v2295, -1.4531521
  %v2320 = vadd.f32 %v2296, -1.4531521
  %v2321 = vadd.f32 %v2297, -1.4531521
  %v2322 = vadd.f32 %v2298, -1.4531521
  %v2323 = vadd.f32 %v2299, -1.4531521
  %v2324 = vadd.f32 %v2300, -1.4531521
  %v2325 = vadd.f32 %v2301, -1.4531521
  %v2326 = vadd.f32 %v2302, -1.4531521
  %v2327 = vadd.f32 %v2303, -1.4531521
  %v2328 = vadd.f32 %v2304, -1.4531521
  %v2329 = vmul.f32 %v2305, %v2257
  %v2330 = vmul.f32 %v2306, %v2258
  %v2331 = vmul.f32 %v2307, %v2259
  %v2332 = vmul.f32 %v2308, %v2260
  %v2333 = vmul.f32 %v2309, %v2261
  %v2334 = vmul.f32 %v2310, %v2262
  %v2335 = vmul.f32 %v2311, %v2263
  %v2336 = vmul.f32 %v2312, %v2264
  %v2337 = vmul.f32 %v2313, %v2265
  %v2338 = vmul.f32 %v2314, %v2266
  %v2339 = vmul.f32 %v2315, %v2267
  %v2340 = vmul.f32 %v2316, %v2268
  %v2341 = vmul.f32 %v2317, %v2269
  %v2342 = vmul.f32 %v2318, %v2270
  %v2343 = vmul.f32 %v2319, %v2271
  %v2344 = vmul.f32 %v2320, %v2272
  %v2345 = vmul.f32 %v2321, %v2273
  %v2346 = vmul.f32 %v2322, %v2274
  %v2347 = vmul.f32 %v2323, %v2275
  %v2348 = vmul.f32 %v2324, %v2276
  %v2349 = vmul.f32 %v2325, %v2277
  %v2350 = vmul.f32 %v2326, %v2278
  %v2351 = vmul.f32 %v2327, %v2279
  %v2352 = vmul.f32 %v2328, %v2280
  %v2353 = vadd.f32 %v2329, 1.4214138
  %v2354 = vadd.f32 %v2330, 1.4214138
  %v2355 = vadd.f32 %v2331, 1.4214138
  %v2356 = vadd.f32 %v2332, 1.4214138
  %v2357 = vadd.f32 %v2333, 1.4214138
  %v2358 = vadd.f32 %v2334, 1.4214138
  %v2359 = vadd.f32 %v2335, 1.4214138
  %v2360 = vadd.f32 %v2336, 1.4214138
  %v2361 = vadd.f32 %v2337, 1.4214138
  %v2362 = vadd.f32 %v2338, 1.4214138
  %v2363 = vadd.f32 %v2339, 1.4214138
  %v2364 = vadd.f32 %v2340, 1.4214138
  %v2365 = vadd.f32 %v2341, 1.4214138
  %v2366 = vadd.f32 %v2342, 1.4214138
  %v2367 = vadd.f32 %v2343, 1.4214138
  %v2368 = vadd.f32 %v2344, 1.4214138
  %v2369 = vadd.f32 %v2345, 1.4214138
  %v2370 = vadd.f32 %v2346, 1.4214138
  %v2371 = vadd.f32 %v2347, 1.4214138
  %v2372 = vadd.f32 %v2348, 1.4214138
  %v2373 = vadd.f32 %v2349, 1.4214138
  %v2374 = vadd.f32 %v2350, 1.4214138
  %v2375 = vadd.f32 %v2351, 1.4214138
  %v2376 = vadd.f32 %v2352, 1.4214138
  %v2377 = vmul.f32 %v2353, %v2257
  %v2378 = vmul.f32 %v2354, %v2258
  %v2379 = vmul.f32 %v2355, %v2259
  %v2380 = vmul.f32 %v2356, %v2260
  %v2381 = vmul.f32 %v2357, %v2261
  %v2382 = vmul.f32 %v2358, %v2262
  %v2383 = vmul.f32 %v2359, %v2263
  %v2384 = vmul.f32 %v2360, %v2264
  %v2385 = vmul.f32 %v2361, %v2265
  %v2386 = vmul.f32 %v2362, %v2266
  %v2387 = vmul.f32 %v2363, %v2267
  %v2388 = vmul.f32 %v2364, %v2268
  %v2389 = vmul.f32 %v2365, %v2269
  %v2390 = vmul.f32 %v2366, %v2270
  %v2391 = vmul.f32 %v2367, %v2271
  %v2392 = vmul.f32 %v2368, %v2272
  %v2393 = vmul.f32 %v2369, %v2273
  %v2394 = vmul.f32 %v2370, %v2274
  %v2395 = vmul.f32 %v2371, %v2275
  %v2396 = vmul.f32 %v2372, %v2276
  %v2397 = vmul.f32 %v2373, %v2277
  %v2398 = vmul.f32 %v2374, %v2278
  %v2399 = vmul.f32 %v2375, %v2279
  %v2400 = vmul.f32 %v2376, %v2280
  %v2401 = vadd.f32 %v2377, -0.28449672
  %v2402 = vadd.f32 %v2378, -0.28449672
  %v2403 = vadd.f32 %v2379, -0.28449672
  %v2404 = vadd.f32 %v2380, -0.28449672
  %v2405 = vadd.f32 %v2381, -0.28449672
  %v2406 = vadd.f32 %v2382, -0.28449672
  %v2407 = vadd.f32 %v2383, -0.28449672
  %v2408 = vadd.f32 %v2384, -0.28449672
  %v2409 = vadd.f32 %v2385, -0.28449672
  %v2410 = vadd.f32 %v2386, -0.28449672
  %v2411 = vadd.f32 %v2387, -0.28449672
  %v2412 = vadd.f32 %v2388, -0.28449672
  %v2413 = vadd.f32 %v2389, -0.28449672
  %v2414 = vadd.f32 %v2390, -0.28449672
  %v2415 = vadd.f32 %v2391, -0.28449672
  %v2416 = vadd.f32 %v2392, -0.28449672
  %v2417 = vadd.f32 %v2393, -0.28449672
  %v2418 = vadd.f32 %v2394, -0.28449672
  %v2419 = vadd.f32 %v2395, -0.28449672
  %v2420 = vadd.f32 %v2396, -0.28449672
  %v2421 = vadd.f32 %v2397, -0.28449672
  %v2422 = vadd.f32 %v2398, -0.28449672
  %v2423 = vadd.f32 %v2399, -0.28449672
  %v2424 = vadd.f32 %v2400, -0.28449672
  %v2425 = vmul.f32 %v2401, %v2257
  %v2426 = vmul.f32 %v2402, %v2258
  %v2427 = vmul.f32 %v2403, %v2259
  %v2428 = vmul.f32 %v2404, %v2260
  %v2429 = vmul.f32 %v2405, %v2261
  %v2430 = vmul.f32 %v2406, %v2262
  %v2431 = vmul.f32 %v2407, %v2263
  %v2432 = vmul.f32 %v2408, %v2264
  %v2433 = vmul.f32 %v2409, %v2265
  %v2434 = vmul.f32 %v2410, %v2266
  %v2435 = vmul.f32 %v2411, %v2267
  %v2436 = vmul.f32 %v2412, %v2268
  %v2437 = vmul.f32 %v2413, %v2269
  %v2438 = vmul.f32 %v2414, %v2270
  %v2439 = vmul.f32 %v2415, %v2271
  %v2440 = vmul.f32 %v2416, %v2272
  %v2441 = vmul.f32 %v2417, %v2273
  %v2442 = vmul.f32 %v2418, %v2274
  %v2443 = vmul.f32 %v2419, %v2275
  %v2444 = vmul.f32 %v2420, %v2276
  %v2445 = vmul.f32 %v2421, %v2277
  %v2446 = vmul.f32 %v2422, %v2278
  %v2447 = vmul.f32 %v2423, %v2279
  %v2448 = vmul.f32 %v2424, %v2280
  %v2449 = vadd.f32 %v2425, 0.2548296
  %v2450 = vadd.f32 %v2426, 0.2548296
  %v2451 = vadd.f32 %v2427, 0.2548296
  %v2452 = vadd.f32 %v2428, 0.2548296
  %v2453 = vadd.f32 %v2429, 0.2548296
  %v2454 = vadd.f32 %v2430, 0.2548296
  %v2455 = vadd.f32 %v2431, 0.2548296
  %v2456 = vadd.f32 %v2432, 0.2548296
  %v2457 = vadd.f32 %v2433, 0.2548296
  %v2458 = vadd.f32 %v2434, 0.2548296
  %v2459 = vadd.f32 %v2435, 0.2548296
  %v2460 = vadd.f32 %v2436, 0.2548296
  %v2461 = vadd.f32 %v2437, 0.2548296
  %v2462 = vadd.f32 %v2438, 0.2548296
  %v2463 = vadd.f32 %v2439, 0.2548296
  %v2464 = vadd.f32 %v2440, 0.2548296
  %v2465 = vadd.f32 %v2441, 0.2548296
  %v2466 = vadd.f32 %v2442, 0.2548296
  %v2467 = vadd.f32 %v2443, 0.2548296
  %v2468 = vadd.f32 %v2444, 0.2548296
  %v2469 = vadd.f32 %v2445, 0.2548296
  %v2470 = vadd.f32 %v2446, 0.2548296
  %v2471 = vadd.f32 %v2447, 0.2548296
  %v2472 = vadd.f32 %v2448, 0.2548296
  %v2473 = vmul.f32 %v2449, %v2257
  %v2474 = vmul.f32 %v2450, %v2258
  %v2475 = vmul.f32 %v2451, %v2259
  %v2476 = vmul.f32 %v2452, %v2260
  %v2477 = vmul.f32 %v2453, %v2261
  %v2478 = vmul.f32 %v2454, %v2262
  %v2479 = vmul.f32 %v2455, %v2263
  %v2480 = vmul.f32 %v2456, %v2264
  %v2481 = vmul.f32 %v2457, %v2265
  %v2482 = vmul.f32 %v2458, %v2266
  %v2483 = vmul.f32 %v2459, %v2267
  %v2484 = vmul.f32 %v2460, %v2268
  %v2485 = vmul.f32 %v2461, %v2269
  %v2486 = vmul.f32 %v2462, %v2270
  %v2487 = vmul.f32 %v2463, %v2271
  %v2488 = vmul.f32 %v2464, %v2272
  %v2489 = vmul.f32 %v2465, %v2273
  %v2490 = vmul.f32 %v2466, %v2274
  %v2491 = vmul.f32 %v2467, %v2275
  %v2492 = vmul.f32 %v2468, %v2276
  %v2493 = vmul.f32 %v2469, %v2277
  %v2494 = vmul.f32 %v2470, %v2278
  %v2495 = vmul.f32 %v2471, %v2279
  %v2496 = vmul.f32 %v2472, %v2280
  %v2497 = vsub.f32 0.0, %v2113
  %v2498 = vsub.f32 0.0, %v2114
  %v2499 = vsub.f32 0.0, %v2115
  %v2500 = vsub.f32 0.0, %v2116
  %v2501 = vsub.f32 0.0, %v2117
  %v2502 = vsub.f32 0.0, %v2118
  %v2503 = vsub.f32 0.0, %v2119
  %v2504 = vsub.f32 0.0, %v2120
  %v2505 = vsub.f32 0.0, %v2121
  %v2506 = vsub.f32 0.0, %v2122
  %v2507 = vsub.f32 0.0, %v2123
  %v2508 = vsub.f32 0.0, %v2124
  %v2509 = vsub.f32 0.0, %v2125
  %v2510 = vsub.f32 0.0, %v2126
  %v2511 = vsub.f32 0.0, %v2127
  %v2512 = vsub.f32 0.0, %v2128
  %v2513 = vsub.f32 0.0, %v2129
  %v2514 = vsub.f32 0.0, %v2130
  %v2515 = vsub.f32 0.0, %v2131
  %v2516 = vsub.f32 0.0, %v2132
  %v2517 = vsub.f32 0.0, %v2133
  %v2518 = vsub.f32 0.0, %v2134
  %v2519 = vsub.f32 0.0, %v2135
  %v2520 = vsub.f32 0.0, %v2136
  %v2521 = vmul.f32 %v2497, %v2113
  %v2522 = vmul.f32 %v2498, %v2114
  %v2523 = vmul.f32 %v2499, %v2115
  %v2524 = vmul.f32 %v2500, %v2116
  %v2525 = vmul.f32 %v2501, %v2117
  %v2526 = vmul.f32 %v2502, %v2118
  %v2527 = vmul.f32 %v2503, %v2119
  %v2528 = vmul.f32 %v2504, %v2120
  %v2529 = vmul.f32 %v2505, %v2121
  %v2530 = vmul.f32 %v2506, %v2122
  %v2531 = vmul.f32 %v2507, %v2123
  %v2532 = vmul.f32 %v2508, %v2124
  %v2533 = vmul.f32 %v2509, %v2125
  %v2534 = vmul.f32 %v2510, %v2126
  %v2535 = vmul.f32 %v2511, %v2127
  %v2536 = vmul.f32 %v2512, %v2128
  %v2537 = vmul.f32 %v2513, %v2129
  %v2538 = vmul.f32 %v2514, %v2130
  %v2539 = vmul.f32 %v2515, %v2131
  %v2540 = vmul.f32 %v2516, %v2132
  %v2541 = vmul.f32 %v2517, %v2133
  %v2542 = vmul.f32 %v2518, %v2134
  %v2543 = vmul.f32 %v2519, %v2135
  %v2544 = vmul.f32 %v2520, %v2136
  %v2545 = vmul.f32 %v2521, 1.442695
  %v2546 = vpow.pop %v2545
  %v2547 = vmul.f32 %v2522, 1.442695
  %v2548 = vpow.pop %v2547
  %v2549 = vmul.f32 %v2523, 1.442695
  %v2550 = vpow.pop %v2549
  %v2551 = vmul.f32 %v2524, 1.442695
  %v2552 = vpow.pop %v2551
  %v2553 = vmul.f32 %v2525, 1.442695
  %v2554 = vpow.pop %v2553
  %v2555 = vmul.f32 %v2526, 1.442695
  %v2556 = vpow.pop %v2555
  %v2557 = vmul.f32 %v2527, 1.442695
  %v2558 = vpow.pop %v2557
  %v2559 = vmul.f32 %v2528, 1.442695
  %v2560 = vpow.pop %v2559
  %v2561 = vmul.f32 %v2529, 1.442695
  %v2562 = vpow.pop %v2561
  %v2563 = vmul.f32 %v2530, 1.442695
  %v2564 = vpow.pop %v2563
  %v2565 = vmul.f32 %v2531, 1.442695
  %v2566 = vpow.pop %v2565
  %v2567 = vmul.f32 %v2532, 1.442695
  %v2568 = vpow.pop %v2567
  %v2569 = vmul.f32 %v2533, 1.442695
  %v2570 = vpow.pop %v2569
  %v2571 = vmul.f32 %v2534, 1.442695
  %v2572 = vpow.pop %v2571
  %v2573 = vmul.f32 %v2535, 1.442695
  %v2574 = vpow.pop %v2573
  %v2575 = vmul.f32 %v2536, 1.442695
  %v2576 = vpow.pop %v2575
  %v2577 = vmul.f32 %v2537, 1.442695
  %v2578 = vpow.pop %v2577
  %v2579 = vmul.f32 %v2538, 1.442695
  %v2580 = vpow.pop %v2579
  %v2581 = vmul.f32 %v2539, 1.442695
  %v2582 = vpow.pop %v2581
  %v2583 = vmul.f32 %v2540, 1.442695
  %v2584 = vpow.pop %v2583
  %v2585 = vmul.f32 %v2541, 1.442695
  %v2586 = vpow.pop %v2585
  %v2587 = vmul.f32 %v2542, 1.442695
  %v2588 = vpow.pop %v2587
  %v2589 = vmul.f32 %v2543, 1.442695
  %v2590 = vpow.pop %v2589
  %v2591 = vmul.f32 %v2544, 1.442695
  %v2592 = vpow.pop %v2591
  %v2593 = vmul.f32 %v2473, %v2546
  %v2594 = vmul.f32 %v2474, %v2548
  %v2595 = vmul.f32 %v2475, %v2550
  %v2596 = vmul.f32 %v2476, %v2552
  %v2597 = vmul.f32 %v2477, %v2554
  %v2598 = vmul.f32 %v2478, %v2556
  %v2599 = vmul.f32 %v2479, %v2558
  %v2600 = vmul.f32 %v2480, %v2560
  %v2601 = vmul.f32 %v2481, %v2562
  %v2602 = vmul.f32 %v2482, %v2564
  %v2603 = vmul.f32 %v2483, %v2566
  %v2604 = vmul.f32 %v2484, %v2568
  %v2605 = vmul.f32 %v2485, %v2570
  %v2606 = vmul.f32 %v2486, %v2572
  %v2607 = vmul.f32 %v2487, %v2574
  %v2608 = vmul.f32 %v2488, %v2576
  %v2609 = vmul.f32 %v2489, %v2578
  %v2610 = vmul.f32 %v2490, %v2580
  %v2611 = vmul.f32 %v2491, %v2582
  %v2612 = vmul.f32 %v2492, %v2584
  %v2613 = vmul.f32 %v2493, %v2586
  %v2614 = vmul.f32 %v2494, %v2588
  %v2615 = vmul.f32 %v2495, %v2590
  %v2616 = vmul.f32 %v2496, %v2592
  %v2617 = vsub.f32 1.0, %v2593
  %v2618 = vsub.f32 1.0, %v2594
  %v2619 = vsub.f32 1.0, %v2595
  %v2620 = vsub.f32 1.0, %v2596
  %v2621 = vsub.f32 1.0, %v2597
  %v2622 = vsub.f32 1.0, %v2598
  %v2623 = vsub.f32 1.0, %v2599
  %v2624 = vsub.f32 1.0, %v2600
  %v2625 = vsub.f32 1.0, %v2601
  %v2626 = vsub.f32 1.0, %v2602
  %v2627 = vsub.f32 1.0, %v2603
  %v2628 = vsub.f32 1.0, %v2604
  %v2629 = vsub.f32 1.0, %v2605
  %v2630 = vsub.f32 1.0, %v2606
  %v2631 = vsub.f32 1.0, %v2607
  %v2632 = vsub.f32 1.0, %v2608
  %v2633 = vsub.f32 1.0, %v2609
  %v2634 = vsub.f32 1.0, %v2610
  %v2635 = vsub.f32 1.0, %v2611
  %v2636 = vsub.f32 1.0, %v2612
  %v2637 = vsub.f32 1.0, %v2613
  %v2638 = vsub.f32 1.0, %v2614
  %v2639 = vsub.f32 1.0, %v2615
  %v2640 = vsub.f32 1.0, %v2616
  %vm2641 = vcmp.ge.f32.partialorder %v2019, 0.0
  %vm2642 = vcmp.ge.f32.partialorder %v2021, 0.0
  %vm2643 = vcmp.ge.f32.partialorder %v2025, 0.0
  %vm2644 = vcmp.ge.f32.partialorder %v2027, 0.0
  %vm2645 = vcmp.ge.f32.partialorder %v2031, 0.0
  %vm2646 = vcmp.ge.f32.partialorder %v2033, 0.0
  %vm2647 = vcmp.ge.f32.partialorder %v2037, 0.0
  %vm2648 = vcmp.ge.f32.partialorder %v2039, 0.0
  %vm2649 = vcmp.ge.f32.partialorder %v2043, 0.0
  %vm2650 = vcmp.ge.f32.partialorder %v2045, 0.0
  %vm2651 = vcmp.ge.f32.partialorder %v2049, 0.0
  %vm2652 = vcmp.ge.f32.partialorder %v2051, 0.0
  %vm2653 = vcmp.ge.f32.partialorder %v2055, 0.0
  %vm2654 = vcmp.ge.f32.partialorder %v2057, 0.0
  %vm2655 = vcmp.ge.f32.partialorder %v2061, 0.0
  %vm2656 = vcmp.ge.f32.partialorder %v2063, 0.0
  %vm2657 = vcmp.ge.f32.partialorder %v2067, 0.0
  %vm2658 = vcmp.ge.f32.partialorder %v2069, 0.0
  %vm2659 = vcmp.ge.f32.partialorder %v2073, 0.0
  %vm2660 = vcmp.ge.f32.partialorder %v2075, 0.0
  %vm2661 = vcmp.ge.f32.partialorder %v2079, 0.0
  %vm2662 = vcmp.ge.f32.partialorder %v2081, 0.0
  %vm2663 = vcmp.ge.f32.partialorder %v2085, 0.0
  %vm2664 = vcmp.ge.f32.partialorder %v2087, 0.0
  %v2665 = vsub.f32 0.0, %v2617
  %v2666 = vsub.f32 0.0, %v2618
  %v2667 = vsub.f32 0.0, %v2619
  %v2668 = vsub.f32 0.0, %v2620
  %v2669 = vsub.f32 0.0, %v2621
  %v2670 = vsub.f32 0.0, %v2622
  %v2671 = vsub.f32 0.0, %v2623
  %v2672 = vsub.f32 0.0, %v2624
  %v2673 = vsub.f32 0.0, %v2625
  %v2674 = vsub.f32 0.0, %v2626
  %v2675 = vsub.f32 0.0, %v2627
  %v2676 = vsub.f32 0.0, %v2628
  %v2677 = vsub.f32 0.0, %v2629
  %v2678 = vsub.f32 0.0, %v2630
  %v2679 = vsub.f32 0.0, %v2631
  %v2680 = vsub.f32 0.0, %v2632
  %v2681 = vsub.f32 0.0, %v2633
  %v2682 = vsub.f32 0.0, %v2634
  %v2683 = vsub.f32 0.0, %v2635
  %v2684 = vsub.f32 0.0, %v2636
  %v2685 = vsub.f32 0.0, %v2637
  %v2686 = vsub.f32 0.0, %v2638
  %v2687 = vsub.f32 0.0, %v2639
  %v2688 = vsub.f32 0.0, %v2640
  %v2689 = vsel %vm2641, %v2617, %v2665
  %v2690 = vsel %vm2642, %v2618, %v2666
  %v2691 = vsel %vm2643, %v2619, %v2667
  %v2692 = vsel %vm2644, %v2620, %v2668
  %v2693 = vsel %vm2645, %v2621, %v2669
  %v2694 = vsel %vm2646, %v2622, %v2670
  %v2695 = vsel %vm2647, %v2623, %v2671
  %v2696 = vsel %vm2648, %v2624, %v2672
  %v2697 = vsel %vm2649, %v2625, %v2673
  %v2698 = vsel %vm2650, %v2626, %v2674
  %v2699 = vsel %vm2651, %v2627, %v2675
  %v2700 = vsel %vm2652, %v2628, %v2676
  %v2701 = vsel %vm2653, %v2629, %v2677
  %v2702 = vsel %vm2654, %v2630, %v2678
  %v2703 = vsel %vm2655, %v2631, %v2679
  %v2704 = vsel %vm2656, %v2632, %v2680
  %v2705 = vsel %vm2657, %v2633, %v2681
  %v2706 = vsel %vm2658, %v2634, %v2682
  %v2707 = vsel %vm2659, %v2635, %v2683
  %v2708 = vsel %vm2660, %v2636, %v2684
  %v2709 = vsel %vm2661, %v2637, %v2685
  %v2710 = vsel %vm2662, %v2638, %v2686
  %v2711 = vsel %vm2663, %v2639, %v2687
  %v2712 = vsel %vm2664, %v2640, %v2688
  %v2713 = vmul.f32 %v2019, 0.5
  %v2714 = vmul.f32 %v2021, 0.5
  %v2715 = vmul.f32 %v2025, 0.5
  %v2716 = vmul.f32 %v2027, 0.5
  %v2717 = vmul.f32 %v2031, 0.5
  %v2718 = vmul.f32 %v2033, 0.5
  %v2719 = vmul.f32 %v2037, 0.5
  %v2720 = vmul.f32 %v2039, 0.5
  %v2721 = vmul.f32 %v2043, 0.5
  %v2722 = vmul.f32 %v2045, 0.5
  %v2723 = vmul.f32 %v2049, 0.5
  %v2724 = vmul.f32 %v2051, 0.5
  %v2725 = vmul.f32 %v2055, 0.5
  %v2726 = vmul.f32 %v2057, 0.5
  %v2727 = vmul.f32 %v2061, 0.5
  %v2728 = vmul.f32 %v2063, 0.5
  %v2729 = vmul.f32 %v2067, 0.5
  %v2730 = vmul.f32 %v2069, 0.5
  %v2731 = vmul.f32 %v2073, 0.5
  %v2732 = vmul.f32 %v2075, 0.5
  %v2733 = vmul.f32 %v2079, 0.5
  %v2734 = vmul.f32 %v2081, 0.5
  %v2735 = vmul.f32 %v2085, 0.5
  %v2736 = vmul.f32 %v2087, 0.5
  %v2737 = vadd.f32 %v2689, 1.0
  %v2738 = vadd.f32 %v2690, 1.0
  %v2739 = vadd.f32 %v2691, 1.0
  %v2740 = vadd.f32 %v2692, 1.0
  %v2741 = vadd.f32 %v2693, 1.0
  %v2742 = vadd.f32 %v2694, 1.0
  %v2743 = vadd.f32 %v2695, 1.0
  %v2744 = vadd.f32 %v2696, 1.0
  %v2745 = vadd.f32 %v2697, 1.0
  %v2746 = vadd.f32 %v2698, 1.0
  %v2747 = vadd.f32 %v2699, 1.0
  %v2748 = vadd.f32 %v2700, 1.0
  %v2749 = vadd.f32 %v2701, 1.0
  %v2750 = vadd.f32 %v2702, 1.0
  %v2751 = vadd.f32 %v2703, 1.0
  %v2752 = vadd.f32 %v2704, 1.0
  %v2753 = vadd.f32 %v2705, 1.0
  %v2754 = vadd.f32 %v2706, 1.0
  %v2755 = vadd.f32 %v2707, 1.0
  %v2756 = vadd.f32 %v2708, 1.0
  %v2757 = vadd.f32 %v2709, 1.0
  %v2758 = vadd.f32 %v2710, 1.0
  %v2759 = vadd.f32 %v2711, 1.0
  %v2760 = vadd.f32 %v2712, 1.0
  %v2761 = vmul.f32 %v2713, %v2737
  %v2762 = vmul.f32 %v2714, %v2738
  %v2763 = vmul.f32 %v2715, %v2739
  %v2764 = vmul.f32 %v2716, %v2740
  %v2765 = vmul.f32 %v2717, %v2741
  %v2766 = vmul.f32 %v2718, %v2742
  %v2767 = vmul.f32 %v2719, %v2743
  %v2768 = vmul.f32 %v2720, %v2744
  %v2769 = vmul.f32 %v2721, %v2745
  %v2770 = vmul.f32 %v2722, %v2746
  %v2771 = vmul.f32 %v2723, %v2747
  %v2772 = vmul.f32 %v2724, %v2748
  %v2773 = vmul.f32 %v2725, %v2749
  %v2774 = vmul.f32 %v2726, %v2750
  %v2775 = vmul.f32 %v2727, %v2751
  %v2776 = vmul.f32 %v2728, %v2752
  %v2777 = vmul.f32 %v2729, %v2753
  %v2778 = vmul.f32 %v2730, %v2754
  %v2779 = vmul.f32 %v2731, %v2755
  %v2780 = vmul.f32 %v2732, %v2756
  %v2781 = vmul.f32 %v2733, %v2757
  %v2782 = vmul.f32 %v2734, %v2758
  %v2783 = vmul.f32 %v2735, %v2759
  %v2784 = vmul.f32 %v2736, %v2760
  %v2785 = vld [vmem:[%s10] sm:$0xff]
  %v2786 = vld [vmem:[%s10 + $0x8] sm:$0xff]
  %v2787 = vld [vmem:[%s10 + $0x10] sm:$0xff]
  %v2788 = vld [vmem:[%s11] sm:$0xff]
  %v2789 = vld [vmem:[%s11 + $0x8] sm:$0xff]
  %v2790 = vld [vmem:[%s11 + $0x10] sm:$0xff]
  %2792 = vset.pattern.permute.xlu0 0
  %2793 = vperm.xlu0 %2792, %v2788
  %v2794 = vpop.permute.xlu0 %2793
  %2797 = vset.pattern.permute.xlu0 0
  %2798 = vperm.xlu0 %2797, %v2789
  %v2799 = vpop.permute.xlu0 %2798
  %2802 = vset.pattern.permute.xlu0 0
  %2803 = vperm.xlu0 %2802, %v2790
  %v2804 = vpop.permute.xlu0 %2803
  %vm2806 = vcmask 785408
  %v2808 = vsel %vm2806, %v2785, 0
  %v2811 = vsel %vm2806, %v2786, 0
  %v2814 = vsel %vm2806, %v2787, 0
  %2816 = vmatprep.subr.mxu0 %v2762
  %2817 = vmatpush1.msra.mxu0 %v2761
  %2818 = vmatprep.subr.mxu0 %v2764
  %2819 = vmatpush1.msra.mxu0 %v2763
  %2820 = vmatprep.subr.mxu0 %v2766
  %2821 = vmatpush1.msra.mxu0 %v2765
  %2822 = vmatprep.subr.mxu0 %v2768
  %2823 = vmatpush1.msra.mxu0 %v2767
  %2824 = vmatprep.subr.mxu0 %v2770
  %2825 = vmatpush1.msra.mxu0 %v2769
  %2826 = vmatprep.subr.mxu0 %v2772
  %2827 = vmatpush1.msra.mxu0 %v2771
  %2828 = vmatprep.subr.mxu0 %v2774
  %2829 = vmatpush1.msra.mxu0 %v2773
  %2830 = vmatprep.subr.mxu0 %v2776
  %2831 = vmatpush1.msra.mxu0 %v2775
  %2832 = vmatprep.subr.mxu0 %v2778
  %2833 = vmatpush1.msra.mxu0 %v2777
  %2834 = vmatprep.subr.mxu0 %v2780
  %2835 = vmatpush1.msra.mxu0 %v2779
  %2836 = vmatprep.subr.mxu0 %v2782
  %2837 = vmatpush1.msra.mxu0 %v2781
  %2838 = vmatprep.subr.mxu0 %v2784
  %2839 = vmatpush1.msra.mxu0 %v2783
  %2840 = vmatprep.subr.mxu0 0.0
  %2841 = vmatpush1.msra.mxu0 0.0
  %2842 = vmatprep.subr.mxu0 0.0
  %2843 = vmatpush1.msra.mxu0 0.0
  %2844 = vmatprep.subr.mxu0 0.0
  %2845 = vmatpush1.msra.mxu0 0.0
  %2846 = vmatprep.subr.mxu0 0.0
  %2847 = vmatpush1.msra.mxu0 0.0
  %2848 = vmatprep.subr.mxu0 0.0
  %2849 = vmatpush1.msra.mxu0 0.0
  %2850 = vmatprep.subr.mxu0 0.0
  %2851 = vmatpush1.msra.mxu0 0.0
  %2852 = vmatprep.subr.mxu0 0.0
  %2853 = vmatpush1.msra.mxu0 0.0
  %2854 = vmatprep.subr.mxu0 0.0
  %2855 = vmatpush1.msra.mxu0 0.0
  %2856 = vmatprep.subr.mxu0 0.0
  %2857 = vmatpush1.msra.mxu0 0.0
  %2858 = vmatprep.subr.mxu0 0.0
  %2859 = vmatpush1.msra.mxu0 0.0
  %2860 = vmatprep.subr.mxu0 0.0
  %2861 = vmatpush1.msra.mxu0 0.0
  %2862 = vmatprep.subr.mxu0 0.0
  %2863 = vmatpush1.msra.mxu0 0.0
  %2864 = vmatprep.subr.mxu0 0.0
  %2865 = vmatpush1.msra.mxu0 0.0
  %2866 = vmatprep.subr.mxu0 0.0
  %2867 = vmatpush1.msra.mxu0 0.0
  %2868 = vmatprep.subr.mxu0 0.0
  %2869 = vmatpush1.msra.mxu0 0.0
  %2870 = vmatprep.subr.mxu0 0.0
  %2871 = vmatpush1.msra.mxu0 0.0
  %2872 = vmatprep.subr.mxu0 0.0
  %2873 = vmatpush1.msra.mxu0 0.0
  %2874 = vmatprep.subr.mxu0 0.0
  %2875 = vmatpush1.msra.mxu0 0.0
  %2876 = vmatprep.subr.mxu0 0.0
  %2877 = vmatpush1.msra.mxu0 0.0
  %2878 = vmatprep.subr.mxu0 0.0
  %2879 = vmatpush1.msra.mxu0 0.0
  %2880 = vmatprep.mubr.f32.mxu0 0.0
  %2881 = vmatmul.mubr.f32.gmra.mrb[0].mxu0 %v2808
  %v2882 = vpop.f32.mrb[0].mxu0
  %v2883 = vadd.f32 %v2794, %v2882
  %v2884 = vpop.f32.mrb[0].mxu0
  %v2885 = vadd.f32 %v2794, %v2884
  %2886 = vmatprep.mubr.f32.mxu0 0.0
  %2887 = vmatmul.mubr.f32.gmra.mrb[0].mxu0 %v2811
  %v2888 = vpop.f32.mrb[0].mxu0
  %v2889 = vadd.f32 %v2799, %v2888
  %v2890 = vpop.f32.mrb[0].mxu0
  %v2891 = vadd.f32 %v2799, %v2890
  %2892 = vmatprep.mubr.f32.mxu0 0.0
  %2893 = vmatmul.mubr.f32.gmra.mrb[0].mxu0 %v2814
  %v2894 = vpop.f32.mrb[0].mxu0
  %v2895 = vadd.f32 %v2804, %v2894
  %v2896 = vpop.f32.mrb[0].mxu0
  %v2897 = vadd.f32 %v2804, %v2896
  %2898 = vdwg.mxu0
  %v2899 = vadd.f32 %v41, %v2883
  %v2900 = vadd.f32 %v42, %v2885
  %v2901 = vadd.f32 %v43, %v2889
  %v2902 = vadd.f32 %v44, %v2891
  %v2903 = vadd.f32 %v45, %v2895
  %v2904 = vadd.f32 %v46, %v2897
  %2905 = vst [vmem:[%s12] sm:$0xff] %v2899
  %2906 = vst [vmem:[%s12 + $0x8] sm:$0xff] %v2900
  %2907 = vst [vmem:[%s12 + $0x10] sm:$0xff] %v2901
  %2908 = vst [vmem:[%s12 + $0x18] sm:$0xff] %v2902
  %2909 = vst [vmem:[%s12 + $0x20] sm:$0xff] %v2903
  %2910 = vst [vmem:[%s12 + $0x28] sm:$0xff] %v2904
  // Predicated region
  $region50: #{_lambda_.1} parent=0 // pred_check
    _
  $region51: #{_lambda_.1} parent=0 // pred_check_branch
    %2912 = sbr.rel (0) target = $region53
  $region52: #{_lambda_.1} parent=0 // pred_region
    _
  $region53: #{_lambda_.1} parent=0 // pred_fallthru
    _
  // Predicated region
  $region54: #{_lambda_.1} parent=0 // pred_check
    _
  $region55: #{_lambda_.1} parent=0 // pred_check_branch
    %2914 = sbr.rel (0) target = $region57
  $region56: #{_lambda_.1} parent=0 // pred_region
    _
  $region57: #{_lambda_.1} parent=0 // pred_fallthru
    _

</llo_original>
